<compile_context>
chip_gen: v6e
topology: v6e:2x2x1
jax: 0.10.0
libtpu: 0.0.40
codegen_flags: <defaults>
</compile_context>

<pallas_src>
import functools

import jax
import jax.numpy as jnp
from jax import lax
from jax.experimental import pallas as pl
from jax.experimental.pallas import tpu as pltpu
from jax.scipy.special import gammaln


# ----------------------------- tiling helpers -----------------------------

def _pick_row_tile(m, target=512):
    """Largest row tile <= target that divides m and is 128-aligned (lane/sublane safe)."""
    if m <= target:
        return m
    for t in (512, 384, 256, 128):
        if m % t == 0:
            return t
    return m


def _pick_time_chunk(t, target=8):
    for c in (target, 4, 2, 1):
        if t % c == 0:
            return c
    return 1


# ----------------------------- fused local + backward-input encoder -----------------------------

def _encoder_fused_kernel(y_ref, w1_ref, b1_ref, wc_ref, bc_ref,
                          ky_ref, Ky_ref, pre_ref, *, L, RY):
    """SiLU MLP encoder; second/third matmuls algebraically fused into one h @ [W2 | W2@W_in]."""
    y = y_ref[...]
    h = jnp.dot(y.astype(jnp.bfloat16), w1_ref[...],
                preferred_element_type=jnp.float32) + b1_ref[...]
    # SiLU in f32; approx reciprocal rides the (otherwise idle) EUP slot.
    h = h * pl.reciprocal(1.0 + jnp.exp(-h), approx=True)
    out = jnp.dot(h.astype(jnp.bfloat16), wc_ref[...],
                  preferred_element_type=jnp.float32) + bc_ref[...]
    De = L * (1 + RY)
    ky_ref[...] = out[:, :L]            # k_y
    Ky_ref[...] = out[:, L:De]          # K_y flattened
    pre_ref[...] = out[:, De:]          # backward-RNN pre-activations


def encoder_fused(y_flat, w1_bf16, b1, wcat_bf16, bcat, n_latents, rank_y):
    M, N = y_flat.shape
    He = w1_bf16.shape[1]
    Dtot = wcat_bf16.shape[1]
    L = n_latents
    De = L * (1 + rank_y)
    Hb = Dtot - De
    TM = _pick_row_tile(M)
    kern = functools.partial(_encoder_fused_kernel, L=L, RY=rank_y)
    ce = pl.CostEstimate(
        flops=int(2 * M * He * (N + Dtot)),
        transcendentals=int(M * He),
        bytes_accessed=int(4 * M * (N + Dtot) + 2 * He * (N + Dtot)))
    return pl.pallas_call(
        kern,
        out_shape=(jax.ShapeDtypeStruct((M, L), jnp.float32),
                   jax.ShapeDtypeStruct((M, L * rank_y), jnp.float32),
                   jax.ShapeDtypeStruct((M, Hb), jnp.float32)),
        grid_spec=pltpu.PrefetchScalarGridSpec(
            num_scalar_prefetch=0,
            grid=(M // TM,),
            in_specs=[
                pl.BlockSpec((TM, N), lambda i: (i, 0)),
                pl.BlockSpec(w1_bf16.shape, lambda i: (0, 0)),
                pl.BlockSpec(b1.shape, lambda i: (0, 0)),
                pl.BlockSpec(wcat_bf16.shape, lambda i: (0, 0)),
                pl.BlockSpec(bcat.shape, lambda i: (0, 0)),
            ],
            out_specs=[
                pl.BlockSpec((TM, L), lambda i: (i, 0)),
                pl.BlockSpec((TM, L * rank_y), lambda i: (i, 0)),
                pl.BlockSpec((TM, Hb), lambda i: (i, 0)),
            ],
        ),
        compiler_params=pltpu.CompilerParams(
            dimension_semantics=("parallel",),           # megacore-shardable on v7x
            vmem_limit_bytes=48 * 1024 * 1024),          # fits v7x's 64 MiB physical VMEM
        cost_estimate=ce,
    )(y_flat, w1_bf16, b1, wcat_bf16, bcat)


# ----------------------------- backward tanh RNN -----------------------------

def _bwd_rnn_kernel(pre_ref, ky_ref, wc_ref, bo_ref, out_ref, h_scr, *, TT, L, DO):
    """Backward recurrence + output head, hidden state in VMEM, TT steps per grid step.

    Grid step i handles time chunk (n_chunks-1-i); within the chunk time runs TT-1..0,
    so overall time runs T-1..0.  At local step tt, h_scr holds hs[:, t+1] (zero at t=T-1):
    the head is read out from the strict-future state and k = k_b + k_y is fused in.
    """
    @pl.when(pl.program_id(0) == 0)
    def _():
        h_scr[...] = jnp.zeros_like(h_scr)

    wc = wc_ref[...]                                   # bf16 (H, DO + H) = [W_out | W_h]
    bo = bo_ref[...]                                   # f32  (1, DO)
    pre_blk = pre_ref[...]                             # (TT, B, H)
    ky_blk = ky_ref[...]                               # (TT, B, L)
    for j in range(TT):                                # static unroll, serial recurrence
        tt = TT - 1 - j
        g = h_scr[...]                                 # (B, H) = hs[:, t+1]
        full = jnp.dot(g.astype(jnp.bfloat16), wc, preferred_element_type=jnp.float32)
        head = full[:, :DO] + bo                       # g @ W_out + b_out
        rec = full[:, DO:]                             # g @ W_h
        out_ref[tt] = jnp.concatenate([head[:, :L] + ky_blk[tt], head[:, L:]], axis=-1)
        h_scr[...] = jnp.tanh(pre_blk[tt] + rec)       # hs[:, t] = tanh(pre_t + hs[:, t+1] W_h)


def bwd_rnn(pre_tm, ky_tm, wcat_bf16, b_out, n_latents, rank_b):
    T, B, H = pre_tm.shape
    L = n_latents
    DO = L * (1 + rank_b)
    TT = _pick_time_chunk(T)
    nch = T // TT
    rev = lambda i: (nch - 1 - i, 0, 0)
    kern = functools.partial(_bwd_rnn_kernel, TT=TT, L=L, DO=DO)
    ce = pl.CostEstimate(
        flops=int(2 * T * B * H * (DO + H)),
        transcendentals=int(T * B * H),
        bytes_accessed=int(4 * T * B * (H + L + DO) + 2 * H * (DO + H)))
    return pl.pallas_call(
        kern,
        out_shape=jax.ShapeDtypeStruct((T, B, DO), jnp.float32),
        grid_spec=pltpu.PrefetchScalarGridSpec(
            num_scalar_prefetch=0,
            grid=(nch,),
            in_specs=[
                pl.BlockSpec((TT, B, H), rev),
                pl.BlockSpec((TT, B, L), rev),
                pl.BlockSpec(wcat_bf16.shape, lambda i: (0, 0)),
                pl.BlockSpec(b_out.shape, lambda i: (0, 0)),
            ],
            out_specs=pl.BlockSpec((TT, B, DO), rev),
            scratch_shapes=[pltpu.VMEM((B, H), jnp.float32)],
        ),
        compiler_params=pltpu.CompilerParams(dimension_semantics=("arbitrary",)),
        cost_estimate=ce,
    )(pre_tm, ky_tm, wcat_bf16, b_out)


# ----------------------------- Poisson log-likelihood -----------------------------

def _poisson_ell_kernel(z_ref, y_ref, c_ref, b_ref, o_ref, *, S, TM):
    """Poisson log-rate readout: one (S*TM, L) matmul, y loaded once, dense (S, TM) output."""
    yb = y_ref[...]                                    # (TM, N) f32
    C = c_ref[...]                                     # (L, N) bf16
    b = b_ref[...]                                     # (1, N) f32
    z2 = jnp.concatenate([z_ref[s] for s in range(S)], axis=0)          # (S*TM, L)
    lr = jnp.dot(z2.astype(jnp.bfloat16), C, preferred_element_type=jnp.float32) + b
    for s in range(S):
        lr_s = lr[s * TM:(s + 1) * TM]                 # (TM, N)
        o_ref[s] = jnp.sum(yb * lr_s - jnp.exp(lr_s), axis=-1)


def poisson_ell(z3, y_flat, c_bf16, bias):
    S, M, L = z3.shape
    N = y_flat.shape[-1]
    TM = _pick_row_tile(M)
    kern = functools.partial(_poisson_ell_kernel, S=S, TM=TM)
    ce = pl.CostEstimate(
        flops=int(2 * S * M * L * N + 3 * S * M * N),
        transcendentals=int(S * M * N),
        bytes_accessed=int(4 * (S * M * L + M * N + S * M) + 2 * L * N))
    return pl.pallas_call(
        kern,
        out_shape=jax.ShapeDtypeStruct((S, M), jnp.float32),
        grid_spec=pltpu.PrefetchScalarGridSpec(
            num_scalar_prefetch=0,
            grid=(M // TM,),
            in_specs=[
                pl.BlockSpec((S, TM, L), lambda i: (0, i, 0)),
                pl.BlockSpec((TM, N), lambda i: (i, 0)),
                pl.BlockSpec((L, N), lambda i: (0, 0)),
                pl.BlockSpec((1, N), lambda i: (0, 0)),
            ],
            out_specs=pl.BlockSpec((S, TM), lambda i: (0, i)),
        ),
        compiler_params=pltpu.CompilerParams(
            dimension_semantics=("parallel",),
            vmem_limit_bytes=48 * 1024 * 1024),
        cost_estimate=ce,
    )(z3, y_flat, c_bf16, bias)


# ----------------------------- nonlinear low-rank filter (Pallas) -----------------------------

def _gj_inverse(A, eye_b, logdet_init):
    """Batched SPD inverse + logdet via fully unrolled Gauss-Jordan (no pivoting needed)."""
    n = A.shape[-1]
    Aw = A
    Inv = eye_b
    logdet = logdet_init
    rowsel = lax.broadcasted_iota(jnp.int32, (n, n), 0)
    for i in range(n):
        pivot = Aw[:, i:i + 1, i:i + 1]                       # (B,1,1), > 0 for SPD
        logdet = logdet + jnp.log(pivot[:, :, 0])             # (B,1)
        rowA = Aw[:, i:i + 1, :] / pivot                      # (B,1,n)
        rowI = Inv[:, i:i + 1, :] / pivot
        fac = Aw[:, :, i:i + 1]                               # (B,n,1)
        sel = (rowsel == i).astype(jnp.float32)[None]         # (1,n,n)
        Aw = sel * rowA + (1.0 - sel) * (Aw - fac * rowA)
        Inv = sel * rowI + (1.0 - sel) * (Inv - fac * rowI)
    return Inv, logdet


def _chol_lower(A):
    """Batched lower Cholesky factor of SPD matrices, fully unrolled column by column."""
    n = A.shape[-1]
    row_pos = lax.broadcasted_iota(jnp.int32, (1, n), 1)       # (1,n)
    col_sel = lax.broadcasted_iota(jnp.int32, (n, n), 1)       # (n,n)
    Lm = jnp.zeros_like(A)
    for j in range(n):
        if j > 0:
            c = A[:, :, j] - jnp.sum(Lm[:, :, :j] * Lm[:, j:j + 1, :j], axis=-1)
        else:
            c = A[:, :, j]
        d = jnp.sqrt(c[:, j:j + 1])                            # (B,1)
        col = (c / d) * (row_pos >= j).astype(jnp.float32)     # zero strict-upper part
        put = (col_sel == j).astype(jnp.float32)[None]         # (1,n,n): column-j selector
        Lm = Lm + put * col[:, :, None]
    return Lm


def _nl_filter_kernel(k_ref, kb_ref, ky_ref, eps_ref,
                      w1_ref, b1_ref, w2_ref, b2_ref,
                      qd_ref, v0d_ref, m0_ref, eye_ref,
                      z_ref, kl_ref, mf_ref, z_scr,
                      *, S, B, L, RB, RY):
    """Per-timestep information-form low-rank Kalman update, state resident in VMEM."""
    t = pl.program_id(0)

    @pl.when(t == 0)
    def _():
        z_scr[...] = jnp.zeros_like(z_scr)

    w1 = w1_ref[...]
    b1 = b1_ref[...]
    w2 = w2_ref[...]
    b2 = b2_ref[...]

    # --- prediction: push previous samples through mean_fn(z) = z + MLP(z) ---
    z_prev = z_scr[...]                                        # (S,B,L) (zeros at t==0)
    zp = []
    for s in range(S):
        zs = z_prev[s]                                         # (B,L)
        h = jnp.tanh(jnp.dot(zs.astype(jnp.bfloat16), w1,
                             preferred_element_type=jnp.float32) + b1)
        zp.append(zs + jnp.dot(h.astype(jnp.bfloat16), w2,
                               preferred_element_type=jnp.float32) + b2)
    m_pred = zp[0]
    for s in range(1, S):
        m_pred = m_pred + zp[s]
    m_pred = m_pred * (1.0 / S)                                # (B,L)
    cov = jnp.zeros((B, L, L), jnp.float32)
    for s in range(S):
        d = zp[s] - m_pred
        cov = cov + d[:, :, None] * d[:, None, :]
    P_pred = cov * (1.0 / S) + qd_ref[...][None]               # (B,L,L)

    # --- t == 0 uses the initial-condition pdf (arithmetic blend; both operands finite) ---
    first = jnp.where(t == 0, 1.0, 0.0)
    m_p = first * m0_ref[...] + (1.0 - first) * m_pred          # (B,L)
    P_p = first * v0d_ref[...][None] + (1.0 - first) * P_pred   # (B,L,L)

    eye_b = eye_ref[...][None] + jnp.zeros((B, L, L), jnp.float32)
    zero_b1 = jnp.zeros((B, 1), jnp.float32)

    # --- information-form low-rank measurement update: J_f = P_p^{-1} + K K^T ---
    J_p, logdet_pp = _gj_inverse(P_p, eye_b, zero_b1)           # P_p^{-1}, logdet(P_p)
    Kb = kb_ref[0]                                              # (B,L,RB)
    Ky = ky_ref[0]                                              # (B,L,RY)
    KKt = jnp.zeros((B, L, L), jnp.float32)
    for r in range(RB):
        c = Kb[:, :, r]
        KKt = KKt + c[:, :, None] * c[:, None, :]
    for r in range(RY):
        c = Ky[:, :, r]
        KKt = KKt + c[:, :, None] * c[:, None, :]
    J_f = J_p + KKt
    P_f, logdet_jf = _gj_inverse(J_f, eye_b, zero_b1)           # J_f^{-1}, logdet(J_f)
    logdet_pf = -logdet_jf                                      # logdet(P_f)

    k_t = k_ref[0]                                              # (B,L)
    h_f = jnp.sum(J_p * m_p[:, None, :], axis=-1) + k_t         # J_p m_p + k
    m_f = jnp.sum(P_f * h_f[:, None, :], axis=-1)               # P_f h_f

    # --- sample z_t ~ N(m_f, P_f) using the Cholesky factor of P_f ---
    Lf = _chol_lower(P_f)
    eps_t = eps_ref[0]                                          # (S,B,L)
    for s in range(S):
        zs = m_f + jnp.sum(Lf * eps_t[s][:, None, :], axis=-1)  # (B,L)
        z_scr[s] = zs
        z_ref[s] = zs[None]

    mf_ref[0] = m_f

    # --- KL(q_f || p_pred) ---
    dm = m_f - m_p
    tr_term = jnp.sum(jnp.sum(J_p * P_f, axis=-1), axis=-1, keepdims=True)     # (B,1)
    v = jnp.sum(J_p * dm[:, None, :], axis=-1)                                  # (B,L)
    quad = jnp.sum(dm * v, axis=-1, keepdims=True)                              # (B,1)
    kl_ref[0] = 0.5 * (tr_term + quad - L + logdet_pp - logdet_pf)


def nl_filter(p, k_tm, Kb_tm, Ky_tm, eps, n_samples):
    # TODO(synk): xfads' exact low-rank Woodbury filter parameterization is replaced by the
    # mathematically equivalent information-form update (Gauss-Jordan inverse + unrolled
    # Cholesky in-kernel instead of torch.linalg factorizations).
    T, B, L = k_tm.shape
    rb = Kb_tm.shape[-1]
    ry = Ky_tm.shape[-1]
    S = n_samples
    Hd = p['dyn_w1'].shape[1]

    Q = jax.nn.softplus(p['log_Q'])
    v0 = jax.nn.softplus(p['log_v0'])
    qd = jnp.diag(Q)
    v0d = jnp.diag(v0)
    eyeL = jnp.eye(L, dtype=jnp.float32)
    m0 = p['m0'].reshape(1, L)
    w1 = p['dyn_w1'].astype(jnp.bfloat16)
    b1 = p['dyn_b1'].reshape(1, Hd)
    w2 = p['dyn_w2'].astype(jnp.bfloat16)
    b2 = p['dyn_b2'].reshape(1, L)

    kern = functools.partial(_nl_filter_kernel, S=S, B=B, L=L, RB=rb, RY=ry)
    z, kl, mf = pl.pallas_call(
        kern,
        out_shape=(jax.ShapeDtypeStruct((S, T, B, L), jnp.float32),
                   jax.ShapeDtypeStruct((T, B, 1), jnp.float32),
                   jax.ShapeDtypeStruct((T, B, L), jnp.float32)),
        grid_spec=pltpu.PrefetchScalarGridSpec(
            num_scalar_prefetch=0,
            grid=(T,),
            in_specs=[
                pl.BlockSpec((1, B, L), lambda t: (t, 0, 0)),            # k
                pl.BlockSpec((1, B, L, rb), lambda t: (t, 0, 0, 0)),     # K_b
                pl.BlockSpec((1, B, L, ry), lambda t: (t, 0, 0, 0)),     # K_y
                pl.BlockSpec((1, S, B, L), lambda t: (t, 0, 0, 0)),      # eps
                pl.BlockSpec((L, Hd), lambda t: (0, 0)),                 # dyn W1 (bf16)
                pl.BlockSpec((1, Hd), lambda t: (0, 0)),                 # dyn b1
                pl.BlockSpec((Hd, L), lambda t: (0, 0)),                 # dyn W2 (bf16)
                pl.BlockSpec((1, L), lambda t: (0, 0)),                  # dyn b2
                pl.BlockSpec((L, L), lambda t: (0, 0)),                  # diag(Q)
                pl.BlockSpec((L, L), lambda t: (0, 0)),                  # diag(v0)
                pl.BlockSpec((1, L), lambda t: (0, 0)),                  # m0
                pl.BlockSpec((L, L), lambda t: (0, 0)),                  # I_L
            ],
            out_specs=[
                pl.BlockSpec((S, 1, B, L), lambda t: (0, t, 0, 0)),      # z samples
                pl.BlockSpec((1, B, 1), lambda t: (t, 0, 0)),            # kl
                pl.BlockSpec((1, B, L), lambda t: (t, 0, 0)),            # m_f
            ],
            scratch_shapes=[pltpu.VMEM((S, B, L), jnp.float32)],
        ),
        compiler_params=pltpu.CompilerParams(dimension_semantics=("arbitrary",)),
    )(k_tm, Kb_tm, Ky_tm, eps, w1, b1, w2, b2, qd, v0d, m0, eyeL)
    return z, kl, mf


# ----------------------------- parameters -----------------------------

def init_params(key, n_neurons, n_latents, rank_y, rank_b, h_enc, h_bwd, h_dyn):
    ks = jax.random.split(key, 8)
    s = 0.1
    p = {
        # local encoder (LocalEncoderLRMvn-style MLP)
        'enc_w1': s * jax.random.normal(ks[0], (n_neurons, h_enc), jnp.float32),
        'enc_b1': jnp.zeros((1, h_enc), jnp.float32),
        'enc_w2': s * jax.random.normal(ks[1], (h_enc, n_latents * (1 + rank_y)), jnp.float32),
        'enc_b2': jnp.zeros((1, n_latents * (1 + rank_y)), jnp.float32),
        # backward encoder (backward RNN + output head)
        'bwd_w_in': s * jax.random.normal(ks[2], (n_latents * (1 + rank_y), h_bwd), jnp.float32),
        'bwd_b_in': jnp.zeros((1, h_bwd), jnp.float32),
        'bwd_w_h': s * jax.random.normal(ks[3], (h_bwd, h_bwd), jnp.float32),
        'bwd_w_out': s * jax.random.normal(ks[4], (h_bwd, n_latents * (1 + rank_b)), jnp.float32),
        'bwd_b_out': jnp.zeros((1, n_latents * (1 + rank_b)), jnp.float32),
        # dynamics: mean_fn(z) = z + MLP(z);  process noise log_Q
        'dyn_w1': s * jax.random.normal(ks[5], (n_latents, h_dyn), jnp.float32),
        'dyn_b1': jnp.zeros((h_dyn,), jnp.float32),
        'dyn_w2': s * jax.random.normal(ks[6], (h_dyn, n_latents), jnp.float32),
        'dyn_b2': jnp.zeros((n_latents,), jnp.float32),
        'log_Q': jnp.full((n_latents,), -1.0, jnp.float32),
        # initial condition pdf
        'm0': jnp.zeros((n_latents,), jnp.float32),
        'log_v0': jnp.zeros((n_latents,), jnp.float32),
        # Poisson likelihood readout
        'C': s * jax.random.normal(ks[7], (n_latents, n_neurons), jnp.float32),
        'bias_r': jnp.full((1, n_neurons), -0.5, jnp.float32),
    }
    return p


# ----------------------------- forward -----------------------------

def forward(p, y, eps, n_samples, n_latents, rank_y, rank_b):
    B, T, N = y.shape
    L = n_latents
    S = n_samples

    # time-major layout for the whole pipeline (one input transpose replaces the previous
    # four intermediate transposes around the backward RNN).
    y_tm = y.transpose(1, 0, 2)                                   # (T, B, N)
    y_flat = y_tm.reshape(T * B, N)

    # --- fused local encoder + backward-encoder input projection (exact algebraic fusion) ---
    w2win = p['enc_w2'] @ p['bwd_w_in']
    wcat = jnp.concatenate([p['enc_w2'], w2win], axis=1)
    bcat = jnp.concatenate([p['enc_b2'], p['enc_b2'] @ p['bwd_w_in'] + p['bwd_b_in']], axis=1)
    ky_flat, Ky_flat, pre_flat = encoder_fused(
        y_flat, p['enc_w1'].astype(jnp.bfloat16), p['enc_b1'],
        wcat.astype(jnp.bfloat16), bcat, L, rank_y)

    # --- backward tanh RNN + output head + (k = k_b + k_y) add, one Pallas kernel ---
    wcat_rnn = jnp.concatenate([p['bwd_w_out'], p['bwd_w_h']], axis=1).astype(jnp.bfloat16)
    pre_tm = pre_flat.reshape(T, B, -1)
    ky_tm = ky_flat.reshape(T, B, L)
    head_tm = bwd_rnn(pre_tm, ky_tm, wcat_rnn, p['bwd_b_out'], L, rank_b)   # (T, B, L*(1+rb))
    k_tm = head_tm[:, :, :L]                                                # k = k_b + k_y
    Kb_tm = head_tm[:, :, L:].reshape(T, B, L, rank_b)
    Ky_tm = Ky_flat.reshape(T, B, L, rank_y)
    # K = [K_b | K_y]: the filter consumes both factors and forms K K^T = K_b K_b^T + K_y K_y^T,
    # so the explicit concatenation is never materialized.

    # --- low-rank nonlinear filter (Pallas, grid over time, samples resident in VMEM) ---
    z_stbl, kl_tb1, mf_tbl = nl_filter(p, k_tm, Kb_tm, Ky_tm, eps, S)       # (S,T,B,L), ...
    stats = {'kl': kl_tb1[..., 0].T,                                        # (B, T)
             'm_f': mf_tbl.transpose(1, 0, 2),                              # (B, T, L)
             't_mask_y_in': jnp.ones((B, T, N), jnp.float32)}

    # --- Poisson log-likelihood ---
    z3 = z_stbl.reshape(S, T * B, L)
    ell_rows = poisson_ell(z3, y_flat, p['C'].astype(jnp.bfloat16), p['bias_r'])   # (S, T*B)
    ell = ell_rows.reshape(S, T, B).transpose(0, 2, 1) - gammaln(y + 1.0).sum(-1)[None]
    ell = ell.mean(axis=0)                                                  # (B, T)

    z_s = z_stbl.transpose(0, 2, 1, 3)                                      # (S, B, T, L)
    loss = (stats['kl'] - ell).sum(axis=-1).mean()
    return loss, z_s, stats


# ----------------------------- main -----------------------------

if __name__ == "__main__":
    B, T, N = 2, 8, 32           # n_trials, n_time_bins, n_neurons
    L, rank_y, rank_b = 8, 4, 4  # latent dim, local rank, backward rank
    H_enc, H_bwd, H_dyn = 32, 32, 16
    S = 4                        # n_samples

    key = jax.random.PRNGKey(0)
    k_param, k_y_data, k_eps = jax.random.split(key, 3)
    params = init_params(k_param, N, L, rank_y, rank_b, H_enc, H_bwd, H_dyn)
    y = jax.random.poisson(k_y_data, 2.0, (B, T, N)).astype(jnp.float32)
    eps = jax.random.normal(k_eps, (T, S, B, L), jnp.float32)     # filter sampling noise

    fwd = jax.jit(functools.partial(
        forward, n_samples=S, n_latents=L, rank_y=rank_y, rank_b=rank_b))
    loss, z_s, stats = fwd(params, y, eps)
    jax.block_until_ready((loss, z_s, stats))

    assert z_s.shape == (S, B, T, L)
    assert stats['kl'].shape == (B, T)
    assert loss.shape == ()
    print("KERNEL_OK")
</pallas_src>

<mosaic_0001>
module attributes {stable_mosaic.version = 11 : i64} {
  func.func @_encoder_fused_kernel(%arg0: i32, %arg1: memref<16x32xf32, #tpu.memory_space<vmem>>, %arg2: memref<32x32xbf16, #tpu.memory_space<vmem>>, %arg3: memref<1x32xf32, #tpu.memory_space<vmem>>, %arg4: memref<32x72xbf16, #tpu.memory_space<vmem>>, %arg5: memref<1x72xf32, #tpu.memory_space<vmem>>, %arg6: memref<16x8xf32, #tpu.memory_space<vmem>>, %arg7: memref<16x32xf32, #tpu.memory_space<vmem>>, %arg8: memref<16x32xf32, #tpu.memory_space<vmem>>) attributes {dimension_semantics = [#tpu.dimension_semantics<parallel>], iteration_bounds = array<i64: 1>, scalar_prefetch = 0 : i64, scratch_operands = 0 : i64, tpu.core_type = #tpu.core_type<tc>, window_params = [{transform_indices = @transform_0, window_bounds = array<i64: 16, 32>}, {pipeline_mode = #tpu.pipeline_mode<synchronous>, transform_indices = @transform_1, window_bounds = array<i64: 32, 32>}, {pipeline_mode = #tpu.pipeline_mode<synchronous>, transform_indices = @transform_2, window_bounds = array<i64: 1, 32>}, {pipeline_mode = #tpu.pipeline_mode<synchronous>, transform_indices = @transform_3, window_bounds = array<i64: 32, 72>}, {pipeline_mode = #tpu.pipeline_mode<synchronous>, transform_indices = @transform_4, window_bounds = array<i64: 1, 72>}, {transform_indices = @transform_5, window_bounds = array<i64: 16, 8>}, {transform_indices = @transform_6, window_bounds = array<i64: 16, 32>}, {transform_indices = @transform_7, window_bounds = array<i64: 16, 32>}]} {
    %c0 = arith.constant 0 : index
    %c0_0 = arith.constant 0 : index
    %0 = vector.load %arg1[%c0, %c0_0] : memref<16x32xf32, #tpu.memory_space<vmem>>, vector<16x32xf32>
    %1 = arith.truncf %0 : vector<16x32xf32> to vector<16x32xbf16>
    %c0_1 = arith.constant 0 : index
    %c0_2 = arith.constant 0 : index
    %2 = vector.load %arg2[%c0_1, %c0_2] : memref<32x32xbf16, #tpu.memory_space<vmem>>, vector<32x32xbf16>
    %cst = arith.constant dense<0.000000e+00> : vector<16x32xf32>
    %3 = tpu.matmul %1, %2, %cst {dimension_numbers = #tpu.dot_dimension_numbers<[1], [0], [0], [1], [0, 0, 1, 1], [], []>} : vector<16x32xbf16>, vector<32x32xbf16>, vector<16x32xf32> -> vector<16x32xf32>
    %c0_3 = arith.constant 0 : index
    %c0_4 = arith.constant 0 : index
    %4 = vector.load %arg3[%c0_3, %c0_4] : memref<1x32xf32, #tpu.memory_space<vmem>>, vector<1x32xf32>
    %5 = vector.broadcast %4 : vector<1x32xf32> to vector<16x32xf32>
    %6 = arith.addf %3, %5 : vector<16x32xf32>
    %cst_5 = arith.constant 0.000000e+00 : f32
    %7 = vector.broadcast %cst_5 : f32 to vector<16x32xf32>
    %8 = arith.subf %7, %6 : vector<16x32xf32>
    %9 = math.exp %8 : vector<16x32xf32>
    %cst_6 = arith.constant 1.000000e+00 : f32
    %10 = vector.broadcast %cst_6 : f32 to vector<16x32xf32>
    %11 = arith.addf %10, %9 : vector<16x32xf32>
    %12 = tpu.reciprocal %11 {approx = true} : vector<16x32xf32> -> vector<16x32xf32>
    %13 = arith.mulf %6, %12 : vector<16x32xf32>
    %14 = arith.truncf %13 : vector<16x32xf32> to vector<16x32xbf16>
    %c0_7 = arith.constant 0 : index
    %c0_8 = arith.constant 0 : index
    %15 = vector.load %arg4[%c0_7, %c0_8] : memref<32x72xbf16, #tpu.memory_space<vmem>>, vector<32x72xbf16>
    %cst_9 = arith.constant dense<0.000000e+00> : vector<16x72xf32>
    %16 = tpu.matmul %14, %15, %cst_9 {dimension_numbers = #tpu.dot_dimension_numbers<[1], [0], [0], [1], [0, 0, 1, 1], [], []>} : vector<16x32xbf16>, vector<32x72xbf16>, vector<16x72xf32> -> vector<16x72xf32>
    %c0_10 = arith.constant 0 : index
    %c0_11 = arith.constant 0 : index
    %17 = vector.load %arg5[%c0_10, %c0_11] : memref<1x72xf32, #tpu.memory_space<vmem>>, vector<1x72xf32>
    %18 = vector.broadcast %17 : vector<1x72xf32> to vector<16x72xf32>
    %19 = arith.addf %16, %18 : vector<16x72xf32>
    %20 = vector.extract_strided_slice %19 {offsets = [0, 0], sizes = [16, 8], strides = [1, 1]} : vector<16x72xf32> to vector<16x8xf32>
    %c0_12 = arith.constant 0 : index
    %c0_13 = arith.constant 0 : index
    %21 = vector.load %arg6[%c0_12, %c0_13] : memref<16x8xf32, #tpu.memory_space<vmem>>, vector<16x8xf32>
    tpu.vector_store %arg6[%c0_12, %c0_13], %20 {strides = array<i32>} : memref<16x8xf32, #tpu.memory_space<vmem>>, vector<16x8xf32>,
    %22 = vector.extract_strided_slice %19 {offsets = [0, 8], sizes = [16, 32], strides = [1, 1]} : vector<16x72xf32> to vector<16x32xf32>
    %c0_14 = arith.constant 0 : index
    %c0_15 = arith.constant 0 : index
    %23 = vector.load %arg7[%c0_14, %c0_15] : memref<16x32xf32, #tpu.memory_space<vmem>>, vector<16x32xf32>
    tpu.vector_store %arg7[%c0_14, %c0_15], %22 {strides = array<i32>} : memref<16x32xf32, #tpu.memory_space<vmem>>, vector<16x32xf32>,
    %24 = vector.extract_strided_slice %19 {offsets = [0, 40], sizes = [16, 32], strides = [1, 1]} : vector<16x72xf32> to vector<16x32xf32>
    %c0_16 = arith.constant 0 : index
    %c0_17 = arith.constant 0 : index
    %25 = vector.load %arg8[%c0_16, %c0_17] : memref<16x32xf32, #tpu.memory_space<vmem>>, vector<16x32xf32>
    tpu.vector_store %arg8[%c0_16, %c0_17], %24 {strides = array<i32>} : memref<16x32xf32, #tpu.memory_space<vmem>>, vector<16x32xf32>,
    return
  }
  func.func @transform_0(%arg0: i32) -> (i32, i32) {
    %c0_i32 = arith.constant 0 : i32
    %c0_i32_0 = arith.constant 0 : i32
    return %arg0, %c0_i32 : i32, i32
  }
  func.func @transform_1(%arg0: i32) -> (i32, i32) {
    %c0_i32 = arith.constant 0 : i32
    %c0_i32_0 = arith.constant 0 : i32
    %c0_i32_1 = arith.constant 0 : i32
    return %c0_i32, %c0_i32_0 : i32, i32
  }
  func.func @transform_2(%arg0: i32) -> (i32, i32) {
    %c0_i32 = arith.constant 0 : i32
    %c0_i32_0 = arith.constant 0 : i32
    %c0_i32_1 = arith.constant 0 : i32
    return %c0_i32, %c0_i32_0 : i32, i32
  }
  func.func @transform_3(%arg0: i32) -> (i32, i32) {
    %c0_i32 = arith.constant 0 : i32
    %c0_i32_0 = arith.constant 0 : i32
    %c0_i32_1 = arith.constant 0 : i32
    return %c0_i32, %c0_i32_0 : i32, i32
  }
  func.func @transform_4(%arg0: i32) -> (i32, i32) {
    %c0_i32 = arith.constant 0 : i32
    %c0_i32_0 = arith.constant 0 : i32
    %c0_i32_1 = arith.constant 0 : i32
    return %c0_i32, %c0_i32_0 : i32, i32
  }
  func.func @transform_5(%arg0: i32) -> (i32, i32) {
    %c0_i32 = arith.constant 0 : i32
    %c0_i32_0 = arith.constant 0 : i32
    return %arg0, %c0_i32 : i32, i32
  }
  func.func @transform_6(%arg0: i32) -> (i32, i32) {
    %c0_i32 = arith.constant 0 : i32
    %c0_i32_0 = arith.constant 0 : i32
    return %arg0, %c0_i32 : i32, i32
  }
  func.func @transform_7(%arg0: i32) -> (i32, i32) {
    %c0_i32 = arith.constant 0 : i32
    %c0_i32_0 = arith.constant 0 : i32
    return %arg0, %c0_i32 : i32, i32
  }
}

module attributes {stable_mosaic.version = 11 : i64} {
  func.func @_bwd_rnn_kernel(%arg0: i32, %arg1: memref<8x2x32xf32, #tpu.memory_space<vmem>>, %arg2: memref<8x2x8xf32, #tpu.memory_space<vmem>>, %arg3: memref<32x72xbf16, #tpu.memory_space<vmem>>, %arg4: memref<1x40xf32, #tpu.memory_space<vmem>>, %arg5: memref<8x2x40xf32, #tpu.memory_space<vmem>>, %arg6: memref<2x32xf32, #tpu.memory_space<vmem>>) attributes {dimension_semantics = [#tpu.dimension_semantics<arbitrary>], iteration_bounds = array<i64: 1>, scalar_prefetch = 0 : i64, scratch_operands = 1 : i64, tpu.core_type = #tpu.core_type<tc>, window_params = [{transform_indices = @transform_0, window_bounds = array<i64: 8, 2, 32>}, {transform_indices = @transform_1, window_bounds = array<i64: 8, 2, 8>}, {pipeline_mode = #tpu.pipeline_mode<synchronous>, transform_indices = @transform_2, window_bounds = array<i64: 32, 72>}, {pipeline_mode = #tpu.pipeline_mode<synchronous>, transform_indices = @transform_3, window_bounds = array<i64: 1, 40>}, {transform_indices = @transform_4, window_bounds = array<i64: 8, 2, 40>}]} {
    %c0_i32 = arith.constant 0 : i32
    %0 = arith.cmpi eq, %arg0, %c0_i32 : i32
    %1 = arith.extui %0 : i1 to i32
    %c0_i32_0 = arith.constant 0 : i32
    %2 = arith.cmpi ne, %1, %c0_i32_0 : i32
    scf.if %2 {
      %cst_66 = arith.constant 0.000000e+00 : f32
      %175 = vector.broadcast %cst_66 : f32 to vector<2x32xf32>
      %c0_67 = arith.constant 0 : index
      %c0_68 = arith.constant 0 : index
      %176 = vector.load %arg6[%c0_67, %c0_68] : memref<2x32xf32, #tpu.memory_space<vmem>>, vector<2x32xf32>
      tpu.vector_store %arg6[%c0_67, %c0_68], %175 {strides = array<i32>} : memref<2x32xf32, #tpu.memory_space<vmem>>, vector<2x32xf32>,
    } else {
    }
    %c0 = arith.constant 0 : index
    %c0_1 = arith.constant 0 : index
    %3 = vector.load %arg3[%c0, %c0_1] : memref<32x72xbf16, #tpu.memory_space<vmem>>, vector<32x72xbf16>
    %c0_2 = arith.constant 0 : index
    %c0_3 = arith.constant 0 : index
    %4 = vector.load %arg4[%c0_2, %c0_3] : memref<1x40xf32, #tpu.memory_space<vmem>>, vector<1x40xf32>
    %c0_4 = arith.constant 0 : index
    %c0_5 = arith.constant 0 : index
    %c0_6 = arith.constant 0 : index
    %5 = vector.load %arg1[%c0_4, %c0_5, %c0_6] : memref<8x2x32xf32, #tpu.memory_space<vmem>>, vector<8x2x32xf32>
    %c0_7 = arith.constant 0 : index
    %c0_8 = arith.constant 0 : index
    %c0_9 = arith.constant 0 : index
    %6 = vector.load %arg2[%c0_7, %c0_8, %c0_9] : memref<8x2x8xf32, #tpu.memory_space<vmem>>, vector<8x2x8xf32>
    %c0_10 = arith.constant 0 : index
    %c0_11 = arith.constant 0 : index
    %7 = vector.load %arg6[%c0_10, %c0_11] : memref<2x32xf32, #tpu.memory_space<vmem>>, vector<2x32xf32>
    %8 = arith.truncf %7 : vector<2x32xf32> to vector<2x32xbf16>
    %cst = arith.constant dense<0.000000e+00> : vector<2x72xf32>
    %9 = tpu.matmul %8, %3, %cst {dimension_numbers = #tpu.dot_dimension_numbers<[1], [0], [0], [1], [0, 0, 1, 1], [], []>} : vector<2x32xbf16>, vector<32x72xbf16>, vector<2x72xf32> -> vector<2x72xf32>
    %10 = vector.extract_strided_slice %9 {offsets = [0, 0], sizes = [2, 40], strides = [1, 1]} : vector<2x72xf32> to vector<2x40xf32>
    %11 = vector.broadcast %4 : vector<1x40xf32> to vector<2x40xf32>
    %12 = arith.addf %10, %11 : vector<2x40xf32>
    %13 = vector.extract_strided_slice %9 {offsets = [0, 40], sizes = [2, 32], strides = [1, 1]} : vector<2x72xf32> to vector<2x32xf32>
    %14 = vector.extract_strided_slice %12 {offsets = [0, 0], sizes = [2, 8], strides = [1, 1]} : vector<2x40xf32> to vector<2x8xf32>
    %15 = vector.extract_strided_slice %6 {offsets = [7, 0, 0], sizes = [1, 2, 8], strides = [1, 1, 1]} : vector<8x2x8xf32> to vector<1x2x8xf32>
    %16 = vector.shape_cast %15 : vector<1x2x8xf32> to vector<2x8xf32>
    %17 = arith.addf %14, %16 : vector<2x8xf32>
    %18 = vector.extract_strided_slice %12 {offsets = [0, 8], sizes = [2, 32], strides = [1, 1]} : vector<2x40xf32> to vector<2x32xf32>
    %19 = tpu.concatenate %17, %18 in 1 : vector<2x8xf32>, vector<2x32xf32> -> vector<2x40xf32>
    %c7 = arith.constant 7 : index
    %c0_12 = arith.constant 0 : index
    %c0_13 = arith.constant 0 : index
    %20 = vector.load %arg5[%c7, %c0_12, %c0_13] : memref<8x2x40xf32, #tpu.memory_space<vmem>>, vector<1x2x40xf32>
    %21 = vector.shape_cast %20 : vector<1x2x40xf32> to vector<2x40xf32>
    %22 = vector.shape_cast %19 : vector<2x40xf32> to vector<1x2x40xf32>
    tpu.vector_store %arg5[%c7, %c0_12, %c0_13], %22 {strides = array<i32>} : memref<8x2x40xf32, #tpu.memory_space<vmem>>, vector<1x2x40xf32>,
    %23 = vector.extract_strided_slice %5 {offsets = [7, 0, 0], sizes = [1, 2, 32], strides = [1, 1, 1]} : vector<8x2x32xf32> to vector<1x2x32xf32>
    %24 = vector.shape_cast %23 : vector<1x2x32xf32> to vector<2x32xf32>
    %25 = arith.addf %24, %13 : vector<2x32xf32>
    %26 = math.tanh %25 : vector<2x32xf32>
    %c0_14 = arith.constant 0 : index
    %c0_15 = arith.constant 0 : index
    %27 = vector.load %arg6[%c0_14, %c0_15] : memref<2x32xf32, #tpu.memory_space<vmem>>, vector<2x32xf32>
    tpu.vector_store %arg6[%c0_14, %c0_15], %26 {strides = array<i32>} : memref<2x32xf32, #tpu.memory_space<vmem>>, vector<2x32xf32>,
    %c0_16 = arith.constant 0 : index
    %c0_17 = arith.constant 0 : index
    %28 = vector.load %arg6[%c0_16, %c0_17] : memref<2x32xf32, #tpu.memory_space<vmem>>, vector<2x32xf32>
    %29 = arith.truncf %28 : vector<2x32xf32> to vector<2x32xbf16>
    %cst_18 = arith.constant dense<0.000000e+00> : vector<2x72xf32>
    %30 = tpu.matmul %29, %3, %cst_18 {dimension_numbers = #tpu.dot_dimension_numbers<[1], [0], [0], [1], [0, 0, 1, 1], [], []>} : vector<2x32xbf16>, vector<32x72xbf16>, vector<2x72xf32> -> vector<2x72xf32>
    %31 = vector.extract_strided_slice %30 {offsets = [0, 0], sizes = [2, 40], strides = [1, 1]} : vector<2x72xf32> to vector<2x40xf32>
    %32 = vector.broadcast %4 : vector<1x40xf32> to vector<2x40xf32>
    %33 = arith.addf %31, %32 : vector<2x40xf32>
    %34 = vector.extract_strided_slice %30 {offsets = [0, 40], sizes = [2, 32], strides = [1, 1]} : vector<2x72xf32> to vector<2x32xf32>
    %35 = vector.extract_strided_slice %33 {offsets = [0, 0], sizes = [2, 8], strides = [1, 1]} : vector<2x40xf32> to vector<2x8xf32>
    %36 = vector.extract_strided_slice %6 {offsets = [6, 0, 0], sizes = [1, 2, 8], strides = [1, 1, 1]} : vector<8x2x8xf32> to vector<1x2x8xf32>
    %37 = vector.shape_cast %36 : vector<1x2x8xf32> to vector<2x8xf32>
    %38 = arith.addf %35, %37 : vector<2x8xf32>
    %39 = vector.extract_strided_slice %33 {offsets = [0, 8], sizes = [2, 32], strides = [1, 1]} : vector<2x40xf32> to vector<2x32xf32>
    %40 = tpu.concatenate %38, %39 in 1 : vector<2x8xf32>, vector<2x32xf32> -> vector<2x40xf32>
    %c6 = arith.constant 6 : index
    %c0_19 = arith.constant 0 : index
    %c0_20 = arith.constant 0 : index
    %41 = vector.load %arg5[%c6, %c0_19, %c0_20] : memref<8x2x40xf32, #tpu.memory_space<vmem>>, vector<1x2x40xf32>
    %42 = vector.shape_cast %41 : vector<1x2x40xf32> to vector<2x40xf32>
    %43 = vector.shape_cast %40 : vector<2x40xf32> to vector<1x2x40xf32>
    tpu.vector_store %arg5[%c6, %c0_19, %c0_20], %43 {strides = array<i32>} : memref<8x2x40xf32, #tpu.memory_space<vmem>>, vector<1x2x40xf32>,
    %44 = vector.extract_strided_slice %5 {offsets = [6, 0, 0], sizes = [1, 2, 32], strides = [1, 1, 1]} : vector<8x2x32xf32> to vector<1x2x32xf32>
    %45 = vector.shape_cast %44 : vector<1x2x32xf32> to vector<2x32xf32>
    %46 = arith.addf %45, %34 : vector<2x32xf32>
    %47 = math.tanh %46 : vector<2x32xf32>
    %c0_21 = arith.constant 0 : index
    %c0_22 = arith.constant 0 : index
    %48 = vector.load %arg6[%c0_21, %c0_22] : memref<2x32xf32, #tpu.memory_space<vmem>>, vector<2x32xf32>
    tpu.vector_store %arg6[%c0_21, %c0_22], %47 {strides = array<i32>} : memref<2x32xf32, #tpu.memory_space<vmem>>, vector<2x32xf32>,
    %c0_23 = arith.constant 0 : index
    %c0_24 = arith.constant 0 : index
    %49 = vector.load %arg6[%c0_23, %c0_24] : memref<2x32xf32, #tpu.memory_space<vmem>>, vector<2x32xf32>
    %50 = arith.truncf %49 : vector<2x32xf32> to vector<2x32xbf16>
    %cst_25 = arith.constant dense<0.000000e+00> : vector<2x72xf32>
    %51 = tpu.matmul %50, %3, %cst_25 {dimension_numbers = #tpu.dot_dimension_numbers<[1], [0], [0], [1], [0, 0, 1, 1], [], []>} : vector<2x32xbf16>, vector<32x72xbf16>, vector<2x72xf32> -> vector<2x72xf32>
    %52 = vector.extract_strided_slice %51 {offsets = [0, 0], sizes = [2, 40], strides = [1, 1]} : vector<2x72xf32> to vector<2x40xf32>
    %53 = vector.broadcast %4 : vector<1x40xf32> to vector<2x40xf32>
    %54 = arith.addf %52, %53 : vector<2x40xf32>
    %55 = vector.extract_strided_slice %51 {offsets = [0, 40], sizes = [2, 32], strides = [1, 1]} : vector<2x72xf32> to vector<2x32xf32>
    %56 = vector.extract_strided_slice %54 {offsets = [0, 0], sizes = [2, 8], strides = [1, 1]} : vector<2x40xf32> to vector<2x8xf32>
    %57 = vector.extract_strided_slice %6 {offsets = [5, 0, 0], sizes = [1, 2, 8], strides = [1, 1, 1]} : vector<8x2x8xf32> to vector<1x2x8xf32>
    %58 = vector.shape_cast %57 : vector<1x2x8xf32> to vector<2x8xf32>
    %59 = arith.addf %56, %58 : vector<2x8xf32>
    %60 = vector.extract_strided_slice %54 {offsets = [0, 8], sizes = [2, 32], strides = [1, 1]} : vector<2x40xf32> to vector<2x32xf32>
    %61 = tpu.concatenate %59, %60 in 1 : vector<2x8xf32>, vector<2x32xf32> -> vector<2x40xf32>
    %c5 = arith.constant 5 : index
    %c0_26 = arith.constant 0 : index
    %c0_27 = arith.constant 0 : index
    %62 = vector.load %arg5[%c5, %c0_26, %c0_27] : memref<8x2x40xf32, #tpu.memory_space<vmem>>, vector<1x2x40xf32>
    %63 = vector.shape_cast %62 : vector<1x2x40xf32> to vector<2x40xf32>
    %64 = vector.shape_cast %61 : vector<2x40xf32> to vector<1x2x40xf32>
    tpu.vector_store %arg5[%c5, %c0_26, %c0_27], %64 {strides = array<i32>} : memref<8x2x40xf32, #tpu.memory_space<vmem>>, vector<1x2x40xf32>,
    %65 = vector.extract_strided_slice %5 {offsets = [5, 0, 0], sizes = [1, 2, 32], strides = [1, 1, 1]} : vector<8x2x32xf32> to vector<1x2x32xf32>
    %66 = vector.shape_cast %65 : vector<1x2x32xf32> to vector<2x32xf32>
    %67 = arith.addf %66, %55 : vector<2x32xf32>
    %68 = math.tanh %67 : vector<2x32xf32>
    %c0_28 = arith.constant 0 : index
    %c0_29 = arith.constant 0 : index
    %69 = vector.load %arg6[%c0_28, %c0_29] : memref<2x32xf32, #tpu.memory_space<vmem>>, vector<2x32xf32>
    tpu.vector_store %arg6[%c0_28, %c0_29], %68 {strides = array<i32>} : memref<2x32xf32, #tpu.memory_space<vmem>>, vector<2x32xf32>,
    %c0_30 = arith.constant 0 : index
    %c0_31 = arith.constant 0 : index
    %70 = vector.load %arg6[%c0_30, %c0_31] : memref<2x32xf32, #tpu.memory_space<vmem>>, vector<2x32xf32>
    %71 = arith.truncf %70 : vector<2x32xf32> to vector<2x32xbf16>
    %cst_32 = arith.constant dense<0.000000e+00> : vector<2x72xf32>
    %72 = tpu.matmul %71, %3, %cst_32 {dimension_numbers = #tpu.dot_dimension_numbers<[1], [0], [0], [1], [0, 0, 1, 1], [], []>} : vector<2x32xbf16>, vector<32x72xbf16>, vector<2x72xf32> -> vector<2x72xf32>
    %73 = vector.extract_strided_slice %72 {offsets = [0, 0], sizes = [2, 40], strides = [1, 1]} : vector<2x72xf32> to vector<2x40xf32>
    %74 = vector.broadcast %4 : vector<1x40xf32> to vector<2x40xf32>
    %75 = arith.addf %73, %74 : vector<2x40xf32>
    %76 = vector.extract_strided_slice %72 {offsets = [0, 40], sizes = [2, 32], strides = [1, 1]} : vector<2x72xf32> to vector<2x32xf32>
    %77 = vector.extract_strided_slice %75 {offsets = [0, 0], sizes = [2, 8], strides = [1, 1]} : vector<2x40xf32> to vector<2x8xf32>
    %78 = vector.extract_strided_slice %6 {offsets = [4, 0, 0], sizes = [1, 2, 8], strides = [1, 1, 1]} : vector<8x2x8xf32> to vector<1x2x8xf32>
    %79 = vector.shape_cast %78 : vector<1x2x8xf32> to vector<2x8xf32>
    %80 = arith.addf %77, %79 : vector<2x8xf32>
    %81 = vector.extract_strided_slice %75 {offsets = [0, 8], sizes = [2, 32], strides = [1, 1]} : vector<2x40xf32> to vector<2x32xf32>
    %82 = tpu.concatenate %80, %81 in 1 : vector<2x8xf32>, vector<2x32xf32> -> vector<2x40xf32>
    %c4 = arith.constant 4 : index
    %c0_33 = arith.constant 0 : index
    %c0_34 = arith.constant 0 : index
    %83 = vector.load %arg5[%c4, %c0_33, %c0_34] : memref<8x2x40xf32, #tpu.memory_space<vmem>>, vector<1x2x40xf32>
    %84 = vector.shape_cast %83 : vector<1x2x40xf32> to vector<2x40xf32>
    %85 = vector.shape_cast %82 : vector<2x40xf32> to vector<1x2x40xf32>
    tpu.vector_store %arg5[%c4, %c0_33, %c0_34], %85 {strides = array<i32>} : memref<8x2x40xf32, #tpu.memory_space<vmem>>, vector<1x2x40xf32>,
    %86 = vector.extract_strided_slice %5 {offsets = [4, 0, 0], sizes = [1, 2, 32], strides = [1, 1, 1]} : vector<8x2x32xf32> to vector<1x2x32xf32>
    %87 = vector.shape_cast %86 : vector<1x2x32xf32> to vector<2x32xf32>
    %88 = arith.addf %87, %76 : vector<2x32xf32>
    %89 = math.tanh %88 : vector<2x32xf32>
    %c0_35 = arith.constant 0 : index
    %c0_36 = arith.constant 0 : index
    %90 = vector.load %arg6[%c0_35, %c0_36] : memref<2x32xf32, #tpu.memory_space<vmem>>, vector<2x32xf32>
    tpu.vector_store %arg6[%c0_35, %c0_36], %89 {strides = array<i32>} : memref<2x32xf32, #tpu.memory_space<vmem>>, vector<2x32xf32>,
    %c0_37 = arith.constant 0 : index
    %c0_38 = arith.constant 0 : index
    %91 = vector.load %arg6[%c0_37, %c0_38] : memref<2x32xf32, #tpu.memory_space<vmem>>, vector<2x32xf32>
    %92 = arith.truncf %91 : vector<2x32xf32> to vector<2x32xbf16>
    %cst_39 = arith.constant dense<0.000000e+00> : vector<2x72xf32>
    %93 = tpu.matmul %92, %3, %cst_39 {dimension_numbers = #tpu.dot_dimension_numbers<[1], [0], [0], [1], [0, 0, 1, 1], [], []>} : vector<2x32xbf16>, vector<32x72xbf16>, vector<2x72xf32> -> vector<2x72xf32>
    %94 = vector.extract_strided_slice %93 {offsets = [0, 0], sizes = [2, 40], strides = [1, 1]} : vector<2x72xf32> to vector<2x40xf32>
    %95 = vector.broadcast %4 : vector<1x40xf32> to vector<2x40xf32>
    %96 = arith.addf %94, %95 : vector<2x40xf32>
    %97 = vector.extract_strided_slice %93 {offsets = [0, 40], sizes = [2, 32], strides = [1, 1]} : vector<2x72xf32> to vector<2x32xf32>
    %98 = vector.extract_strided_slice %96 {offsets = [0, 0], sizes = [2, 8], strides = [1, 1]} : vector<2x40xf32> to vector<2x8xf32>
    %99 = vector.extract_strided_slice %6 {offsets = [3, 0, 0], sizes = [1, 2, 8], strides = [1, 1, 1]} : vector<8x2x8xf32> to vector<1x2x8xf32>
    %100 = vector.shape_cast %99 : vector<1x2x8xf32> to vector<2x8xf32>
    %101 = arith.addf %98, %100 : vector<2x8xf32>
    %102 = vector.extract_strided_slice %96 {offsets = [0, 8], sizes = [2, 32], strides = [1, 1]} : vector<2x40xf32> to vector<2x32xf32>
    %103 = tpu.concatenate %101, %102 in 1 : vector<2x8xf32>, vector<2x32xf32> -> vector<2x40xf32>
    %c3 = arith.constant 3 : index
    %c0_40 = arith.constant 0 : index
    %c0_41 = arith.constant 0 : index
    %104 = vector.load %arg5[%c3, %c0_40, %c0_41] : memref<8x2x40xf32, #tpu.memory_space<vmem>>, vector<1x2x40xf32>
    %105 = vector.shape_cast %104 : vector<1x2x40xf32> to vector<2x40xf32>
    %106 = vector.shape_cast %103 : vector<2x40xf32> to vector<1x2x40xf32>
    tpu.vector_store %arg5[%c3, %c0_40, %c0_41], %106 {strides = array<i32>} : memref<8x2x40xf32, #tpu.memory_space<vmem>>, vector<1x2x40xf32>,
    %107 = vector.extract_strided_slice %5 {offsets = [3, 0, 0], sizes = [1, 2, 32], strides = [1, 1, 1]} : vector<8x2x32xf32> to vector<1x2x32xf32>
    %108 = vector.shape_cast %107 : vector<1x2x32xf32> to vector<2x32xf32>
    %109 = arith.addf %108, %97 : vector<2x32xf32>
    %110 = math.tanh %109 : vector<2x32xf32>
    %c0_42 = arith.constant 0 : index
    %c0_43 = arith.constant 0 : index
    %111 = vector.load %arg6[%c0_42, %c0_43] : memref<2x32xf32, #tpu.memory_space<vmem>>, vector<2x32xf32>
    tpu.vector_store %arg6[%c0_42, %c0_43], %110 {strides = array<i32>} : memref<2x32xf32, #tpu.memory_space<vmem>>, vector<2x32xf32>,
    %c0_44 = arith.constant 0 : index
    %c0_45 = arith.constant 0 : index
    %112 = vector.load %arg6[%c0_44, %c0_45] : memref<2x32xf32, #tpu.memory_space<vmem>>, vector<2x32xf32>
    %113 = arith.truncf %112 : vector<2x32xf32> to vector<2x32xbf16>
    %cst_46 = arith.constant dense<0.000000e+00> : vector<2x72xf32>
    %114 = tpu.matmul %113, %3, %cst_46 {dimension_numbers = #tpu.dot_dimension_numbers<[1], [0], [0], [1], [0, 0, 1, 1], [], []>} : vector<2x32xbf16>, vector<32x72xbf16>, vector<2x72xf32> -> vector<2x72xf32>
    %115 = vector.extract_strided_slice %114 {offsets = [0, 0], sizes = [2, 40], strides = [1, 1]} : vector<2x72xf32> to vector<2x40xf32>
    %116 = vector.broadcast %4 : vector<1x40xf32> to vector<2x40xf32>
    %117 = arith.addf %115, %116 : vector<2x40xf32>
    %118 = vector.extract_strided_slice %114 {offsets = [0, 40], sizes = [2, 32], strides = [1, 1]} : vector<2x72xf32> to vector<2x32xf32>
    %119 = vector.extract_strided_slice %117 {offsets = [0, 0], sizes = [2, 8], strides = [1, 1]} : vector<2x40xf32> to vector<2x8xf32>
    %120 = vector.extract_strided_slice %6 {offsets = [2, 0, 0], sizes = [1, 2, 8], strides = [1, 1, 1]} : vector<8x2x8xf32> to vector<1x2x8xf32>
    %121 = vector.shape_cast %120 : vector<1x2x8xf32> to vector<2x8xf32>
    %122 = arith.addf %119, %121 : vector<2x8xf32>
    %123 = vector.extract_strided_slice %117 {offsets = [0, 8], sizes = [2, 32], strides = [1, 1]} : vector<2x40xf32> to vector<2x32xf32>
    %124 = tpu.concatenate %122, %123 in 1 : vector<2x8xf32>, vector<2x32xf32> -> vector<2x40xf32>
    %c2 = arith.constant 2 : index
    %c0_47 = arith.constant 0 : index
    %c0_48 = arith.constant 0 : index
    %125 = vector.load %arg5[%c2, %c0_47, %c0_48] : memref<8x2x40xf32, #tpu.memory_space<vmem>>, vector<1x2x40xf32>
    %126 = vector.shape_cast %125 : vector<1x2x40xf32> to vector<2x40xf32>
    %127 = vector.shape_cast %124 : vector<2x40xf32> to vector<1x2x40xf32>
    tpu.vector_store %arg5[%c2, %c0_47, %c0_48], %127 {strides = array<i32>} : memref<8x2x40xf32, #tpu.memory_space<vmem>>, vector<1x2x40xf32>,
    %128 = vector.extract_strided_slice %5 {offsets = [2, 0, 0], sizes = [1, 2, 32], strides = [1, 1, 1]} : vector<8x2x32xf32> to vector<1x2x32xf32>
    %129 = vector.shape_cast %128 : vector<1x2x32xf32> to vector<2x32xf32>
    %130 = arith.addf %129, %118 : vector<2x32xf32>
    %131 = math.tanh %130 : vector<2x32xf32>
    %c0_49 = arith.constant 0 : index
    %c0_50 = arith.constant 0 : index
    %132 = vector.load %arg6[%c0_49, %c0_50] : memref<2x32xf32, #tpu.memory_space<vmem>>, vector<2x32xf32>
    tpu.vector_store %arg6[%c0_49, %c0_50], %131 {strides = array<i32>} : memref<2x32xf32, #tpu.memory_space<vmem>>, vector<2x32xf32>,
    %c0_51 = arith.constant 0 : index
    %c0_52 = arith.constant 0 : index
    %133 = vector.load %arg6[%c0_51, %c0_52] : memref<2x32xf32, #tpu.memory_space<vmem>>, vector<2x32xf32>
    %134 = arith.truncf %133 : vector<2x32xf32> to vector<2x32xbf16>
    %cst_53 = arith.constant dense<0.000000e+00> : vector<2x72xf32>
    %135 = tpu.matmul %134, %3, %cst_53 {dimension_numbers = #tpu.dot_dimension_numbers<[1], [0], [0], [1], [0, 0, 1, 1], [], []>} : vector<2x32xbf16>, vector<32x72xbf16>, vector<2x72xf32> -> vector<2x72xf32>
    %136 = vector.extract_strided_slice %135 {offsets = [0, 0], sizes = [2, 40], strides = [1, 1]} : vector<2x72xf32> to vector<2x40xf32>
    %137 = vector.broadcast %4 : vector<1x40xf32> to vector<2x40xf32>
    %138 = arith.addf %136, %137 : vector<2x40xf32>
    %139 = vector.extract_strided_slice %135 {offsets = [0, 40], sizes = [2, 32], strides = [1, 1]} : vector<2x72xf32> to vector<2x32xf32>
    %140 = vector.extract_strided_slice %138 {offsets = [0, 0], sizes = [2, 8], strides = [1, 1]} : vector<2x40xf32> to vector<2x8xf32>
    %141 = vector.extract_strided_slice %6 {offsets = [1, 0, 0], sizes = [1, 2, 8], strides = [1, 1, 1]} : vector<8x2x8xf32> to vector<1x2x8xf32>
    %142 = vector.shape_cast %141 : vector<1x2x8xf32> to vector<2x8xf32>
    %143 = arith.addf %140, %142 : vector<2x8xf32>
    %144 = vector.extract_strided_slice %138 {offsets = [0, 8], sizes = [2, 32], strides = [1, 1]} : vector<2x40xf32> to vector<2x32xf32>
    %145 = tpu.concatenate %143, %144 in 1 : vector<2x8xf32>, vector<2x32xf32> -> vector<2x40xf32>
    %c1 = arith.constant 1 : index
    %c0_54 = arith.constant 0 : index
    %c0_55 = arith.constant 0 : index
    %146 = vector.load %arg5[%c1, %c0_54, %c0_55] : memref<8x2x40xf32, #tpu.memory_space<vmem>>, vector<1x2x40xf32>
    %147 = vector.shape_cast %146 : vector<1x2x40xf32> to vector<2x40xf32>
    %148 = vector.shape_cast %145 : vector<2x40xf32> to vector<1x2x40xf32>
    tpu.vector_store %arg5[%c1, %c0_54, %c0_55], %148 {strides = array<i32>} : memref<8x2x40xf32, #tpu.memory_space<vmem>>, vector<1x2x40xf32>,
    %149 = vector.extract_strided_slice %5 {offsets = [1, 0, 0], sizes = [1, 2, 32], strides = [1, 1, 1]} : vector<8x2x32xf32> to vector<1x2x32xf32>
    %150 = vector.shape_cast %149 : vector<1x2x32xf32> to vector<2x32xf32>
    %151 = arith.addf %150, %139 : vector<2x32xf32>
    %152 = math.tanh %151 : vector<2x32xf32>
    %c0_56 = arith.constant 0 : index
    %c0_57 = arith.constant 0 : index
    %153 = vector.load %arg6[%c0_56, %c0_57] : memref<2x32xf32, #tpu.memory_space<vmem>>, vector<2x32xf32>
    tpu.vector_store %arg6[%c0_56, %c0_57], %152 {strides = array<i32>} : memref<2x32xf32, #tpu.memory_space<vmem>>, vector<2x32xf32>,
    %c0_58 = arith.constant 0 : index
    %c0_59 = arith.constant 0 : index
    %154 = vector.load %arg6[%c0_58, %c0_59] : memref<2x32xf32, #tpu.memory_space<vmem>>, vector<2x32xf32>
    %155 = arith.truncf %154 : vector<2x32xf32> to vector<2x32xbf16>
    %cst_60 = arith.constant dense<0.000000e+00> : vector<2x72xf32>
    %156 = tpu.matmul %155, %3, %cst_60 {dimension_numbers = #tpu.dot_dimension_numbers<[1], [0], [0], [1], [0, 0, 1, 1], [], []>} : vector<2x32xbf16>, vector<32x72xbf16>, vector<2x72xf32> -> vector<2x72xf32>
    %157 = vector.extract_strided_slice %156 {offsets = [0, 0], sizes = [2, 40], strides = [1, 1]} : vector<2x72xf32> to vector<2x40xf32>
    %158 = vector.broadcast %4 : vector<1x40xf32> to vector<2x40xf32>
    %159 = arith.addf %157, %158 : vector<2x40xf32>
    %160 = vector.extract_strided_slice %156 {offsets = [0, 40], sizes = [2, 32], strides = [1, 1]} : vector<2x72xf32> to vector<2x32xf32>
    %161 = vector.extract_strided_slice %159 {offsets = [0, 0], sizes = [2, 8], strides = [1, 1]} : vector<2x40xf32> to vector<2x8xf32>
    %162 = vector.extract_strided_slice %6 {offsets = [0, 0, 0], sizes = [1, 2, 8], strides = [1, 1, 1]} : vector<8x2x8xf32> to vector<1x2x8xf32>
    %163 = vector.shape_cast %162 : vector<1x2x8xf32> to vector<2x8xf32>
    %164 = arith.addf %161, %163 : vector<2x8xf32>
    %165 = vector.extract_strided_slice %159 {offsets = [0, 8], sizes = [2, 32], strides = [1, 1]} : vector<2x40xf32> to vector<2x32xf32>
    %166 = tpu.concatenate %164, %165 in 1 : vector<2x8xf32>, vector<2x32xf32> -> vector<2x40xf32>
    %c0_61 = arith.constant 0 : index
    %c0_62 = arith.constant 0 : index
    %c0_63 = arith.constant 0 : index
    %167 = vector.load %arg5[%c0_61, %c0_62, %c0_63] : memref<8x2x40xf32, #tpu.memory_space<vmem>>, vector<1x2x40xf32>
    %168 = vector.shape_cast %167 : vector<1x2x40xf32> to vector<2x40xf32>
    %169 = vector.shape_cast %166 : vector<2x40xf32> to vector<1x2x40xf32>
    tpu.vector_store %arg5[%c0_61, %c0_62, %c0_63], %169 {strides = array<i32>} : memref<8x2x40xf32, #tpu.memory_space<vmem>>, vector<1x2x40xf32>,
    %170 = vector.extract_strided_slice %5 {offsets = [0, 0, 0], sizes = [1, 2, 32], strides = [1, 1, 1]} : vector<8x2x32xf32> to vector<1x2x32xf32>
    %171 = vector.shape_cast %170 : vector<1x2x32xf32> to vector<2x32xf32>
    %172 = arith.addf %171, %160 : vector<2x32xf32>
    %173 = math.tanh %172 : vector<2x32xf32>
    %c0_64 = arith.constant 0 : index
    %c0_65 = arith.constant 0 : index
    %174 = vector.load %arg6[%c0_64, %c0_65] : memref<2x32xf32, #tpu.memory_space<vmem>>, vector<2x32xf32>
    tpu.vector_store %arg6[%c0_64, %c0_65], %173 {strides = array<i32>} : memref<2x32xf32, #tpu.memory_space<vmem>>, vector<2x32xf32>,
    return
  }
  func.func @transform_0(%arg0: i32) -> (i32, i32, i32) {
    %c0_i32 = arith.constant 0 : i32
    %0 = arith.subi %c0_i32, %arg0 : i32
    %c0_i32_0 = arith.constant 0 : i32
    %c0_i32_1 = arith.constant 0 : i32
    %c0_i32_2 = arith.constant 0 : i32
    return %0, %c0_i32_0, %c0_i32_1 : i32, i32, i32
  }
  func.func @transform_1(%arg0: i32) -> (i32, i32, i32) {
    %c0_i32 = arith.constant 0 : i32
    %0 = arith.subi %c0_i32, %arg0 : i32
    %c0_i32_0 = arith.constant 0 : i32
    %c0_i32_1 = arith.constant 0 : i32
    %c0_i32_2 = arith.constant 0 : i32
    return %0, %c0_i32_0, %c0_i32_1 : i32, i32, i32
  }
  func.func @transform_2(%arg0: i32) -> (i32, i32) {
    %c0_i32 = arith.constant 0 : i32
    %c0_i32_0 = arith.constant 0 : i32
    %c0_i32_1 = arith.constant 0 : i32
    return %c0_i32, %c0_i32_0 : i32, i32
  }
  func.func @transform_3(%arg0: i32) -> (i32, i32) {
    %c0_i32 = arith.constant 0 : i32
    %c0_i32_0 = arith.constant 0 : i32
    %c0_i32_1 = arith.constant 0 : i32
    return %c0_i32, %c0_i32_0 : i32, i32
  }
  func.func @transform_4(%arg0: i32) -> (i32, i32, i32) {
    %c0_i32 = arith.constant 0 : i32
    %0 = arith.subi %c0_i32, %arg0 : i32
    %c0_i32_0 = arith.constant 0 : i32
    %c0_i32_1 = arith.constant 0 : i32
    %c0_i32_2 = arith.constant 0 : i32
    return %0, %c0_i32_0, %c0_i32_1 : i32, i32, i32
  }
}

module attributes {stable_mosaic.version = 11 : i64} {
  func.func @_poisson_ell_kernel(%arg0: i32, %arg1: memref<4x16x8xf32, #tpu.memory_space<vmem>>, %arg2: memref<16x32xf32, #tpu.memory_space<vmem>>, %arg3: memref<8x32xbf16, #tpu.memory_space<vmem>>, %arg4: memref<1x32xf32, #tpu.memory_space<vmem>>, %arg5: memref<4x16xf32, #tpu.memory_space<vmem>>) attributes {dimension_semantics = [#tpu.dimension_semantics<parallel>], iteration_bounds = array<i64: 1>, scalar_prefetch = 0 : i64, scratch_operands = 0 : i64, tpu.core_type = #tpu.core_type<tc>, window_params = [{transform_indices = @transform_0, window_bounds = array<i64: 4, 16, 8>}, {transform_indices = @transform_1, window_bounds = array<i64: 16, 32>}, {pipeline_mode = #tpu.pipeline_mode<synchronous>, transform_indices = @transform_2, window_bounds = array<i64: 8, 32>}, {pipeline_mode = #tpu.pipeline_mode<synchronous>, transform_indices = @transform_3, window_bounds = array<i64: 1, 32>}, {transform_indices = @transform_4, window_bounds = array<i64: 4, 16>}]} {
    %c0 = arith.constant 0 : index
    %c0_0 = arith.constant 0 : index
    %0 = vector.load %arg2[%c0, %c0_0] : memref<16x32xf32, #tpu.memory_space<vmem>>, vector<16x32xf32>
    %c0_1 = arith.constant 0 : index
    %c0_2 = arith.constant 0 : index
    %1 = vector.load %arg3[%c0_1, %c0_2] : memref<8x32xbf16, #tpu.memory_space<vmem>>, vector<8x32xbf16>
    %c0_3 = arith.constant 0 : index
    %c0_4 = arith.constant 0 : index
    %2 = vector.load %arg4[%c0_3, %c0_4] : memref<1x32xf32, #tpu.memory_space<vmem>>, vector<1x32xf32>
    %c0_5 = arith.constant 0 : index
    %c0_6 = arith.constant 0 : index
    %c0_7 = arith.constant 0 : index
    %3 = vector.load %arg1[%c0_5, %c0_6, %c0_7] : memref<4x16x8xf32, #tpu.memory_space<vmem>>, vector<1x16x8xf32>
    %4 = vector.shape_cast %3 : vector<1x16x8xf32> to vector<16x8xf32>
    %c1 = arith.constant 1 : index
    %c0_8 = arith.constant 0 : index
    %c0_9 = arith.constant 0 : index
    %5 = vector.load %arg1[%c1, %c0_8, %c0_9] : memref<4x16x8xf32, #tpu.memory_space<vmem>>, vector<1x16x8xf32>
    %6 = vector.shape_cast %5 : vector<1x16x8xf32> to vector<16x8xf32>
    %c2 = arith.constant 2 : index
    %c0_10 = arith.constant 0 : index
    %c0_11 = arith.constant 0 : index
    %7 = vector.load %arg1[%c2, %c0_10, %c0_11] : memref<4x16x8xf32, #tpu.memory_space<vmem>>, vector<1x16x8xf32>
    %8 = vector.shape_cast %7 : vector<1x16x8xf32> to vector<16x8xf32>
    %c3 = arith.constant 3 : index
    %c0_12 = arith.constant 0 : index
    %c0_13 = arith.constant 0 : index
    %9 = vector.load %arg1[%c3, %c0_12, %c0_13] : memref<4x16x8xf32, #tpu.memory_space<vmem>>, vector<1x16x8xf32>
    %10 = vector.shape_cast %9 : vector<1x16x8xf32> to vector<16x8xf32>
    %11 = tpu.concatenate %4, %6, %8, %10 in 0 : vector<16x8xf32>, vector<16x8xf32>, vector<16x8xf32>, vector<16x8xf32> -> vector<64x8xf32>
    %12 = arith.truncf %11 : vector<64x8xf32> to vector<64x8xbf16>
    %cst = arith.constant dense<0.000000e+00> : vector<64x32xf32>
    %13 = tpu.matmul %12, %1, %cst {dimension_numbers = #tpu.dot_dimension_numbers<[1], [0], [0], [1], [0, 0, 1, 1], [], []>} : vector<64x8xbf16>, vector<8x32xbf16>, vector<64x32xf32> -> vector<64x32xf32>
    %14 = vector.broadcast %2 : vector<1x32xf32> to vector<64x32xf32>
    %15 = arith.addf %13, %14 : vector<64x32xf32>
    %16 = vector.extract_strided_slice %15 {offsets = [0, 0], sizes = [16, 32], strides = [1, 1]} : vector<64x32xf32> to vector<16x32xf32>
    %17 = arith.mulf %0, %16 : vector<16x32xf32>
    %18 = math.exp %16 : vector<16x32xf32>
    %19 = arith.subf %17, %18 : vector<16x32xf32>
    %cst_14 = arith.constant dense<0.000000e+00> : vector<16xf32>
    %20 = vector.multi_reduction <add>, %19, %cst_14 [1] : vector<16x32xf32> to vector<16xf32>
    %c0_15 = arith.constant 0 : index
    %c0_16 = arith.constant 0 : index
    %21 = vector.load %arg5[%c0_15, %c0_16] : memref<4x16xf32, #tpu.memory_space<vmem>>, vector<1x16xf32>
    %22 = vector.shape_cast %21 : vector<1x16xf32> to vector<16xf32>
    %23 = vector.shape_cast %20 : vector<16xf32> to vector<1x16xf32>
    tpu.vector_store %arg5[%c0_15, %c0_16], %23 {strides = array<i32>} : memref<4x16xf32, #tpu.memory_space<vmem>>, vector<1x16xf32>,
    %24 = vector.extract_strided_slice %15 {offsets = [16, 0], sizes = [16, 32], strides = [1, 1]} : vector<64x32xf32> to vector<16x32xf32>
    %25 = arith.mulf %0, %24 : vector<16x32xf32>
    %26 = math.exp %24 : vector<16x32xf32>
    %27 = arith.subf %25, %26 : vector<16x32xf32>
    %cst_17 = arith.constant dense<0.000000e+00> : vector<16xf32>
    %28 = vector.multi_reduction <add>, %27, %cst_17 [1] : vector<16x32xf32> to vector<16xf32>
    %c1_18 = arith.constant 1 : index
    %c0_19 = arith.constant 0 : index
    %29 = vector.load %arg5[%c1_18, %c0_19] : memref<4x16xf32, #tpu.memory_space<vmem>>, vector<1x16xf32>
    %30 = vector.shape_cast %29 : vector<1x16xf32> to vector<16xf32>
    %31 = vector.shape_cast %28 : vector<16xf32> to vector<1x16xf32>
    tpu.vector_store %arg5[%c1_18, %c0_19], %31 {strides = array<i32>} : memref<4x16xf32, #tpu.memory_space<vmem>>, vector<1x16xf32>,
    %32 = vector.extract_strided_slice %15 {offsets = [32, 0], sizes = [16, 32], strides = [1, 1]} : vector<64x32xf32> to vector<16x32xf32>
    %33 = arith.mulf %0, %32 : vector<16x32xf32>
    %34 = math.exp %32 : vector<16x32xf32>
    %35 = arith.subf %33, %34 : vector<16x32xf32>
    %cst_20 = arith.constant dense<0.000000e+00> : vector<16xf32>
    %36 = vector.multi_reduction <add>, %35, %cst_20 [1] : vector<16x32xf32> to vector<16xf32>
    %c2_21 = arith.constant 2 : index
    %c0_22 = arith.constant 0 : index
    %37 = vector.load %arg5[%c2_21, %c0_22] : memref<4x16xf32, #tpu.memory_space<vmem>>, vector<1x16xf32>
    %38 = vector.shape_cast %37 : vector<1x16xf32> to vector<16xf32>
    %39 = vector.shape_cast %36 : vector<16xf32> to vector<1x16xf32>
    tpu.vector_store %arg5[%c2_21, %c0_22], %39 {strides = array<i32>} : memref<4x16xf32, #tpu.memory_space<vmem>>, vector<1x16xf32>,
    %40 = vector.extract_strided_slice %15 {offsets = [48, 0], sizes = [16, 32], strides = [1, 1]} : vector<64x32xf32> to vector<16x32xf32>
    %41 = arith.mulf %0, %40 : vector<16x32xf32>
    %42 = math.exp %40 : vector<16x32xf32>
    %43 = arith.subf %41, %42 : vector<16x32xf32>
    %cst_23 = arith.constant dense<0.000000e+00> : vector<16xf32>
    %44 = vector.multi_reduction <add>, %43, %cst_23 [1] : vector<16x32xf32> to vector<16xf32>
    %c3_24 = arith.constant 3 : index
    %c0_25 = arith.constant 0 : index
    %45 = vector.load %arg5[%c3_24, %c0_25] : memref<4x16xf32, #tpu.memory_space<vmem>>, vector<1x16xf32>
    %46 = vector.shape_cast %45 : vector<1x16xf32> to vector<16xf32>
    %47 = vector.shape_cast %44 : vector<16xf32> to vector<1x16xf32>
    tpu.vector_store %arg5[%c3_24, %c0_25], %47 {strides = array<i32>} : memref<4x16xf32, #tpu.memory_space<vmem>>, vector<1x16xf32>,
    return
  }
  func.func @transform_0(%arg0: i32) -> (i32, i32, i32) {
    %c0_i32 = arith.constant 0 : i32
    %c0_i32_0 = arith.constant 0 : i32
    %c0_i32_1 = arith.constant 0 : i32
    return %c0_i32, %arg0, %c0_i32_0 : i32, i32, i32
  }
  func.func @transform_1(%arg0: i32) -> (i32, i32) {
    %c0_i32 = arith.constant 0 : i32
    %c0_i32_0 = arith.constant 0 : i32
    return %arg0, %c0_i32 : i32, i32
  }
  func.func @transform_2(%arg0: i32) -> (i32, i32) {
    %c0_i32 = arith.constant 0 : i32
    %c0_i32_0 = arith.constant 0 : i32
    %c0_i32_1 = arith.constant 0 : i32
    return %c0_i32, %c0_i32_0 : i32, i32
  }
  func.func @transform_3(%arg0: i32) -> (i32, i32) {
    %c0_i32 = arith.constant 0 : i32
    %c0_i32_0 = arith.constant 0 : i32
    %c0_i32_1 = arith.constant 0 : i32
    return %c0_i32, %c0_i32_0 : i32, i32
  }
  func.func @transform_4(%arg0: i32) -> (i32, i32) {
    %c0_i32 = arith.constant 0 : i32
    %c0_i32_0 = arith.constant 0 : i32
    return %c0_i32, %arg0 : i32, i32
  }
}

module attributes {stable_mosaic.version = 11 : i64} {
  func.func @_nl_filter_kernel(%arg0: i32, %arg1: memref<1x2x8xf32, #tpu.memory_space<vmem>>, %arg2: memref<1x2x8x4xf32, #tpu.memory_space<vmem>>, %arg3: memref<1x2x8x4xf32, #tpu.memory_space<vmem>>, %arg4: memref<1x4x2x8xf32, #tpu.memory_space<vmem>>, %arg5: memref<8x16xbf16, #tpu.memory_space<vmem>>, %arg6: memref<1x16xf32, #tpu.memory_space<vmem>>, %arg7: memref<16x8xbf16, #tpu.memory_space<vmem>>, %arg8: memref<1x8xf32, #tpu.memory_space<vmem>>, %arg9: memref<8x8xf32, #tpu.memory_space<vmem>>, %arg10: memref<8x8xf32, #tpu.memory_space<vmem>>, %arg11: memref<1x8xf32, #tpu.memory_space<vmem>>, %arg12: memref<8x8xf32, #tpu.memory_space<vmem>>, %arg13: memref<4x1x2x8xf32, #tpu.memory_space<vmem>>, %arg14: memref<1x2x1xf32, #tpu.memory_space<vmem>>, %arg15: memref<1x2x8xf32, #tpu.memory_space<vmem>>, %arg16: memref<4x2x8xf32, #tpu.memory_space<vmem>>) attributes {dimension_semantics = [#tpu.dimension_semantics<arbitrary>], iteration_bounds = array<i64: 8>, scalar_prefetch = 0 : i64, scratch_operands = 1 : i64, tpu.core_type = #tpu.core_type<tc>, window_params = [{transform_indices = @transform_0, window_bounds = array<i64: 1, 2, 8>}, {transform_indices = @transform_1, window_bounds = array<i64: 1, 2, 8, 4>}, {transform_indices = @transform_2, window_bounds = array<i64: 1, 2, 8, 4>}, {transform_indices = @transform_3, window_bounds = array<i64: 1, 4, 2, 8>}, {pipeline_mode = #tpu.pipeline_mode<synchronous>, transform_indices = @transform_4, window_bounds = array<i64: 8, 16>}, {pipeline_mode = #tpu.pipeline_mode<synchronous>, transform_indices = @transform_5, window_bounds = array<i64: 1, 16>}, {pipeline_mode = #tpu.pipeline_mode<synchronous>, transform_indices = @transform_6, window_bounds = array<i64: 16, 8>}, {pipeline_mode = #tpu.pipeline_mode<synchronous>, transform_indices = @transform_7, window_bounds = array<i64: 1, 8>}, {pipeline_mode = #tpu.pipeline_mode<synchronous>, transform_indices = @transform_8, window_bounds = array<i64: 8, 8>}, {pipeline_mode = #tpu.pipeline_mode<synchronous>, transform_indices = @transform_9, window_bounds = array<i64: 8, 8>}, {pipeline_mode = #tpu.pipeline_mode<synchronous>, transform_indices = @transform_10, window_bounds = array<i64: 1, 8>}, {pipeline_mode = #tpu.pipeline_mode<synchronous>, transform_indices = @transform_11, window_bounds = array<i64: 8, 8>}, {transform_indices = @transform_12, window_bounds = array<i64: 4, 1, 2, 8>}, {transform_indices = @transform_13, window_bounds = array<i64: 1, 2, 1>}, {transform_indices = @transform_14, window_bounds = array<i64: 1, 2, 8>}]} {
    %c0_i32 = arith.constant 0 : i32
    %0 = arith.cmpi eq, %arg0, %c0_i32 : i32
    %1 = arith.extui %0 : i1 to i32
    %c0_i32_0 = arith.constant 0 : i32
    %2 = arith.cmpi ne, %1, %c0_i32_0 : i32
    scf.if %2 {
      %cst_159 = arith.constant 0.000000e+00 : f32
      %1120 = vector.broadcast %cst_159 : f32 to vector<4x2x8xf32>
      %c0_160 = arith.constant 0 : index
      %c0_161 = arith.constant 0 : index
      %c0_162 = arith.constant 0 : index
      %1121 = vector.load %arg16[%c0_160, %c0_161, %c0_162] : memref<4x2x8xf32, #tpu.memory_space<vmem>>, vector<4x2x8xf32>
      tpu.vector_store %arg16[%c0_160, %c0_161, %c0_162], %1120 {strides = array<i32>} : memref<4x2x8xf32, #tpu.memory_space<vmem>>, vector<4x2x8xf32>,
    } else {
    }
    %c0 = arith.constant 0 : index
    %c0_1 = arith.constant 0 : index
    %3 = vector.load %arg5[%c0, %c0_1] : memref<8x16xbf16, #tpu.memory_space<vmem>>, vector<8x16xbf16>
    %c0_2 = arith.constant 0 : index
    %c0_3 = arith.constant 0 : index
    %4 = vector.load %arg6[%c0_2, %c0_3] : memref<1x16xf32, #tpu.memory_space<vmem>>, vector<1x16xf32>
    %c0_4 = arith.constant 0 : index
    %c0_5 = arith.constant 0 : index
    %5 = vector.load %arg7[%c0_4, %c0_5] : memref<16x8xbf16, #tpu.memory_space<vmem>>, vector<16x8xbf16>
    %c0_6 = arith.constant 0 : index
    %c0_7 = arith.constant 0 : index
    %6 = vector.load %arg8[%c0_6, %c0_7] : memref<1x8xf32, #tpu.memory_space<vmem>>, vector<1x8xf32>
    %c0_8 = arith.constant 0 : index
    %c0_9 = arith.constant 0 : index
    %c0_10 = arith.constant 0 : index
    %7 = vector.load %arg16[%c0_8, %c0_9, %c0_10] : memref<4x2x8xf32, #tpu.memory_space<vmem>>, vector<4x2x8xf32>
    %8 = vector.extract_strided_slice %7 {offsets = [0, 0, 0], sizes = [1, 2, 8], strides = [1, 1, 1]} : vector<4x2x8xf32> to vector<1x2x8xf32>
    %9 = vector.shape_cast %8 : vector<1x2x8xf32> to vector<2x8xf32>
    %10 = arith.truncf %9 : vector<2x8xf32> to vector<2x8xbf16>
    %cst = arith.constant dense<0.000000e+00> : vector<2x16xf32>
    %11 = tpu.matmul %10, %3, %cst {dimension_numbers = #tpu.dot_dimension_numbers<[1], [0], [0], [1], [0, 0, 1, 1], [], []>} : vector<2x8xbf16>, vector<8x16xbf16>, vector<2x16xf32> -> vector<2x16xf32>
    %12 = vector.broadcast %4 : vector<1x16xf32> to vector<2x16xf32>
    %13 = arith.addf %11, %12 : vector<2x16xf32>
    %14 = math.tanh %13 : vector<2x16xf32>
    %15 = arith.truncf %14 : vector<2x16xf32> to vector<2x16xbf16>
    %cst_11 = arith.constant dense<0.000000e+00> : vector<2x8xf32>
    %16 = tpu.matmul %15, %5, %cst_11 {dimension_numbers = #tpu.dot_dimension_numbers<[1], [0], [0], [1], [0, 0, 1, 1], [], []>} : vector<2x16xbf16>, vector<16x8xbf16>, vector<2x8xf32> -> vector<2x8xf32>
    %17 = arith.addf %9, %16 : vector<2x8xf32>
    %18 = vector.broadcast %6 : vector<1x8xf32> to vector<2x8xf32>
    %19 = arith.addf %17, %18 : vector<2x8xf32>
    %20 = vector.extract_strided_slice %7 {offsets = [1, 0, 0], sizes = [1, 2, 8], strides = [1, 1, 1]} : vector<4x2x8xf32> to vector<1x2x8xf32>
    %21 = vector.shape_cast %20 : vector<1x2x8xf32> to vector<2x8xf32>
    %22 = arith.truncf %21 : vector<2x8xf32> to vector<2x8xbf16>
    %cst_12 = arith.constant dense<0.000000e+00> : vector<2x16xf32>
    %23 = tpu.matmul %22, %3, %cst_12 {dimension_numbers = #tpu.dot_dimension_numbers<[1], [0], [0], [1], [0, 0, 1, 1], [], []>} : vector<2x8xbf16>, vector<8x16xbf16>, vector<2x16xf32> -> vector<2x16xf32>
    %24 = vector.broadcast %4 : vector<1x16xf32> to vector<2x16xf32>
    %25 = arith.addf %23, %24 : vector<2x16xf32>
    %26 = math.tanh %25 : vector<2x16xf32>
    %27 = arith.truncf %26 : vector<2x16xf32> to vector<2x16xbf16>
    %cst_13 = arith.constant dense<0.000000e+00> : vector<2x8xf32>
    %28 = tpu.matmul %27, %5, %cst_13 {dimension_numbers = #tpu.dot_dimension_numbers<[1], [0], [0], [1], [0, 0, 1, 1], [], []>} : vector<2x16xbf16>, vector<16x8xbf16>, vector<2x8xf32> -> vector<2x8xf32>
    %29 = arith.addf %21, %28 : vector<2x8xf32>
    %30 = vector.broadcast %6 : vector<1x8xf32> to vector<2x8xf32>
    %31 = arith.addf %29, %30 : vector<2x8xf32>
    %32 = vector.extract_strided_slice %7 {offsets = [2, 0, 0], sizes = [1, 2, 8], strides = [1, 1, 1]} : vector<4x2x8xf32> to vector<1x2x8xf32>
    %33 = vector.shape_cast %32 : vector<1x2x8xf32> to vector<2x8xf32>
    %34 = arith.truncf %33 : vector<2x8xf32> to vector<2x8xbf16>
    %cst_14 = arith.constant dense<0.000000e+00> : vector<2x16xf32>
    %35 = tpu.matmul %34, %3, %cst_14 {dimension_numbers = #tpu.dot_dimension_numbers<[1], [0], [0], [1], [0, 0, 1, 1], [], []>} : vector<2x8xbf16>, vector<8x16xbf16>, vector<2x16xf32> -> vector<2x16xf32>
    %36 = vector.broadcast %4 : vector<1x16xf32> to vector<2x16xf32>
    %37 = arith.addf %35, %36 : vector<2x16xf32>
    %38 = math.tanh %37 : vector<2x16xf32>
    %39 = arith.truncf %38 : vector<2x16xf32> to vector<2x16xbf16>
    %cst_15 = arith.constant dense<0.000000e+00> : vector<2x8xf32>
    %40 = tpu.matmul %39, %5, %cst_15 {dimension_numbers = #tpu.dot_dimension_numbers<[1], [0], [0], [1], [0, 0, 1, 1], [], []>} : vector<2x16xbf16>, vector<16x8xbf16>, vector<2x8xf32> -> vector<2x8xf32>
    %41 = arith.addf %33, %40 : vector<2x8xf32>
    %42 = vector.broadcast %6 : vector<1x8xf32> to vector<2x8xf32>
    %43 = arith.addf %41, %42 : vector<2x8xf32>
    %44 = vector.extract_strided_slice %7 {offsets = [3, 0, 0], sizes = [1, 2, 8], strides = [1, 1, 1]} : vector<4x2x8xf32> to vector<1x2x8xf32>
    %45 = vector.shape_cast %44 : vector<1x2x8xf32> to vector<2x8xf32>
    %46 = arith.truncf %45 : vector<2x8xf32> to vector<2x8xbf16>
    %cst_16 = arith.constant dense<0.000000e+00> : vector<2x16xf32>
    %47 = tpu.matmul %46, %3, %cst_16 {dimension_numbers = #tpu.dot_dimension_numbers<[1], [0], [0], [1], [0, 0, 1, 1], [], []>} : vector<2x8xbf16>, vector<8x16xbf16>, vector<2x16xf32> -> vector<2x16xf32>
    %48 = vector.broadcast %4 : vector<1x16xf32> to vector<2x16xf32>
    %49 = arith.addf %47, %48 : vector<2x16xf32>
    %50 = math.tanh %49 : vector<2x16xf32>
    %51 = arith.truncf %50 : vector<2x16xf32> to vector<2x16xbf16>
    %cst_17 = arith.constant dense<0.000000e+00> : vector<2x8xf32>
    %52 = tpu.matmul %51, %5, %cst_17 {dimension_numbers = #tpu.dot_dimension_numbers<[1], [0], [0], [1], [0, 0, 1, 1], [], []>} : vector<2x16xbf16>, vector<16x8xbf16>, vector<2x8xf32> -> vector<2x8xf32>
    %53 = arith.addf %45, %52 : vector<2x8xf32>
    %54 = vector.broadcast %6 : vector<1x8xf32> to vector<2x8xf32>
    %55 = arith.addf %53, %54 : vector<2x8xf32>
    %56 = arith.addf %19, %31 : vector<2x8xf32>
    %57 = arith.addf %56, %43 : vector<2x8xf32>
    %58 = arith.addf %57, %55 : vector<2x8xf32>
    %cst_18 = arith.constant 2.500000e-01 : f32
    %59 = vector.broadcast %cst_18 : f32 to vector<2x8xf32>
    %60 = arith.mulf %58, %59 : vector<2x8xf32>
    %cst_19 = arith.constant 0.000000e+00 : f32
    %61 = vector.broadcast %cst_19 : f32 to vector<2x8x8xf32>
    %62 = arith.subf %19, %60 : vector<2x8xf32>
    %63 = vector.shape_cast %62 : vector<2x8xf32> to vector<2x8x1xf32>
    %64 = vector.shape_cast %62 : vector<2x8xf32> to vector<2x1x8xf32>
    %65 = vector.broadcast %63 : vector<2x8x1xf32> to vector<2x8x8xf32>
    %66 = vector.broadcast %64 : vector<2x1x8xf32> to vector<2x8x8xf32>
    %67 = arith.mulf %65, %66 : vector<2x8x8xf32>
    %68 = arith.addf %61, %67 : vector<2x8x8xf32>
    %69 = arith.subf %31, %60 : vector<2x8xf32>
    %70 = vector.shape_cast %69 : vector<2x8xf32> to vector<2x8x1xf32>
    %71 = vector.shape_cast %69 : vector<2x8xf32> to vector<2x1x8xf32>
    %72 = vector.broadcast %70 : vector<2x8x1xf32> to vector<2x8x8xf32>
    %73 = vector.broadcast %71 : vector<2x1x8xf32> to vector<2x8x8xf32>
    %74 = arith.mulf %72, %73 : vector<2x8x8xf32>
    %75 = arith.addf %68, %74 : vector<2x8x8xf32>
    %76 = arith.subf %43, %60 : vector<2x8xf32>
    %77 = vector.shape_cast %76 : vector<2x8xf32> to vector<2x8x1xf32>
    %78 = vector.shape_cast %76 : vector<2x8xf32> to vector<2x1x8xf32>
    %79 = vector.broadcast %77 : vector<2x8x1xf32> to vector<2x8x8xf32>
    %80 = vector.broadcast %78 : vector<2x1x8xf32> to vector<2x8x8xf32>
    %81 = arith.mulf %79, %80 : vector<2x8x8xf32>
    %82 = arith.addf %75, %81 : vector<2x8x8xf32>
    %83 = arith.subf %55, %60 : vector<2x8xf32>
    %84 = vector.shape_cast %83 : vector<2x8xf32> to vector<2x8x1xf32>
    %85 = vector.shape_cast %83 : vector<2x8xf32> to vector<2x1x8xf32>
    %86 = vector.broadcast %84 : vector<2x8x1xf32> to vector<2x8x8xf32>
    %87 = vector.broadcast %85 : vector<2x1x8xf32> to vector<2x8x8xf32>
    %88 = arith.mulf %86, %87 : vector<2x8x8xf32>
    %89 = arith.addf %82, %88 : vector<2x8x8xf32>
    %cst_20 = arith.constant 2.500000e-01 : f32
    %90 = vector.broadcast %cst_20 : f32 to vector<2x8x8xf32>
    %91 = arith.mulf %89, %90 : vector<2x8x8xf32>
    %c0_21 = arith.constant 0 : index
    %c0_22 = arith.constant 0 : index
    %92 = vector.load %arg9[%c0_21, %c0_22] : memref<8x8xf32, #tpu.memory_space<vmem>>, vector<8x8xf32>
    %93 = vector.shape_cast %92 : vector<8x8xf32> to vector<1x8x8xf32>
    %94 = vector.broadcast %93 : vector<1x8x8xf32> to vector<2x8x8xf32>
    %95 = arith.addf %91, %94 : vector<2x8x8xf32>
    %c0_i32_23 = arith.constant 0 : i32
    %96 = arith.cmpi eq, %arg0, %c0_i32_23 : i32
    %cst_24 = arith.constant 1.000000e+00 : f32
    %cst_25 = arith.constant 0.000000e+00 : f32
    %97 = arith.select %96, %cst_24, %cst_25 : f32
    %c0_26 = arith.constant 0 : index
    %c0_27 = arith.constant 0 : index
    %98 = vector.load %arg11[%c0_26, %c0_27] : memref<1x8xf32, #tpu.memory_space<vmem>>, vector<1x8xf32>
    %99 = vector.broadcast %97 : f32 to vector<1x8xf32>
    %100 = arith.mulf %99, %98 : vector<1x8xf32>
    %cst_28 = arith.constant 1.000000e+00 : f32
    %101 = arith.subf %cst_28, %97 : f32
    %102 = vector.broadcast %101 : f32 to vector<2x8xf32>
    %103 = arith.mulf %102, %60 : vector<2x8xf32>
    %104 = vector.broadcast %100 : vector<1x8xf32> to vector<2x8xf32>
    %105 = arith.addf %104, %103 : vector<2x8xf32>
    %c0_29 = arith.constant 0 : index
    %c0_30 = arith.constant 0 : index
    %106 = vector.load %arg10[%c0_29, %c0_30] : memref<8x8xf32, #tpu.memory_space<vmem>>, vector<8x8xf32>
    %107 = vector.shape_cast %106 : vector<8x8xf32> to vector<1x8x8xf32>
    %108 = vector.broadcast %97 : f32 to vector<1x8x8xf32>
    %109 = arith.mulf %108, %107 : vector<1x8x8xf32>
    %cst_31 = arith.constant 1.000000e+00 : f32
    %110 = arith.subf %cst_31, %97 : f32
    %111 = vector.broadcast %110 : f32 to vector<2x8x8xf32>
    %112 = arith.mulf %111, %95 : vector<2x8x8xf32>
    %113 = vector.broadcast %109 : vector<1x8x8xf32> to vector<2x8x8xf32>
    %114 = arith.addf %113, %112 : vector<2x8x8xf32>
    %c0_32 = arith.constant 0 : index
    %c0_33 = arith.constant 0 : index
    %115 = vector.load %arg12[%c0_32, %c0_33] : memref<8x8xf32, #tpu.memory_space<vmem>>, vector<8x8xf32>
    %116 = vector.shape_cast %115 : vector<8x8xf32> to vector<1x8x8xf32>
    %cst_34 = arith.constant 0.000000e+00 : f32
    %117 = vector.broadcast %cst_34 : f32 to vector<2x8x8xf32>
    %118 = vector.broadcast %116 : vector<1x8x8xf32> to vector<2x8x8xf32>
    %119 = arith.addf %118, %117 : vector<2x8x8xf32>
    %cst_35 = arith.constant 0.000000e+00 : f32
    %120 = vector.broadcast %cst_35 : f32 to vector<2x1xf32>
    %121 = tpu.iota {dimensions = array<i32: 0>} : vector<8x8xi32>
    %122 = vector.extract_strided_slice %114 {offsets = [0, 0, 0], sizes = [2, 1, 1], strides = [1, 1, 1]} : vector<2x8x8xf32> to vector<2x1x1xf32>
    %123 = vector.shape_cast %122 : vector<2x1x1xf32> to vector<2x1xf32>
    %124 = math.log %123 : vector<2x1xf32>
    %125 = arith.addf %120, %124 : vector<2x1xf32>
    %126 = vector.extract_strided_slice %114 {offsets = [0, 0, 0], sizes = [2, 1, 8], strides = [1, 1, 1]} : vector<2x8x8xf32> to vector<2x1x8xf32>
    %127 = vector.broadcast %122 : vector<2x1x1xf32> to vector<2x1x8xf32>
    %128 = arith.divf %126, %127 : vector<2x1x8xf32>
    %129 = vector.extract_strided_slice %119 {offsets = [0, 0, 0], sizes = [2, 1, 8], strides = [1, 1, 1]} : vector<2x8x8xf32> to vector<2x1x8xf32>
    %130 = vector.broadcast %122 : vector<2x1x1xf32> to vector<2x1x8xf32>
    %131 = arith.divf %129, %130 : vector<2x1x8xf32>
    %132 = vector.extract_strided_slice %114 {offsets = [0, 0, 0], sizes = [2, 8, 1], strides = [1, 1, 1]} : vector<2x8x8xf32> to vector<2x8x1xf32>
    %c0_i32_36 = arith.constant 0 : i32
    %133 = vector.broadcast %c0_i32_36 : i32 to vector<8x8xi32>
    %134 = arith.cmpi eq, %121, %133 : vector<8x8xi32>
    %135 = arith.extui %134 : vector<8x8xi1> to vector<8x8xi32>
    %136 = arith.sitofp %135 : vector<8x8xi32> to vector<8x8xf32>
    %137 = vector.shape_cast %136 : vector<8x8xf32> to vector<1x8x8xf32>
    %138 = vector.broadcast %137 : vector<1x8x8xf32> to vector<2x8x8xf32>
    %139 = vector.broadcast %128 : vector<2x1x8xf32> to vector<2x8x8xf32>
    %140 = arith.mulf %138, %139 : vector<2x8x8xf32>
    %cst_37 = arith.constant 1.000000e+00 : f32
    %141 = vector.broadcast %cst_37 : f32 to vector<1x8x8xf32>
    %142 = arith.subf %141, %137 : vector<1x8x8xf32>
    %143 = vector.broadcast %132 : vector<2x8x1xf32> to vector<2x8x8xf32>
    %144 = vector.broadcast %128 : vector<2x1x8xf32> to vector<2x8x8xf32>
    %145 = arith.mulf %143, %144 : vector<2x8x8xf32>
    %146 = arith.subf %114, %145 : vector<2x8x8xf32>
    %147 = vector.broadcast %142 : vector<1x8x8xf32> to vector<2x8x8xf32>
    %148 = arith.mulf %147, %146 : vector<2x8x8xf32>
    %149 = arith.addf %140, %148 : vector<2x8x8xf32>
    %150 = vector.broadcast %137 : vector<1x8x8xf32> to vector<2x8x8xf32>
    %151 = vector.broadcast %131 : vector<2x1x8xf32> to vector<2x8x8xf32>
    %152 = arith.mulf %150, %151 : vector<2x8x8xf32>
    %cst_38 = arith.constant 1.000000e+00 : f32
    %153 = vector.broadcast %cst_38 : f32 to vector<1x8x8xf32>
    %154 = arith.subf %153, %137 : vector<1x8x8xf32>
    %155 = vector.broadcast %132 : vector<2x8x1xf32> to vector<2x8x8xf32>
    %156 = vector.broadcast %131 : vector<2x1x8xf32> to vector<2x8x8xf32>
    %157 = arith.mulf %155, %156 : vector<2x8x8xf32>
    %158 = arith.subf %119, %157 : vector<2x8x8xf32>
    %159 = vector.broadcast %154 : vector<1x8x8xf32> to vector<2x8x8xf32>
    %160 = arith.mulf %159, %158 : vector<2x8x8xf32>
    %161 = arith.addf %152, %160 : vector<2x8x8xf32>
    %162 = vector.extract_strided_slice %149 {offsets = [0, 1, 1], sizes = [2, 1, 1], strides = [1, 1, 1]} : vector<2x8x8xf32> to vector<2x1x1xf32>
    %163 = vector.shape_cast %162 : vector<2x1x1xf32> to vector<2x1xf32>
    %164 = math.log %163 : vector<2x1xf32>
    %165 = arith.addf %125, %164 : vector<2x1xf32>
    %166 = vector.extract_strided_slice %149 {offsets = [0, 1, 0], sizes = [2, 1, 8], strides = [1, 1, 1]} : vector<2x8x8xf32> to vector<2x1x8xf32>
    %167 = vector.broadcast %162 : vector<2x1x1xf32> to vector<2x1x8xf32>
    %168 = arith.divf %166, %167 : vector<2x1x8xf32>
    %169 = vector.extract_strided_slice %161 {offsets = [0, 1, 0], sizes = [2, 1, 8], strides = [1, 1, 1]} : vector<2x8x8xf32> to vector<2x1x8xf32>
    %170 = vector.broadcast %162 : vector<2x1x1xf32> to vector<2x1x8xf32>
    %171 = arith.divf %169, %170 : vector<2x1x8xf32>
    %172 = vector.extract_strided_slice %149 {offsets = [0, 0, 1], sizes = [2, 8, 1], strides = [1, 1, 1]} : vector<2x8x8xf32> to vector<2x8x1xf32>
    %c1_i32 = arith.constant 1 : i32
    %173 = vector.broadcast %c1_i32 : i32 to vector<8x8xi32>
    %174 = arith.cmpi eq, %121, %173 : vector<8x8xi32>
    %175 = arith.extui %174 : vector<8x8xi1> to vector<8x8xi32>
    %176 = arith.sitofp %175 : vector<8x8xi32> to vector<8x8xf32>
    %177 = vector.shape_cast %176 : vector<8x8xf32> to vector<1x8x8xf32>
    %178 = vector.broadcast %177 : vector<1x8x8xf32> to vector<2x8x8xf32>
    %179 = vector.broadcast %168 : vector<2x1x8xf32> to vector<2x8x8xf32>
    %180 = arith.mulf %178, %179 : vector<2x8x8xf32>
    %cst_39 = arith.constant 1.000000e+00 : f32
    %181 = vector.broadcast %cst_39 : f32 to vector<1x8x8xf32>
    %182 = arith.subf %181, %177 : vector<1x8x8xf32>
    %183 = vector.broadcast %172 : vector<2x8x1xf32> to vector<2x8x8xf32>
    %184 = vector.broadcast %168 : vector<2x1x8xf32> to vector<2x8x8xf32>
    %185 = arith.mulf %183, %184 : vector<2x8x8xf32>
    %186 = arith.subf %149, %185 : vector<2x8x8xf32>
    %187 = vector.broadcast %182 : vector<1x8x8xf32> to vector<2x8x8xf32>
    %188 = arith.mulf %187, %186 : vector<2x8x8xf32>
    %189 = arith.addf %180, %188 : vector<2x8x8xf32>
    %190 = vector.broadcast %177 : vector<1x8x8xf32> to vector<2x8x8xf32>
    %191 = vector.broadcast %171 : vector<2x1x8xf32> to vector<2x8x8xf32>
    %192 = arith.mulf %190, %191 : vector<2x8x8xf32>
    %cst_40 = arith.constant 1.000000e+00 : f32
    %193 = vector.broadcast %cst_40 : f32 to vector<1x8x8xf32>
    %194 = arith.subf %193, %177 : vector<1x8x8xf32>
    %195 = vector.broadcast %172 : vector<2x8x1xf32> to vector<2x8x8xf32>
    %196 = vector.broadcast %171 : vector<2x1x8xf32> to vector<2x8x8xf32>
    %197 = arith.mulf %195, %196 : vector<2x8x8xf32>
    %198 = arith.subf %161, %197 : vector<2x8x8xf32>
    %199 = vector.broadcast %194 : vector<1x8x8xf32> to vector<2x8x8xf32>
    %200 = arith.mulf %199, %198 : vector<2x8x8xf32>
    %201 = arith.addf %192, %200 : vector<2x8x8xf32>
    %202 = vector.extract_strided_slice %189 {offsets = [0, 2, 2], sizes = [2, 1, 1], strides = [1, 1, 1]} : vector<2x8x8xf32> to vector<2x1x1xf32>
    %203 = vector.shape_cast %202 : vector<2x1x1xf32> to vector<2x1xf32>
    %204 = math.log %203 : vector<2x1xf32>
    %205 = arith.addf %165, %204 : vector<2x1xf32>
    %206 = vector.extract_strided_slice %189 {offsets = [0, 2, 0], sizes = [2, 1, 8], strides = [1, 1, 1]} : vector<2x8x8xf32> to vector<2x1x8xf32>
    %207 = vector.broadcast %202 : vector<2x1x1xf32> to vector<2x1x8xf32>
    %208 = arith.divf %206, %207 : vector<2x1x8xf32>
    %209 = vector.extract_strided_slice %201 {offsets = [0, 2, 0], sizes = [2, 1, 8], strides = [1, 1, 1]} : vector<2x8x8xf32> to vector<2x1x8xf32>
    %210 = vector.broadcast %202 : vector<2x1x1xf32> to vector<2x1x8xf32>
    %211 = arith.divf %209, %210 : vector<2x1x8xf32>
    %212 = vector.extract_strided_slice %189 {offsets = [0, 0, 2], sizes = [2, 8, 1], strides = [1, 1, 1]} : vector<2x8x8xf32> to vector<2x8x1xf32>
    %c2_i32 = arith.constant 2 : i32
    %213 = vector.broadcast %c2_i32 : i32 to vector<8x8xi32>
    %214 = arith.cmpi eq, %121, %213 : vector<8x8xi32>
    %215 = arith.extui %214 : vector<8x8xi1> to vector<8x8xi32>
    %216 = arith.sitofp %215 : vector<8x8xi32> to vector<8x8xf32>
    %217 = vector.shape_cast %216 : vector<8x8xf32> to vector<1x8x8xf32>
    %218 = vector.broadcast %217 : vector<1x8x8xf32> to vector<2x8x8xf32>
    %219 = vector.broadcast %208 : vector<2x1x8xf32> to vector<2x8x8xf32>
    %220 = arith.mulf %218, %219 : vector<2x8x8xf32>
    %cst_41 = arith.constant 1.000000e+00 : f32
    %221 = vector.broadcast %cst_41 : f32 to vector<1x8x8xf32>
    %222 = arith.subf %221, %217 : vector<1x8x8xf32>
    %223 = vector.broadcast %212 : vector<2x8x1xf32> to vector<2x8x8xf32>
    %224 = vector.broadcast %208 : vector<2x1x8xf32> to vector<2x8x8xf32>
    %225 = arith.mulf %223, %224 : vector<2x8x8xf32>
    %226 = arith.subf %189, %225 : vector<2x8x8xf32>
    %227 = vector.broadcast %222 : vector<1x8x8xf32> to vector<2x8x8xf32>
    %228 = arith.mulf %227, %226 : vector<2x8x8xf32>
    %229 = arith.addf %220, %228 : vector<2x8x8xf32>
    %230 = vector.broadcast %217 : vector<1x8x8xf32> to vector<2x8x8xf32>
    %231 = vector.broadcast %211 : vector<2x1x8xf32> to vector<2x8x8xf32>
    %232 = arith.mulf %230, %231 : vector<2x8x8xf32>
    %cst_42 = arith.constant 1.000000e+00 : f32
    %233 = vector.broadcast %cst_42 : f32 to vector<1x8x8xf32>
    %234 = arith.subf %233, %217 : vector<1x8x8xf32>
    %235 = vector.broadcast %212 : vector<2x8x1xf32> to vector<2x8x8xf32>
    %236 = vector.broadcast %211 : vector<2x1x8xf32> to vector<2x8x8xf32>
    %237 = arith.mulf %235, %236 : vector<2x8x8xf32>
    %238 = arith.subf %201, %237 : vector<2x8x8xf32>
    %239 = vector.broadcast %234 : vector<1x8x8xf32> to vector<2x8x8xf32>
    %240 = arith.mulf %239, %238 : vector<2x8x8xf32>
    %241 = arith.addf %232, %240 : vector<2x8x8xf32>
    %242 = vector.extract_strided_slice %229 {offsets = [0, 3, 3], sizes = [2, 1, 1], strides = [1, 1, 1]} : vector<2x8x8xf32> to vector<2x1x1xf32>
    %243 = vector.shape_cast %242 : vector<2x1x1xf32> to vector<2x1xf32>
    %244 = math.log %243 : vector<2x1xf32>
    %245 = arith.addf %205, %244 : vector<2x1xf32>
    %246 = vector.extract_strided_slice %229 {offsets = [0, 3, 0], sizes = [2, 1, 8], strides = [1, 1, 1]} : vector<2x8x8xf32> to vector<2x1x8xf32>
    %247 = vector.broadcast %242 : vector<2x1x1xf32> to vector<2x1x8xf32>
    %248 = arith.divf %246, %247 : vector<2x1x8xf32>
    %249 = vector.extract_strided_slice %241 {offsets = [0, 3, 0], sizes = [2, 1, 8], strides = [1, 1, 1]} : vector<2x8x8xf32> to vector<2x1x8xf32>
    %250 = vector.broadcast %242 : vector<2x1x1xf32> to vector<2x1x8xf32>
    %251 = arith.divf %249, %250 : vector<2x1x8xf32>
    %252 = vector.extract_strided_slice %229 {offsets = [0, 0, 3], sizes = [2, 8, 1], strides = [1, 1, 1]} : vector<2x8x8xf32> to vector<2x8x1xf32>
    %c3_i32 = arith.constant 3 : i32
    %253 = vector.broadcast %c3_i32 : i32 to vector<8x8xi32>
    %254 = arith.cmpi eq, %121, %253 : vector<8x8xi32>
    %255 = arith.extui %254 : vector<8x8xi1> to vector<8x8xi32>
    %256 = arith.sitofp %255 : vector<8x8xi32> to vector<8x8xf32>
    %257 = vector.shape_cast %256 : vector<8x8xf32> to vector<1x8x8xf32>
    %258 = vector.broadcast %257 : vector<1x8x8xf32> to vector<2x8x8xf32>
    %259 = vector.broadcast %248 : vector<2x1x8xf32> to vector<2x8x8xf32>
    %260 = arith.mulf %258, %259 : vector<2x8x8xf32>
    %cst_43 = arith.constant 1.000000e+00 : f32
    %261 = vector.broadcast %cst_43 : f32 to vector<1x8x8xf32>
    %262 = arith.subf %261, %257 : vector<1x8x8xf32>
    %263 = vector.broadcast %252 : vector<2x8x1xf32> to vector<2x8x8xf32>
    %264 = vector.broadcast %248 : vector<2x1x8xf32> to vector<2x8x8xf32>
    %265 = arith.mulf %263, %264 : vector<2x8x8xf32>
    %266 = arith.subf %229, %265 : vector<2x8x8xf32>
    %267 = vector.broadcast %262 : vector<1x8x8xf32> to vector<2x8x8xf32>
    %268 = arith.mulf %267, %266 : vector<2x8x8xf32>
    %269 = arith.addf %260, %268 : vector<2x8x8xf32>
    %270 = vector.broadcast %257 : vector<1x8x8xf32> to vector<2x8x8xf32>
    %271 = vector.broadcast %251 : vector<2x1x8xf32> to vector<2x8x8xf32>
    %272 = arith.mulf %270, %271 : vector<2x8x8xf32>
    %cst_44 = arith.constant 1.000000e+00 : f32
    %273 = vector.broadcast %cst_44 : f32 to vector<1x8x8xf32>
    %274 = arith.subf %273, %257 : vector<1x8x8xf32>
    %275 = vector.broadcast %252 : vector<2x8x1xf32> to vector<2x8x8xf32>
    %276 = vector.broadcast %251 : vector<2x1x8xf32> to vector<2x8x8xf32>
    %277 = arith.mulf %275, %276 : vector<2x8x8xf32>
    %278 = arith.subf %241, %277 : vector<2x8x8xf32>
    %279 = vector.broadcast %274 : vector<1x8x8xf32> to vector<2x8x8xf32>
    %280 = arith.mulf %279, %278 : vector<2x8x8xf32>
    %281 = arith.addf %272, %280 : vector<2x8x8xf32>
    %282 = vector.extract_strided_slice %269 {offsets = [0, 4, 4], sizes = [2, 1, 1], strides = [1, 1, 1]} : vector<2x8x8xf32> to vector<2x1x1xf32>
    %283 = vector.shape_cast %282 : vector<2x1x1xf32> to vector<2x1xf32>
    %284 = math.log %283 : vector<2x1xf32>
    %285 = arith.addf %245, %284 : vector<2x1xf32>
    %286 = vector.extract_strided_slice %269 {offsets = [0, 4, 0], sizes = [2, 1, 8], strides = [1, 1, 1]} : vector<2x8x8xf32> to vector<2x1x8xf32>
    %287 = vector.broadcast %282 : vector<2x1x1xf32> to vector<2x1x8xf32>
    %288 = arith.divf %286, %287 : vector<2x1x8xf32>
    %289 = vector.extract_strided_slice %281 {offsets = [0, 4, 0], sizes = [2, 1, 8], strides = [1, 1, 1]} : vector<2x8x8xf32> to vector<2x1x8xf32>
    %290 = vector.broadcast %282 : vector<2x1x1xf32> to vector<2x1x8xf32>
    %291 = arith.divf %289, %290 : vector<2x1x8xf32>
    %292 = vector.extract_strided_slice %269 {offsets = [0, 0, 4], sizes = [2, 8, 1], strides = [1, 1, 1]} : vector<2x8x8xf32> to vector<2x8x1xf32>
    %c4_i32 = arith.constant 4 : i32
    %293 = vector.broadcast %c4_i32 : i32 to vector<8x8xi32>
    %294 = arith.cmpi eq, %121, %293 : vector<8x8xi32>
    %295 = arith.extui %294 : vector<8x8xi1> to vector<8x8xi32>
    %296 = arith.sitofp %295 : vector<8x8xi32> to vector<8x8xf32>
    %297 = vector.shape_cast %296 : vector<8x8xf32> to vector<1x8x8xf32>
    %298 = vector.broadcast %297 : vector<1x8x8xf32> to vector<2x8x8xf32>
    %299 = vector.broadcast %288 : vector<2x1x8xf32> to vector<2x8x8xf32>
    %300 = arith.mulf %298, %299 : vector<2x8x8xf32>
    %cst_45 = arith.constant 1.000000e+00 : f32
    %301 = vector.broadcast %cst_45 : f32 to vector<1x8x8xf32>
    %302 = arith.subf %301, %297 : vector<1x8x8xf32>
    %303 = vector.broadcast %292 : vector<2x8x1xf32> to vector<2x8x8xf32>
    %304 = vector.broadcast %288 : vector<2x1x8xf32> to vector<2x8x8xf32>
    %305 = arith.mulf %303, %304 : vector<2x8x8xf32>
    %306 = arith.subf %269, %305 : vector<2x8x8xf32>
    %307 = vector.broadcast %302 : vector<1x8x8xf32> to vector<2x8x8xf32>
    %308 = arith.mulf %307, %306 : vector<2x8x8xf32>
    %309 = arith.addf %300, %308 : vector<2x8x8xf32>
    %310 = vector.broadcast %297 : vector<1x8x8xf32> to vector<2x8x8xf32>
    %311 = vector.broadcast %291 : vector<2x1x8xf32> to vector<2x8x8xf32>
    %312 = arith.mulf %310, %311 : vector<2x8x8xf32>
    %cst_46 = arith.constant 1.000000e+00 : f32
    %313 = vector.broadcast %cst_46 : f32 to vector<1x8x8xf32>
    %314 = arith.subf %313, %297 : vector<1x8x8xf32>
    %315 = vector.broadcast %292 : vector<2x8x1xf32> to vector<2x8x8xf32>
    %316 = vector.broadcast %291 : vector<2x1x8xf32> to vector<2x8x8xf32>
    %317 = arith.mulf %315, %316 : vector<2x8x8xf32>
    %318 = arith.subf %281, %317 : vector<2x8x8xf32>
    %319 = vector.broadcast %314 : vector<1x8x8xf32> to vector<2x8x8xf32>
    %320 = arith.mulf %319, %318 : vector<2x8x8xf32>
    %321 = arith.addf %312, %320 : vector<2x8x8xf32>
    %322 = vector.extract_strided_slice %309 {offsets = [0, 5, 5], sizes = [2, 1, 1], strides = [1, 1, 1]} : vector<2x8x8xf32> to vector<2x1x1xf32>
    %323 = vector.shape_cast %322 : vector<2x1x1xf32> to vector<2x1xf32>
    %324 = math.log %323 : vector<2x1xf32>
    %325 = arith.addf %285, %324 : vector<2x1xf32>
    %326 = vector.extract_strided_slice %309 {offsets = [0, 5, 0], sizes = [2, 1, 8], strides = [1, 1, 1]} : vector<2x8x8xf32> to vector<2x1x8xf32>
    %327 = vector.broadcast %322 : vector<2x1x1xf32> to vector<2x1x8xf32>
    %328 = arith.divf %326, %327 : vector<2x1x8xf32>
    %329 = vector.extract_strided_slice %321 {offsets = [0, 5, 0], sizes = [2, 1, 8], strides = [1, 1, 1]} : vector<2x8x8xf32> to vector<2x1x8xf32>
    %330 = vector.broadcast %322 : vector<2x1x1xf32> to vector<2x1x8xf32>
    %331 = arith.divf %329, %330 : vector<2x1x8xf32>
    %332 = vector.extract_strided_slice %309 {offsets = [0, 0, 5], sizes = [2, 8, 1], strides = [1, 1, 1]} : vector<2x8x8xf32> to vector<2x8x1xf32>
    %c5_i32 = arith.constant 5 : i32
    %333 = vector.broadcast %c5_i32 : i32 to vector<8x8xi32>
    %334 = arith.cmpi eq, %121, %333 : vector<8x8xi32>
    %335 = arith.extui %334 : vector<8x8xi1> to vector<8x8xi32>
    %336 = arith.sitofp %335 : vector<8x8xi32> to vector<8x8xf32>
    %337 = vector.shape_cast %336 : vector<8x8xf32> to vector<1x8x8xf32>
    %338 = vector.broadcast %337 : vector<1x8x8xf32> to vector<2x8x8xf32>
    %339 = vector.broadcast %328 : vector<2x1x8xf32> to vector<2x8x8xf32>
    %340 = arith.mulf %338, %339 : vector<2x8x8xf32>
    %cst_47 = arith.constant 1.000000e+00 : f32
    %341 = vector.broadcast %cst_47 : f32 to vector<1x8x8xf32>
    %342 = arith.subf %341, %337 : vector<1x8x8xf32>
    %343 = vector.broadcast %332 : vector<2x8x1xf32> to vector<2x8x8xf32>
    %344 = vector.broadcast %328 : vector<2x1x8xf32> to vector<2x8x8xf32>
    %345 = arith.mulf %343, %344 : vector<2x8x8xf32>
    %346 = arith.subf %309, %345 : vector<2x8x8xf32>
    %347 = vector.broadcast %342 : vector<1x8x8xf32> to vector<2x8x8xf32>
    %348 = arith.mulf %347, %346 : vector<2x8x8xf32>
    %349 = arith.addf %340, %348 : vector<2x8x8xf32>
    %350 = vector.broadcast %337 : vector<1x8x8xf32> to vector<2x8x8xf32>
    %351 = vector.broadcast %331 : vector<2x1x8xf32> to vector<2x8x8xf32>
    %352 = arith.mulf %350, %351 : vector<2x8x8xf32>
    %cst_48 = arith.constant 1.000000e+00 : f32
    %353 = vector.broadcast %cst_48 : f32 to vector<1x8x8xf32>
    %354 = arith.subf %353, %337 : vector<1x8x8xf32>
    %355 = vector.broadcast %332 : vector<2x8x1xf32> to vector<2x8x8xf32>
    %356 = vector.broadcast %331 : vector<2x1x8xf32> to vector<2x8x8xf32>
    %357 = arith.mulf %355, %356 : vector<2x8x8xf32>
    %358 = arith.subf %321, %357 : vector<2x8x8xf32>
    %359 = vector.broadcast %354 : vector<1x8x8xf32> to vector<2x8x8xf32>
    %360 = arith.mulf %359, %358 : vector<2x8x8xf32>
    %361 = arith.addf %352, %360 : vector<2x8x8xf32>
    %362 = vector.extract_strided_slice %349 {offsets = [0, 6, 6], sizes = [2, 1, 1], strides = [1, 1, 1]} : vector<2x8x8xf32> to vector<2x1x1xf32>
    %363 = vector.shape_cast %362 : vector<2x1x1xf32> to vector<2x1xf32>
    %364 = math.log %363 : vector<2x1xf32>
    %365 = arith.addf %325, %364 : vector<2x1xf32>
    %366 = vector.extract_strided_slice %349 {offsets = [0, 6, 0], sizes = [2, 1, 8], strides = [1, 1, 1]} : vector<2x8x8xf32> to vector<2x1x8xf32>
    %367 = vector.broadcast %362 : vector<2x1x1xf32> to vector<2x1x8xf32>
    %368 = arith.divf %366, %367 : vector<2x1x8xf32>
    %369 = vector.extract_strided_slice %361 {offsets = [0, 6, 0], sizes = [2, 1, 8], strides = [1, 1, 1]} : vector<2x8x8xf32> to vector<2x1x8xf32>
    %370 = vector.broadcast %362 : vector<2x1x1xf32> to vector<2x1x8xf32>
    %371 = arith.divf %369, %370 : vector<2x1x8xf32>
    %372 = vector.extract_strided_slice %349 {offsets = [0, 0, 6], sizes = [2, 8, 1], strides = [1, 1, 1]} : vector<2x8x8xf32> to vector<2x8x1xf32>
    %c6_i32 = arith.constant 6 : i32
    %373 = vector.broadcast %c6_i32 : i32 to vector<8x8xi32>
    %374 = arith.cmpi eq, %121, %373 : vector<8x8xi32>
    %375 = arith.extui %374 : vector<8x8xi1> to vector<8x8xi32>
    %376 = arith.sitofp %375 : vector<8x8xi32> to vector<8x8xf32>
    %377 = vector.shape_cast %376 : vector<8x8xf32> to vector<1x8x8xf32>
    %378 = vector.broadcast %377 : vector<1x8x8xf32> to vector<2x8x8xf32>
    %379 = vector.broadcast %368 : vector<2x1x8xf32> to vector<2x8x8xf32>
    %380 = arith.mulf %378, %379 : vector<2x8x8xf32>
    %cst_49 = arith.constant 1.000000e+00 : f32
    %381 = vector.broadcast %cst_49 : f32 to vector<1x8x8xf32>
    %382 = arith.subf %381, %377 : vector<1x8x8xf32>
    %383 = vector.broadcast %372 : vector<2x8x1xf32> to vector<2x8x8xf32>
    %384 = vector.broadcast %368 : vector<2x1x8xf32> to vector<2x8x8xf32>
    %385 = arith.mulf %383, %384 : vector<2x8x8xf32>
    %386 = arith.subf %349, %385 : vector<2x8x8xf32>
    %387 = vector.broadcast %382 : vector<1x8x8xf32> to vector<2x8x8xf32>
    %388 = arith.mulf %387, %386 : vector<2x8x8xf32>
    %389 = arith.addf %380, %388 : vector<2x8x8xf32>
    %390 = vector.broadcast %377 : vector<1x8x8xf32> to vector<2x8x8xf32>
    %391 = vector.broadcast %371 : vector<2x1x8xf32> to vector<2x8x8xf32>
    %392 = arith.mulf %390, %391 : vector<2x8x8xf32>
    %cst_50 = arith.constant 1.000000e+00 : f32
    %393 = vector.broadcast %cst_50 : f32 to vector<1x8x8xf32>
    %394 = arith.subf %393, %377 : vector<1x8x8xf32>
    %395 = vector.broadcast %372 : vector<2x8x1xf32> to vector<2x8x8xf32>
    %396 = vector.broadcast %371 : vector<2x1x8xf32> to vector<2x8x8xf32>
    %397 = arith.mulf %395, %396 : vector<2x8x8xf32>
    %398 = arith.subf %361, %397 : vector<2x8x8xf32>
    %399 = vector.broadcast %394 : vector<1x8x8xf32> to vector<2x8x8xf32>
    %400 = arith.mulf %399, %398 : vector<2x8x8xf32>
    %401 = arith.addf %392, %400 : vector<2x8x8xf32>
    %402 = vector.extract_strided_slice %389 {offsets = [0, 7, 7], sizes = [2, 1, 1], strides = [1, 1, 1]} : vector<2x8x8xf32> to vector<2x1x1xf32>
    %403 = vector.shape_cast %402 : vector<2x1x1xf32> to vector<2x1xf32>
    %404 = math.log %403 : vector<2x1xf32>
    %405 = arith.addf %365, %404 : vector<2x1xf32>
    %406 = vector.extract_strided_slice %401 {offsets = [0, 7, 0], sizes = [2, 1, 8], strides = [1, 1, 1]} : vector<2x8x8xf32> to vector<2x1x8xf32>
    %407 = vector.broadcast %402 : vector<2x1x1xf32> to vector<2x1x8xf32>
    %408 = arith.divf %406, %407 : vector<2x1x8xf32>
    %409 = vector.extract_strided_slice %389 {offsets = [0, 0, 7], sizes = [2, 8, 1], strides = [1, 1, 1]} : vector<2x8x8xf32> to vector<2x8x1xf32>
    %c7_i32 = arith.constant 7 : i32
    %410 = vector.broadcast %c7_i32 : i32 to vector<8x8xi32>
    %411 = arith.cmpi eq, %121, %410 : vector<8x8xi32>
    %412 = arith.extui %411 : vector<8x8xi1> to vector<8x8xi32>
    %413 = arith.sitofp %412 : vector<8x8xi32> to vector<8x8xf32>
    %414 = vector.shape_cast %413 : vector<8x8xf32> to vector<1x8x8xf32>
    %415 = vector.broadcast %414 : vector<1x8x8xf32> to vector<2x8x8xf32>
    %416 = vector.broadcast %408 : vector<2x1x8xf32> to vector<2x8x8xf32>
    %417 = arith.mulf %415, %416 : vector<2x8x8xf32>
    %cst_51 = arith.constant 1.000000e+00 : f32
    %418 = vector.broadcast %cst_51 : f32 to vector<1x8x8xf32>
    %419 = arith.subf %418, %414 : vector<1x8x8xf32>
    %420 = vector.broadcast %409 : vector<2x8x1xf32> to vector<2x8x8xf32>
    %421 = vector.broadcast %408 : vector<2x1x8xf32> to vector<2x8x8xf32>
    %422 = arith.mulf %420, %421 : vector<2x8x8xf32>
    %423 = arith.subf %401, %422 : vector<2x8x8xf32>
    %424 = vector.broadcast %419 : vector<1x8x8xf32> to vector<2x8x8xf32>
    %425 = arith.mulf %424, %423 : vector<2x8x8xf32>
    %426 = arith.addf %417, %425 : vector<2x8x8xf32>
    %c0_52 = arith.constant 0 : index
    %c0_53 = arith.constant 0 : index
    %c0_54 = arith.constant 0 : index
    %c0_55 = arith.constant 0 : index
    %427 = vector.load %arg2[%c0_52, %c0_53, %c0_54, %c0_55] : memref<1x2x8x4xf32, #tpu.memory_space<vmem>>, vector<1x2x8x4xf32>
    %428 = vector.shape_cast %427 : vector<1x2x8x4xf32> to vector<2x8x4xf32>
    %c0_56 = arith.constant 0 : index
    %c0_57 = arith.constant 0 : index
    %c0_58 = arith.constant 0 : index
    %c0_59 = arith.constant 0 : index
    %429 = vector.load %arg3[%c0_56, %c0_57, %c0_58, %c0_59] : memref<1x2x8x4xf32, #tpu.memory_space<vmem>>, vector<1x2x8x4xf32>
    %430 = vector.shape_cast %429 : vector<1x2x8x4xf32> to vector<2x8x4xf32>
    %cst_60 = arith.constant 0.000000e+00 : f32
    %431 = vector.broadcast %cst_60 : f32 to vector<2x8x8xf32>
    %432 = vector.extract_strided_slice %428 {offsets = [0, 0, 0], sizes = [2, 8, 1], strides = [1, 1, 1]} : vector<2x8x4xf32> to vector<2x8x1xf32>
    %433 = vector.shape_cast %432 : vector<2x8x1xf32> to vector<2x8xf32>
    %434 = vector.shape_cast %433 : vector<2x8xf32> to vector<2x8x1xf32>
    %435 = vector.shape_cast %433 : vector<2x8xf32> to vector<2x1x8xf32>
    %436 = vector.broadcast %434 : vector<2x8x1xf32> to vector<2x8x8xf32>
    %437 = vector.broadcast %435 : vector<2x1x8xf32> to vector<2x8x8xf32>
    %438 = arith.mulf %436, %437 : vector<2x8x8xf32>
    %439 = arith.addf %431, %438 : vector<2x8x8xf32>
    %440 = vector.extract_strided_slice %428 {offsets = [0, 0, 1], sizes = [2, 8, 1], strides = [1, 1, 1]} : vector<2x8x4xf32> to vector<2x8x1xf32>
    %441 = vector.shape_cast %440 : vector<2x8x1xf32> to vector<2x8xf32>
    %442 = vector.shape_cast %441 : vector<2x8xf32> to vector<2x8x1xf32>
    %443 = vector.shape_cast %441 : vector<2x8xf32> to vector<2x1x8xf32>
    %444 = vector.broadcast %442 : vector<2x8x1xf32> to vector<2x8x8xf32>
    %445 = vector.broadcast %443 : vector<2x1x8xf32> to vector<2x8x8xf32>
    %446 = arith.mulf %444, %445 : vector<2x8x8xf32>
    %447 = arith.addf %439, %446 : vector<2x8x8xf32>
    %448 = vector.extract_strided_slice %428 {offsets = [0, 0, 2], sizes = [2, 8, 1], strides = [1, 1, 1]} : vector<2x8x4xf32> to vector<2x8x1xf32>
    %449 = vector.shape_cast %448 : vector<2x8x1xf32> to vector<2x8xf32>
    %450 = vector.shape_cast %449 : vector<2x8xf32> to vector<2x8x1xf32>
    %451 = vector.shape_cast %449 : vector<2x8xf32> to vector<2x1x8xf32>
    %452 = vector.broadcast %450 : vector<2x8x1xf32> to vector<2x8x8xf32>
    %453 = vector.broadcast %451 : vector<2x1x8xf32> to vector<2x8x8xf32>
    %454 = arith.mulf %452, %453 : vector<2x8x8xf32>
    %455 = arith.addf %447, %454 : vector<2x8x8xf32>
    %456 = vector.extract_strided_slice %428 {offsets = [0, 0, 3], sizes = [2, 8, 1], strides = [1, 1, 1]} : vector<2x8x4xf32> to vector<2x8x1xf32>
    %457 = vector.shape_cast %456 : vector<2x8x1xf32> to vector<2x8xf32>
    %458 = vector.shape_cast %457 : vector<2x8xf32> to vector<2x8x1xf32>
    %459 = vector.shape_cast %457 : vector<2x8xf32> to vector<2x1x8xf32>
    %460 = vector.broadcast %458 : vector<2x8x1xf32> to vector<2x8x8xf32>
    %461 = vector.broadcast %459 : vector<2x1x8xf32> to vector<2x8x8xf32>
    %462 = arith.mulf %460, %461 : vector<2x8x8xf32>
    %463 = arith.addf %455, %462 : vector<2x8x8xf32>
    %464 = vector.extract_strided_slice %430 {offsets = [0, 0, 0], sizes = [2, 8, 1], strides = [1, 1, 1]} : vector<2x8x4xf32> to vector<2x8x1xf32>
    %465 = vector.shape_cast %464 : vector<2x8x1xf32> to vector<2x8xf32>
    %466 = vector.shape_cast %465 : vector<2x8xf32> to vector<2x8x1xf32>
    %467 = vector.shape_cast %465 : vector<2x8xf32> to vector<2x1x8xf32>
    %468 = vector.broadcast %466 : vector<2x8x1xf32> to vector<2x8x8xf32>
    %469 = vector.broadcast %467 : vector<2x1x8xf32> to vector<2x8x8xf32>
    %470 = arith.mulf %468, %469 : vector<2x8x8xf32>
    %471 = arith.addf %463, %470 : vector<2x8x8xf32>
    %472 = vector.extract_strided_slice %430 {offsets = [0, 0, 1], sizes = [2, 8, 1], strides = [1, 1, 1]} : vector<2x8x4xf32> to vector<2x8x1xf32>
    %473 = vector.shape_cast %472 : vector<2x8x1xf32> to vector<2x8xf32>
    %474 = vector.shape_cast %473 : vector<2x8xf32> to vector<2x8x1xf32>
    %475 = vector.shape_cast %473 : vector<2x8xf32> to vector<2x1x8xf32>
    %476 = vector.broadcast %474 : vector<2x8x1xf32> to vector<2x8x8xf32>
    %477 = vector.broadcast %475 : vector<2x1x8xf32> to vector<2x8x8xf32>
    %478 = arith.mulf %476, %477 : vector<2x8x8xf32>
    %479 = arith.addf %471, %478 : vector<2x8x8xf32>
    %480 = vector.extract_strided_slice %430 {offsets = [0, 0, 2], sizes = [2, 8, 1], strides = [1, 1, 1]} : vector<2x8x4xf32> to vector<2x8x1xf32>
    %481 = vector.shape_cast %480 : vector<2x8x1xf32> to vector<2x8xf32>
    %482 = vector.shape_cast %481 : vector<2x8xf32> to vector<2x8x1xf32>
    %483 = vector.shape_cast %481 : vector<2x8xf32> to vector<2x1x8xf32>
    %484 = vector.broadcast %482 : vector<2x8x1xf32> to vector<2x8x8xf32>
    %485 = vector.broadcast %483 : vector<2x1x8xf32> to vector<2x8x8xf32>
    %486 = arith.mulf %484, %485 : vector<2x8x8xf32>
    %487 = arith.addf %479, %486 : vector<2x8x8xf32>
    %488 = vector.extract_strided_slice %430 {offsets = [0, 0, 3], sizes = [2, 8, 1], strides = [1, 1, 1]} : vector<2x8x4xf32> to vector<2x8x1xf32>
    %489 = vector.shape_cast %488 : vector<2x8x1xf32> to vector<2x8xf32>
    %490 = vector.shape_cast %489 : vector<2x8xf32> to vector<2x8x1xf32>
    %491 = vector.shape_cast %489 : vector<2x8xf32> to vector<2x1x8xf32>
    %492 = vector.broadcast %490 : vector<2x8x1xf32> to vector<2x8x8xf32>
    %493 = vector.broadcast %491 : vector<2x1x8xf32> to vector<2x8x8xf32>
    %494 = arith.mulf %492, %493 : vector<2x8x8xf32>
    %495 = arith.addf %487, %494 : vector<2x8x8xf32>
    %496 = arith.addf %426, %495 : vector<2x8x8xf32>
    %497 = tpu.iota {dimensions = array<i32: 0>} : vector<8x8xi32>
    %498 = vector.extract_strided_slice %496 {offsets = [0, 0, 0], sizes = [2, 1, 1], strides = [1, 1, 1]} : vector<2x8x8xf32> to vector<2x1x1xf32>
    %499 = vector.shape_cast %498 : vector<2x1x1xf32> to vector<2x1xf32>
    %500 = math.log %499 : vector<2x1xf32>
    %501 = arith.addf %120, %500 : vector<2x1xf32>
    %502 = vector.extract_strided_slice %496 {offsets = [0, 0, 0], sizes = [2, 1, 8], strides = [1, 1, 1]} : vector<2x8x8xf32> to vector<2x1x8xf32>
    %503 = vector.broadcast %498 : vector<2x1x1xf32> to vector<2x1x8xf32>
    %504 = arith.divf %502, %503 : vector<2x1x8xf32>
    %505 = vector.extract_strided_slice %119 {offsets = [0, 0, 0], sizes = [2, 1, 8], strides = [1, 1, 1]} : vector<2x8x8xf32> to vector<2x1x8xf32>
    %506 = vector.broadcast %498 : vector<2x1x1xf32> to vector<2x1x8xf32>
    %507 = arith.divf %505, %506 : vector<2x1x8xf32>
    %508 = vector.extract_strided_slice %496 {offsets = [0, 0, 0], sizes = [2, 8, 1], strides = [1, 1, 1]} : vector<2x8x8xf32> to vector<2x8x1xf32>
    %c0_i32_61 = arith.constant 0 : i32
    %509 = vector.broadcast %c0_i32_61 : i32 to vector<8x8xi32>
    %510 = arith.cmpi eq, %497, %509 : vector<8x8xi32>
    %511 = arith.extui %510 : vector<8x8xi1> to vector<8x8xi32>
    %512 = arith.sitofp %511 : vector<8x8xi32> to vector<8x8xf32>
    %513 = vector.shape_cast %512 : vector<8x8xf32> to vector<1x8x8xf32>
    %514 = vector.broadcast %513 : vector<1x8x8xf32> to vector<2x8x8xf32>
    %515 = vector.broadcast %504 : vector<2x1x8xf32> to vector<2x8x8xf32>
    %516 = arith.mulf %514, %515 : vector<2x8x8xf32>
    %cst_62 = arith.constant 1.000000e+00 : f32
    %517 = vector.broadcast %cst_62 : f32 to vector<1x8x8xf32>
    %518 = arith.subf %517, %513 : vector<1x8x8xf32>
    %519 = vector.broadcast %508 : vector<2x8x1xf32> to vector<2x8x8xf32>
    %520 = vector.broadcast %504 : vector<2x1x8xf32> to vector<2x8x8xf32>
    %521 = arith.mulf %519, %520 : vector<2x8x8xf32>
    %522 = arith.subf %496, %521 : vector<2x8x8xf32>
    %523 = vector.broadcast %518 : vector<1x8x8xf32> to vector<2x8x8xf32>
    %524 = arith.mulf %523, %522 : vector<2x8x8xf32>
    %525 = arith.addf %516, %524 : vector<2x8x8xf32>
    %526 = vector.broadcast %513 : vector<1x8x8xf32> to vector<2x8x8xf32>
    %527 = vector.broadcast %507 : vector<2x1x8xf32> to vector<2x8x8xf32>
    %528 = arith.mulf %526, %527 : vector<2x8x8xf32>
    %cst_63 = arith.constant 1.000000e+00 : f32
    %529 = vector.broadcast %cst_63 : f32 to vector<1x8x8xf32>
    %530 = arith.subf %529, %513 : vector<1x8x8xf32>
    %531 = vector.broadcast %508 : vector<2x8x1xf32> to vector<2x8x8xf32>
    %532 = vector.broadcast %507 : vector<2x1x8xf32> to vector<2x8x8xf32>
    %533 = arith.mulf %531, %532 : vector<2x8x8xf32>
    %534 = arith.subf %119, %533 : vector<2x8x8xf32>
    %535 = vector.broadcast %530 : vector<1x8x8xf32> to vector<2x8x8xf32>
    %536 = arith.mulf %535, %534 : vector<2x8x8xf32>
    %537 = arith.addf %528, %536 : vector<2x8x8xf32>
    %538 = vector.extract_strided_slice %525 {offsets = [0, 1, 1], sizes = [2, 1, 1], strides = [1, 1, 1]} : vector<2x8x8xf32> to vector<2x1x1xf32>
    %539 = vector.shape_cast %538 : vector<2x1x1xf32> to vector<2x1xf32>
    %540 = math.log %539 : vector<2x1xf32>
    %541 = arith.addf %501, %540 : vector<2x1xf32>
    %542 = vector.extract_strided_slice %525 {offsets = [0, 1, 0], sizes = [2, 1, 8], strides = [1, 1, 1]} : vector<2x8x8xf32> to vector<2x1x8xf32>
    %543 = vector.broadcast %538 : vector<2x1x1xf32> to vector<2x1x8xf32>
    %544 = arith.divf %542, %543 : vector<2x1x8xf32>
    %545 = vector.extract_strided_slice %537 {offsets = [0, 1, 0], sizes = [2, 1, 8], strides = [1, 1, 1]} : vector<2x8x8xf32> to vector<2x1x8xf32>
    %546 = vector.broadcast %538 : vector<2x1x1xf32> to vector<2x1x8xf32>
    %547 = arith.divf %545, %546 : vector<2x1x8xf32>
    %548 = vector.extract_strided_slice %525 {offsets = [0, 0, 1], sizes = [2, 8, 1], strides = [1, 1, 1]} : vector<2x8x8xf32> to vector<2x8x1xf32>
    %c1_i32_64 = arith.constant 1 : i32
    %549 = vector.broadcast %c1_i32_64 : i32 to vector<8x8xi32>
    %550 = arith.cmpi eq, %497, %549 : vector<8x8xi32>
    %551 = arith.extui %550 : vector<8x8xi1> to vector<8x8xi32>
    %552 = arith.sitofp %551 : vector<8x8xi32> to vector<8x8xf32>
    %553 = vector.shape_cast %552 : vector<8x8xf32> to vector<1x8x8xf32>
    %554 = vector.broadcast %553 : vector<1x8x8xf32> to vector<2x8x8xf32>
    %555 = vector.broadcast %544 : vector<2x1x8xf32> to vector<2x8x8xf32>
    %556 = arith.mulf %554, %555 : vector<2x8x8xf32>
    %cst_65 = arith.constant 1.000000e+00 : f32
    %557 = vector.broadcast %cst_65 : f32 to vector<1x8x8xf32>
    %558 = arith.subf %557, %553 : vector<1x8x8xf32>
    %559 = vector.broadcast %548 : vector<2x8x1xf32> to vector<2x8x8xf32>
    %560 = vector.broadcast %544 : vector<2x1x8xf32> to vector<2x8x8xf32>
    %561 = arith.mulf %559, %560 : vector<2x8x8xf32>
    %562 = arith.subf %525, %561 : vector<2x8x8xf32>
    %563 = vector.broadcast %558 : vector<1x8x8xf32> to vector<2x8x8xf32>
    %564 = arith.mulf %563, %562 : vector<2x8x8xf32>
    %565 = arith.addf %556, %564 : vector<2x8x8xf32>
    %566 = vector.broadcast %553 : vector<1x8x8xf32> to vector<2x8x8xf32>
    %567 = vector.broadcast %547 : vector<2x1x8xf32> to vector<2x8x8xf32>
    %568 = arith.mulf %566, %567 : vector<2x8x8xf32>
    %cst_66 = arith.constant 1.000000e+00 : f32
    %569 = vector.broadcast %cst_66 : f32 to vector<1x8x8xf32>
    %570 = arith.subf %569, %553 : vector<1x8x8xf32>
    %571 = vector.broadcast %548 : vector<2x8x1xf32> to vector<2x8x8xf32>
    %572 = vector.broadcast %547 : vector<2x1x8xf32> to vector<2x8x8xf32>
    %573 = arith.mulf %571, %572 : vector<2x8x8xf32>
    %574 = arith.subf %537, %573 : vector<2x8x8xf32>
    %575 = vector.broadcast %570 : vector<1x8x8xf32> to vector<2x8x8xf32>
    %576 = arith.mulf %575, %574 : vector<2x8x8xf32>
    %577 = arith.addf %568, %576 : vector<2x8x8xf32>
    %578 = vector.extract_strided_slice %565 {offsets = [0, 2, 2], sizes = [2, 1, 1], strides = [1, 1, 1]} : vector<2x8x8xf32> to vector<2x1x1xf32>
    %579 = vector.shape_cast %578 : vector<2x1x1xf32> to vector<2x1xf32>
    %580 = math.log %579 : vector<2x1xf32>
    %581 = arith.addf %541, %580 : vector<2x1xf32>
    %582 = vector.extract_strided_slice %565 {offsets = [0, 2, 0], sizes = [2, 1, 8], strides = [1, 1, 1]} : vector<2x8x8xf32> to vector<2x1x8xf32>
    %583 = vector.broadcast %578 : vector<2x1x1xf32> to vector<2x1x8xf32>
    %584 = arith.divf %582, %583 : vector<2x1x8xf32>
    %585 = vector.extract_strided_slice %577 {offsets = [0, 2, 0], sizes = [2, 1, 8], strides = [1, 1, 1]} : vector<2x8x8xf32> to vector<2x1x8xf32>
    %586 = vector.broadcast %578 : vector<2x1x1xf32> to vector<2x1x8xf32>
    %587 = arith.divf %585, %586 : vector<2x1x8xf32>
    %588 = vector.extract_strided_slice %565 {offsets = [0, 0, 2], sizes = [2, 8, 1], strides = [1, 1, 1]} : vector<2x8x8xf32> to vector<2x8x1xf32>
    %c2_i32_67 = arith.constant 2 : i32
    %589 = vector.broadcast %c2_i32_67 : i32 to vector<8x8xi32>
    %590 = arith.cmpi eq, %497, %589 : vector<8x8xi32>
    %591 = arith.extui %590 : vector<8x8xi1> to vector<8x8xi32>
    %592 = arith.sitofp %591 : vector<8x8xi32> to vector<8x8xf32>
    %593 = vector.shape_cast %592 : vector<8x8xf32> to vector<1x8x8xf32>
    %594 = vector.broadcast %593 : vector<1x8x8xf32> to vector<2x8x8xf32>
    %595 = vector.broadcast %584 : vector<2x1x8xf32> to vector<2x8x8xf32>
    %596 = arith.mulf %594, %595 : vector<2x8x8xf32>
    %cst_68 = arith.constant 1.000000e+00 : f32
    %597 = vector.broadcast %cst_68 : f32 to vector<1x8x8xf32>
    %598 = arith.subf %597, %593 : vector<1x8x8xf32>
    %599 = vector.broadcast %588 : vector<2x8x1xf32> to vector<2x8x8xf32>
    %600 = vector.broadcast %584 : vector<2x1x8xf32> to vector<2x8x8xf32>
    %601 = arith.mulf %599, %600 : vector<2x8x8xf32>
    %602 = arith.subf %565, %601 : vector<2x8x8xf32>
    %603 = vector.broadcast %598 : vector<1x8x8xf32> to vector<2x8x8xf32>
    %604 = arith.mulf %603, %602 : vector<2x8x8xf32>
    %605 = arith.addf %596, %604 : vector<2x8x8xf32>
    %606 = vector.broadcast %593 : vector<1x8x8xf32> to vector<2x8x8xf32>
    %607 = vector.broadcast %587 : vector<2x1x8xf32> to vector<2x8x8xf32>
    %608 = arith.mulf %606, %607 : vector<2x8x8xf32>
    %cst_69 = arith.constant 1.000000e+00 : f32
    %609 = vector.broadcast %cst_69 : f32 to vector<1x8x8xf32>
    %610 = arith.subf %609, %593 : vector<1x8x8xf32>
    %611 = vector.broadcast %588 : vector<2x8x1xf32> to vector<2x8x8xf32>
    %612 = vector.broadcast %587 : vector<2x1x8xf32> to vector<2x8x8xf32>
    %613 = arith.mulf %611, %612 : vector<2x8x8xf32>
    %614 = arith.subf %577, %613 : vector<2x8x8xf32>
    %615 = vector.broadcast %610 : vector<1x8x8xf32> to vector<2x8x8xf32>
    %616 = arith.mulf %615, %614 : vector<2x8x8xf32>
    %617 = arith.addf %608, %616 : vector<2x8x8xf32>
    %618 = vector.extract_strided_slice %605 {offsets = [0, 3, 3], sizes = [2, 1, 1], strides = [1, 1, 1]} : vector<2x8x8xf32> to vector<2x1x1xf32>
    %619 = vector.shape_cast %618 : vector<2x1x1xf32> to vector<2x1xf32>
    %620 = math.log %619 : vector<2x1xf32>
    %621 = arith.addf %581, %620 : vector<2x1xf32>
    %622 = vector.extract_strided_slice %605 {offsets = [0, 3, 0], sizes = [2, 1, 8], strides = [1, 1, 1]} : vector<2x8x8xf32> to vector<2x1x8xf32>
    %623 = vector.broadcast %618 : vector<2x1x1xf32> to vector<2x1x8xf32>
    %624 = arith.divf %622, %623 : vector<2x1x8xf32>
    %625 = vector.extract_strided_slice %617 {offsets = [0, 3, 0], sizes = [2, 1, 8], strides = [1, 1, 1]} : vector<2x8x8xf32> to vector<2x1x8xf32>
    %626 = vector.broadcast %618 : vector<2x1x1xf32> to vector<2x1x8xf32>
    %627 = arith.divf %625, %626 : vector<2x1x8xf32>
    %628 = vector.extract_strided_slice %605 {offsets = [0, 0, 3], sizes = [2, 8, 1], strides = [1, 1, 1]} : vector<2x8x8xf32> to vector<2x8x1xf32>
    %c3_i32_70 = arith.constant 3 : i32
    %629 = vector.broadcast %c3_i32_70 : i32 to vector<8x8xi32>
    %630 = arith.cmpi eq, %497, %629 : vector<8x8xi32>
    %631 = arith.extui %630 : vector<8x8xi1> to vector<8x8xi32>
    %632 = arith.sitofp %631 : vector<8x8xi32> to vector<8x8xf32>
    %633 = vector.shape_cast %632 : vector<8x8xf32> to vector<1x8x8xf32>
    %634 = vector.broadcast %633 : vector<1x8x8xf32> to vector<2x8x8xf32>
    %635 = vector.broadcast %624 : vector<2x1x8xf32> to vector<2x8x8xf32>
    %636 = arith.mulf %634, %635 : vector<2x8x8xf32>
    %cst_71 = arith.constant 1.000000e+00 : f32
    %637 = vector.broadcast %cst_71 : f32 to vector<1x8x8xf32>
    %638 = arith.subf %637, %633 : vector<1x8x8xf32>
    %639 = vector.broadcast %628 : vector<2x8x1xf32> to vector<2x8x8xf32>
    %640 = vector.broadcast %624 : vector<2x1x8xf32> to vector<2x8x8xf32>
    %641 = arith.mulf %639, %640 : vector<2x8x8xf32>
    %642 = arith.subf %605, %641 : vector<2x8x8xf32>
    %643 = vector.broadcast %638 : vector<1x8x8xf32> to vector<2x8x8xf32>
    %644 = arith.mulf %643, %642 : vector<2x8x8xf32>
    %645 = arith.addf %636, %644 : vector<2x8x8xf32>
    %646 = vector.broadcast %633 : vector<1x8x8xf32> to vector<2x8x8xf32>
    %647 = vector.broadcast %627 : vector<2x1x8xf32> to vector<2x8x8xf32>
    %648 = arith.mulf %646, %647 : vector<2x8x8xf32>
    %cst_72 = arith.constant 1.000000e+00 : f32
    %649 = vector.broadcast %cst_72 : f32 to vector<1x8x8xf32>
    %650 = arith.subf %649, %633 : vector<1x8x8xf32>
    %651 = vector.broadcast %628 : vector<2x8x1xf32> to vector<2x8x8xf32>
    %652 = vector.broadcast %627 : vector<2x1x8xf32> to vector<2x8x8xf32>
    %653 = arith.mulf %651, %652 : vector<2x8x8xf32>
    %654 = arith.subf %617, %653 : vector<2x8x8xf32>
    %655 = vector.broadcast %650 : vector<1x8x8xf32> to vector<2x8x8xf32>
    %656 = arith.mulf %655, %654 : vector<2x8x8xf32>
    %657 = arith.addf %648, %656 : vector<2x8x8xf32>
    %658 = vector.extract_strided_slice %645 {offsets = [0, 4, 4], sizes = [2, 1, 1], strides = [1, 1, 1]} : vector<2x8x8xf32> to vector<2x1x1xf32>
    %659 = vector.shape_cast %658 : vector<2x1x1xf32> to vector<2x1xf32>
    %660 = math.log %659 : vector<2x1xf32>
    %661 = arith.addf %621, %660 : vector<2x1xf32>
    %662 = vector.extract_strided_slice %645 {offsets = [0, 4, 0], sizes = [2, 1, 8], strides = [1, 1, 1]} : vector<2x8x8xf32> to vector<2x1x8xf32>
    %663 = vector.broadcast %658 : vector<2x1x1xf32> to vector<2x1x8xf32>
    %664 = arith.divf %662, %663 : vector<2x1x8xf32>
    %665 = vector.extract_strided_slice %657 {offsets = [0, 4, 0], sizes = [2, 1, 8], strides = [1, 1, 1]} : vector<2x8x8xf32> to vector<2x1x8xf32>
    %666 = vector.broadcast %658 : vector<2x1x1xf32> to vector<2x1x8xf32>
    %667 = arith.divf %665, %666 : vector<2x1x8xf32>
    %668 = vector.extract_strided_slice %645 {offsets = [0, 0, 4], sizes = [2, 8, 1], strides = [1, 1, 1]} : vector<2x8x8xf32> to vector<2x8x1xf32>
    %c4_i32_73 = arith.constant 4 : i32
    %669 = vector.broadcast %c4_i32_73 : i32 to vector<8x8xi32>
    %670 = arith.cmpi eq, %497, %669 : vector<8x8xi32>
    %671 = arith.extui %670 : vector<8x8xi1> to vector<8x8xi32>
    %672 = arith.sitofp %671 : vector<8x8xi32> to vector<8x8xf32>
    %673 = vector.shape_cast %672 : vector<8x8xf32> to vector<1x8x8xf32>
    %674 = vector.broadcast %673 : vector<1x8x8xf32> to vector<2x8x8xf32>
    %675 = vector.broadcast %664 : vector<2x1x8xf32> to vector<2x8x8xf32>
    %676 = arith.mulf %674, %675 : vector<2x8x8xf32>
    %cst_74 = arith.constant 1.000000e+00 : f32
    %677 = vector.broadcast %cst_74 : f32 to vector<1x8x8xf32>
    %678 = arith.subf %677, %673 : vector<1x8x8xf32>
    %679 = vector.broadcast %668 : vector<2x8x1xf32> to vector<2x8x8xf32>
    %680 = vector.broadcast %664 : vector<2x1x8xf32> to vector<2x8x8xf32>
    %681 = arith.mulf %679, %680 : vector<2x8x8xf32>
    %682 = arith.subf %645, %681 : vector<2x8x8xf32>
    %683 = vector.broadcast %678 : vector<1x8x8xf32> to vector<2x8x8xf32>
    %684 = arith.mulf %683, %682 : vector<2x8x8xf32>
    %685 = arith.addf %676, %684 : vector<2x8x8xf32>
    %686 = vector.broadcast %673 : vector<1x8x8xf32> to vector<2x8x8xf32>
    %687 = vector.broadcast %667 : vector<2x1x8xf32> to vector<2x8x8xf32>
    %688 = arith.mulf %686, %687 : vector<2x8x8xf32>
    %cst_75 = arith.constant 1.000000e+00 : f32
    %689 = vector.broadcast %cst_75 : f32 to vector<1x8x8xf32>
    %690 = arith.subf %689, %673 : vector<1x8x8xf32>
    %691 = vector.broadcast %668 : vector<2x8x1xf32> to vector<2x8x8xf32>
    %692 = vector.broadcast %667 : vector<2x1x8xf32> to vector<2x8x8xf32>
    %693 = arith.mulf %691, %692 : vector<2x8x8xf32>
    %694 = arith.subf %657, %693 : vector<2x8x8xf32>
    %695 = vector.broadcast %690 : vector<1x8x8xf32> to vector<2x8x8xf32>
    %696 = arith.mulf %695, %694 : vector<2x8x8xf32>
    %697 = arith.addf %688, %696 : vector<2x8x8xf32>
    %698 = vector.extract_strided_slice %685 {offsets = [0, 5, 5], sizes = [2, 1, 1], strides = [1, 1, 1]} : vector<2x8x8xf32> to vector<2x1x1xf32>
    %699 = vector.shape_cast %698 : vector<2x1x1xf32> to vector<2x1xf32>
    %700 = math.log %699 : vector<2x1xf32>
    %701 = arith.addf %661, %700 : vector<2x1xf32>
    %702 = vector.extract_strided_slice %685 {offsets = [0, 5, 0], sizes = [2, 1, 8], strides = [1, 1, 1]} : vector<2x8x8xf32> to vector<2x1x8xf32>
    %703 = vector.broadcast %698 : vector<2x1x1xf32> to vector<2x1x8xf32>
    %704 = arith.divf %702, %703 : vector<2x1x8xf32>
    %705 = vector.extract_strided_slice %697 {offsets = [0, 5, 0], sizes = [2, 1, 8], strides = [1, 1, 1]} : vector<2x8x8xf32> to vector<2x1x8xf32>
    %706 = vector.broadcast %698 : vector<2x1x1xf32> to vector<2x1x8xf32>
    %707 = arith.divf %705, %706 : vector<2x1x8xf32>
    %708 = vector.extract_strided_slice %685 {offsets = [0, 0, 5], sizes = [2, 8, 1], strides = [1, 1, 1]} : vector<2x8x8xf32> to vector<2x8x1xf32>
    %c5_i32_76 = arith.constant 5 : i32
    %709 = vector.broadcast %c5_i32_76 : i32 to vector<8x8xi32>
    %710 = arith.cmpi eq, %497, %709 : vector<8x8xi32>
    %711 = arith.extui %710 : vector<8x8xi1> to vector<8x8xi32>
    %712 = arith.sitofp %711 : vector<8x8xi32> to vector<8x8xf32>
    %713 = vector.shape_cast %712 : vector<8x8xf32> to vector<1x8x8xf32>
    %714 = vector.broadcast %713 : vector<1x8x8xf32> to vector<2x8x8xf32>
    %715 = vector.broadcast %704 : vector<2x1x8xf32> to vector<2x8x8xf32>
    %716 = arith.mulf %714, %715 : vector<2x8x8xf32>
    %cst_77 = arith.constant 1.000000e+00 : f32
    %717 = vector.broadcast %cst_77 : f32 to vector<1x8x8xf32>
    %718 = arith.subf %717, %713 : vector<1x8x8xf32>
    %719 = vector.broadcast %708 : vector<2x8x1xf32> to vector<2x8x8xf32>
    %720 = vector.broadcast %704 : vector<2x1x8xf32> to vector<2x8x8xf32>
    %721 = arith.mulf %719, %720 : vector<2x8x8xf32>
    %722 = arith.subf %685, %721 : vector<2x8x8xf32>
    %723 = vector.broadcast %718 : vector<1x8x8xf32> to vector<2x8x8xf32>
    %724 = arith.mulf %723, %722 : vector<2x8x8xf32>
    %725 = arith.addf %716, %724 : vector<2x8x8xf32>
    %726 = vector.broadcast %713 : vector<1x8x8xf32> to vector<2x8x8xf32>
    %727 = vector.broadcast %707 : vector<2x1x8xf32> to vector<2x8x8xf32>
    %728 = arith.mulf %726, %727 : vector<2x8x8xf32>
    %cst_78 = arith.constant 1.000000e+00 : f32
    %729 = vector.broadcast %cst_78 : f32 to vector<1x8x8xf32>
    %730 = arith.subf %729, %713 : vector<1x8x8xf32>
    %731 = vector.broadcast %708 : vector<2x8x1xf32> to vector<2x8x8xf32>
    %732 = vector.broadcast %707 : vector<2x1x8xf32> to vector<2x8x8xf32>
    %733 = arith.mulf %731, %732 : vector<2x8x8xf32>
    %734 = arith.subf %697, %733 : vector<2x8x8xf32>
    %735 = vector.broadcast %730 : vector<1x8x8xf32> to vector<2x8x8xf32>
    %736 = arith.mulf %735, %734 : vector<2x8x8xf32>
    %737 = arith.addf %728, %736 : vector<2x8x8xf32>
    %738 = vector.extract_strided_slice %725 {offsets = [0, 6, 6], sizes = [2, 1, 1], strides = [1, 1, 1]} : vector<2x8x8xf32> to vector<2x1x1xf32>
    %739 = vector.shape_cast %738 : vector<2x1x1xf32> to vector<2x1xf32>
    %740 = math.log %739 : vector<2x1xf32>
    %741 = arith.addf %701, %740 : vector<2x1xf32>
    %742 = vector.extract_strided_slice %725 {offsets = [0, 6, 0], sizes = [2, 1, 8], strides = [1, 1, 1]} : vector<2x8x8xf32> to vector<2x1x8xf32>
    %743 = vector.broadcast %738 : vector<2x1x1xf32> to vector<2x1x8xf32>
    %744 = arith.divf %742, %743 : vector<2x1x8xf32>
    %745 = vector.extract_strided_slice %737 {offsets = [0, 6, 0], sizes = [2, 1, 8], strides = [1, 1, 1]} : vector<2x8x8xf32> to vector<2x1x8xf32>
    %746 = vector.broadcast %738 : vector<2x1x1xf32> to vector<2x1x8xf32>
    %747 = arith.divf %745, %746 : vector<2x1x8xf32>
    %748 = vector.extract_strided_slice %725 {offsets = [0, 0, 6], sizes = [2, 8, 1], strides = [1, 1, 1]} : vector<2x8x8xf32> to vector<2x8x1xf32>
    %c6_i32_79 = arith.constant 6 : i32
    %749 = vector.broadcast %c6_i32_79 : i32 to vector<8x8xi32>
    %750 = arith.cmpi eq, %497, %749 : vector<8x8xi32>
    %751 = arith.extui %750 : vector<8x8xi1> to vector<8x8xi32>
    %752 = arith.sitofp %751 : vector<8x8xi32> to vector<8x8xf32>
    %753 = vector.shape_cast %752 : vector<8x8xf32> to vector<1x8x8xf32>
    %754 = vector.broadcast %753 : vector<1x8x8xf32> to vector<2x8x8xf32>
    %755 = vector.broadcast %744 : vector<2x1x8xf32> to vector<2x8x8xf32>
    %756 = arith.mulf %754, %755 : vector<2x8x8xf32>
    %cst_80 = arith.constant 1.000000e+00 : f32
    %757 = vector.broadcast %cst_80 : f32 to vector<1x8x8xf32>
    %758 = arith.subf %757, %753 : vector<1x8x8xf32>
    %759 = vector.broadcast %748 : vector<2x8x1xf32> to vector<2x8x8xf32>
    %760 = vector.broadcast %744 : vector<2x1x8xf32> to vector<2x8x8xf32>
    %761 = arith.mulf %759, %760 : vector<2x8x8xf32>
    %762 = arith.subf %725, %761 : vector<2x8x8xf32>
    %763 = vector.broadcast %758 : vector<1x8x8xf32> to vector<2x8x8xf32>
    %764 = arith.mulf %763, %762 : vector<2x8x8xf32>
    %765 = arith.addf %756, %764 : vector<2x8x8xf32>
    %766 = vector.broadcast %753 : vector<1x8x8xf32> to vector<2x8x8xf32>
    %767 = vector.broadcast %747 : vector<2x1x8xf32> to vector<2x8x8xf32>
    %768 = arith.mulf %766, %767 : vector<2x8x8xf32>
    %cst_81 = arith.constant 1.000000e+00 : f32
    %769 = vector.broadcast %cst_81 : f32 to vector<1x8x8xf32>
    %770 = arith.subf %769, %753 : vector<1x8x8xf32>
    %771 = vector.broadcast %748 : vector<2x8x1xf32> to vector<2x8x8xf32>
    %772 = vector.broadcast %747 : vector<2x1x8xf32> to vector<2x8x8xf32>
    %773 = arith.mulf %771, %772 : vector<2x8x8xf32>
    %774 = arith.subf %737, %773 : vector<2x8x8xf32>
    %775 = vector.broadcast %770 : vector<1x8x8xf32> to vector<2x8x8xf32>
    %776 = arith.mulf %775, %774 : vector<2x8x8xf32>
    %777 = arith.addf %768, %776 : vector<2x8x8xf32>
    %778 = vector.extract_strided_slice %765 {offsets = [0, 7, 7], sizes = [2, 1, 1], strides = [1, 1, 1]} : vector<2x8x8xf32> to vector<2x1x1xf32>
    %779 = vector.shape_cast %778 : vector<2x1x1xf32> to vector<2x1xf32>
    %780 = math.log %779 : vector<2x1xf32>
    %781 = arith.addf %741, %780 : vector<2x1xf32>
    %782 = vector.extract_strided_slice %777 {offsets = [0, 7, 0], sizes = [2, 1, 8], strides = [1, 1, 1]} : vector<2x8x8xf32> to vector<2x1x8xf32>
    %783 = vector.broadcast %778 : vector<2x1x1xf32> to vector<2x1x8xf32>
    %784 = arith.divf %782, %783 : vector<2x1x8xf32>
    %785 = vector.extract_strided_slice %765 {offsets = [0, 0, 7], sizes = [2, 8, 1], strides = [1, 1, 1]} : vector<2x8x8xf32> to vector<2x8x1xf32>
    %c7_i32_82 = arith.constant 7 : i32
    %786 = vector.broadcast %c7_i32_82 : i32 to vector<8x8xi32>
    %787 = arith.cmpi eq, %497, %786 : vector<8x8xi32>
    %788 = arith.extui %787 : vector<8x8xi1> to vector<8x8xi32>
    %789 = arith.sitofp %788 : vector<8x8xi32> to vector<8x8xf32>
    %790 = vector.shape_cast %789 : vector<8x8xf32> to vector<1x8x8xf32>
    %791 = vector.broadcast %790 : vector<1x8x8xf32> to vector<2x8x8xf32>
    %792 = vector.broadcast %784 : vector<2x1x8xf32> to vector<2x8x8xf32>
    %793 = arith.mulf %791, %792 : vector<2x8x8xf32>
    %cst_83 = arith.constant 1.000000e+00 : f32
    %794 = vector.broadcast %cst_83 : f32 to vector<1x8x8xf32>
    %795 = arith.subf %794, %790 : vector<1x8x8xf32>
    %796 = vector.broadcast %785 : vector<2x8x1xf32> to vector<2x8x8xf32>
    %797 = vector.broadcast %784 : vector<2x1x8xf32> to vector<2x8x8xf32>
    %798 = arith.mulf %796, %797 : vector<2x8x8xf32>
    %799 = arith.subf %777, %798 : vector<2x8x8xf32>
    %800 = vector.broadcast %795 : vector<1x8x8xf32> to vector<2x8x8xf32>
    %801 = arith.mulf %800, %799 : vector<2x8x8xf32>
    %802 = arith.addf %793, %801 : vector<2x8x8xf32>
    %cst_84 = arith.constant 0.000000e+00 : f32
    %803 = vector.broadcast %cst_84 : f32 to vector<2x1xf32>
    %804 = arith.subf %803, %781 : vector<2x1xf32>
    %c0_85 = arith.constant 0 : index
    %c0_86 = arith.constant 0 : index
    %c0_87 = arith.constant 0 : index
    %805 = vector.load %arg1[%c0_85, %c0_86, %c0_87] : memref<1x2x8xf32, #tpu.memory_space<vmem>>, vector<1x2x8xf32>
    %806 = vector.shape_cast %805 : vector<1x2x8xf32> to vector<2x8xf32>
    %807 = vector.shape_cast %105 : vector<2x8xf32> to vector<2x1x8xf32>
    %808 = vector.broadcast %807 : vector<2x1x8xf32> to vector<2x8x8xf32>
    %809 = arith.mulf %426, %808 : vector<2x8x8xf32>
    %cst_88 = arith.constant dense<0.000000e+00> : vector<2x8xf32>
    %810 = vector.multi_reduction <add>, %809, %cst_88 [2] : vector<2x8x8xf32> to vector<2x8xf32>
    %811 = arith.addf %810, %806 : vector<2x8xf32>
    %812 = vector.shape_cast %811 : vector<2x8xf32> to vector<2x1x8xf32>
    %813 = vector.broadcast %812 : vector<2x1x8xf32> to vector<2x8x8xf32>
    %814 = arith.mulf %802, %813 : vector<2x8x8xf32>
    %cst_89 = arith.constant dense<0.000000e+00> : vector<2x8xf32>
    %815 = vector.multi_reduction <add>, %814, %cst_89 [2] : vector<2x8x8xf32> to vector<2x8xf32>
    %816 = tpu.iota {dimensions = array<i32: 1>} : vector<1x8xi32>
    %817 = tpu.iota {dimensions = array<i32: 1>} : vector<8x8xi32>
    %cst_90 = arith.constant 0.000000e+00 : f32
    %818 = vector.broadcast %cst_90 : f32 to vector<2x8x8xf32>
    %819 = vector.extract_strided_slice %802 {offsets = [0, 0, 0], sizes = [2, 8, 1], strides = [1, 1, 1]} : vector<2x8x8xf32> to vector<2x8x1xf32>
    %820 = vector.shape_cast %819 : vector<2x8x1xf32> to vector<2x8xf32>
    %821 = vector.extract_strided_slice %820 {offsets = [0, 0], sizes = [2, 1], strides = [1, 1]} : vector<2x8xf32> to vector<2x1xf32>
    %822 = math.sqrt %821 : vector<2x1xf32>
    %823 = vector.broadcast %822 : vector<2x1xf32> to vector<2x8xf32>
    %824 = arith.divf %820, %823 : vector<2x8xf32>
    %c0_i32_91 = arith.constant 0 : i32
    %825 = vector.broadcast %c0_i32_91 : i32 to vector<1x8xi32>
    %826 = arith.cmpi sge, %816, %825 : vector<1x8xi32>
    %827 = arith.extui %826 : vector<1x8xi1> to vector<1x8xi32>
    %828 = arith.sitofp %827 : vector<1x8xi32> to vector<1x8xf32>
    %829 = vector.broadcast %828 : vector<1x8xf32> to vector<2x8xf32>
    %830 = arith.mulf %824, %829 : vector<2x8xf32>
    %c0_i32_92 = arith.constant 0 : i32
    %831 = vector.broadcast %c0_i32_92 : i32 to vector<8x8xi32>
    %832 = arith.cmpi eq, %817, %831 : vector<8x8xi32>
    %833 = arith.extui %832 : vector<8x8xi1> to vector<8x8xi32>
    %834 = arith.sitofp %833 : vector<8x8xi32> to vector<8x8xf32>
    %835 = vector.shape_cast %834 : vector<8x8xf32> to vector<1x8x8xf32>
    %836 = vector.shape_cast %830 : vector<2x8xf32> to vector<2x8x1xf32>
    %837 = vector.broadcast %835 : vector<1x8x8xf32> to vector<2x8x8xf32>
    %838 = vector.broadcast %836 : vector<2x8x1xf32> to vector<2x8x8xf32>
    %839 = arith.mulf %837, %838 : vector<2x8x8xf32>
    %840 = arith.addf %818, %839 : vector<2x8x8xf32>
    %841 = vector.extract_strided_slice %802 {offsets = [0, 0, 1], sizes = [2, 8, 1], strides = [1, 1, 1]} : vector<2x8x8xf32> to vector<2x8x1xf32>
    %842 = vector.shape_cast %841 : vector<2x8x1xf32> to vector<2x8xf32>
    %843 = vector.extract_strided_slice %840 {offsets = [0, 0, 0], sizes = [2, 8, 1], strides = [1, 1, 1]} : vector<2x8x8xf32> to vector<2x8x1xf32>
    %844 = vector.extract_strided_slice %840 {offsets = [0, 1, 0], sizes = [2, 1, 1], strides = [1, 1, 1]} : vector<2x8x8xf32> to vector<2x1x1xf32>
    %845 = vector.broadcast %844 : vector<2x1x1xf32> to vector<2x8x1xf32>
    %846 = arith.mulf %843, %845 : vector<2x8x1xf32>
    %cst_93 = arith.constant dense<0.000000e+00> : vector<2x8xf32>
    %847 = vector.multi_reduction <add>, %846, %cst_93 [2] : vector<2x8x1xf32> to vector<2x8xf32>
    %848 = arith.subf %842, %847 : vector<2x8xf32>
    %849 = vector.extract_strided_slice %848 {offsets = [0, 1], sizes = [2, 1], strides = [1, 1]} : vector<2x8xf32> to vector<2x1xf32>
    %850 = math.sqrt %849 : vector<2x1xf32>
    %851 = vector.broadcast %850 : vector<2x1xf32> to vector<2x8xf32>
    %852 = arith.divf %848, %851 : vector<2x8xf32>
    %c1_i32_94 = arith.constant 1 : i32
    %853 = vector.broadcast %c1_i32_94 : i32 to vector<1x8xi32>
    %854 = arith.cmpi sge, %816, %853 : vector<1x8xi32>
    %855 = arith.extui %854 : vector<1x8xi1> to vector<1x8xi32>
    %856 = arith.sitofp %855 : vector<1x8xi32> to vector<1x8xf32>
    %857 = vector.broadcast %856 : vector<1x8xf32> to vector<2x8xf32>
    %858 = arith.mulf %852, %857 : vector<2x8xf32>
    %c1_i32_95 = arith.constant 1 : i32
    %859 = vector.broadcast %c1_i32_95 : i32 to vector<8x8xi32>
    %860 = arith.cmpi eq, %817, %859 : vector<8x8xi32>
    %861 = arith.extui %860 : vector<8x8xi1> to vector<8x8xi32>
    %862 = arith.sitofp %861 : vector<8x8xi32> to vector<8x8xf32>
    %863 = vector.shape_cast %862 : vector<8x8xf32> to vector<1x8x8xf32>
    %864 = vector.shape_cast %858 : vector<2x8xf32> to vector<2x8x1xf32>
    %865 = vector.broadcast %863 : vector<1x8x8xf32> to vector<2x8x8xf32>
    %866 = vector.broadcast %864 : vector<2x8x1xf32> to vector<2x8x8xf32>
    %867 = arith.mulf %865, %866 : vector<2x8x8xf32>
    %868 = arith.addf %840, %867 : vector<2x8x8xf32>
    %869 = vector.extract_strided_slice %802 {offsets = [0, 0, 2], sizes = [2, 8, 1], strides = [1, 1, 1]} : vector<2x8x8xf32> to vector<2x8x1xf32>
    %870 = vector.shape_cast %869 : vector<2x8x1xf32> to vector<2x8xf32>
    %871 = vector.extract_strided_slice %868 {offsets = [0, 0, 0], sizes = [2, 8, 2], strides = [1, 1, 1]} : vector<2x8x8xf32> to vector<2x8x2xf32>
    %872 = vector.extract_strided_slice %868 {offsets = [0, 2, 0], sizes = [2, 1, 2], strides = [1, 1, 1]} : vector<2x8x8xf32> to vector<2x1x2xf32>
    %873 = vector.broadcast %872 : vector<2x1x2xf32> to vector<2x8x2xf32>
    %874 = arith.mulf %871, %873 : vector<2x8x2xf32>
    %cst_96 = arith.constant dense<0.000000e+00> : vector<2x8xf32>
    %875 = vector.multi_reduction <add>, %874, %cst_96 [2] : vector<2x8x2xf32> to vector<2x8xf32>
    %876 = arith.subf %870, %875 : vector<2x8xf32>
    %877 = vector.extract_strided_slice %876 {offsets = [0, 2], sizes = [2, 1], strides = [1, 1]} : vector<2x8xf32> to vector<2x1xf32>
    %878 = math.sqrt %877 : vector<2x1xf32>
    %879 = vector.broadcast %878 : vector<2x1xf32> to vector<2x8xf32>
    %880 = arith.divf %876, %879 : vector<2x8xf32>
    %c2_i32_97 = arith.constant 2 : i32
    %881 = vector.broadcast %c2_i32_97 : i32 to vector<1x8xi32>
    %882 = arith.cmpi sge, %816, %881 : vector<1x8xi32>
    %883 = arith.extui %882 : vector<1x8xi1> to vector<1x8xi32>
    %884 = arith.sitofp %883 : vector<1x8xi32> to vector<1x8xf32>
    %885 = vector.broadcast %884 : vector<1x8xf32> to vector<2x8xf32>
    %886 = arith.mulf %880, %885 : vector<2x8xf32>
    %c2_i32_98 = arith.constant 2 : i32
    %887 = vector.broadcast %c2_i32_98 : i32 to vector<8x8xi32>
    %888 = arith.cmpi eq, %817, %887 : vector<8x8xi32>
    %889 = arith.extui %888 : vector<8x8xi1> to vector<8x8xi32>
    %890 = arith.sitofp %889 : vector<8x8xi32> to vector<8x8xf32>
    %891 = vector.shape_cast %890 : vector<8x8xf32> to vector<1x8x8xf32>
    %892 = vector.shape_cast %886 : vector<2x8xf32> to vector<2x8x1xf32>
    %893 = vector.broadcast %891 : vector<1x8x8xf32> to vector<2x8x8xf32>
    %894 = vector.broadcast %892 : vector<2x8x1xf32> to vector<2x8x8xf32>
    %895 = arith.mulf %893, %894 : vector<2x8x8xf32>
    %896 = arith.addf %868, %895 : vector<2x8x8xf32>
    %897 = vector.extract_strided_slice %802 {offsets = [0, 0, 3], sizes = [2, 8, 1], strides = [1, 1, 1]} : vector<2x8x8xf32> to vector<2x8x1xf32>
    %898 = vector.shape_cast %897 : vector<2x8x1xf32> to vector<2x8xf32>
    %899 = vector.extract_strided_slice %896 {offsets = [0, 0, 0], sizes = [2, 8, 3], strides = [1, 1, 1]} : vector<2x8x8xf32> to vector<2x8x3xf32>
    %900 = vector.extract_strided_slice %896 {offsets = [0, 3, 0], sizes = [2, 1, 3], strides = [1, 1, 1]} : vector<2x8x8xf32> to vector<2x1x3xf32>
    %901 = vector.broadcast %900 : vector<2x1x3xf32> to vector<2x8x3xf32>
    %902 = arith.mulf %899, %901 : vector<2x8x3xf32>
    %cst_99 = arith.constant dense<0.000000e+00> : vector<2x8xf32>
    %903 = vector.multi_reduction <add>, %902, %cst_99 [2] : vector<2x8x3xf32> to vector<2x8xf32>
    %904 = arith.subf %898, %903 : vector<2x8xf32>
    %905 = vector.extract_strided_slice %904 {offsets = [0, 3], sizes = [2, 1], strides = [1, 1]} : vector<2x8xf32> to vector<2x1xf32>
    %906 = math.sqrt %905 : vector<2x1xf32>
    %907 = vector.broadcast %906 : vector<2x1xf32> to vector<2x8xf32>
    %908 = arith.divf %904, %907 : vector<2x8xf32>
    %c3_i32_100 = arith.constant 3 : i32
    %909 = vector.broadcast %c3_i32_100 : i32 to vector<1x8xi32>
    %910 = arith.cmpi sge, %816, %909 : vector<1x8xi32>
    %911 = arith.extui %910 : vector<1x8xi1> to vector<1x8xi32>
    %912 = arith.sitofp %911 : vector<1x8xi32> to vector<1x8xf32>
    %913 = vector.broadcast %912 : vector<1x8xf32> to vector<2x8xf32>
    %914 = arith.mulf %908, %913 : vector<2x8xf32>
    %c3_i32_101 = arith.constant 3 : i32
    %915 = vector.broadcast %c3_i32_101 : i32 to vector<8x8xi32>
    %916 = arith.cmpi eq, %817, %915 : vector<8x8xi32>
    %917 = arith.extui %916 : vector<8x8xi1> to vector<8x8xi32>
    %918 = arith.sitofp %917 : vector<8x8xi32> to vector<8x8xf32>
    %919 = vector.shape_cast %918 : vector<8x8xf32> to vector<1x8x8xf32>
    %920 = vector.shape_cast %914 : vector<2x8xf32> to vector<2x8x1xf32>
    %921 = vector.broadcast %919 : vector<1x8x8xf32> to vector<2x8x8xf32>
    %922 = vector.broadcast %920 : vector<2x8x1xf32> to vector<2x8x8xf32>
    %923 = arith.mulf %921, %922 : vector<2x8x8xf32>
    %924 = arith.addf %896, %923 : vector<2x8x8xf32>
    %925 = vector.extract_strided_slice %802 {offsets = [0, 0, 4], sizes = [2, 8, 1], strides = [1, 1, 1]} : vector<2x8x8xf32> to vector<2x8x1xf32>
    %926 = vector.shape_cast %925 : vector<2x8x1xf32> to vector<2x8xf32>
    %927 = vector.extract_strided_slice %924 {offsets = [0, 0, 0], sizes = [2, 8, 4], strides = [1, 1, 1]} : vector<2x8x8xf32> to vector<2x8x4xf32>
    %928 = vector.extract_strided_slice %924 {offsets = [0, 4, 0], sizes = [2, 1, 4], strides = [1, 1, 1]} : vector<2x8x8xf32> to vector<2x1x4xf32>
    %929 = vector.broadcast %928 : vector<2x1x4xf32> to vector<2x8x4xf32>
    %930 = arith.mulf %927, %929 : vector<2x8x4xf32>
    %cst_102 = arith.constant dense<0.000000e+00> : vector<2x8xf32>
    %931 = vector.multi_reduction <add>, %930, %cst_102 [2] : vector<2x8x4xf32> to vector<2x8xf32>
    %932 = arith.subf %926, %931 : vector<2x8xf32>
    %933 = vector.extract_strided_slice %932 {offsets = [0, 4], sizes = [2, 1], strides = [1, 1]} : vector<2x8xf32> to vector<2x1xf32>
    %934 = math.sqrt %933 : vector<2x1xf32>
    %935 = vector.broadcast %934 : vector<2x1xf32> to vector<2x8xf32>
    %936 = arith.divf %932, %935 : vector<2x8xf32>
    %c4_i32_103 = arith.constant 4 : i32
    %937 = vector.broadcast %c4_i32_103 : i32 to vector<1x8xi32>
    %938 = arith.cmpi sge, %816, %937 : vector<1x8xi32>
    %939 = arith.extui %938 : vector<1x8xi1> to vector<1x8xi32>
    %940 = arith.sitofp %939 : vector<1x8xi32> to vector<1x8xf32>
    %941 = vector.broadcast %940 : vector<1x8xf32> to vector<2x8xf32>
    %942 = arith.mulf %936, %941 : vector<2x8xf32>
    %c4_i32_104 = arith.constant 4 : i32
    %943 = vector.broadcast %c4_i32_104 : i32 to vector<8x8xi32>
    %944 = arith.cmpi eq, %817, %943 : vector<8x8xi32>
    %945 = arith.extui %944 : vector<8x8xi1> to vector<8x8xi32>
    %946 = arith.sitofp %945 : vector<8x8xi32> to vector<8x8xf32>
    %947 = vector.shape_cast %946 : vector<8x8xf32> to vector<1x8x8xf32>
    %948 = vector.shape_cast %942 : vector<2x8xf32> to vector<2x8x1xf32>
    %949 = vector.broadcast %947 : vector<1x8x8xf32> to vector<2x8x8xf32>
    %950 = vector.broadcast %948 : vector<2x8x1xf32> to vector<2x8x8xf32>
    %951 = arith.mulf %949, %950 : vector<2x8x8xf32>
    %952 = arith.addf %924, %951 : vector<2x8x8xf32>
    %953 = vector.extract_strided_slice %802 {offsets = [0, 0, 5], sizes = [2, 8, 1], strides = [1, 1, 1]} : vector<2x8x8xf32> to vector<2x8x1xf32>
    %954 = vector.shape_cast %953 : vector<2x8x1xf32> to vector<2x8xf32>
    %955 = vector.extract_strided_slice %952 {offsets = [0, 0, 0], sizes = [2, 8, 5], strides = [1, 1, 1]} : vector<2x8x8xf32> to vector<2x8x5xf32>
    %956 = vector.extract_strided_slice %952 {offsets = [0, 5, 0], sizes = [2, 1, 5], strides = [1, 1, 1]} : vector<2x8x8xf32> to vector<2x1x5xf32>
    %957 = vector.broadcast %956 : vector<2x1x5xf32> to vector<2x8x5xf32>
    %958 = arith.mulf %955, %957 : vector<2x8x5xf32>
    %cst_105 = arith.constant dense<0.000000e+00> : vector<2x8xf32>
    %959 = vector.multi_reduction <add>, %958, %cst_105 [2] : vector<2x8x5xf32> to vector<2x8xf32>
    %960 = arith.subf %954, %959 : vector<2x8xf32>
    %961 = vector.extract_strided_slice %960 {offsets = [0, 5], sizes = [2, 1], strides = [1, 1]} : vector<2x8xf32> to vector<2x1xf32>
    %962 = math.sqrt %961 : vector<2x1xf32>
    %963 = vector.broadcast %962 : vector<2x1xf32> to vector<2x8xf32>
    %964 = arith.divf %960, %963 : vector<2x8xf32>
    %c5_i32_106 = arith.constant 5 : i32
    %965 = vector.broadcast %c5_i32_106 : i32 to vector<1x8xi32>
    %966 = arith.cmpi sge, %816, %965 : vector<1x8xi32>
    %967 = arith.extui %966 : vector<1x8xi1> to vector<1x8xi32>
    %968 = arith.sitofp %967 : vector<1x8xi32> to vector<1x8xf32>
    %969 = vector.broadcast %968 : vector<1x8xf32> to vector<2x8xf32>
    %970 = arith.mulf %964, %969 : vector<2x8xf32>
    %c5_i32_107 = arith.constant 5 : i32
    %971 = vector.broadcast %c5_i32_107 : i32 to vector<8x8xi32>
    %972 = arith.cmpi eq, %817, %971 : vector<8x8xi32>
    %973 = arith.extui %972 : vector<8x8xi1> to vector<8x8xi32>
    %974 = arith.sitofp %973 : vector<8x8xi32> to vector<8x8xf32>
    %975 = vector.shape_cast %974 : vector<8x8xf32> to vector<1x8x8xf32>
    %976 = vector.shape_cast %970 : vector<2x8xf32> to vector<2x8x1xf32>
    %977 = vector.broadcast %975 : vector<1x8x8xf32> to vector<2x8x8xf32>
    %978 = vector.broadcast %976 : vector<2x8x1xf32> to vector<2x8x8xf32>
    %979 = arith.mulf %977, %978 : vector<2x8x8xf32>
    %980 = arith.addf %952, %979 : vector<2x8x8xf32>
    %981 = vector.extract_strided_slice %802 {offsets = [0, 0, 6], sizes = [2, 8, 1], strides = [1, 1, 1]} : vector<2x8x8xf32> to vector<2x8x1xf32>
    %982 = vector.shape_cast %981 : vector<2x8x1xf32> to vector<2x8xf32>
    %983 = vector.extract_strided_slice %980 {offsets = [0, 0, 0], sizes = [2, 8, 6], strides = [1, 1, 1]} : vector<2x8x8xf32> to vector<2x8x6xf32>
    %984 = vector.extract_strided_slice %980 {offsets = [0, 6, 0], sizes = [2, 1, 6], strides = [1, 1, 1]} : vector<2x8x8xf32> to vector<2x1x6xf32>
    %985 = vector.broadcast %984 : vector<2x1x6xf32> to vector<2x8x6xf32>
    %986 = arith.mulf %983, %985 : vector<2x8x6xf32>
    %cst_108 = arith.constant dense<0.000000e+00> : vector<2x8xf32>
    %987 = vector.multi_reduction <add>, %986, %cst_108 [2] : vector<2x8x6xf32> to vector<2x8xf32>
    %988 = arith.subf %982, %987 : vector<2x8xf32>
    %989 = vector.extract_strided_slice %988 {offsets = [0, 6], sizes = [2, 1], strides = [1, 1]} : vector<2x8xf32> to vector<2x1xf32>
    %990 = math.sqrt %989 : vector<2x1xf32>
    %991 = vector.broadcast %990 : vector<2x1xf32> to vector<2x8xf32>
    %992 = arith.divf %988, %991 : vector<2x8xf32>
    %c6_i32_109 = arith.constant 6 : i32
    %993 = vector.broadcast %c6_i32_109 : i32 to vector<1x8xi32>
    %994 = arith.cmpi sge, %816, %993 : vector<1x8xi32>
    %995 = arith.extui %994 : vector<1x8xi1> to vector<1x8xi32>
    %996 = arith.sitofp %995 : vector<1x8xi32> to vector<1x8xf32>
    %997 = vector.broadcast %996 : vector<1x8xf32> to vector<2x8xf32>
    %998 = arith.mulf %992, %997 : vector<2x8xf32>
    %c6_i32_110 = arith.constant 6 : i32
    %999 = vector.broadcast %c6_i32_110 : i32 to vector<8x8xi32>
    %1000 = arith.cmpi eq, %817, %999 : vector<8x8xi32>
    %1001 = arith.extui %1000 : vector<8x8xi1> to vector<8x8xi32>
    %1002 = arith.sitofp %1001 : vector<8x8xi32> to vector<8x8xf32>
    %1003 = vector.shape_cast %1002 : vector<8x8xf32> to vector<1x8x8xf32>
    %1004 = vector.shape_cast %998 : vector<2x8xf32> to vector<2x8x1xf32>
    %1005 = vector.broadcast %1003 : vector<1x8x8xf32> to vector<2x8x8xf32>
    %1006 = vector.broadcast %1004 : vector<2x8x1xf32> to vector<2x8x8xf32>
    %1007 = arith.mulf %1005, %1006 : vector<2x8x8xf32>
    %1008 = arith.addf %980, %1007 : vector<2x8x8xf32>
    %1009 = vector.extract_strided_slice %802 {offsets = [0, 0, 7], sizes = [2, 8, 1], strides = [1, 1, 1]} : vector<2x8x8xf32> to vector<2x8x1xf32>
    %1010 = vector.shape_cast %1009 : vector<2x8x1xf32> to vector<2x8xf32>
    %1011 = vector.extract_strided_slice %1008 {offsets = [0, 0, 0], sizes = [2, 8, 7], strides = [1, 1, 1]} : vector<2x8x8xf32> to vector<2x8x7xf32>
    %1012 = vector.extract_strided_slice %1008 {offsets = [0, 7, 0], sizes = [2, 1, 7], strides = [1, 1, 1]} : vector<2x8x8xf32> to vector<2x1x7xf32>
    %1013 = vector.broadcast %1012 : vector<2x1x7xf32> to vector<2x8x7xf32>
    %1014 = arith.mulf %1011, %1013 : vector<2x8x7xf32>
    %cst_111 = arith.constant dense<0.000000e+00> : vector<2x8xf32>
    %1015 = vector.multi_reduction <add>, %1014, %cst_111 [2] : vector<2x8x7xf32> to vector<2x8xf32>
    %1016 = arith.subf %1010, %1015 : vector<2x8xf32>
    %1017 = vector.extract_strided_slice %1016 {offsets = [0, 7], sizes = [2, 1], strides = [1, 1]} : vector<2x8xf32> to vector<2x1xf32>
    %1018 = math.sqrt %1017 : vector<2x1xf32>
    %1019 = vector.broadcast %1018 : vector<2x1xf32> to vector<2x8xf32>
    %1020 = arith.divf %1016, %1019 : vector<2x8xf32>
    %c7_i32_112 = arith.constant 7 : i32
    %1021 = vector.broadcast %c7_i32_112 : i32 to vector<1x8xi32>
    %1022 = arith.cmpi sge, %816, %1021 : vector<1x8xi32>
    %1023 = arith.extui %1022 : vector<1x8xi1> to vector<1x8xi32>
    %1024 = arith.sitofp %1023 : vector<1x8xi32> to vector<1x8xf32>
    %1025 = vector.broadcast %1024 : vector<1x8xf32> to vector<2x8xf32>
    %1026 = arith.mulf %1020, %1025 : vector<2x8xf32>
    %c7_i32_113 = arith.constant 7 : i32
    %1027 = vector.broadcast %c7_i32_113 : i32 to vector<8x8xi32>
    %1028 = arith.cmpi eq, %817, %1027 : vector<8x8xi32>
    %1029 = arith.extui %1028 : vector<8x8xi1> to vector<8x8xi32>
    %1030 = arith.sitofp %1029 : vector<8x8xi32> to vector<8x8xf32>
    %1031 = vector.shape_cast %1030 : vector<8x8xf32> to vector<1x8x8xf32>
    %1032 = vector.shape_cast %1026 : vector<2x8xf32> to vector<2x8x1xf32>
    %1033 = vector.broadcast %1031 : vector<1x8x8xf32> to vector<2x8x8xf32>
    %1034 = vector.broadcast %1032 : vector<2x8x1xf32> to vector<2x8x8xf32>
    %1035 = arith.mulf %1033, %1034 : vector<2x8x8xf32>
    %1036 = arith.addf %1008, %1035 : vector<2x8x8xf32>
    %c0_114 = arith.constant 0 : index
    %c0_115 = arith.constant 0 : index
    %c0_116 = arith.constant 0 : index
    %c0_117 = arith.constant 0 : index
    %1037 = vector.load %arg4[%c0_114, %c0_115, %c0_116, %c0_117] : memref<1x4x2x8xf32, #tpu.memory_space<vmem>>, vector<1x4x2x8xf32>
    %1038 = vector.shape_cast %1037 : vector<1x4x2x8xf32> to vector<4x2x8xf32>
    %1039 = vector.extract_strided_slice %1038 {offsets = [0, 0, 0], sizes = [1, 2, 8], strides = [1, 1, 1]} : vector<4x2x8xf32> to vector<1x2x8xf32>
    %1040 = vector.shape_cast %1039 : vector<1x2x8xf32> to vector<2x8xf32>
    %1041 = vector.shape_cast %1040 : vector<2x8xf32> to vector<2x1x8xf32>
    %1042 = vector.broadcast %1041 : vector<2x1x8xf32> to vector<2x8x8xf32>
    %1043 = arith.mulf %1036, %1042 : vector<2x8x8xf32>
    %cst_118 = arith.constant dense<0.000000e+00> : vector<2x8xf32>
    %1044 = vector.multi_reduction <add>, %1043, %cst_118 [2] : vector<2x8x8xf32> to vector<2x8xf32>
    %1045 = arith.addf %815, %1044 : vector<2x8xf32>
    %c0_119 = arith.constant 0 : index
    %c0_120 = arith.constant 0 : index
    %c0_121 = arith.constant 0 : index
    %1046 = vector.load %arg16[%c0_119, %c0_120, %c0_121] : memref<4x2x8xf32, #tpu.memory_space<vmem>>, vector<1x2x8xf32>
    %1047 = vector.shape_cast %1046 : vector<1x2x8xf32> to vector<2x8xf32>
    %1048 = vector.shape_cast %1045 : vector<2x8xf32> to vector<1x2x8xf32>
    tpu.vector_store %arg16[%c0_119, %c0_120, %c0_121], %1048 {strides = array<i32>} : memref<4x2x8xf32, #tpu.memory_space<vmem>>, vector<1x2x8xf32>,
    %1049 = vector.shape_cast %1045 : vector<2x8xf32> to vector<1x2x8xf32>
    %c0_122 = arith.constant 0 : index
    %c0_123 = arith.constant 0 : index
    %c0_124 = arith.constant 0 : index
    %c0_125 = arith.constant 0 : index
    %1050 = vector.load %arg13[%c0_122, %c0_123, %c0_124, %c0_125] : memref<4x1x2x8xf32, #tpu.memory_space<vmem>>, vector<1x1x2x8xf32>
    %1051 = vector.shape_cast %1050 : vector<1x1x2x8xf32> to vector<1x2x8xf32>
    %1052 = vector.shape_cast %1049 : vector<1x2x8xf32> to vector<1x1x2x8xf32>
    tpu.vector_store %arg13[%c0_122, %c0_123, %c0_124, %c0_125], %1052 {strides = array<i32>} : memref<4x1x2x8xf32, #tpu.memory_space<vmem>>, vector<1x1x2x8xf32>,
    %1053 = vector.extract_strided_slice %1038 {offsets = [1, 0, 0], sizes = [1, 2, 8], strides = [1, 1, 1]} : vector<4x2x8xf32> to vector<1x2x8xf32>
    %1054 = vector.shape_cast %1053 : vector<1x2x8xf32> to vector<2x8xf32>
    %1055 = vector.shape_cast %1054 : vector<2x8xf32> to vector<2x1x8xf32>
    %1056 = vector.broadcast %1055 : vector<2x1x8xf32> to vector<2x8x8xf32>
    %1057 = arith.mulf %1036, %1056 : vector<2x8x8xf32>
    %cst_126 = arith.constant dense<0.000000e+00> : vector<2x8xf32>
    %1058 = vector.multi_reduction <add>, %1057, %cst_126 [2] : vector<2x8x8xf32> to vector<2x8xf32>
    %1059 = arith.addf %815, %1058 : vector<2x8xf32>
    %c1 = arith.constant 1 : index
    %c0_127 = arith.constant 0 : index
    %c0_128 = arith.constant 0 : index
    %1060 = vector.load %arg16[%c1, %c0_127, %c0_128] : memref<4x2x8xf32, #tpu.memory_space<vmem>>, vector<1x2x8xf32>
    %1061 = vector.shape_cast %1060 : vector<1x2x8xf32> to vector<2x8xf32>
    %1062 = vector.shape_cast %1059 : vector<2x8xf32> to vector<1x2x8xf32>
    tpu.vector_store %arg16[%c1, %c0_127, %c0_128], %1062 {strides = array<i32>} : memref<4x2x8xf32, #tpu.memory_space<vmem>>, vector<1x2x8xf32>,
    %1063 = vector.shape_cast %1059 : vector<2x8xf32> to vector<1x2x8xf32>
    %c1_129 = arith.constant 1 : index
    %c0_130 = arith.constant 0 : index
    %c0_131 = arith.constant 0 : index
    %c0_132 = arith.constant 0 : index
    %1064 = vector.load %arg13[%c1_129, %c0_130, %c0_131, %c0_132] : memref<4x1x2x8xf32, #tpu.memory_space<vmem>>, vector<1x1x2x8xf32>
    %1065 = vector.shape_cast %1064 : vector<1x1x2x8xf32> to vector<1x2x8xf32>
    %1066 = vector.shape_cast %1063 : vector<1x2x8xf32> to vector<1x1x2x8xf32>
    tpu.vector_store %arg13[%c1_129, %c0_130, %c0_131, %c0_132], %1066 {strides = array<i32>} : memref<4x1x2x8xf32, #tpu.memory_space<vmem>>, vector<1x1x2x8xf32>,
    %1067 = vector.extract_strided_slice %1038 {offsets = [2, 0, 0], sizes = [1, 2, 8], strides = [1, 1, 1]} : vector<4x2x8xf32> to vector<1x2x8xf32>
    %1068 = vector.shape_cast %1067 : vector<1x2x8xf32> to vector<2x8xf32>
    %1069 = vector.shape_cast %1068 : vector<2x8xf32> to vector<2x1x8xf32>
    %1070 = vector.broadcast %1069 : vector<2x1x8xf32> to vector<2x8x8xf32>
    %1071 = arith.mulf %1036, %1070 : vector<2x8x8xf32>
    %cst_133 = arith.constant dense<0.000000e+00> : vector<2x8xf32>
    %1072 = vector.multi_reduction <add>, %1071, %cst_133 [2] : vector<2x8x8xf32> to vector<2x8xf32>
    %1073 = arith.addf %815, %1072 : vector<2x8xf32>
    %c2 = arith.constant 2 : index
    %c0_134 = arith.constant 0 : index
    %c0_135 = arith.constant 0 : index
    %1074 = vector.load %arg16[%c2, %c0_134, %c0_135] : memref<4x2x8xf32, #tpu.memory_space<vmem>>, vector<1x2x8xf32>
    %1075 = vector.shape_cast %1074 : vector<1x2x8xf32> to vector<2x8xf32>
    %1076 = vector.shape_cast %1073 : vector<2x8xf32> to vector<1x2x8xf32>
    tpu.vector_store %arg16[%c2, %c0_134, %c0_135], %1076 {strides = array<i32>} : memref<4x2x8xf32, #tpu.memory_space<vmem>>, vector<1x2x8xf32>,
    %1077 = vector.shape_cast %1073 : vector<2x8xf32> to vector<1x2x8xf32>
    %c2_136 = arith.constant 2 : index
    %c0_137 = arith.constant 0 : index
    %c0_138 = arith.constant 0 : index
    %c0_139 = arith.constant 0 : index
    %1078 = vector.load %arg13[%c2_136, %c0_137, %c0_138, %c0_139] : memref<4x1x2x8xf32, #tpu.memory_space<vmem>>, vector<1x1x2x8xf32>
    %1079 = vector.shape_cast %1078 : vector<1x1x2x8xf32> to vector<1x2x8xf32>
    %1080 = vector.shape_cast %1077 : vector<1x2x8xf32> to vector<1x1x2x8xf32>
    tpu.vector_store %arg13[%c2_136, %c0_137, %c0_138, %c0_139], %1080 {strides = array<i32>} : memref<4x1x2x8xf32, #tpu.memory_space<vmem>>, vector<1x1x2x8xf32>,
    %1081 = vector.extract_strided_slice %1038 {offsets = [3, 0, 0], sizes = [1, 2, 8], strides = [1, 1, 1]} : vector<4x2x8xf32> to vector<1x2x8xf32>
    %1082 = vector.shape_cast %1081 : vector<1x2x8xf32> to vector<2x8xf32>
    %1083 = vector.shape_cast %1082 : vector<2x8xf32> to vector<2x1x8xf32>
    %1084 = vector.broadcast %1083 : vector<2x1x8xf32> to vector<2x8x8xf32>
    %1085 = arith.mulf %1036, %1084 : vector<2x8x8xf32>
    %cst_140 = arith.constant dense<0.000000e+00> : vector<2x8xf32>
    %1086 = vector.multi_reduction <add>, %1085, %cst_140 [2] : vector<2x8x8xf32> to vector<2x8xf32>
    %1087 = arith.addf %815, %1086 : vector<2x8xf32>
    %c3 = arith.constant 3 : index
    %c0_141 = arith.constant 0 : index
    %c0_142 = arith.constant 0 : index
    %1088 = vector.load %arg16[%c3, %c0_141, %c0_142] : memref<4x2x8xf32, #tpu.memory_space<vmem>>, vector<1x2x8xf32>
    %1089 = vector.shape_cast %1088 : vector<1x2x8xf32> to vector<2x8xf32>
    %1090 = vector.shape_cast %1087 : vector<2x8xf32> to vector<1x2x8xf32>
    tpu.vector_store %arg16[%c3, %c0_141, %c0_142], %1090 {strides = array<i32>} : memref<4x2x8xf32, #tpu.memory_space<vmem>>, vector<1x2x8xf32>,
    %1091 = vector.shape_cast %1087 : vector<2x8xf32> to vector<1x2x8xf32>
    %c3_143 = arith.constant 3 : index
    %c0_144 = arith.constant 0 : index
    %c0_145 = arith.constant 0 : index
    %c0_146 = arith.constant 0 : index
    %1092 = vector.load %arg13[%c3_143, %c0_144, %c0_145, %c0_146] : memref<4x1x2x8xf32, #tpu.memory_space<vmem>>, vector<1x1x2x8xf32>
    %1093 = vector.shape_cast %1092 : vector<1x1x2x8xf32> to vector<1x2x8xf32>
    %1094 = vector.shape_cast %1091 : vector<1x2x8xf32> to vector<1x1x2x8xf32>
    tpu.vector_store %arg13[%c3_143, %c0_144, %c0_145, %c0_146], %1094 {strides = array<i32>} : memref<4x1x2x8xf32, #tpu.memory_space<vmem>>, vector<1x1x2x8xf32>,
    %c0_147 = arith.constant 0 : index
    %c0_148 = arith.constant 0 : index
    %c0_149 = arith.constant 0 : index
    %1095 = vector.load %arg15[%c0_147, %c0_148, %c0_149] : memref<1x2x8xf32, #tpu.memory_space<vmem>>, vector<1x2x8xf32>
    %1096 = vector.shape_cast %1095 : vector<1x2x8xf32> to vector<2x8xf32>
    %1097 = vector.shape_cast %815 : vector<2x8xf32> to vector<1x2x8xf32>
    tpu.vector_store %arg15[%c0_147, %c0_148, %c0_149], %1097 {strides = array<i32>} : memref<1x2x8xf32, #tpu.memory_space<vmem>>, vector<1x2x8xf32>,
    %1098 = arith.subf %815, %105 : vector<2x8xf32>
    %1099 = arith.mulf %426, %802 : vector<2x8x8xf32>
    %cst_150 = arith.constant dense<0.000000e+00> : vector<2x8xf32>
    %1100 = vector.multi_reduction <add>, %1099, %cst_150 [2] : vector<2x8x8xf32> to vector<2x8xf32>
    %cst_151 = arith.constant dense<0.000000e+00> : vector<2xf32>
    %1101 = vector.multi_reduction <add>, %1100, %cst_151 [1] : vector<2x8xf32> to vector<2xf32>
    %1102 = vector.shape_cast %1101 : vector<2xf32> to vector<2x1xf32>
    %1103 = vector.shape_cast %1098 : vector<2x8xf32> to vector<2x1x8xf32>
    %1104 = vector.broadcast %1103 : vector<2x1x8xf32> to vector<2x8x8xf32>
    %1105 = arith.mulf %426, %1104 : vector<2x8x8xf32>
    %cst_152 = arith.constant dense<0.000000e+00> : vector<2x8xf32>
    %1106 = vector.multi_reduction <add>, %1105, %cst_152 [2] : vector<2x8x8xf32> to vector<2x8xf32>
    %1107 = arith.mulf %1098, %1106 : vector<2x8xf32>
    %cst_153 = arith.constant dense<0.000000e+00> : vector<2xf32>
    %1108 = vector.multi_reduction <add>, %1107, %cst_153 [1] : vector<2x8xf32> to vector<2xf32>
    %1109 = vector.shape_cast %1108 : vector<2xf32> to vector<2x1xf32>
    %1110 = arith.addf %1102, %1109 : vector<2x1xf32>
    %cst_154 = arith.constant 8.000000e+00 : f32
    %1111 = vector.broadcast %cst_154 : f32 to vector<2x1xf32>
    %1112 = arith.subf %1110, %1111 : vector<2x1xf32>
    %1113 = arith.addf %1112, %405 : vector<2x1xf32>
    %1114 = arith.subf %1113, %804 : vector<2x1xf32>
    %cst_155 = arith.constant 5.000000e-01 : f32
    %1115 = vector.broadcast %cst_155 : f32 to vector<2x1xf32>
    %1116 = arith.mulf %1115, %1114 : vector<2x1xf32>
    %c0_156 = arith.constant 0 : index
    %c0_157 = arith.constant 0 : index
    %c0_158 = arith.constant 0 : index
    %1117 = vector.load %arg14[%c0_156, %c0_157, %c0_158] : memref<1x2x1xf32, #tpu.memory_space<vmem>>, vector<1x2x1xf32>
    %1118 = vector.shape_cast %1117 : vector<1x2x1xf32> to vector<2x1xf32>
    %1119 = vector.shape_cast %1116 : vector<2x1xf32> to vector<1x2x1xf32>
    tpu.vector_store %arg14[%c0_156, %c0_157, %c0_158], %1119 {strides = array<i32>} : memref<1x2x1xf32, #tpu.memory_space<vmem>>, vector<1x2x1xf32>,
    return
  }
  func.func @transform_0(%arg0: i32) -> (i32, i32, i32) {
    %c0_i32 = arith.constant 0 : i32
    %c0_i32_0 = arith.constant 0 : i32
    %c0_i32_1 = arith.constant 0 : i32
    return %arg0, %c0_i32, %c0_i32_0 : i32, i32, i32
  }
  func.func @transform_1(%arg0: i32) -> (i32, i32, i32, i32) {
    %c0_i32 = arith.constant 0 : i32
    %c0_i32_0 = arith.constant 0 : i32
    %c0_i32_1 = arith.constant 0 : i32
    %c0_i32_2 = arith.constant 0 : i32
    return %arg0, %c0_i32, %c0_i32_0, %c0_i32_1 : i32, i32, i32, i32
  }
  func.func @transform_2(%arg0: i32) -> (i32, i32, i32, i32) {
    %c0_i32 = arith.constant 0 : i32
    %c0_i32_0 = arith.constant 0 : i32
    %c0_i32_1 = arith.constant 0 : i32
    %c0_i32_2 = arith.constant 0 : i32
    return %arg0, %c0_i32, %c0_i32_0, %c0_i32_1 : i32, i32, i32, i32
  }
  func.func @transform_3(%arg0: i32) -> (i32, i32, i32, i32) {
    %c0_i32 = arith.constant 0 : i32
    %c0_i32_0 = arith.constant 0 : i32
    %c0_i32_1 = arith.constant 0 : i32
    %c0_i32_2 = arith.constant 0 : i32
    return %arg0, %c0_i32, %c0_i32_0, %c0_i32_1 : i32, i32, i32, i32
  }
  func.func @transform_4(%arg0: i32) -> (i32, i32) {
    %c0_i32 = arith.constant 0 : i32
    %c0_i32_0 = arith.constant 0 : i32
    %c0_i32_1 = arith.constant 0 : i32
    return %c0_i32, %c0_i32_0 : i32, i32
  }
  func.func @transform_5(%arg0: i32) -> (i32, i32) {
    %c0_i32 = arith.constant 0 : i32
    %c0_i32_0 = arith.constant 0 : i32
    %c0_i32_1 = arith.constant 0 : i32
    return %c0_i32, %c0_i32_0 : i32, i32
  }
  func.func @transform_6(%arg0: i32) -> (i32, i32) {
    %c0_i32 = arith.constant 0 : i32
    %c0_i32_0 = arith.constant 0 : i32
    %c0_i32_1 = arith.constant 0 : i32
    return %c0_i32, %c0_i32_0 : i32, i32
  }
  func.func @transform_7(%arg0: i32) -> (i32, i32) {
    %c0_i32 = arith.constant 0 : i32
    %c0_i32_0 = arith.constant 0 : i32
    %c0_i32_1 = arith.constant 0 : i32
    return %c0_i32, %c0_i32_0 : i32, i32
  }
  func.func @transform_8(%arg0: i32) -> (i32, i32) {
    %c0_i32 = arith.constant 0 : i32
    %c0_i32_0 = arith.constant 0 : i32
    %c0_i32_1 = arith.constant 0 : i32
    return %c0_i32, %c0_i32_0 : i32, i32
  }
  func.func @transform_9(%arg0: i32) -> (i32, i32) {
    %c0_i32 = arith.constant 0 : i32
    %c0_i32_0 = arith.constant 0 : i32
    %c0_i32_1 = arith.constant 0 : i32
    return %c0_i32, %c0_i32_0 : i32, i32
  }
  func.func @transform_10(%arg0: i32) -> (i32, i32) {
    %c0_i32 = arith.constant 0 : i32
    %c0_i32_0 = arith.constant 0 : i32
    %c0_i32_1 = arith.constant 0 : i32
    return %c0_i32, %c0_i32_0 : i32, i32
  }
  func.func @transform_11(%arg0: i32) -> (i32, i32) {
    %c0_i32 = arith.constant 0 : i32
    %c0_i32_0 = arith.constant 0 : i32
    %c0_i32_1 = arith.constant 0 : i32
    return %c0_i32, %c0_i32_0 : i32, i32
  }
  func.func @transform_12(%arg0: i32) -> (i32, i32, i32, i32) {
    %c0_i32 = arith.constant 0 : i32
    %c0_i32_0 = arith.constant 0 : i32
    %c0_i32_1 = arith.constant 0 : i32
    %c0_i32_2 = arith.constant 0 : i32
    return %c0_i32, %arg0, %c0_i32_0, %c0_i32_1 : i32, i32, i32, i32
  }
  func.func @transform_13(%arg0: i32) -> (i32, i32, i32) {
    %c0_i32 = arith.constant 0 : i32
    %c0_i32_0 = arith.constant 0 : i32
    %c0_i32_1 = arith.constant 0 : i32
    return %arg0, %c0_i32, %c0_i32_0 : i32, i32, i32
  }
  func.func @transform_14(%arg0: i32) -> (i32, i32, i32) {
    %c0_i32 = arith.constant 0 : i32
    %c0_i32_0 = arith.constant 0 : i32
    %c0_i32_1 = arith.constant 0 : i32
    return %arg0, %c0_i32, %c0_i32_0 : i32, i32, i32
  }
}

</mosaic_0001>

<llo_original>
// kernel: forward.4
$region0: #{forward.4}
  #allocation0 [shape = 'u32[]', space=smem, size = 0x4, offset = 0x4, fixed_abs, tag = 'smem constant byte address 0x4 - core index']
  #allocation1 [shape = 'u32[144,128]{1,0:T(1,128)}', space=vmem, size = 0x12000, scoped, tag = 'internal scratch']
  %s0 = inlined_call_operand.vmem [shape: f32[16,32], index: 0, kind: input, shape index: {}]
  %s1 = inlined_call_operand.vmem [shape: bf16[32,32], index: 1, kind: input, shape index: {}]
  %s2 = inlined_call_operand.vmem [shape: f32[1,32], index: 2, kind: input, shape index: {}]
  %s3 = inlined_call_operand.vmem [shape: bf16[32,72], index: 3, kind: input, shape index: {}]
  %s4 = inlined_call_operand.vmem [shape: f32[1,72], index: 4, kind: input, shape index: {}]
  %s5 = inlined_call_operand.vmem [shape: f32[16,8], index: 5, kind: output, shape index: {0}]
  %s6 = inlined_call_operand.vmem [shape: f32[16,32], index: 6, kind: output, shape index: {1}]
  %s7 = inlined_call_operand.vmem [shape: f32[16,32], index: 7, kind: output, shape index: {2}]
  %8 = xla_tuple %s5, %s6, %s7
  %s9 = sld [smem:[#allocation0]]
  $region46: #{forward.4} parent=0
    _
  %s11 = ssub.s32 1, %s9
  %s12 = scalar_select 0, %s11, %s9
  // Predicated region
  $region2: #{forward.4} parent=0 // pred_check
    _
  $region3: #{forward.4} parent=0 // pred_check_branch
    %14 = sbr.rel (0) target = $region5
  $region4: #{forward.4} parent=0 // pred_region
    _
  $region5: #{forward.4} parent=0 // pred_fallthru
    _
  // Predicated region
  $region6: #{forward.4} parent=0 // pred_check
    _
  $region7: #{forward.4} parent=0 // pred_check_branch
    %16 = sbr.rel (0) target = $region9
  $region8: #{forward.4} parent=0 // pred_region
    _
  $region9: #{forward.4} parent=0 // pred_fallthru
    _
  // Predicated region
  $region10: #{forward.4} parent=0 // pred_check
    _
  $region11: #{forward.4} parent=0 // pred_check_branch
    %18 = sbr.rel (0) target = $region13
  $region12: #{forward.4} parent=0 // pred_region
    _
  $region13: #{forward.4} parent=0 // pred_fallthru
    _
  // Predicated region
  $region14: #{forward.4} parent=0 // pred_check
    _
  $region15: #{forward.4} parent=0 // pred_check_branch
    %20 = sbr.rel (0) target = $region17
  $region16: #{forward.4} parent=0 // pred_region
    _
  $region17: #{forward.4} parent=0 // pred_fallthru
    _
  // Predicated region
  $region18: #{forward.4} parent=0 // pred_check
    _
  $region19: #{forward.4} parent=0 // pred_check_branch
    %22 = sbr.rel (0) target = $region21
  $region20: #{forward.4} parent=0 // pred_region
    _
  $region21: #{forward.4} parent=0 // pred_fallthru
    _
  %v24 = vld [vmem:[%s0] sm:$0xff]
  %v25 = vld [vmem:[%s0 + $0x8] sm:$0xff]
  %v26 = vpack.c.bf16 %v25, %v24
  %v27 = vld [vmem:[%s1] sm:$0xf]
  %v28 = vld [vmem:[%s1 + $0x4] sm:$0xf]
  %v29 = vld [vmem:[%s1 + $0x8] sm:$0xf]
  %v30 = vld [vmem:[%s1 + $0xc] sm:$0xf]
  %v31 = vld [vmem:[%s2] sm:$0x1]
  %v33 = vlaneseq
  %v34 = vshrl.u32 %v33, 7
  %v35 = vsub.s32 0, %v34
  %v36 = vrot.slane %v31, %v35
  %v42 = vunpack.c.l.b16 %v27
  %v43 = vunpack.c.l.b16 %v28
  %v44 = vunpack.c.l.b16 %v29
  %v45 = vunpack.c.l.b16 %v30
  %v46 = vpack.c.b16 %v43, %v42
  %v47 = vpack.c.b16 %v45, %v44
  %vm50 = vcmask 261120
  %v52 = vsel %vm50, %v26, 0
  %54 = vmatprep.subr.bf16.mxu0 0
  %55 = vmatpush1.bf16.msra.mxu0 0
  %56 = vmatprep.subr.bf16.mxu0 0
  %57 = vmatpush1.bf16.msra.mxu0 0
  %58 = vmatprep.subr.bf16.mxu0 0
  %59 = vmatpush1.bf16.msra.mxu0 0
  %60 = vmatprep.subr.bf16.mxu0 0
  %61 = vmatpush1.bf16.msra.mxu0 0
  %62 = vmatprep.subr.bf16.mxu0 0
  %63 = vmatpush1.bf16.msra.mxu0 0
  %64 = vmatprep.subr.bf16.mxu0 0
  %65 = vmatpush1.bf16.msra.mxu0 0
  %66 = vmatprep.subr.bf16.mxu0 0
  %67 = vmatpush1.bf16.msra.mxu0 %v47
  %68 = vmatprep.subr.bf16.mxu0 0
  %69 = vmatpush1.bf16.msra.mxu0 %v46
  %70 = vmatprep.subr.bf16.mxu0 0
  %71 = vmatpush2.bf16.msra.mxu0 0
  %72 = vmatprep.subr.bf16.mxu0 0
  %73 = vmatpush2.bf16.msra.mxu0 0
  %74 = vmatprep.subr.bf16.mxu0 0
  %75 = vmatpush2.bf16.msra.mxu0 0
  %76 = vmatprep.subr.bf16.mxu0 0
  %77 = vmatpush2.bf16.msra.mxu0 0
  %78 = vmatprep.subr.bf16.mxu0 0
  %79 = vmatpush2.bf16.msra.mxu0 0
  %80 = vmatprep.subr.bf16.mxu0 0
  %81 = vmatpush2.bf16.msra.mxu0 0
  %82 = vmatprep.subr.bf16.mxu0 0
  %83 = vmatpush2.bf16.msra.mxu0 0
  %84 = vmatprep.subr.bf16.mxu0 0
  %85 = vmatpush2.bf16.msra.mxu0 0
  %86 = vmatprep.mubr.bf16.mxu0 0
  %87 = vmatmul.mubr.bf16.gmra.mxu0 %v52
  %v88 = vpop.f32.mrf.mxu0
  %v89 = vadd.f32 %v36, %v88
  %v90 = vpop.f32.mrf.mxu0
  %v91 = vpop.f32.mrf.mxu0
  %v92 = vadd.f32 %v36, %v91
  %v93 = vpop.f32.mrf.mxu0
  %94 = vdwg.mxu0
  %v95 = vsub.f32 0.0, %v89
  %v96 = vsub.f32 0.0, %v92
  %v97 = vmul.f32 %v95, 1.442695
  %v98 = vpow.pop %v97
  %v99 = vmul.f32 %v96, 1.442695
  %v100 = vpow.pop %v99
  %v101 = vadd.f32 %v98, 1.0
  %v102 = vadd.f32 %v100, 1.0
  %v103 = vrcp.pop %v101
  %v104 = vrcp.pop %v102
  %v105 = vmul.f32 %v89, %v103
  %v106 = vmul.f32 %v92, %v104
  %v107 = vpack.c.bf16 %v106, %v105
  %v108 = vld [vmem:[%s3] sm:$0xf]
  %v109 = vld [vmem:[%s3 + $0x4] sm:$0xf]
  %v110 = vld [vmem:[%s3 + $0x8] sm:$0xf]
  %v111 = vld [vmem:[%s3 + $0xc] sm:$0xf]
  %v112 = vld [vmem:[%s4] sm:$0x1]
  %v114 = vlaneseq
  %v115 = vshrl.u32 %v114, 7
  %v116 = vsub.s32 0, %v115
  %v117 = vrot.slane %v112, %v116
  %v123 = vunpack.c.l.b16 %v108
  %v124 = vunpack.c.l.b16 %v109
  %v125 = vunpack.c.l.b16 %v110
  %v126 = vunpack.c.l.b16 %v111
  %v127 = vpack.c.b16 %v124, %v123
  %v128 = vpack.c.b16 %v126, %v125
  %v132 = vsel %vm50, %v107, 0
  %134 = vmatprep.subr.bf16.mxu0 0
  %135 = vmatpush1.bf16.msra.mxu0 0
  %136 = vmatprep.subr.bf16.mxu0 0
  %137 = vmatpush1.bf16.msra.mxu0 0
  %138 = vmatprep.subr.bf16.mxu0 0
  %139 = vmatpush1.bf16.msra.mxu0 0
  %140 = vmatprep.subr.bf16.mxu0 0
  %141 = vmatpush1.bf16.msra.mxu0 0
  %142 = vmatprep.subr.bf16.mxu0 0
  %143 = vmatpush1.bf16.msra.mxu0 0
  %144 = vmatprep.subr.bf16.mxu0 0
  %145 = vmatpush1.bf16.msra.mxu0 0
  %146 = vmatprep.subr.bf16.mxu0 0
  %147 = vmatpush1.bf16.msra.mxu0 %v128
  %148 = vmatprep.subr.bf16.mxu0 0
  %149 = vmatpush1.bf16.msra.mxu0 %v127
  %150 = vmatprep.subr.bf16.mxu0 0
  %151 = vmatpush2.bf16.msra.mxu0 0
  %152 = vmatprep.subr.bf16.mxu0 0
  %153 = vmatpush2.bf16.msra.mxu0 0
  %154 = vmatprep.subr.bf16.mxu0 0
  %155 = vmatpush2.bf16.msra.mxu0 0
  %156 = vmatprep.subr.bf16.mxu0 0
  %157 = vmatpush2.bf16.msra.mxu0 0
  %158 = vmatprep.subr.bf16.mxu0 0
  %159 = vmatpush2.bf16.msra.mxu0 0
  %160 = vmatprep.subr.bf16.mxu0 0
  %161 = vmatpush2.bf16.msra.mxu0 0
  %162 = vmatprep.subr.bf16.mxu0 0
  %163 = vmatpush2.bf16.msra.mxu0 0
  %164 = vmatprep.subr.bf16.mxu0 0
  %165 = vmatpush2.bf16.msra.mxu0 0
  %166 = vmatprep.mubr.bf16.mxu0 0
  %167 = vmatmul.mubr.bf16.gmra.mxu0 %v132
  %v168 = vpop.f32.mrf.mxu0
  %v169 = vadd.f32 %v117, %v168
  %v170 = vpop.f32.mrf.mxu0
  %v171 = vpop.f32.mrf.mxu0
  %v172 = vadd.f32 %v117, %v171
  %v173 = vpop.f32.mrf.mxu0
  %174 = vdwg.mxu0
  %vm175 = vcmask 64512
  %176 = vst.msk [vmem:[%s5] sm:$0xff] %vm175, %v169
  %177 = vst.msk [vmem:[%s5 + $0x8] sm:$0xff] %vm175, %v172
  %180 = vrot.lane.b32.xlu0 %v169, 120
  %v181 = vpop.permute.xlu0 %180
  %182 = vrot.lane.b32.xlu0 %v172, 120
  %v183 = vpop.permute.xlu0 %182
  %186 = vst.msk [vmem:[%s6] sm:$0xff] %vm50, %v181
  %187 = vst.msk [vmem:[%s6 + $0x8] sm:$0xff] %vm50, %v183
  %188 = vrot.lane.b32.xlu0 %v169, 88
  %v189 = vpop.permute.xlu0 %188
  %190 = vrot.lane.b32.xlu0 %v172, 88
  %v191 = vpop.permute.xlu0 %190
  %194 = vst.msk [vmem:[%s7] sm:$0xff] %vm50, %v189
  %195 = vst.msk [vmem:[%s7 + $0x8] sm:$0xff] %vm50, %v191
  // Predicated region
  $region22: #{forward.4} parent=0 // pred_check
    _
  $region23: #{forward.4} parent=0 // pred_check_branch
    %197 = sbr.rel (0) target = $region25
  $region24: #{forward.4} parent=0 // pred_region
    _
  $region25: #{forward.4} parent=0 // pred_fallthru
    _
  // Predicated region
  $region26: #{forward.4} parent=0 // pred_check
    _
  $region27: #{forward.4} parent=0 // pred_check_branch
    %199 = sbr.rel (0) target = $region29
  $region28: #{forward.4} parent=0 // pred_region
    _
  $region29: #{forward.4} parent=0 // pred_fallthru
    _
  // Predicated region
  $region30: #{forward.4} parent=0 // pred_check
    _
  $region31: #{forward.4} parent=0 // pred_check_branch
    %201 = sbr.rel (0) target = $region33
  $region32: #{forward.4} parent=0 // pred_region
    _
  $region33: #{forward.4} parent=0 // pred_fallthru
    _
  // Predicated region
  $region34: #{forward.4} parent=0 // pred_check
    _
  $region35: #{forward.4} parent=0 // pred_check_branch
    %203 = sbr.rel (0) target = $region37
  $region36: #{forward.4} parent=0 // pred_region
    _
  $region37: #{forward.4} parent=0 // pred_fallthru
    _
  // Predicated region
  $region38: #{forward.4} parent=0 // pred_check
    _
  $region39: #{forward.4} parent=0 // pred_check_branch
    %205 = sbr.rel (0) target = $region41
  $region40: #{forward.4} parent=0 // pred_region
    _
  $region41: #{forward.4} parent=0 // pred_fallthru
    _
  // Predicated region
  $region42: #{forward.4} parent=0 // pred_check
    _
  $region43: #{forward.4} parent=0 // pred_check_branch
    %207 = sbr.rel (0) target = $region45
  $region44: #{forward.4} parent=0 // pred_region
    _
  $region45: #{forward.4} parent=0 // pred_fallthru
    _

// kernel: forward.5
$region0: #{forward.5}
  #allocation0 [shape = 'u32[]', space=smem, size = 0x4, offset = 0x4, fixed_abs, tag = 'smem constant byte address 0x4 - core index']
  #allocation1 [shape = 'u32[144,128]{1,0:T(1,128)}', space=vmem, size = 0x12000, scoped, tag = 'internal scratch']
  #allocation2 [shape = 'f32[2,32]{1,0:T(2,128)}', space=vmem, size = 0x400, scoped, tag = 'scratch operand']
  %s0 = inlined_call_operand.vmem [shape: f32[8,2,32], index: 0, kind: input, shape index: {}]
  %s1 = inlined_call_operand.vmem [shape: f32[8,2,8], index: 1, kind: input, shape index: {}]
  %s2 = inlined_call_operand.vmem [shape: bf16[32,72], index: 2, kind: input, shape index: {}]
  %s3 = inlined_call_operand.vmem [shape: f32[1,40], index: 3, kind: input, shape index: {}]
  %s4 = inlined_call_operand.vmem [shape: f32[8,2,40], index: 4, kind: output, shape index: {}]
  %s5 = sld [smem:[#allocation0]]
  $region30: #{forward.5} parent=0
    _
  %s7 = ssub.s32 1, %s5
  %s8 = scalar_select 0, %s7, %s5
  // Predicated region
  $region2: #{forward.5} parent=0 // pred_check
    _
  $region3: #{forward.5} parent=0 // pred_check_branch
    %10 = sbr.rel (0) target = $region5
  $region4: #{forward.5} parent=0 // pred_region
    %s11 = ssub.s32 0, 0
    %s12 = smul.u32 8, %s11
    %p13 = scmp.lt.s32.totalorder %s12, 7
    %s14 = scalar_select %p13, %s12, 7
    %s15 = smul.addr %s14, 2
    %s16 = scalar_lea.vmem %s0, %s15
    %s17 = ssub.s32 0, 0
    %s18 = smul.u32 8, %s17
  $region5: #{forward.5} parent=0 // pred_fallthru
    _
  // Predicated region
  $region6: #{forward.5} parent=0 // pred_check
    _
  $region7: #{forward.5} parent=0 // pred_check_branch
    %20 = sbr.rel (0) target = $region9
  $region8: #{forward.5} parent=0 // pred_region
    %s21 = ssub.s32 0, 0
    %s22 = smul.u32 8, %s21
    %p23 = scmp.lt.s32.totalorder %s22, 7
    %s24 = scalar_select %p23, %s22, 7
    %s25 = smul.addr %s24, 2
    %s26 = scalar_lea.vmem %s1, %s25
    %s27 = ssub.s32 0, 0
    %s28 = smul.u32 8, %s27
  $region9: #{forward.5} parent=0 // pred_fallthru
    _
  // Predicated region
  $region10: #{forward.5} parent=0 // pred_check
    _
  $region11: #{forward.5} parent=0 // pred_check_branch
    %30 = sbr.rel (0) target = $region13
  $region12: #{forward.5} parent=0 // pred_region
    _
  $region13: #{forward.5} parent=0 // pred_fallthru
    _
  // Predicated region
  $region14: #{forward.5} parent=0 // pred_check
    _
  $region15: #{forward.5} parent=0 // pred_check_branch
    %32 = sbr.rel (0) target = $region17
  $region16: #{forward.5} parent=0 // pred_region
    _
  $region17: #{forward.5} parent=0 // pred_fallthru
    _
  %s33 = ssub.s32 0, 0
  %s34 = smul.u32 8, %s33
  %p35 = scmp.lt.s32.totalorder %s34, 7
  %s36 = scalar_select %p35, %s34, 7
  %s37 = smul.addr %s36, 2
  %s38 = scalar_lea.vmem %s0, %s37
  %s39 = ssub.s32 0, 0
  %s40 = smul.u32 8, %s39
  %p41 = scmp.lt.s32.totalorder %s40, 7
  %s42 = scalar_select %p41, %s40, 7
  %s43 = smul.addr %s42, 2
  %s44 = scalar_lea.vmem %s1, %s43
  %s45 = ssub.s32 0, 0
  %s46 = smul.u32 8, %s45
  %p47 = scmp.lt.s32.totalorder %s46, 7
  %s48 = scalar_select %p47, %s46, 7
  %s49 = smul.addr %s48, 2
  %s50 = scalar_lea.vmem %s4, %s49
  %s51 = ssub.s32 0, 0
  %s52 = smul.u32 8, %s51
  %p53 = scmp.lt.s32.totalorder %s52, 7
  %s54 = scalar_select %p53, %s52, 7
  %s55 = smul.addr %s54, 2
  %s56 = scalar_lea.vmem %s0, %s55
  %s57 = ssub.s32 0, 0
  %s58 = smul.u32 8, %s57
  %s59 = ssub.s32 0, 0
  %s60 = smul.u32 8, %s59
  %p61 = scmp.lt.s32.totalorder %s60, 7
  %s62 = scalar_select %p61, %s60, 7
  %s63 = smul.addr %s62, 2
  %s64 = scalar_lea.vmem %s1, %s63
  %s65 = ssub.s32 0, 0
  %s66 = smul.u32 8, %s65
  %s67 = ssub.s32 0, 0
  %s68 = smul.u32 8, %s67
  %p69 = scmp.lt.s32.totalorder %s68, 7
  %s70 = scalar_select %p69, %s68, 7
  %s71 = smul.addr %s70, 2
  %s72 = scalar_lea.vmem %s4, %s71
  %s73 = ssub.s32 0, 0
  %s74 = smul.u32 8, %s73
  %p76 = scmp.eq.s32.totalorder 0, 0
  // Predicated region
  $region18: #{forward.5} parent=0 // pred_check
    %p77 = pneg %p76
  $region19: #{forward.5} parent=0 // pred_check_branch
    %79 = sbr.rel (%p77) target = $region21
  $region20: #{forward.5} parent=0 // pred_region
    %vm80 = vcmask 254976
    %81 = vst.msk [vmem:[#allocation2] sm:$0x3] %vm80, 0.0
  $region21: #{forward.5} parent=0 // pred_fallthru
    _
  %v82 = vld [vmem:[%s2] sm:$0xf]
  %v83 = vld [vmem:[%s2 + $0x4] sm:$0xf]
  %v84 = vld [vmem:[%s2 + $0x8] sm:$0xf]
  %v85 = vld [vmem:[%s2 + $0xc] sm:$0xf]
  %v86 = vld [vmem:[%s3] sm:$0x1]
  %v87 = vld [vmem:[%s56] sm:$0x3]
  %v88 = vld [vmem:[%s56 + $0x2] sm:$0x3]
  %v89 = vld [vmem:[%s56 + $0x4] sm:$0x3]
  %v90 = vld [vmem:[%s56 + $0x6] sm:$0x3]
  %v91 = vld [vmem:[%s56 + $0x8] sm:$0x3]
  %v92 = vld [vmem:[%s56 + $0xa] sm:$0x3]
  %v93 = vld [vmem:[%s56 + $0xc] sm:$0x3]
  %v94 = vld [vmem:[%s56 + $0xe] sm:$0x3]
  %v95 = vld [vmem:[%s64] sm:$0x3]
  %v96 = vld [vmem:[%s64 + $0x2] sm:$0x3]
  %v97 = vld [vmem:[%s64 + $0x4] sm:$0x3]
  %v98 = vld [vmem:[%s64 + $0x6] sm:$0x3]
  %v99 = vld [vmem:[%s64 + $0x8] sm:$0x3]
  %v100 = vld [vmem:[%s64 + $0xa] sm:$0x3]
  %v101 = vld [vmem:[%s64 + $0xc] sm:$0x3]
  %v102 = vld [vmem:[%s64 + $0xe] sm:$0x3]
  %v103 = vld [vmem:[#allocation2] sm:$0x3]
  %v104 = vpack.c.bf16 %v103, %v103
  %v109 = vunpack.c.l.b16 %v82
  %v110 = vunpack.c.l.b16 %v83
  %v111 = vunpack.c.l.b16 %v84
  %v112 = vunpack.c.l.b16 %v85
  %v113 = vpack.c.b16 %v110, %v109
  %v114 = vpack.c.b16 %v112, %v111
  %vm117 = vcmask 261120
  %v119 = vsel %vm117, %v104, 0
  %121 = vmatprep.subr.bf16.mxu0 0
  %122 = vmatpush1.bf16.msra.mxu0 0
  %123 = vmatprep.subr.bf16.mxu0 0
  %124 = vmatpush1.bf16.msra.mxu0 0
  %125 = vmatprep.subr.bf16.mxu0 0
  %126 = vmatpush1.bf16.msra.mxu0 0
  %127 = vmatprep.subr.bf16.mxu0 0
  %128 = vmatpush1.bf16.msra.mxu0 0
  %129 = vmatprep.subr.bf16.mxu0 0
  %130 = vmatpush1.bf16.msra.mxu0 0
  %131 = vmatprep.subr.bf16.mxu0 0
  %132 = vmatpush1.bf16.msra.mxu0 0
  %133 = vmatprep.subr.bf16.mxu0 0
  %134 = vmatpush1.bf16.msra.mxu0 %v114
  %135 = vmatprep.subr.bf16.mxu0 0
  %136 = vmatpush1.bf16.msra.mxu0 %v113
  %137 = vmatprep.subr.bf16.mxu0 0
  %138 = vmatpush2.bf16.msra.mxu0 0
  %139 = vmatprep.subr.bf16.mxu0 0
  %140 = vmatpush2.bf16.msra.mxu0 0
  %141 = vmatprep.subr.bf16.mxu0 0
  %142 = vmatpush2.bf16.msra.mxu0 0
  %143 = vmatprep.subr.bf16.mxu0 0
  %144 = vmatpush2.bf16.msra.mxu0 0
  %145 = vmatprep.subr.bf16.mxu0 0
  %146 = vmatpush2.bf16.msra.mxu0 0
  %147 = vmatprep.subr.bf16.mxu0 0
  %148 = vmatpush2.bf16.msra.mxu0 0
  %149 = vmatprep.subr.bf16.mxu0 0
  %150 = vmatpush2.bf16.msra.mxu0 0
  %151 = vmatprep.subr.bf16.mxu0 0
  %152 = vmatpush2.bf16.msra.mxu0 0
  %153 = vmatprep.mubr.bf16.mxu0 0
  %154 = vmatmul.mubr.bf16.gmra.mxu0 %v119
  %v155 = vpop.f32.mrf.mxu0
  %v156 = vadd.f32 0.0, %v155
  %v157 = vpop.f32.mrf.mxu0
  %v158 = vpop.f32.mrf.mxu0
  %v159 = vpop.f32.mrf.mxu0
  %160 = vdwg.mxu0
  %v162 = vlaneseq
  %v163 = vshrl.u32 %v162, 7
  %v164 = vsub.s32 0, %v163
  %v165 = vrot.slane %v86, %v164
  %v167 = vadd.f32 %v156, %v165
  %v168 = vadd.f32 %v167, %v102
  %vm169 = vcmask 64512
  %v170 = vsel %vm169, %v168, %v167
  %s171 = scalar_lea.vmem %s72, 14
  %vm172 = vcmask 320512
  %173 = vst.msk [vmem:[%s171] sm:$0x3] %vm172, %v170
  %175 = vrot.lane.b32.xlu0 %v156, 88
  %v176 = vpop.permute.xlu0 %175
  %v178 = vadd.f32 %v94, %v176
  %v179 = vtanh.pop %v178
  %vm180 = vcmask 254976
  %181 = vst.msk [vmem:[#allocation2] sm:$0x3] %vm180, %v179
  %v182 = vld [vmem:[#allocation2] sm:$0x3]
  %v183 = vpack.c.bf16 %v182, %v182
  %v185 = vsel %vm117, %v183, 0
  %187 = vmatprep.subr.bf16.mxu0 0
  %188 = vmatpush1.bf16.msra.mxu0 0
  %189 = vmatprep.subr.bf16.mxu0 0
  %190 = vmatpush1.bf16.msra.mxu0 0
  %191 = vmatprep.subr.bf16.mxu0 0
  %192 = vmatpush1.bf16.msra.mxu0 0
  %193 = vmatprep.subr.bf16.mxu0 0
  %194 = vmatpush1.bf16.msra.mxu0 0
  %195 = vmatprep.subr.bf16.mxu0 0
  %196 = vmatpush1.bf16.msra.mxu0 0
  %197 = vmatprep.subr.bf16.mxu0 0
  %198 = vmatpush1.bf16.msra.mxu0 0
  %199 = vmatprep.subr.bf16.mxu0 0
  %200 = vmatpush1.bf16.msra.mxu0 %v114
  %201 = vmatprep.subr.bf16.mxu0 0
  %202 = vmatpush1.bf16.msra.mxu0 %v113
  %203 = vmatprep.subr.bf16.mxu0 0
  %204 = vmatpush2.bf16.msra.mxu0 0
  %205 = vmatprep.subr.bf16.mxu0 0
  %206 = vmatpush2.bf16.msra.mxu0 0
  %207 = vmatprep.subr.bf16.mxu0 0
  %208 = vmatpush2.bf16.msra.mxu0 0
  %209 = vmatprep.subr.bf16.mxu0 0
  %210 = vmatpush2.bf16.msra.mxu0 0
  %211 = vmatprep.subr.bf16.mxu0 0
  %212 = vmatpush2.bf16.msra.mxu0 0
  %213 = vmatprep.subr.bf16.mxu0 0
  %214 = vmatpush2.bf16.msra.mxu0 0
  %215 = vmatprep.subr.bf16.mxu0 0
  %216 = vmatpush2.bf16.msra.mxu0 0
  %217 = vmatprep.subr.bf16.mxu0 0
  %218 = vmatpush2.bf16.msra.mxu0 0
  %219 = vmatprep.mubr.bf16.mxu0 0
  %220 = vmatmul.mubr.bf16.gmra.mxu0 %v185
  %v221 = vpop.f32.mrf.mxu0
  %v222 = vadd.f32 0.0, %v221
  %v223 = vpop.f32.mrf.mxu0
  %v224 = vpop.f32.mrf.mxu0
  %v225 = vpop.f32.mrf.mxu0
  %226 = vdwg.mxu0
  %v227 = vadd.f32 %v222, %v165
  %v228 = vadd.f32 %v227, %v101
  %v229 = vsel %vm169, %v228, %v227
  %s230 = scalar_lea.vmem %s72, 12
  %231 = vst.msk [vmem:[%s230] sm:$0x3] %vm172, %v229
  %233 = vrot.lane.b32.xlu0 %v222, 88
  %v234 = vpop.permute.xlu0 %233
  %v236 = vadd.f32 %v93, %v234
  %v237 = vtanh.pop %v236
  %238 = vst.msk [vmem:[#allocation2] sm:$0x3] %vm180, %v237
  %v239 = vld [vmem:[#allocation2] sm:$0x3]
  %v240 = vpack.c.bf16 %v239, %v239
  %v242 = vsel %vm117, %v240, 0
  %244 = vmatprep.subr.bf16.mxu0 0
  %245 = vmatpush1.bf16.msra.mxu0 0
  %246 = vmatprep.subr.bf16.mxu0 0
  %247 = vmatpush1.bf16.msra.mxu0 0
  %248 = vmatprep.subr.bf16.mxu0 0
  %249 = vmatpush1.bf16.msra.mxu0 0
  %250 = vmatprep.subr.bf16.mxu0 0
  %251 = vmatpush1.bf16.msra.mxu0 0
  %252 = vmatprep.subr.bf16.mxu0 0
  %253 = vmatpush1.bf16.msra.mxu0 0
  %254 = vmatprep.subr.bf16.mxu0 0
  %255 = vmatpush1.bf16.msra.mxu0 0
  %256 = vmatprep.subr.bf16.mxu0 0
  %257 = vmatpush1.bf16.msra.mxu0 %v114
  %258 = vmatprep.subr.bf16.mxu0 0
  %259 = vmatpush1.bf16.msra.mxu0 %v113
  %260 = vmatprep.subr.bf16.mxu0 0
  %261 = vmatpush2.bf16.msra.mxu0 0
  %262 = vmatprep.subr.bf16.mxu0 0
  %263 = vmatpush2.bf16.msra.mxu0 0
  %264 = vmatprep.subr.bf16.mxu0 0
  %265 = vmatpush2.bf16.msra.mxu0 0
  %266 = vmatprep.subr.bf16.mxu0 0
  %267 = vmatpush2.bf16.msra.mxu0 0
  %268 = vmatprep.subr.bf16.mxu0 0
  %269 = vmatpush2.bf16.msra.mxu0 0
  %270 = vmatprep.subr.bf16.mxu0 0
  %271 = vmatpush2.bf16.msra.mxu0 0
  %272 = vmatprep.subr.bf16.mxu0 0
  %273 = vmatpush2.bf16.msra.mxu0 0
  %274 = vmatprep.subr.bf16.mxu0 0
  %275 = vmatpush2.bf16.msra.mxu0 0
  %276 = vmatprep.mubr.bf16.mxu0 0
  %277 = vmatmul.mubr.bf16.gmra.mxu0 %v242
  %v278 = vpop.f32.mrf.mxu0
  %v279 = vadd.f32 0.0, %v278
  %v280 = vpop.f32.mrf.mxu0
  %v281 = vpop.f32.mrf.mxu0
  %v282 = vpop.f32.mrf.mxu0
  %283 = vdwg.mxu0
  %v284 = vadd.f32 %v279, %v165
  %v285 = vadd.f32 %v284, %v100
  %v286 = vsel %vm169, %v285, %v284
  %s287 = scalar_lea.vmem %s72, 10
  %288 = vst.msk [vmem:[%s287] sm:$0x3] %vm172, %v286
  %290 = vrot.lane.b32.xlu0 %v279, 88
  %v291 = vpop.permute.xlu0 %290
  %v293 = vadd.f32 %v92, %v291
  %v294 = vtanh.pop %v293
  %295 = vst.msk [vmem:[#allocation2] sm:$0x3] %vm180, %v294
  %v296 = vld [vmem:[#allocation2] sm:$0x3]
  %v297 = vpack.c.bf16 %v296, %v296
  %v299 = vsel %vm117, %v297, 0
  %301 = vmatprep.subr.bf16.mxu0 0
  %302 = vmatpush1.bf16.msra.mxu0 0
  %303 = vmatprep.subr.bf16.mxu0 0
  %304 = vmatpush1.bf16.msra.mxu0 0
  %305 = vmatprep.subr.bf16.mxu0 0
  %306 = vmatpush1.bf16.msra.mxu0 0
  %307 = vmatprep.subr.bf16.mxu0 0
  %308 = vmatpush1.bf16.msra.mxu0 0
  %309 = vmatprep.subr.bf16.mxu0 0
  %310 = vmatpush1.bf16.msra.mxu0 0
  %311 = vmatprep.subr.bf16.mxu0 0
  %312 = vmatpush1.bf16.msra.mxu0 0
  %313 = vmatprep.subr.bf16.mxu0 0
  %314 = vmatpush1.bf16.msra.mxu0 %v114
  %315 = vmatprep.subr.bf16.mxu0 0
  %316 = vmatpush1.bf16.msra.mxu0 %v113
  %317 = vmatprep.subr.bf16.mxu0 0
  %318 = vmatpush2.bf16.msra.mxu0 0
  %319 = vmatprep.subr.bf16.mxu0 0
  %320 = vmatpush2.bf16.msra.mxu0 0
  %321 = vmatprep.subr.bf16.mxu0 0
  %322 = vmatpush2.bf16.msra.mxu0 0
  %323 = vmatprep.subr.bf16.mxu0 0
  %324 = vmatpush2.bf16.msra.mxu0 0
  %325 = vmatprep.subr.bf16.mxu0 0
  %326 = vmatpush2.bf16.msra.mxu0 0
  %327 = vmatprep.subr.bf16.mxu0 0
  %328 = vmatpush2.bf16.msra.mxu0 0
  %329 = vmatprep.subr.bf16.mxu0 0
  %330 = vmatpush2.bf16.msra.mxu0 0
  %331 = vmatprep.subr.bf16.mxu0 0
  %332 = vmatpush2.bf16.msra.mxu0 0
  %333 = vmatprep.mubr.bf16.mxu0 0
  %334 = vmatmul.mubr.bf16.gmra.mxu0 %v299
  %v335 = vpop.f32.mrf.mxu0
  %v336 = vadd.f32 0.0, %v335
  %v337 = vpop.f32.mrf.mxu0
  %v338 = vpop.f32.mrf.mxu0
  %v339 = vpop.f32.mrf.mxu0
  %340 = vdwg.mxu0
  %v341 = vadd.f32 %v336, %v165
  %v342 = vadd.f32 %v341, %v99
  %v343 = vsel %vm169, %v342, %v341
  %s344 = scalar_lea.vmem %s72, 8
  %345 = vst.msk [vmem:[%s344] sm:$0x3] %vm172, %v343
  %347 = vrot.lane.b32.xlu0 %v336, 88
  %v348 = vpop.permute.xlu0 %347
  %v350 = vadd.f32 %v91, %v348
  %v351 = vtanh.pop %v350
  %352 = vst.msk [vmem:[#allocation2] sm:$0x3] %vm180, %v351
  %v353 = vld [vmem:[#allocation2] sm:$0x3]
  %v354 = vpack.c.bf16 %v353, %v353
  %v356 = vsel %vm117, %v354, 0
  %358 = vmatprep.subr.bf16.mxu0 0
  %359 = vmatpush1.bf16.msra.mxu0 0
  %360 = vmatprep.subr.bf16.mxu0 0
  %361 = vmatpush1.bf16.msra.mxu0 0
  %362 = vmatprep.subr.bf16.mxu0 0
  %363 = vmatpush1.bf16.msra.mxu0 0
  %364 = vmatprep.subr.bf16.mxu0 0
  %365 = vmatpush1.bf16.msra.mxu0 0
  %366 = vmatprep.subr.bf16.mxu0 0
  %367 = vmatpush1.bf16.msra.mxu0 0
  %368 = vmatprep.subr.bf16.mxu0 0
  %369 = vmatpush1.bf16.msra.mxu0 0
  %370 = vmatprep.subr.bf16.mxu0 0
  %371 = vmatpush1.bf16.msra.mxu0 %v114
  %372 = vmatprep.subr.bf16.mxu0 0
  %373 = vmatpush1.bf16.msra.mxu0 %v113
  %374 = vmatprep.subr.bf16.mxu0 0
  %375 = vmatpush2.bf16.msra.mxu0 0
  %376 = vmatprep.subr.bf16.mxu0 0
  %377 = vmatpush2.bf16.msra.mxu0 0
  %378 = vmatprep.subr.bf16.mxu0 0
  %379 = vmatpush2.bf16.msra.mxu0 0
  %380 = vmatprep.subr.bf16.mxu0 0
  %381 = vmatpush2.bf16.msra.mxu0 0
  %382 = vmatprep.subr.bf16.mxu0 0
  %383 = vmatpush2.bf16.msra.mxu0 0
  %384 = vmatprep.subr.bf16.mxu0 0
  %385 = vmatpush2.bf16.msra.mxu0 0
  %386 = vmatprep.subr.bf16.mxu0 0
  %387 = vmatpush2.bf16.msra.mxu0 0
  %388 = vmatprep.subr.bf16.mxu0 0
  %389 = vmatpush2.bf16.msra.mxu0 0
  %390 = vmatprep.mubr.bf16.mxu0 0
  %391 = vmatmul.mubr.bf16.gmra.mxu0 %v356
  %v392 = vpop.f32.mrf.mxu0
  %v393 = vadd.f32 0.0, %v392
  %v394 = vpop.f32.mrf.mxu0
  %v395 = vpop.f32.mrf.mxu0
  %v396 = vpop.f32.mrf.mxu0
  %397 = vdwg.mxu0
  %v398 = vadd.f32 %v393, %v165
  %v399 = vadd.f32 %v398, %v98
  %v400 = vsel %vm169, %v399, %v398
  %s401 = scalar_lea.vmem %s72, 6
  %402 = vst.msk [vmem:[%s401] sm:$0x3] %vm172, %v400
  %404 = vrot.lane.b32.xlu0 %v393, 88
  %v405 = vpop.permute.xlu0 %404
  %v407 = vadd.f32 %v90, %v405
  %v408 = vtanh.pop %v407
  %409 = vst.msk [vmem:[#allocation2] sm:$0x3] %vm180, %v408
  %v410 = vld [vmem:[#allocation2] sm:$0x3]
  %v411 = vpack.c.bf16 %v410, %v410
  %v413 = vsel %vm117, %v411, 0
  %415 = vmatprep.subr.bf16.mxu0 0
  %416 = vmatpush1.bf16.msra.mxu0 0
  %417 = vmatprep.subr.bf16.mxu0 0
  %418 = vmatpush1.bf16.msra.mxu0 0
  %419 = vmatprep.subr.bf16.mxu0 0
  %420 = vmatpush1.bf16.msra.mxu0 0
  %421 = vmatprep.subr.bf16.mxu0 0
  %422 = vmatpush1.bf16.msra.mxu0 0
  %423 = vmatprep.subr.bf16.mxu0 0
  %424 = vmatpush1.bf16.msra.mxu0 0
  %425 = vmatprep.subr.bf16.mxu0 0
  %426 = vmatpush1.bf16.msra.mxu0 0
  %427 = vmatprep.subr.bf16.mxu0 0
  %428 = vmatpush1.bf16.msra.mxu0 %v114
  %429 = vmatprep.subr.bf16.mxu0 0
  %430 = vmatpush1.bf16.msra.mxu0 %v113
  %431 = vmatprep.subr.bf16.mxu0 0
  %432 = vmatpush2.bf16.msra.mxu0 0
  %433 = vmatprep.subr.bf16.mxu0 0
  %434 = vmatpush2.bf16.msra.mxu0 0
  %435 = vmatprep.subr.bf16.mxu0 0
  %436 = vmatpush2.bf16.msra.mxu0 0
  %437 = vmatprep.subr.bf16.mxu0 0
  %438 = vmatpush2.bf16.msra.mxu0 0
  %439 = vmatprep.subr.bf16.mxu0 0
  %440 = vmatpush2.bf16.msra.mxu0 0
  %441 = vmatprep.subr.bf16.mxu0 0
  %442 = vmatpush2.bf16.msra.mxu0 0
  %443 = vmatprep.subr.bf16.mxu0 0
  %444 = vmatpush2.bf16.msra.mxu0 0
  %445 = vmatprep.subr.bf16.mxu0 0
  %446 = vmatpush2.bf16.msra.mxu0 0
  %447 = vmatprep.mubr.bf16.mxu0 0
  %448 = vmatmul.mubr.bf16.gmra.mxu0 %v413
  %v449 = vpop.f32.mrf.mxu0
  %v450 = vadd.f32 0.0, %v449
  %v451 = vpop.f32.mrf.mxu0
  %v452 = vpop.f32.mrf.mxu0
  %v453 = vpop.f32.mrf.mxu0
  %454 = vdwg.mxu0
  %v455 = vadd.f32 %v450, %v165
  %v456 = vadd.f32 %v455, %v97
  %v457 = vsel %vm169, %v456, %v455
  %s458 = scalar_lea.vmem %s72, 4
  %459 = vst.msk [vmem:[%s458] sm:$0x3] %vm172, %v457
  %461 = vrot.lane.b32.xlu0 %v450, 88
  %v462 = vpop.permute.xlu0 %461
  %v464 = vadd.f32 %v89, %v462
  %v465 = vtanh.pop %v464
  %466 = vst.msk [vmem:[#allocation2] sm:$0x3] %vm180, %v465
  %v467 = vld [vmem:[#allocation2] sm:$0x3]
  %v468 = vpack.c.bf16 %v467, %v467
  %v470 = vsel %vm117, %v468, 0
  %472 = vmatprep.subr.bf16.mxu0 0
  %473 = vmatpush1.bf16.msra.mxu0 0
  %474 = vmatprep.subr.bf16.mxu0 0
  %475 = vmatpush1.bf16.msra.mxu0 0
  %476 = vmatprep.subr.bf16.mxu0 0
  %477 = vmatpush1.bf16.msra.mxu0 0
  %478 = vmatprep.subr.bf16.mxu0 0
  %479 = vmatpush1.bf16.msra.mxu0 0
  %480 = vmatprep.subr.bf16.mxu0 0
  %481 = vmatpush1.bf16.msra.mxu0 0
  %482 = vmatprep.subr.bf16.mxu0 0
  %483 = vmatpush1.bf16.msra.mxu0 0
  %484 = vmatprep.subr.bf16.mxu0 0
  %485 = vmatpush1.bf16.msra.mxu0 %v114
  %486 = vmatprep.subr.bf16.mxu0 0
  %487 = vmatpush1.bf16.msra.mxu0 %v113
  %488 = vmatprep.subr.bf16.mxu0 0
  %489 = vmatpush2.bf16.msra.mxu0 0
  %490 = vmatprep.subr.bf16.mxu0 0
  %491 = vmatpush2.bf16.msra.mxu0 0
  %492 = vmatprep.subr.bf16.mxu0 0
  %493 = vmatpush2.bf16.msra.mxu0 0
  %494 = vmatprep.subr.bf16.mxu0 0
  %495 = vmatpush2.bf16.msra.mxu0 0
  %496 = vmatprep.subr.bf16.mxu0 0
  %497 = vmatpush2.bf16.msra.mxu0 0
  %498 = vmatprep.subr.bf16.mxu0 0
  %499 = vmatpush2.bf16.msra.mxu0 0
  %500 = vmatprep.subr.bf16.mxu0 0
  %501 = vmatpush2.bf16.msra.mxu0 0
  %502 = vmatprep.subr.bf16.mxu0 0
  %503 = vmatpush2.bf16.msra.mxu0 0
  %504 = vmatprep.mubr.bf16.mxu0 0
  %505 = vmatmul.mubr.bf16.gmra.mxu0 %v470
  %v506 = vpop.f32.mrf.mxu0
  %v507 = vadd.f32 0.0, %v506
  %v508 = vpop.f32.mrf.mxu0
  %v509 = vpop.f32.mrf.mxu0
  %v510 = vpop.f32.mrf.mxu0
  %511 = vdwg.mxu0
  %v512 = vadd.f32 %v507, %v165
  %v513 = vadd.f32 %v512, %v96
  %v514 = vsel %vm169, %v513, %v512
  %s515 = scalar_lea.vmem %s72, 2
  %516 = vst.msk [vmem:[%s515] sm:$0x3] %vm172, %v514
  %518 = vrot.lane.b32.xlu0 %v507, 88
  %v519 = vpop.permute.xlu0 %518
  %v521 = vadd.f32 %v88, %v519
  %v522 = vtanh.pop %v521
  %523 = vst.msk [vmem:[#allocation2] sm:$0x3] %vm180, %v522
  %v524 = vld [vmem:[#allocation2] sm:$0x3]
  %v525 = vpack.c.bf16 %v524, %v524
  %v527 = vsel %vm117, %v525, 0
  %529 = vmatprep.subr.bf16.mxu0 0
  %530 = vmatpush1.bf16.msra.mxu0 0
  %531 = vmatprep.subr.bf16.mxu0 0
  %532 = vmatpush1.bf16.msra.mxu0 0
  %533 = vmatprep.subr.bf16.mxu0 0
  %534 = vmatpush1.bf16.msra.mxu0 0
  %535 = vmatprep.subr.bf16.mxu0 0
  %536 = vmatpush1.bf16.msra.mxu0 0
  %537 = vmatprep.subr.bf16.mxu0 0
  %538 = vmatpush1.bf16.msra.mxu0 0
  %539 = vmatprep.subr.bf16.mxu0 0
  %540 = vmatpush1.bf16.msra.mxu0 0
  %541 = vmatprep.subr.bf16.mxu0 0
  %542 = vmatpush1.bf16.msra.mxu0 %v114
  %543 = vmatprep.subr.bf16.mxu0 0
  %544 = vmatpush1.bf16.msra.mxu0 %v113
  %545 = vmatprep.subr.bf16.mxu0 0
  %546 = vmatpush2.bf16.msra.mxu0 0
  %547 = vmatprep.subr.bf16.mxu0 0
  %548 = vmatpush2.bf16.msra.mxu0 0
  %549 = vmatprep.subr.bf16.mxu0 0
  %550 = vmatpush2.bf16.msra.mxu0 0
  %551 = vmatprep.subr.bf16.mxu0 0
  %552 = vmatpush2.bf16.msra.mxu0 0
  %553 = vmatprep.subr.bf16.mxu0 0
  %554 = vmatpush2.bf16.msra.mxu0 0
  %555 = vmatprep.subr.bf16.mxu0 0
  %556 = vmatpush2.bf16.msra.mxu0 0
  %557 = vmatprep.subr.bf16.mxu0 0
  %558 = vmatpush2.bf16.msra.mxu0 0
  %559 = vmatprep.subr.bf16.mxu0 0
  %560 = vmatpush2.bf16.msra.mxu0 0
  %561 = vmatprep.mubr.bf16.mxu0 0
  %562 = vmatmul.mubr.bf16.gmra.mxu0 %v527
  %v563 = vpop.f32.mrf.mxu0
  %v564 = vadd.f32 0.0, %v563
  %v565 = vpop.f32.mrf.mxu0
  %v566 = vpop.f32.mrf.mxu0
  %v567 = vpop.f32.mrf.mxu0
  %568 = vdwg.mxu0
  %v569 = vadd.f32 %v564, %v165
  %v570 = vadd.f32 %v569, %v95
  %v571 = vsel %vm169, %v570, %v569
  %572 = vst.msk [vmem:[%s72] sm:$0x3] %vm172, %v571
  %574 = vrot.lane.b32.xlu0 %v564, 88
  %v575 = vpop.permute.xlu0 %574
  %v577 = vadd.f32 %v87, %v575
  %v578 = vtanh.pop %v577
  %579 = vst.msk [vmem:[#allocation2] sm:$0x3] %vm180, %v578
  %s580 = ssub.s32 0, 0
  %s581 = smul.u32 8, %s580
  %p582 = scmp.lt.s32.totalorder %s581, 7
  %s583 = scalar_select %p582, %s581, 7
  %s584 = smul.addr %s583, 2
  %s585 = scalar_lea.vmem %s4, %s584
  // Predicated region
  $region22: #{forward.5} parent=0 // pred_check
    _
  $region23: #{forward.5} parent=0 // pred_check_branch
    %587 = sbr.rel (0) target = $region25
  $region24: #{forward.5} parent=0 // pred_region
    %s588 = ssub.s32 0, 0
    %s589 = smul.u32 8, %s588
  $region25: #{forward.5} parent=0 // pred_fallthru
    _
  // Predicated region
  $region26: #{forward.5} parent=0 // pred_check
    _
  $region27: #{forward.5} parent=0 // pred_check_branch
    %591 = sbr.rel (0) target = $region29
  $region28: #{forward.5} parent=0 // pred_region
    %s592 = ssub.s32 0, 0
    %s593 = smul.u32 8, %s592
    %p594 = scmp.lt.s32.totalorder %s593, 7
    %s595 = scalar_select %p594, %s593, 7
    %s596 = smul.addr %s595, 2
    %s597 = scalar_lea.vmem %s4, %s596
  $region29: #{forward.5} parent=0 // pred_fallthru
    _

// kernel: forward.7
$region0: #{forward.7}
  #allocation0 [shape = 'u32[]', space=smem, size = 0x4, offset = 0x4, fixed_abs, tag = 'smem constant byte address 0x4 - core index']
  #allocation1 [shape = 'u32[144,128]{1,0:T(1,128)}', space=vmem, size = 0x12000, scoped, tag = 'internal scratch']
  %s0 = inlined_call_operand.vmem [shape: f32[4,16,8], index: 0, kind: input, shape index: {}]
  %s1 = inlined_call_operand.vmem [shape: f32[16,32], index: 1, kind: input, shape index: {}]
  %s2 = inlined_call_operand.vmem [shape: bf16[8,32], index: 2, kind: input, shape index: {}]
  %s3 = inlined_call_operand.vmem [shape: f32[1,32], index: 3, kind: input, shape index: {}]
  %s4 = inlined_call_operand.vmem [shape: f32[4,16], index: 4, kind: output, shape index: {}]
  %s5 = sld [smem:[#allocation0]]
  $region26: #{forward.7} parent=0
    _
  %s7 = ssub.s32 1, %s5
  %s8 = scalar_select 0, %s7, %s5
  // Predicated region
  $region2: #{forward.7} parent=0 // pred_check
    _
  $region3: #{forward.7} parent=0 // pred_check_branch
    %10 = sbr.rel (0) target = $region5
  $region4: #{forward.7} parent=0 // pred_region
    _
  $region5: #{forward.7} parent=0 // pred_fallthru
    _
  // Predicated region
  $region6: #{forward.7} parent=0 // pred_check
    _
  $region7: #{forward.7} parent=0 // pred_check_branch
    %12 = sbr.rel (0) target = $region9
  $region8: #{forward.7} parent=0 // pred_region
    _
  $region9: #{forward.7} parent=0 // pred_fallthru
    _
  // Predicated region
  $region10: #{forward.7} parent=0 // pred_check
    _
  $region11: #{forward.7} parent=0 // pred_check_branch
    %14 = sbr.rel (0) target = $region13
  $region12: #{forward.7} parent=0 // pred_region
    _
  $region13: #{forward.7} parent=0 // pred_fallthru
    _
  // Predicated region
  $region14: #{forward.7} parent=0 // pred_check
    _
  $region15: #{forward.7} parent=0 // pred_check_branch
    %16 = sbr.rel (0) target = $region17
  $region16: #{forward.7} parent=0 // pred_region
    _
  $region17: #{forward.7} parent=0 // pred_fallthru
    _
  %v18 = vld [vmem:[%s1] sm:$0xff]
  %v19 = vld [vmem:[%s1 + $0x8] sm:$0xff]
  %v20 = vld [vmem:[%s2] sm:$0xf]
  %v21 = vld [vmem:[%s3] sm:$0x1]
  %v22 = vld [vmem:[%s0] sm:$0xff]
  %v23 = vld [vmem:[%s0 + $0x8] sm:$0xff]
  %s24 = scalar_lea.vmem %s0, 16
  %v25 = vld [vmem:[%s24] sm:$0xff]
  %v26 = vld [vmem:[%s24 + $0x8] sm:$0xff]
  %s27 = scalar_lea.vmem %s0, 32
  %v28 = vld [vmem:[%s27] sm:$0xff]
  %v29 = vld [vmem:[%s27 + $0x8] sm:$0xff]
  %s30 = scalar_lea.vmem %s0, 48
  %v31 = vld [vmem:[%s30] sm:$0xff]
  %v32 = vld [vmem:[%s30 + $0x8] sm:$0xff]
  %v33 = vpack.c.bf16 %v23, %v22
  %v34 = vpack.c.bf16 %v26, %v25
  %v35 = vpack.c.bf16 %v29, %v28
  %v36 = vpack.c.bf16 %v32, %v31
  %v38 = vlaneseq
  %v39 = vshrl.u32 %v38, 7
  %v40 = vsub.s32 0, %v39
  %v41 = vrot.slane %v21, %v40
  %vm43 = vcmask 64512
  %v45 = vsel %vm43, %v33, 0
  %v48 = vsel %vm43, %v34, 0
  %v51 = vsel %vm43, %v35, 0
  %v54 = vsel %vm43, %v36, 0
  %vm56 = vcmask 1043456
  %v58 = vsel %vm56, %v20, 0
  %60 = vmatprep.subr.bf16.mxu0 0
  %61 = vmatpush1.bf16.msra.mxu0 0
  %62 = vmatprep.subr.bf16.mxu0 0
  %63 = vmatpush1.bf16.msra.mxu0 0
  %64 = vmatprep.subr.bf16.mxu0 0
  %65 = vmatpush1.bf16.msra.mxu0 0
  %66 = vmatprep.subr.bf16.mxu0 0
  %67 = vmatpush1.bf16.msra.mxu0 0
  %68 = vmatprep.subr.bf16.mxu0 0
  %69 = vmatpush1.bf16.msra.mxu0 0
  %70 = vmatprep.subr.bf16.mxu0 0
  %71 = vmatpush1.bf16.msra.mxu0 0
  %72 = vmatprep.subr.bf16.mxu0 0
  %73 = vmatpush1.bf16.msra.mxu0 0
  %74 = vmatprep.subr.bf16.mxu0 0
  %75 = vmatpush1.bf16.msra.mxu0 %v58
  %76 = vmatprep.subr.bf16.mxu0 0
  %77 = vmatpush2.bf16.msra.mxu0 0
  %78 = vmatprep.subr.bf16.mxu0 0
  %79 = vmatpush2.bf16.msra.mxu0 0
  %80 = vmatprep.subr.bf16.mxu0 0
  %81 = vmatpush2.bf16.msra.mxu0 0
  %82 = vmatprep.subr.bf16.mxu0 0
  %83 = vmatpush2.bf16.msra.mxu0 0
  %84 = vmatprep.subr.bf16.mxu0 0
  %85 = vmatpush2.bf16.msra.mxu0 0
  %86 = vmatprep.subr.bf16.mxu0 0
  %87 = vmatpush2.bf16.msra.mxu0 0
  %88 = vmatprep.subr.bf16.mxu0 0
  %89 = vmatpush2.bf16.msra.mxu0 0
  %90 = vmatprep.subr.bf16.mxu0 0
  %91 = vmatpush2.bf16.msra.mxu0 0
  %92 = vmatprep.mubr.bf16.mxu0 0
  %93 = vmatmul.mubr.bf16.gmra.mxu0 %v45
  %v94 = vpop.f32.mrf.mxu0
  %v95 = vadd.f32 %v41, %v94
  %v96 = vpop.f32.mrf.mxu0
  %v97 = vpop.f32.mrf.mxu0
  %v98 = vadd.f32 %v41, %v97
  %v99 = vpop.f32.mrf.mxu0
  %100 = vmatprep.mubr.bf16.mxu0 0
  %101 = vmatmul.mubr.bf16.gmra.mxu0 %v48
  %v102 = vpop.f32.mrf.mxu0
  %v103 = vadd.f32 %v41, %v102
  %v104 = vpop.f32.mrf.mxu0
  %v105 = vpop.f32.mrf.mxu0
  %v106 = vadd.f32 %v41, %v105
  %v107 = vpop.f32.mrf.mxu0
  %108 = vmatprep.mubr.bf16.mxu0 0
  %109 = vmatmul.mubr.bf16.gmra.mxu0 %v51
  %v110 = vpop.f32.mrf.mxu0
  %v111 = vadd.f32 %v41, %v110
  %v112 = vpop.f32.mrf.mxu0
  %v113 = vpop.f32.mrf.mxu0
  %v114 = vadd.f32 %v41, %v113
  %v115 = vpop.f32.mrf.mxu0
  %116 = vmatprep.mubr.bf16.mxu0 0
  %117 = vmatmul.mubr.bf16.gmra.mxu0 %v54
  %v118 = vpop.f32.mrf.mxu0
  %v119 = vadd.f32 %v41, %v118
  %v120 = vpop.f32.mrf.mxu0
  %v121 = vpop.f32.mrf.mxu0
  %v122 = vadd.f32 %v41, %v121
  %v123 = vpop.f32.mrf.mxu0
  %124 = vdwg.mxu0
  %v125 = vmul.f32 %v18, %v95
  %v126 = vmul.f32 %v19, %v98
  %v127 = vmul.f32 %v95, 1.442695
  %v128 = vpow.pop %v127
  %v129 = vmul.f32 %v98, 1.442695
  %v130 = vpow.pop %v129
  %v131 = vsub.f32 %v125, %v128
  %v132 = vsub.f32 %v126, %v130
  %vm133 = vcmask 261120
  %v134 = vsel %vm133, %v131, 0.0
  %135 = vadd.xlane.f32.xlu0 %v134
  %v136 = vpop.xlane.xlu0 %135
  %v137 = vsel %vm133, %v132, 0.0
  %138 = vadd.xlane.f32.xlu0 %v137
  %v139 = vpop.xlane.xlu0 %138
  %v142 = vlaneseq
  %v143 = vand.u32 %v142, 127
  %v144 = vlaneseq
  %v145 = vshrl.u32 %v144, 7
  %v146 = vsub.s32 %v143, %v145
  %v147 = vrot.slane %v136, %v146
  %v148 = vadd.s32 %v143, 4294967288
  %v149 = vlaneseq
  %v150 = vshrl.u32 %v149, 7
  %v151 = vsub.s32 %v148, %v150
  %v152 = vrot.slane %v139, %v151
  %vm153 = vcmask 130112
  %v154 = vsel %vm153, %v152, %v147
  %vm156 = vcmask 122880
  %157 = vst.msk [vmem:[%s4] sm:$0x1] %vm156, %v154
  %v158 = vmul.f32 %v18, %v103
  %v159 = vmul.f32 %v19, %v106
  %v160 = vmul.f32 %v103, 1.442695
  %v161 = vpow.pop %v160
  %v162 = vmul.f32 %v106, 1.442695
  %v163 = vpow.pop %v162
  %v164 = vsub.f32 %v158, %v161
  %v165 = vsub.f32 %v159, %v163
  %v166 = vsel %vm133, %v164, 0.0
  %167 = vadd.xlane.f32.xlu0 %v166
  %v168 = vpop.xlane.xlu0 %167
  %v169 = vsel %vm133, %v165, 0.0
  %170 = vadd.xlane.f32.xlu0 %v169
  %v171 = vpop.xlane.xlu0 %170
  %v174 = vlaneseq
  %v175 = vshrl.u32 %v174, 7
  %v176 = vsub.s32 %v143, %v175
  %v177 = vrot.slane %v168, %v176
  %v178 = vlaneseq
  %v179 = vshrl.u32 %v178, 7
  %v180 = vsub.s32 %v148, %v179
  %v181 = vrot.slane %v171, %v180
  %v182 = vsel %vm153, %v181, %v177
  %184 = vst.msk [vmem:[%s4 + $0x1] sm:$0x1] %vm156, %v182
  %v185 = vmul.f32 %v18, %v111
  %v186 = vmul.f32 %v19, %v114
  %v187 = vmul.f32 %v111, 1.442695
  %v188 = vpow.pop %v187
  %v189 = vmul.f32 %v114, 1.442695
  %v190 = vpow.pop %v189
  %v191 = vsub.f32 %v185, %v188
  %v192 = vsub.f32 %v186, %v190
  %v193 = vsel %vm133, %v191, 0.0
  %194 = vadd.xlane.f32.xlu0 %v193
  %v195 = vpop.xlane.xlu0 %194
  %v196 = vsel %vm133, %v192, 0.0
  %197 = vadd.xlane.f32.xlu0 %v196
  %v198 = vpop.xlane.xlu0 %197
  %v201 = vlaneseq
  %v202 = vshrl.u32 %v201, 7
  %v203 = vsub.s32 %v143, %v202
  %v204 = vrot.slane %v195, %v203
  %v205 = vlaneseq
  %v206 = vshrl.u32 %v205, 7
  %v207 = vsub.s32 %v148, %v206
  %v208 = vrot.slane %v198, %v207
  %v209 = vsel %vm153, %v208, %v204
  %211 = vst.msk [vmem:[%s4 + $0x2] sm:$0x1] %vm156, %v209
  %v212 = vmul.f32 %v18, %v119
  %v213 = vmul.f32 %v19, %v122
  %v214 = vmul.f32 %v119, 1.442695
  %v215 = vpow.pop %v214
  %v216 = vmul.f32 %v122, 1.442695
  %v217 = vpow.pop %v216
  %v218 = vsub.f32 %v212, %v215
  %v219 = vsub.f32 %v213, %v217
  %v220 = vsel %vm133, %v218, 0.0
  %221 = vadd.xlane.f32.xlu0 %v220
  %v222 = vpop.xlane.xlu0 %221
  %v223 = vsel %vm133, %v219, 0.0
  %224 = vadd.xlane.f32.xlu0 %v223
  %v225 = vpop.xlane.xlu0 %224
  %v228 = vlaneseq
  %v229 = vshrl.u32 %v228, 7
  %v230 = vsub.s32 %v143, %v229
  %v231 = vrot.slane %v222, %v230
  %v232 = vlaneseq
  %v233 = vshrl.u32 %v232, 7
  %v234 = vsub.s32 %v148, %v233
  %v235 = vrot.slane %v225, %v234
  %v236 = vsel %vm153, %v235, %v231
  %238 = vst.msk [vmem:[%s4 + $0x3] sm:$0x1] %vm156, %v236
  // Predicated region
  $region18: #{forward.7} parent=0 // pred_check
    _
  $region19: #{forward.7} parent=0 // pred_check_branch
    %240 = sbr.rel (0) target = $region21
  $region20: #{forward.7} parent=0 // pred_region
    _
  $region21: #{forward.7} parent=0 // pred_fallthru
    _
  // Predicated region
  $region22: #{forward.7} parent=0 // pred_check
    _
  $region23: #{forward.7} parent=0 // pred_check_branch
    %242 = sbr.rel (0) target = $region25
  $region24: #{forward.7} parent=0 // pred_region
    _
  $region25: #{forward.7} parent=0 // pred_fallthru
    _

// kernel: forward.6
$region0: #{forward.6}
  #allocation0 [shape = 'u32[]', space=smem, size = 0x4, offset = 0x4, fixed_abs, tag = 'smem constant byte address 0x4 - core index']
  #allocation1 [shape = 'u32[144,128]{1,0:T(1,128)}', space=vmem, size = 0x12000, scoped, tag = 'internal scratch']
  #allocation2 [shape = 'f32[4,2,8]{2,1,0:T(2,128)}', space=vmem, size = 0x1000, scoped, tag = 'scratch operand']
  %s0 = inlined_call_operand.vmem [shape: f32[8,2,8], index: 0, kind: input, shape index: {}]
  %s1 = inlined_call_operand.vmem [shape: f32[8,2,8,4], index: 1, kind: input, shape index: {}]
  %s2 = inlined_call_operand.vmem [shape: f32[8,2,8,4], index: 2, kind: input, shape index: {}]
  %s3 = inlined_call_operand.vmem [shape: f32[8,4,2,8], index: 3, kind: input, shape index: {}]
  %s4 = inlined_call_operand.vmem [shape: bf16[8,16], index: 4, kind: input, shape index: {}]
  %s5 = inlined_call_operand.vmem [shape: f32[1,16], index: 5, kind: input, shape index: {}]
  %s6 = inlined_call_operand.vmem [shape: bf16[16,8], index: 6, kind: input, shape index: {}]
  %s7 = inlined_call_operand.vmem [shape: f32[1,8], index: 7, kind: input, shape index: {}]
  %s8 = inlined_call_operand.vmem [shape: f32[8,8], index: 8, kind: input, shape index: {}]
  %s9 = inlined_call_operand.vmem [shape: f32[8,8], index: 9, kind: input, shape index: {}]
  %s10 = inlined_call_operand.vmem [shape: f32[1,8], index: 10, kind: input, shape index: {}]
  %s11 = inlined_call_operand.vmem [shape: f32[8,8], index: 11, kind: input, shape index: {}]
  %s12 = inlined_call_operand.vmem [shape: f32[4,8,2,8], index: 12, kind: output, shape index: {0}]
  %s13 = inlined_call_operand.vmem [shape: f32[8,2,1], index: 13, kind: output, shape index: {1}]
  %s14 = inlined_call_operand.vmem [shape: f32[8,2,8], index: 14, kind: output, shape index: {2}]
  %15 = xla_tuple %s12, %s13, %s14
  %s16 = sld [smem:[#allocation0]]
  $region138: #{forward.6} parent=0
    _
  %s18 = ssub.s32 1, %s16
  %s19 = scalar_select 0, %s18, %s16
  $region1: #{forward.6} parent=0
    #allocation3 [shape = 'u8[8192]{0}', space=vmem, size = 0x2000, scoped, tag = 'output window, operand 0']
    loop: start=0, step=1, limit=10
    $region2: #{forward.6} parent=1 // loop_pre_header
      _
    $region3: #{forward.6} parent=1 // loop_header
      %s21 = sphi 0, %s25
      %p22 = scmp.ge.s32.totalorder %s21, 10
      %s31 = sphi 0, %s33
      %s34 = sphi 0, %s31
      %s35 = sphi 0, %s34
      %s51 = sphi 0, %s35
      %s57 = sphi 0, %s59
      %s60 = sphi 0, %s57
      %s61 = sphi 0, %s60
      %s77 = sphi 0, %s61
      %s83 = sphi 0, %s85
      %s86 = sphi 0, %s83
      %s87 = sphi 0, %s86
      %s103 = sphi 0, %s87
      %s109 = sphi 0, %s111
      %s112 = sphi 0, %s109
      %s113 = sphi 0, %s112
      %s129 = sphi 0, %s113
      %s133 = sphi 0, %s133
      %s135 = sphi 0, %s133
      %s136 = sphi 0, %s135
      %s150 = sphi 0, %s136
      %s154 = sphi 0, %s154
      %s156 = sphi 0, %s154
      %s157 = sphi 0, %s156
      %s171 = sphi 0, %s157
      %s175 = sphi 0, %s175
      %s177 = sphi 0, %s175
      %s178 = sphi 0, %s177
      %s192 = sphi 0, %s178
      %s196 = sphi 0, %s196
      %s198 = sphi 0, %s196
      %s199 = sphi 0, %s198
      %s213 = sphi 0, %s199
      %s217 = sphi 0, %s217
      %s219 = sphi 0, %s217
      %s220 = sphi 0, %s219
      %s234 = sphi 0, %s220
      %s238 = sphi 0, %s238
      %s240 = sphi 0, %s238
      %s241 = sphi 0, %s240
      %s255 = sphi 0, %s241
      %s259 = sphi 0, %s259
      %s261 = sphi 0, %s259
      %s262 = sphi 0, %s261
      %s276 = sphi 0, %s262
      %s280 = sphi 0, %s280
      %s282 = sphi 0, %s280
      %s283 = sphi 0, %s282
      %s297 = sphi 0, %s283
      %s303 = sphi 0, %s305
      %s306 = sphi 0, %s303
      %s307 = sphi 0, %s306
      %s323 = sphi 0, %s307
      %s329 = sphi 0, %s331
      %s332 = sphi 0, %s329
      %s333 = sphi 0, %s332
      %s349 = sphi 0, %s333
      %s355 = sphi 0, %s357
      %s358 = sphi 0, %s355
      %s359 = sphi 0, %s358
      %s375 = sphi 0, %s359
    $region4: #{forward.6} parent=1 // loop_header_branch
      %24 = sbr.rel (%p22) target = $region8
    $region5: #{forward.6} parent=1 // loop_body
      %s26 = ssub.s32 %s21, 1
      %s27 = ssub.s32 %s21, 2
      %s28 = sadd.s32 %s21, 1
      %s29 = ssub.s32 %s21, %s28
      %p30 = scmp.eq.s32.totalorder %s29, 0
      %s32 = sadd.s32 %s31, 1
      %s33 = scalar_select %p30, %s31, %s32
      %p36 = pneg %p30
      %p37 = scmp.eq.s32.totalorder %s21, 7
      %p38 = por %p36, %p37
      %p39 = scmp.ne.s32.totalorder %s31, %s34
      %p40 = scmp.eq.s32.totalorder %s21, 0
      %p41 = por %p39, %p40
      %p42 = scmp.ne.s32.totalorder %s31, %s34
      %p43 = scmp.eq.s32.totalorder %s26, 7
      %p44 = por %p42, %p43
      %p45 = scmp.ne.s32.totalorder %s34, %s35
      %p46 = scmp.eq.s32.totalorder %s26, 0
      %p47 = por %p45, %p46
      %p48 = scmp.ne.s32.totalorder %s34, %s35
      %p49 = scmp.eq.s32.totalorder %s27, 7
      %p50 = por %p48, %p49
      %p52 = scmp.ne.s32.totalorder %s35, %s51
      %p53 = scmp.eq.s32.totalorder %s27, 0
      %p54 = por %p52, %p53
      %s55 = ssub.s32 %s21, %s28
      %p56 = scmp.eq.s32.totalorder %s55, 0
      %s58 = sadd.s32 %s57, 1
      %s59 = scalar_select %p56, %s57, %s58
      %p62 = pneg %p56
      %p63 = scmp.eq.s32.totalorder %s21, 7
      %p64 = por %p62, %p63
      %p65 = scmp.ne.s32.totalorder %s57, %s60
      %p66 = scmp.eq.s32.totalorder %s21, 0
      %p67 = por %p65, %p66
      %p68 = scmp.ne.s32.totalorder %s57, %s60
      %p69 = scmp.eq.s32.totalorder %s26, 7
      %p70 = por %p68, %p69
      %p71 = scmp.ne.s32.totalorder %s60, %s61
      %p72 = scmp.eq.s32.totalorder %s26, 0
      %p73 = por %p71, %p72
      %p74 = scmp.ne.s32.totalorder %s60, %s61
      %p75 = scmp.eq.s32.totalorder %s27, 7
      %p76 = por %p74, %p75
      %p78 = scmp.ne.s32.totalorder %s61, %s77
      %p79 = scmp.eq.s32.totalorder %s27, 0
      %p80 = por %p78, %p79
      %s81 = ssub.s32 %s21, %s28
      %p82 = scmp.eq.s32.totalorder %s81, 0
      %s84 = sadd.s32 %s83, 1
      %s85 = scalar_select %p82, %s83, %s84
      %p88 = pneg %p82
      %p89 = scmp.eq.s32.totalorder %s21, 7
      %p90 = por %p88, %p89
      %p91 = scmp.ne.s32.totalorder %s83, %s86
      %p92 = scmp.eq.s32.totalorder %s21, 0
      %p93 = por %p91, %p92
      %p94 = scmp.ne.s32.totalorder %s83, %s86
      %p95 = scmp.eq.s32.totalorder %s26, 7
      %p96 = por %p94, %p95
      %p97 = scmp.ne.s32.totalorder %s86, %s87
      %p98 = scmp.eq.s32.totalorder %s26, 0
      %p99 = por %p97, %p98
      %p100 = scmp.ne.s32.totalorder %s86, %s87
      %p101 = scmp.eq.s32.totalorder %s27, 7
      %p102 = por %p100, %p101
      %p104 = scmp.ne.s32.totalorder %s87, %s103
      %p105 = scmp.eq.s32.totalorder %s27, 0
      %p106 = por %p104, %p105
      %s107 = ssub.s32 %s21, %s28
      %p108 = scmp.eq.s32.totalorder %s107, 0
      %s110 = sadd.s32 %s109, 1
      %s111 = scalar_select %p108, %s109, %s110
      %p114 = pneg %p108
      %p115 = scmp.eq.s32.totalorder %s21, 7
      %p116 = por %p114, %p115
      %p117 = scmp.ne.s32.totalorder %s109, %s112
      %p118 = scmp.eq.s32.totalorder %s21, 0
      %p119 = por %p117, %p118
      %p120 = scmp.ne.s32.totalorder %s109, %s112
      %p121 = scmp.eq.s32.totalorder %s26, 7
      %p122 = por %p120, %p121
      %p123 = scmp.ne.s32.totalorder %s112, %s113
      %p124 = scmp.eq.s32.totalorder %s26, 0
      %p125 = por %p123, %p124
      %p126 = scmp.ne.s32.totalorder %s112, %s113
      %p127 = scmp.eq.s32.totalorder %s27, 7
      %p128 = por %p126, %p127
      %p130 = scmp.ne.s32.totalorder %s113, %s129
      %p131 = scmp.eq.s32.totalorder %s27, 0
      %p132 = por %p130, %p131
      %s134 = sadd.s32 %s133, 1
      %p137 = scmp.eq.s32.totalorder %s21, 7
      %p138 = scmp.ne.s32.totalorder %s133, %s135
      %p139 = scmp.eq.s32.totalorder %s21, 0
      %p140 = por %p138, %p139
      %p141 = scmp.ne.s32.totalorder %s133, %s135
      %p142 = scmp.eq.s32.totalorder %s26, 7
      %p143 = por %p141, %p142
      %p144 = scmp.ne.s32.totalorder %s135, %s136
      %p145 = scmp.eq.s32.totalorder %s26, 0
      %p146 = por %p144, %p145
      %p147 = scmp.ne.s32.totalorder %s135, %s136
      %p148 = scmp.eq.s32.totalorder %s27, 7
      %p149 = por %p147, %p148
      %p151 = scmp.ne.s32.totalorder %s136, %s150
      %p152 = scmp.eq.s32.totalorder %s27, 0
      %p153 = por %p151, %p152
      %s155 = sadd.s32 %s154, 1
      %p158 = scmp.eq.s32.totalorder %s21, 7
      %p159 = scmp.ne.s32.totalorder %s154, %s156
      %p160 = scmp.eq.s32.totalorder %s21, 0
      %p161 = por %p159, %p160
      %p162 = scmp.ne.s32.totalorder %s154, %s156
      %p163 = scmp.eq.s32.totalorder %s26, 7
      %p164 = por %p162, %p163
      %p165 = scmp.ne.s32.totalorder %s156, %s157
      %p166 = scmp.eq.s32.totalorder %s26, 0
      %p167 = por %p165, %p166
      %p168 = scmp.ne.s32.totalorder %s156, %s157
      %p169 = scmp.eq.s32.totalorder %s27, 7
      %p170 = por %p168, %p169
      %p172 = scmp.ne.s32.totalorder %s157, %s171
      %p173 = scmp.eq.s32.totalorder %s27, 0
      %p174 = por %p172, %p173
      %s176 = sadd.s32 %s175, 1
      %p179 = scmp.eq.s32.totalorder %s21, 7
      %p180 = scmp.ne.s32.totalorder %s175, %s177
      %p181 = scmp.eq.s32.totalorder %s21, 0
      %p182 = por %p180, %p181
      %p183 = scmp.ne.s32.totalorder %s175, %s177
      %p184 = scmp.eq.s32.totalorder %s26, 7
      %p185 = por %p183, %p184
      %p186 = scmp.ne.s32.totalorder %s177, %s178
      %p187 = scmp.eq.s32.totalorder %s26, 0
      %p188 = por %p186, %p187
      %p189 = scmp.ne.s32.totalorder %s177, %s178
      %p190 = scmp.eq.s32.totalorder %s27, 7
      %p191 = por %p189, %p190
      %p193 = scmp.ne.s32.totalorder %s178, %s192
      %p194 = scmp.eq.s32.totalorder %s27, 0
      %p195 = por %p193, %p194
      %s197 = sadd.s32 %s196, 1
      %p200 = scmp.eq.s32.totalorder %s21, 7
      %p201 = scmp.ne.s32.totalorder %s196, %s198
      %p202 = scmp.eq.s32.totalorder %s21, 0
      %p203 = por %p201, %p202
      %p204 = scmp.ne.s32.totalorder %s196, %s198
      %p205 = scmp.eq.s32.totalorder %s26, 7
      %p206 = por %p204, %p205
      %p207 = scmp.ne.s32.totalorder %s198, %s199
      %p208 = scmp.eq.s32.totalorder %s26, 0
      %p209 = por %p207, %p208
      %p210 = scmp.ne.s32.totalorder %s198, %s199
      %p211 = scmp.eq.s32.totalorder %s27, 7
      %p212 = por %p210, %p211
      %p214 = scmp.ne.s32.totalorder %s199, %s213
      %p215 = scmp.eq.s32.totalorder %s27, 0
      %p216 = por %p214, %p215
      %s218 = sadd.s32 %s217, 1
      %p221 = scmp.eq.s32.totalorder %s21, 7
      %p222 = scmp.ne.s32.totalorder %s217, %s219
      %p223 = scmp.eq.s32.totalorder %s21, 0
      %p224 = por %p222, %p223
      %p225 = scmp.ne.s32.totalorder %s217, %s219
      %p226 = scmp.eq.s32.totalorder %s26, 7
      %p227 = por %p225, %p226
      %p228 = scmp.ne.s32.totalorder %s219, %s220
      %p229 = scmp.eq.s32.totalorder %s26, 0
      %p230 = por %p228, %p229
      %p231 = scmp.ne.s32.totalorder %s219, %s220
      %p232 = scmp.eq.s32.totalorder %s27, 7
      %p233 = por %p231, %p232
      %p235 = scmp.ne.s32.totalorder %s220, %s234
      %p236 = scmp.eq.s32.totalorder %s27, 0
      %p237 = por %p235, %p236
      %s239 = sadd.s32 %s238, 1
      %p242 = scmp.eq.s32.totalorder %s21, 7
      %p243 = scmp.ne.s32.totalorder %s238, %s240
      %p244 = scmp.eq.s32.totalorder %s21, 0
      %p245 = por %p243, %p244
      %p246 = scmp.ne.s32.totalorder %s238, %s240
      %p247 = scmp.eq.s32.totalorder %s26, 7
      %p248 = por %p246, %p247
      %p249 = scmp.ne.s32.totalorder %s240, %s241
      %p250 = scmp.eq.s32.totalorder %s26, 0
      %p251 = por %p249, %p250
      %p252 = scmp.ne.s32.totalorder %s240, %s241
      %p253 = scmp.eq.s32.totalorder %s27, 7
      %p254 = por %p252, %p253
      %p256 = scmp.ne.s32.totalorder %s241, %s255
      %p257 = scmp.eq.s32.totalorder %s27, 0
      %p258 = por %p256, %p257
      %s260 = sadd.s32 %s259, 1
      %p263 = scmp.eq.s32.totalorder %s21, 7
      %p264 = scmp.ne.s32.totalorder %s259, %s261
      %p265 = scmp.eq.s32.totalorder %s21, 0
      %p266 = por %p264, %p265
      %p267 = scmp.ne.s32.totalorder %s259, %s261
      %p268 = scmp.eq.s32.totalorder %s26, 7
      %p269 = por %p267, %p268
      %p270 = scmp.ne.s32.totalorder %s261, %s262
      %p271 = scmp.eq.s32.totalorder %s26, 0
      %p272 = por %p270, %p271
      %p273 = scmp.ne.s32.totalorder %s261, %s262
      %p274 = scmp.eq.s32.totalorder %s27, 7
      %p275 = por %p273, %p274
      %p277 = scmp.ne.s32.totalorder %s262, %s276
      %p278 = scmp.eq.s32.totalorder %s27, 0
      %p279 = por %p277, %p278
      %s281 = sadd.s32 %s280, 1
      %p284 = scmp.eq.s32.totalorder %s21, 7
      %p285 = scmp.ne.s32.totalorder %s280, %s282
      %p286 = scmp.eq.s32.totalorder %s21, 0
      %p287 = por %p285, %p286
      %p288 = scmp.ne.s32.totalorder %s280, %s282
      %p289 = scmp.eq.s32.totalorder %s26, 7
      %p290 = por %p288, %p289
      %p291 = scmp.ne.s32.totalorder %s282, %s283
      %p292 = scmp.eq.s32.totalorder %s26, 0
      %p293 = por %p291, %p292
      %p294 = scmp.ne.s32.totalorder %s282, %s283
      %p295 = scmp.eq.s32.totalorder %s27, 7
      %p296 = por %p294, %p295
      %p298 = scmp.ne.s32.totalorder %s283, %s297
      %p299 = scmp.eq.s32.totalorder %s27, 0
      %p300 = por %p298, %p299
      %s301 = ssub.s32 %s21, %s28
      %p302 = scmp.eq.s32.totalorder %s301, 0
      %s304 = sadd.s32 %s303, 1
      %s305 = scalar_select %p302, %s303, %s304
      %p308 = pneg %p302
      %p309 = scmp.eq.s32.totalorder %s21, 7
      %p310 = por %p308, %p309
      %p311 = scmp.ne.s32.totalorder %s303, %s306
      %p312 = scmp.eq.s32.totalorder %s21, 0
      %p313 = por %p311, %p312
      %p314 = scmp.ne.s32.totalorder %s303, %s306
      %p315 = scmp.eq.s32.totalorder %s26, 7
      %p316 = por %p314, %p315
      %p317 = scmp.ne.s32.totalorder %s306, %s307
      %p318 = scmp.eq.s32.totalorder %s26, 0
      %p319 = por %p317, %p318
      %p320 = scmp.ne.s32.totalorder %s306, %s307
      %p321 = scmp.eq.s32.totalorder %s27, 7
      %p322 = por %p320, %p321
      %p324 = scmp.ne.s32.totalorder %s307, %s323
      %p325 = scmp.eq.s32.totalorder %s27, 0
      %p326 = por %p324, %p325
      %s327 = ssub.s32 %s21, %s28
      %p328 = scmp.eq.s32.totalorder %s327, 0
      %s330 = sadd.s32 %s329, 1
      %s331 = scalar_select %p328, %s329, %s330
      %p334 = pneg %p328
      %p335 = scmp.eq.s32.totalorder %s21, 7
      %p336 = por %p334, %p335
      %p337 = scmp.ne.s32.totalorder %s329, %s332
      %p338 = scmp.eq.s32.totalorder %s21, 0
      %p339 = por %p337, %p338
      %p340 = scmp.ne.s32.totalorder %s329, %s332
      %p341 = scmp.eq.s32.totalorder %s26, 7
      %p342 = por %p340, %p341
      %p343 = scmp.ne.s32.totalorder %s332, %s333
      %p344 = scmp.eq.s32.totalorder %s26, 0
      %p345 = por %p343, %p344
      %p346 = scmp.ne.s32.totalorder %s332, %s333
      %p347 = scmp.eq.s32.totalorder %s27, 7
      %p348 = por %p346, %p347
      %p350 = scmp.ne.s32.totalorder %s333, %s349
      %p351 = scmp.eq.s32.totalorder %s27, 0
      %p352 = por %p350, %p351
      %s353 = ssub.s32 %s21, %s28
      %p354 = scmp.eq.s32.totalorder %s353, 0
      %s356 = sadd.s32 %s355, 1
      %s357 = scalar_select %p354, %s355, %s356
      %p360 = pneg %p354
      %p361 = scmp.eq.s32.totalorder %s21, 7
      %p362 = por %p360, %p361
      %p363 = scmp.ne.s32.totalorder %s355, %s358
      %p364 = scmp.eq.s32.totalorder %s21, 0
      %p365 = por %p363, %p364
      %p366 = scmp.ne.s32.totalorder %s355, %s358
      %p367 = scmp.eq.s32.totalorder %s26, 7
      %p368 = por %p366, %p367
      %p369 = scmp.ne.s32.totalorder %s358, %s359
      %p370 = scmp.eq.s32.totalorder %s26, 0
      %p371 = por %p369, %p370
      %p372 = scmp.ne.s32.totalorder %s358, %s359
      %p373 = scmp.eq.s32.totalorder %s27, 7
      %p374 = por %p372, %p373
      %p376 = scmp.ne.s32.totalorder %s359, %s375
      %p377 = scmp.eq.s32.totalorder %s27, 0
      %p378 = por %p376, %p377
      %p379 = scmp.le.s32.totalorder 1, %s21
      %p380 = scmp.lt.s32.totalorder %s21, 9
      %p381 = pnand %p379, %p380
      %p382 = pneg %p381
      // Predicated region
      $region9: #{forward.6} parent=5 // pred_check
        _
      $region10: #{forward.6} parent=5 // pred_check_branch
        %384 = sbr.rel (%p381) target = $region12
      $region11: #{forward.6} parent=5 // pred_region
        %s385 = ssub.s32 %s21, 1
        // Predicated region
        $region13: #{forward.6} parent=11 // pred_check
          %p386 = pneg %p146
        $region14: #{forward.6} parent=11 // pred_check_branch
          %388 = sbr.rel (%p386) target = $region16
        $region15: #{forward.6} parent=11 // pred_region
          _
        $region16: #{forward.6} parent=11 // pred_fallthru
          _
        // Predicated region
        $region17: #{forward.6} parent=11 // pred_check
          %p389 = pneg %p167
        $region18: #{forward.6} parent=11 // pred_check_branch
          %391 = sbr.rel (%p389) target = $region20
        $region19: #{forward.6} parent=11 // pred_region
          _
        $region20: #{forward.6} parent=11 // pred_fallthru
          _
        // Predicated region
        $region21: #{forward.6} parent=11 // pred_check
          %p392 = pneg %p188
        $region22: #{forward.6} parent=11 // pred_check_branch
          %394 = sbr.rel (%p392) target = $region24
        $region23: #{forward.6} parent=11 // pred_region
          _
        $region24: #{forward.6} parent=11 // pred_fallthru
          _
        // Predicated region
        $region25: #{forward.6} parent=11 // pred_check
          %p395 = pneg %p209
        $region26: #{forward.6} parent=11 // pred_check_branch
          %397 = sbr.rel (%p395) target = $region28
        $region27: #{forward.6} parent=11 // pred_region
          _
        $region28: #{forward.6} parent=11 // pred_fallthru
          _
        // Predicated region
        $region29: #{forward.6} parent=11 // pred_check
          %p398 = pneg %p230
        $region30: #{forward.6} parent=11 // pred_check_branch
          %400 = sbr.rel (%p398) target = $region32
        $region31: #{forward.6} parent=11 // pred_region
          _
        $region32: #{forward.6} parent=11 // pred_fallthru
          _
        // Predicated region
        $region33: #{forward.6} parent=11 // pred_check
          %p401 = pneg %p251
        $region34: #{forward.6} parent=11 // pred_check_branch
          %403 = sbr.rel (%p401) target = $region36
        $region35: #{forward.6} parent=11 // pred_region
          _
        $region36: #{forward.6} parent=11 // pred_fallthru
          _
        // Predicated region
        $region37: #{forward.6} parent=11 // pred_check
          %p404 = pneg %p272
        $region38: #{forward.6} parent=11 // pred_check_branch
          %406 = sbr.rel (%p404) target = $region40
        $region39: #{forward.6} parent=11 // pred_region
          _
        $region40: #{forward.6} parent=11 // pred_fallthru
          _
        // Predicated region
        $region41: #{forward.6} parent=11 // pred_check
          %p407 = pneg %p293
        $region42: #{forward.6} parent=11 // pred_check_branch
          %409 = sbr.rel (%p407) target = $region44
        $region43: #{forward.6} parent=11 // pred_region
          _
        $region44: #{forward.6} parent=11 // pred_fallthru
          _
      $region12: #{forward.6} parent=5 // pred_fallthru
        _
      %p410 = scmp.lt.s32.totalorder %s21, 8
      // Predicated region
      $region45: #{forward.6} parent=5 // pred_check
        %p411 = pneg %p410
      $region46: #{forward.6} parent=5 // pred_check_branch
        %413 = sbr.rel (%p411) target = $region48
      $region47: #{forward.6} parent=5 // pred_region
        // Predicated region
        $region49: #{forward.6} parent=47 // pred_check
          %p414 = pneg %p41
        $region50: #{forward.6} parent=47 // pred_check_branch
          %416 = sbr.rel (%p414) target = $region52
        $region51: #{forward.6} parent=47 // pred_region
          %p417 = scmp.lt.s32.totalorder %s21, 7
          %s418 = scalar_select %p417, %s21, 7
          %s419 = smul.addr %s418, 2
          %s420 = scalar_lea.vmem %s0, %s419
        $region52: #{forward.6} parent=47 // pred_fallthru
          _
        // Predicated region
        $region53: #{forward.6} parent=47 // pred_check
          %p421 = pneg %p67
        $region54: #{forward.6} parent=47 // pred_check_branch
          %423 = sbr.rel (%p421) target = $region56
        $region55: #{forward.6} parent=47 // pred_region
          %p424 = scmp.lt.s32.totalorder %s21, 7
          %s425 = scalar_select %p424, %s21, 7
          %s426 = smul.addr %s425, 2
          %s427 = smul.addr %s426, 8
          %s428 = scalar_lea.vmem %s1, %s427
        $region56: #{forward.6} parent=47 // pred_fallthru
          _
        // Predicated region
        $region57: #{forward.6} parent=47 // pred_check
          %p429 = pneg %p93
        $region58: #{forward.6} parent=47 // pred_check_branch
          %431 = sbr.rel (%p429) target = $region60
        $region59: #{forward.6} parent=47 // pred_region
          %p432 = scmp.lt.s32.totalorder %s21, 7
          %s433 = scalar_select %p432, %s21, 7
          %s434 = smul.addr %s433, 2
          %s435 = smul.addr %s434, 8
          %s436 = scalar_lea.vmem %s2, %s435
        $region60: #{forward.6} parent=47 // pred_fallthru
          _
        // Predicated region
        $region61: #{forward.6} parent=47 // pred_check
          %p437 = pneg %p119
        $region62: #{forward.6} parent=47 // pred_check_branch
          %439 = sbr.rel (%p437) target = $region64
        $region63: #{forward.6} parent=47 // pred_region
          %p440 = scmp.lt.s32.totalorder %s21, 7
          %s441 = scalar_select %p440, %s21, 7
          %s442 = smul.addr %s441, 4
          %s443 = smul.addr %s442, 2
          %s444 = scalar_lea.vmem %s3, %s443
        $region64: #{forward.6} parent=47 // pred_fallthru
          _
      $region48: #{forward.6} parent=5 // pred_fallthru
        _
      %p445 = scmp.le.s32.totalorder 1, %s21
      %p446 = scmp.lt.s32.totalorder %s21, 9
      %p447 = pnand %p445, %p446
      %p448 = pneg %p447
      // Predicated region
      $region65: #{forward.6} parent=5 // pred_check
        _
      $region66: #{forward.6} parent=5 // pred_check_branch
        %450 = sbr.rel (%p447) target = $region68
      $region67: #{forward.6} parent=5 // pred_region
        %s451 = ssub.s32 %s21, 1
        %p452 = scmp.lt.s32.totalorder %s26, 7
        %s453 = scalar_select %p452, %s26, 7
        %s454 = smul.addr %s453, 2
        %s455 = scalar_lea.vmem %s0, %s454
        %p456 = pneg %p47
        %p457 = pneg %p44
        %p458 = scmp.lt.s32.totalorder %s26, 7
        %s459 = scalar_select %p458, %s26, 7
        %s460 = smul.addr %s459, 2
        %s461 = smul.addr %s460, 8
        %s462 = scalar_lea.vmem %s1, %s461
        %p463 = pneg %p73
        %p464 = pneg %p70
        %p465 = scmp.lt.s32.totalorder %s26, 7
        %s466 = scalar_select %p465, %s26, 7
        %s467 = smul.addr %s466, 2
        %s468 = smul.addr %s467, 8
        %s469 = scalar_lea.vmem %s2, %s468
        %p470 = pneg %p99
        %p471 = pneg %p96
        %p472 = scmp.lt.s32.totalorder %s26, 7
        %s473 = scalar_select %p472, %s26, 7
        %s474 = smul.addr %s473, 4
        %s475 = smul.addr %s474, 2
        %s476 = scalar_lea.vmem %s3, %s475
        %p477 = pneg %p125
        %p478 = pneg %p122
        %p479 = pneg %p146
        %p480 = pneg %p143
        %p481 = pneg %p167
        %p482 = pneg %p164
        %p483 = pneg %p188
        %p484 = pneg %p185
        %p485 = pneg %p209
        %p486 = pneg %p206
        %p487 = pneg %p230
        %p488 = pneg %p227
        %p489 = pneg %p251
        %p490 = pneg %p248
        %p491 = pneg %p272
        %p492 = pneg %p269
        %p493 = pneg %p293
        %p494 = pneg %p290
        %p495 = pneg %p319
        %p496 = pneg %p316
        %s497 = sand.u32 %s306, 1
        %s498 = sand.u32 %s306, 1
        %s499 = smul.addr %s498, 8
        %s500 = scalar_lea.vmem [#allocation3], %s499
        %p501 = pneg %p345
        %p502 = pneg %p342
        %p503 = scmp.lt.s32.totalorder %s26, 7
        %s504 = scalar_select %p503, %s26, 7
        %s505 = smul.addr %s504, 2
        %s506 = scalar_lea.vmem %s13, %s505
        %p507 = pneg %p371
        %p508 = pneg %p368
        %p509 = scmp.lt.s32.totalorder %s26, 7
        %s510 = scalar_select %p509, %s26, 7
        %s511 = smul.addr %s510, 2
        %s512 = scalar_lea.vmem %s14, %s511
        %p513 = scmp.lt.s32.totalorder %s26, 7
        %s514 = scalar_select %p513, %s26, 7
        %s515 = smul.addr %s514, 2
        %s516 = scalar_lea.vmem %s0, %s515
        %p517 = scmp.lt.s32.totalorder %s26, 7
        %s518 = scalar_select %p517, %s26, 7
        %s519 = smul.addr %s518, 2
        %s520 = smul.addr %s519, 8
        %s521 = scalar_lea.vmem %s1, %s520
        %p522 = scmp.lt.s32.totalorder %s26, 7
        %s523 = scalar_select %p522, %s26, 7
        %s524 = smul.addr %s523, 2
        %s525 = smul.addr %s524, 8
        %s526 = scalar_lea.vmem %s2, %s525
        %p527 = scmp.lt.s32.totalorder %s26, 7
        %s528 = scalar_select %p527, %s26, 7
        %s529 = smul.addr %s528, 4
        %s530 = smul.addr %s529, 2
        %s531 = scalar_lea.vmem %s3, %s530
        %p532 = scmp.lt.s32.totalorder %s26, 7
        %s533 = scalar_select %p532, %s26, 7
        %s534 = smul.addr %s533, 2
        %s535 = scalar_lea.vmem %s13, %s534
        %p536 = scmp.lt.s32.totalorder %s26, 7
        %s537 = scalar_select %p536, %s26, 7
        %s538 = smul.addr %s537, 2
        %s539 = scalar_lea.vmem %s14, %s538
        %p541 = scmp.eq.s32.totalorder %s26, 0
        // Predicated region
        $region69: #{forward.6} parent=67 // pred_check
          %p542 = pneg %p541
        $region70: #{forward.6} parent=67 // pred_check_branch
          %544 = sbr.rel (%p542) target = $region72
        $region71: #{forward.6} parent=67 // pred_region
          %vm545 = vcmask 58368
          %546 = vst.msk [vmem:[#allocation2] sm:$0x3] %vm545, 0.0
          %547 = vst.msk [vmem:[#allocation2 + $0x2] sm:$0x3] %vm545, 0.0
          %548 = vst.msk [vmem:[#allocation2 + $0x4] sm:$0x3] %vm545, 0.0
          %549 = vst.msk [vmem:[#allocation2 + $0x6] sm:$0x3] %vm545, 0.0
        $region72: #{forward.6} parent=67 // pred_fallthru
          _
        %v550 = vld [vmem:[%s4] sm:$0xf]
        %v551 = vld [vmem:[%s5] sm:$0x1]
        %v552 = vld [vmem:[%s6] sm:$0xf]
        %v553 = vld [vmem:[%s6 + $0x4] sm:$0xf]
        %v554 = vld [vmem:[%s7] sm:$0x1]
        %v555 = vld [vmem:[#allocation2] sm:$0x3]
        %v556 = vld [vmem:[#allocation2 + $0x2] sm:$0x3]
        %v557 = vld [vmem:[#allocation2 + $0x4] sm:$0x3]
        %v558 = vld [vmem:[#allocation2 + $0x6] sm:$0x3]
        %v559 = vpack.c.bf16 %v555, %v555
        %v561 = vlaneseq
        %v562 = vshrl.u32 %v561, 7
        %v563 = vsub.s32 0, %v562
        %v564 = vrot.slane %v551, %v563
        %vm566 = vcmask 64512
        %v568 = vsel %vm566, %v559, 0
        %vm570 = vcmask 1043456
        %v572 = vsel %vm570, %v550, 0
        %574 = vmatprep.subr.bf16.mxu0 0
        %575 = vmatpush1.bf16.msra.mxu0 0
        %576 = vmatprep.subr.bf16.mxu0 0
        %577 = vmatpush1.bf16.msra.mxu0 0
        %578 = vmatprep.subr.bf16.mxu0 0
        %579 = vmatpush1.bf16.msra.mxu0 0
        %580 = vmatprep.subr.bf16.mxu0 0
        %581 = vmatpush1.bf16.msra.mxu0 0
        %582 = vmatprep.subr.bf16.mxu0 0
        %583 = vmatpush1.bf16.msra.mxu0 0
        %584 = vmatprep.subr.bf16.mxu0 0
        %585 = vmatpush1.bf16.msra.mxu0 0
        %586 = vmatprep.subr.bf16.mxu0 0
        %587 = vmatpush1.bf16.msra.mxu0 0
        %588 = vmatprep.subr.bf16.mxu0 0
        %589 = vmatpush1.bf16.msra.mxu0 %v572
        %590 = vmatprep.subr.bf16.mxu0 0
        %591 = vmatpush2.bf16.msra.mxu0 0
        %592 = vmatprep.subr.bf16.mxu0 0
        %593 = vmatpush2.bf16.msra.mxu0 0
        %594 = vmatprep.subr.bf16.mxu0 0
        %595 = vmatpush2.bf16.msra.mxu0 0
        %596 = vmatprep.subr.bf16.mxu0 0
        %597 = vmatpush2.bf16.msra.mxu0 0
        %598 = vmatprep.subr.bf16.mxu0 0
        %599 = vmatpush2.bf16.msra.mxu0 0
        %600 = vmatprep.subr.bf16.mxu0 0
        %601 = vmatpush2.bf16.msra.mxu0 0
        %602 = vmatprep.subr.bf16.mxu0 0
        %603 = vmatpush2.bf16.msra.mxu0 0
        %604 = vmatprep.subr.bf16.mxu0 0
        %605 = vmatpush2.bf16.msra.mxu0 0
        %606 = vmatprep.mubr.bf16.mxu0 0
        %607 = vmatmul.mubr.bf16.gmra.mxu0 %v568
        %v608 = vpop.f32.mrf.mxu0
        %v609 = vadd.f32 %v564, %v608
        %v610 = vpop.f32.mrf.mxu0
        %v611 = vpop.f32.mrf.mxu0
        %v612 = vpop.f32.mrf.mxu0
        %613 = vdwg.mxu0
        %v614 = vtanh.pop %v609
        %v615 = vpack.c.bf16 %v614, %v614
        %v618 = vunpack.c.l.b16 %v552
        %v619 = vunpack.c.l.b16 %v553
        %v620 = vpack.c.b16 %v619, %v618
        %vm622 = vcmask 130048
        %v624 = vsel %vm622, %v615, 0
        %626 = vmatprep.subr.bf16.mxu0 0
        %627 = vmatpush1.bf16.msra.mxu0 0
        %628 = vmatprep.subr.bf16.mxu0 0
        %629 = vmatpush1.bf16.msra.mxu0 0
        %630 = vmatprep.subr.bf16.mxu0 0
        %631 = vmatpush1.bf16.msra.mxu0 0
        %632 = vmatprep.subr.bf16.mxu0 0
        %633 = vmatpush1.bf16.msra.mxu0 0
        %634 = vmatprep.subr.bf16.mxu0 0
        %635 = vmatpush1.bf16.msra.mxu0 0
        %636 = vmatprep.subr.bf16.mxu0 0
        %637 = vmatpush1.bf16.msra.mxu0 0
        %638 = vmatprep.subr.bf16.mxu0 0
        %639 = vmatpush1.bf16.msra.mxu0 0
        %640 = vmatprep.subr.bf16.mxu0 0
        %641 = vmatpush1.bf16.msra.mxu0 %v620
        %642 = vmatprep.subr.bf16.mxu0 0
        %643 = vmatpush2.bf16.msra.mxu0 0
        %644 = vmatprep.subr.bf16.mxu0 0
        %645 = vmatpush2.bf16.msra.mxu0 0
        %646 = vmatprep.subr.bf16.mxu0 0
        %647 = vmatpush2.bf16.msra.mxu0 0
        %648 = vmatprep.subr.bf16.mxu0 0
        %649 = vmatpush2.bf16.msra.mxu0 0
        %650 = vmatprep.subr.bf16.mxu0 0
        %651 = vmatpush2.bf16.msra.mxu0 0
        %652 = vmatprep.subr.bf16.mxu0 0
        %653 = vmatpush2.bf16.msra.mxu0 0
        %654 = vmatprep.subr.bf16.mxu0 0
        %655 = vmatpush2.bf16.msra.mxu0 0
        %656 = vmatprep.subr.bf16.mxu0 0
        %657 = vmatpush2.bf16.msra.mxu0 0
        %658 = vmatprep.mubr.bf16.mxu0 0
        %659 = vmatmul.mubr.bf16.gmra.mxu0 %v624
        %v660 = vpop.f32.mrf.mxu0
        %v661 = vadd.f32 0.0, %v660
        %v662 = vpop.f32.mrf.mxu0
        %v663 = vpop.f32.mrf.mxu0
        %v664 = vpop.f32.mrf.mxu0
        %665 = vdwg.mxu0
        %v666 = vadd.f32 %v555, %v661
        %v668 = vlaneseq
        %v669 = vshrl.u32 %v668, 7
        %v670 = vsub.s32 0, %v669
        %v671 = vrot.slane %v554, %v670
        %v673 = vadd.f32 %v666, %v671
        %v674 = vpack.c.bf16 %v556, %v556
        %v676 = vsel %vm566, %v674, 0
        %678 = vmatprep.subr.bf16.mxu0 0
        %679 = vmatpush1.bf16.msra.mxu0 0
        %680 = vmatprep.subr.bf16.mxu0 0
        %681 = vmatpush1.bf16.msra.mxu0 0
        %682 = vmatprep.subr.bf16.mxu0 0
        %683 = vmatpush1.bf16.msra.mxu0 0
        %684 = vmatprep.subr.bf16.mxu0 0
        %685 = vmatpush1.bf16.msra.mxu0 0
        %686 = vmatprep.subr.bf16.mxu0 0
        %687 = vmatpush1.bf16.msra.mxu0 0
        %688 = vmatprep.subr.bf16.mxu0 0
        %689 = vmatpush1.bf16.msra.mxu0 0
        %690 = vmatprep.subr.bf16.mxu0 0
        %691 = vmatpush1.bf16.msra.mxu0 0
        %692 = vmatprep.subr.bf16.mxu0 0
        %693 = vmatpush1.bf16.msra.mxu0 %v572
        %694 = vmatprep.subr.bf16.mxu0 0
        %695 = vmatpush2.bf16.msra.mxu0 0
        %696 = vmatprep.subr.bf16.mxu0 0
        %697 = vmatpush2.bf16.msra.mxu0 0
        %698 = vmatprep.subr.bf16.mxu0 0
        %699 = vmatpush2.bf16.msra.mxu0 0
        %700 = vmatprep.subr.bf16.mxu0 0
        %701 = vmatpush2.bf16.msra.mxu0 0
        %702 = vmatprep.subr.bf16.mxu0 0
        %703 = vmatpush2.bf16.msra.mxu0 0
        %704 = vmatprep.subr.bf16.mxu0 0
        %705 = vmatpush2.bf16.msra.mxu0 0
        %706 = vmatprep.subr.bf16.mxu0 0
        %707 = vmatpush2.bf16.msra.mxu0 0
        %708 = vmatprep.subr.bf16.mxu0 0
        %709 = vmatpush2.bf16.msra.mxu0 0
        %710 = vmatprep.mubr.bf16.mxu0 0
        %711 = vmatmul.mubr.bf16.gmra.mxu0 %v676
        %v712 = vpop.f32.mrf.mxu0
        %v713 = vadd.f32 %v564, %v712
        %v714 = vpop.f32.mrf.mxu0
        %v715 = vpop.f32.mrf.mxu0
        %v716 = vpop.f32.mrf.mxu0
        %717 = vdwg.mxu0
        %v718 = vtanh.pop %v713
        %v719 = vpack.c.bf16 %v718, %v718
        %v721 = vsel %vm622, %v719, 0
        %723 = vmatprep.subr.bf16.mxu0 0
        %724 = vmatpush1.bf16.msra.mxu0 0
        %725 = vmatprep.subr.bf16.mxu0 0
        %726 = vmatpush1.bf16.msra.mxu0 0
        %727 = vmatprep.subr.bf16.mxu0 0
        %728 = vmatpush1.bf16.msra.mxu0 0
        %729 = vmatprep.subr.bf16.mxu0 0
        %730 = vmatpush1.bf16.msra.mxu0 0
        %731 = vmatprep.subr.bf16.mxu0 0
        %732 = vmatpush1.bf16.msra.mxu0 0
        %733 = vmatprep.subr.bf16.mxu0 0
        %734 = vmatpush1.bf16.msra.mxu0 0
        %735 = vmatprep.subr.bf16.mxu0 0
        %736 = vmatpush1.bf16.msra.mxu0 0
        %737 = vmatprep.subr.bf16.mxu0 0
        %738 = vmatpush1.bf16.msra.mxu0 %v620
        %739 = vmatprep.subr.bf16.mxu0 0
        %740 = vmatpush2.bf16.msra.mxu0 0
        %741 = vmatprep.subr.bf16.mxu0 0
        %742 = vmatpush2.bf16.msra.mxu0 0
        %743 = vmatprep.subr.bf16.mxu0 0
        %744 = vmatpush2.bf16.msra.mxu0 0
        %745 = vmatprep.subr.bf16.mxu0 0
        %746 = vmatpush2.bf16.msra.mxu0 0
        %747 = vmatprep.subr.bf16.mxu0 0
        %748 = vmatpush2.bf16.msra.mxu0 0
        %749 = vmatprep.subr.bf16.mxu0 0
        %750 = vmatpush2.bf16.msra.mxu0 0
        %751 = vmatprep.subr.bf16.mxu0 0
        %752 = vmatpush2.bf16.msra.mxu0 0
        %753 = vmatprep.subr.bf16.mxu0 0
        %754 = vmatpush2.bf16.msra.mxu0 0
        %755 = vmatprep.mubr.bf16.mxu0 0
        %756 = vmatmul.mubr.bf16.gmra.mxu0 %v721
        %v757 = vpop.f32.mrf.mxu0
        %v758 = vadd.f32 0.0, %v757
        %v759 = vpop.f32.mrf.mxu0
        %v760 = vpop.f32.mrf.mxu0
        %v761 = vpop.f32.mrf.mxu0
        %762 = vdwg.mxu0
        %v763 = vadd.f32 %v556, %v758
        %v764 = vadd.f32 %v763, %v671
        %v765 = vpack.c.bf16 %v557, %v557
        %v767 = vsel %vm566, %v765, 0
        %769 = vmatprep.subr.bf16.mxu0 0
        %770 = vmatpush1.bf16.msra.mxu0 0
        %771 = vmatprep.subr.bf16.mxu0 0
        %772 = vmatpush1.bf16.msra.mxu0 0
        %773 = vmatprep.subr.bf16.mxu0 0
        %774 = vmatpush1.bf16.msra.mxu0 0
        %775 = vmatprep.subr.bf16.mxu0 0
        %776 = vmatpush1.bf16.msra.mxu0 0
        %777 = vmatprep.subr.bf16.mxu0 0
        %778 = vmatpush1.bf16.msra.mxu0 0
        %779 = vmatprep.subr.bf16.mxu0 0
        %780 = vmatpush1.bf16.msra.mxu0 0
        %781 = vmatprep.subr.bf16.mxu0 0
        %782 = vmatpush1.bf16.msra.mxu0 0
        %783 = vmatprep.subr.bf16.mxu0 0
        %784 = vmatpush1.bf16.msra.mxu0 %v572
        %785 = vmatprep.subr.bf16.mxu0 0
        %786 = vmatpush2.bf16.msra.mxu0 0
        %787 = vmatprep.subr.bf16.mxu0 0
        %788 = vmatpush2.bf16.msra.mxu0 0
        %789 = vmatprep.subr.bf16.mxu0 0
        %790 = vmatpush2.bf16.msra.mxu0 0
        %791 = vmatprep.subr.bf16.mxu0 0
        %792 = vmatpush2.bf16.msra.mxu0 0
        %793 = vmatprep.subr.bf16.mxu0 0
        %794 = vmatpush2.bf16.msra.mxu0 0
        %795 = vmatprep.subr.bf16.mxu0 0
        %796 = vmatpush2.bf16.msra.mxu0 0
        %797 = vmatprep.subr.bf16.mxu0 0
        %798 = vmatpush2.bf16.msra.mxu0 0
        %799 = vmatprep.subr.bf16.mxu0 0
        %800 = vmatpush2.bf16.msra.mxu0 0
        %801 = vmatprep.mubr.bf16.mxu0 0
        %802 = vmatmul.mubr.bf16.gmra.mxu0 %v767
        %v803 = vpop.f32.mrf.mxu0
        %v804 = vadd.f32 %v564, %v803
        %v805 = vpop.f32.mrf.mxu0
        %v806 = vpop.f32.mrf.mxu0
        %v807 = vpop.f32.mrf.mxu0
        %808 = vdwg.mxu0
        %v809 = vtanh.pop %v804
        %v810 = vpack.c.bf16 %v809, %v809
        %v812 = vsel %vm622, %v810, 0
        %814 = vmatprep.subr.bf16.mxu0 0
        %815 = vmatpush1.bf16.msra.mxu0 0
        %816 = vmatprep.subr.bf16.mxu0 0
        %817 = vmatpush1.bf16.msra.mxu0 0
        %818 = vmatprep.subr.bf16.mxu0 0
        %819 = vmatpush1.bf16.msra.mxu0 0
        %820 = vmatprep.subr.bf16.mxu0 0
        %821 = vmatpush1.bf16.msra.mxu0 0
        %822 = vmatprep.subr.bf16.mxu0 0
        %823 = vmatpush1.bf16.msra.mxu0 0
        %824 = vmatprep.subr.bf16.mxu0 0
        %825 = vmatpush1.bf16.msra.mxu0 0
        %826 = vmatprep.subr.bf16.mxu0 0
        %827 = vmatpush1.bf16.msra.mxu0 0
        %828 = vmatprep.subr.bf16.mxu0 0
        %829 = vmatpush1.bf16.msra.mxu0 %v620
        %830 = vmatprep.subr.bf16.mxu0 0
        %831 = vmatpush2.bf16.msra.mxu0 0
        %832 = vmatprep.subr.bf16.mxu0 0
        %833 = vmatpush2.bf16.msra.mxu0 0
        %834 = vmatprep.subr.bf16.mxu0 0
        %835 = vmatpush2.bf16.msra.mxu0 0
        %836 = vmatprep.subr.bf16.mxu0 0
        %837 = vmatpush2.bf16.msra.mxu0 0
        %838 = vmatprep.subr.bf16.mxu0 0
        %839 = vmatpush2.bf16.msra.mxu0 0
        %840 = vmatprep.subr.bf16.mxu0 0
        %841 = vmatpush2.bf16.msra.mxu0 0
        %842 = vmatprep.subr.bf16.mxu0 0
        %843 = vmatpush2.bf16.msra.mxu0 0
        %844 = vmatprep.subr.bf16.mxu0 0
        %845 = vmatpush2.bf16.msra.mxu0 0
        %846 = vmatprep.mubr.bf16.mxu0 0
        %847 = vmatmul.mubr.bf16.gmra.mxu0 %v812
        %v848 = vpop.f32.mrf.mxu0
        %v849 = vadd.f32 0.0, %v848
        %v850 = vpop.f32.mrf.mxu0
        %v851 = vpop.f32.mrf.mxu0
        %v852 = vpop.f32.mrf.mxu0
        %853 = vdwg.mxu0
        %v854 = vadd.f32 %v557, %v849
        %v855 = vadd.f32 %v854, %v671
        %v856 = vpack.c.bf16 %v558, %v558
        %v858 = vsel %vm566, %v856, 0
        %860 = vmatprep.subr.bf16.mxu0 0
        %861 = vmatpush1.bf16.msra.mxu0 0
        %862 = vmatprep.subr.bf16.mxu0 0
        %863 = vmatpush1.bf16.msra.mxu0 0
        %864 = vmatprep.subr.bf16.mxu0 0
        %865 = vmatpush1.bf16.msra.mxu0 0
        %866 = vmatprep.subr.bf16.mxu0 0
        %867 = vmatpush1.bf16.msra.mxu0 0
        %868 = vmatprep.subr.bf16.mxu0 0
        %869 = vmatpush1.bf16.msra.mxu0 0
        %870 = vmatprep.subr.bf16.mxu0 0
        %871 = vmatpush1.bf16.msra.mxu0 0
        %872 = vmatprep.subr.bf16.mxu0 0
        %873 = vmatpush1.bf16.msra.mxu0 0
        %874 = vmatprep.subr.bf16.mxu0 0
        %875 = vmatpush1.bf16.msra.mxu0 %v572
        %876 = vmatprep.subr.bf16.mxu0 0
        %877 = vmatpush2.bf16.msra.mxu0 0
        %878 = vmatprep.subr.bf16.mxu0 0
        %879 = vmatpush2.bf16.msra.mxu0 0
        %880 = vmatprep.subr.bf16.mxu0 0
        %881 = vmatpush2.bf16.msra.mxu0 0
        %882 = vmatprep.subr.bf16.mxu0 0
        %883 = vmatpush2.bf16.msra.mxu0 0
        %884 = vmatprep.subr.bf16.mxu0 0
        %885 = vmatpush2.bf16.msra.mxu0 0
        %886 = vmatprep.subr.bf16.mxu0 0
        %887 = vmatpush2.bf16.msra.mxu0 0
        %888 = vmatprep.subr.bf16.mxu0 0
        %889 = vmatpush2.bf16.msra.mxu0 0
        %890 = vmatprep.subr.bf16.mxu0 0
        %891 = vmatpush2.bf16.msra.mxu0 0
        %892 = vmatprep.mubr.bf16.mxu0 0
        %893 = vmatmul.mubr.bf16.gmra.mxu0 %v858
        %v894 = vpop.f32.mrf.mxu0
        %v895 = vadd.f32 %v564, %v894
        %v896 = vpop.f32.mrf.mxu0
        %v897 = vpop.f32.mrf.mxu0
        %v898 = vpop.f32.mrf.mxu0
        %899 = vdwg.mxu0
        %v900 = vtanh.pop %v895
        %v901 = vpack.c.bf16 %v900, %v900
        %v903 = vsel %vm622, %v901, 0
        %905 = vmatprep.subr.bf16.mxu0 0
        %906 = vmatpush1.bf16.msra.mxu0 0
        %907 = vmatprep.subr.bf16.mxu0 0
        %908 = vmatpush1.bf16.msra.mxu0 0
        %909 = vmatprep.subr.bf16.mxu0 0
        %910 = vmatpush1.bf16.msra.mxu0 0
        %911 = vmatprep.subr.bf16.mxu0 0
        %912 = vmatpush1.bf16.msra.mxu0 0
        %913 = vmatprep.subr.bf16.mxu0 0
        %914 = vmatpush1.bf16.msra.mxu0 0
        %915 = vmatprep.subr.bf16.mxu0 0
        %916 = vmatpush1.bf16.msra.mxu0 0
        %917 = vmatprep.subr.bf16.mxu0 0
        %918 = vmatpush1.bf16.msra.mxu0 0
        %919 = vmatprep.subr.bf16.mxu0 0
        %920 = vmatpush1.bf16.msra.mxu0 %v620
        %921 = vmatprep.subr.bf16.mxu0 0
        %922 = vmatpush2.bf16.msra.mxu0 0
        %923 = vmatprep.subr.bf16.mxu0 0
        %924 = vmatpush2.bf16.msra.mxu0 0
        %925 = vmatprep.subr.bf16.mxu0 0
        %926 = vmatpush2.bf16.msra.mxu0 0
        %927 = vmatprep.subr.bf16.mxu0 0
        %928 = vmatpush2.bf16.msra.mxu0 0
        %929 = vmatprep.subr.bf16.mxu0 0
        %930 = vmatpush2.bf16.msra.mxu0 0
        %931 = vmatprep.subr.bf16.mxu0 0
        %932 = vmatpush2.bf16.msra.mxu0 0
        %933 = vmatprep.subr.bf16.mxu0 0
        %934 = vmatpush2.bf16.msra.mxu0 0
        %935 = vmatprep.subr.bf16.mxu0 0
        %936 = vmatpush2.bf16.msra.mxu0 0
        %937 = vmatprep.mubr.bf16.mxu0 0
        %938 = vmatmul.mubr.bf16.gmra.mxu0 %v903
        %v939 = vpop.f32.mrf.mxu0
        %v940 = vadd.f32 0.0, %v939
        %v941 = vpop.f32.mrf.mxu0
        %v942 = vpop.f32.mrf.mxu0
        %v943 = vpop.f32.mrf.mxu0
        %944 = vdwg.mxu0
        %v945 = vadd.f32 %v558, %v940
        %v946 = vadd.f32 %v945, %v671
        %v947 = vadd.f32 %v673, %v764
        %v948 = vadd.f32 %v947, %v855
        %v949 = vadd.f32 %v948, %v946
        %v950 = vmul.f32 %v949, 0.25
        %v951 = vsub.f32 %v673, %v950
        %v952 = vlaneseq
        %v953 = vshrl.u32 %v952, 7
        %v954 = vsub.s32 0, %v953
        %v955 = vrot.slane %v951, %v954
        %957 = vbcast.lane.b32.xlu0 %v955, 256
        %v958 = vpop.permute.xlu0 %957
        %v959 = vlaneseq
        %v960 = vshrl.u32 %v959, 7
        %v961 = vsub.s32 1, %v960
        %v962 = vrot.slane %v951, %v961
        %964 = vbcast.lane.b32.xlu0 %v962, 256
        %v965 = vpop.permute.xlu0 %964
        %v968 = vunpack.c.l.s4 1966171168
        %v969 = vunpack.c.0.s8 %v968
        %v970 = vlaneseq
        %v971 = vshrl.u32 %v970, 7
        %v972 = vsub.s32 %v969, %v971
        %v973 = vrot.slane %v951, %v972
        %v974 = vcombine.high %v973, %v973
        %v976 = vunpack.c.l.s4 1966171168
        %v977 = vunpack.c.0.s8 %v976
        %v978 = vlaneseq
        %v979 = vshrl.u32 %v978, 7
        %v980 = vsub.s32 %v977, %v979
        %v981 = vrot.slane %v973, %v980
        %v983 = vunpack.c.l.s4 1966171168
        %v984 = vunpack.c.0.s8 %v983
        %v985 = vlaneseq
        %v986 = vshrl.u32 %v985, 7
        %v987 = vsub.s32 %v984, %v986
        %v988 = vrot.slane %v974, %v987
        %v989 = vlaneseq
        %v990 = vshrl.u32 %v989, 7
        %v991 = vsub.s32 0, %v990
        %v992 = vrot.slane %v981, %v991
        %v993 = vlaneseq
        %v994 = vshrl.u32 %v993, 7
        %v995 = vsub.s32 0, %v994
        %v996 = vrot.slane %v988, %v995
        %v999 = vmul.f32 %v958, %v992
        %v1000 = vmul.f32 %v965, %v996
        %v1001 = vadd.f32 %v999, 0.0
        %v1002 = vadd.f32 %v1000, 0.0
        %v1003 = vsub.f32 %v764, %v950
        %v1004 = vlaneseq
        %v1005 = vshrl.u32 %v1004, 7
        %v1006 = vsub.s32 0, %v1005
        %v1007 = vrot.slane %v1003, %v1006
        %1009 = vbcast.lane.b32.xlu0 %v1007, 256
        %v1010 = vpop.permute.xlu0 %1009
        %v1011 = vlaneseq
        %v1012 = vshrl.u32 %v1011, 7
        %v1013 = vsub.s32 1, %v1012
        %v1014 = vrot.slane %v1003, %v1013
        %1016 = vbcast.lane.b32.xlu0 %v1014, 256
        %v1017 = vpop.permute.xlu0 %1016
        %v1020 = vunpack.c.l.s4 1966171168
        %v1021 = vunpack.c.0.s8 %v1020
        %v1022 = vlaneseq
        %v1023 = vshrl.u32 %v1022, 7
        %v1024 = vsub.s32 %v1021, %v1023
        %v1025 = vrot.slane %v1003, %v1024
        %v1026 = vcombine.high %v1025, %v1025
        %v1028 = vunpack.c.l.s4 1966171168
        %v1029 = vunpack.c.0.s8 %v1028
        %v1030 = vlaneseq
        %v1031 = vshrl.u32 %v1030, 7
        %v1032 = vsub.s32 %v1029, %v1031
        %v1033 = vrot.slane %v1025, %v1032
        %v1035 = vunpack.c.l.s4 1966171168
        %v1036 = vunpack.c.0.s8 %v1035
        %v1037 = vlaneseq
        %v1038 = vshrl.u32 %v1037, 7
        %v1039 = vsub.s32 %v1036, %v1038
        %v1040 = vrot.slane %v1026, %v1039
        %v1041 = vlaneseq
        %v1042 = vshrl.u32 %v1041, 7
        %v1043 = vsub.s32 0, %v1042
        %v1044 = vrot.slane %v1033, %v1043
        %v1045 = vlaneseq
        %v1046 = vshrl.u32 %v1045, 7
        %v1047 = vsub.s32 0, %v1046
        %v1048 = vrot.slane %v1040, %v1047
        %v1051 = vmul.f32 %v1010, %v1044
        %v1052 = vmul.f32 %v1017, %v1048
        %v1053 = vadd.f32 %v1001, %v1051
        %v1054 = vadd.f32 %v1002, %v1052
        %v1055 = vsub.f32 %v855, %v950
        %v1056 = vlaneseq
        %v1057 = vshrl.u32 %v1056, 7
        %v1058 = vsub.s32 0, %v1057
        %v1059 = vrot.slane %v1055, %v1058
        %1061 = vbcast.lane.b32.xlu0 %v1059, 256
        %v1062 = vpop.permute.xlu0 %1061
        %v1063 = vlaneseq
        %v1064 = vshrl.u32 %v1063, 7
        %v1065 = vsub.s32 1, %v1064
        %v1066 = vrot.slane %v1055, %v1065
        %1068 = vbcast.lane.b32.xlu0 %v1066, 256
        %v1069 = vpop.permute.xlu0 %1068
        %v1072 = vunpack.c.l.s4 1966171168
        %v1073 = vunpack.c.0.s8 %v1072
        %v1074 = vlaneseq
        %v1075 = vshrl.u32 %v1074, 7
        %v1076 = vsub.s32 %v1073, %v1075
        %v1077 = vrot.slane %v1055, %v1076
        %v1078 = vcombine.high %v1077, %v1077
        %v1080 = vunpack.c.l.s4 1966171168
        %v1081 = vunpack.c.0.s8 %v1080
        %v1082 = vlaneseq
        %v1083 = vshrl.u32 %v1082, 7
        %v1084 = vsub.s32 %v1081, %v1083
        %v1085 = vrot.slane %v1077, %v1084
        %v1087 = vunpack.c.l.s4 1966171168
        %v1088 = vunpack.c.0.s8 %v1087
        %v1089 = vlaneseq
        %v1090 = vshrl.u32 %v1089, 7
        %v1091 = vsub.s32 %v1088, %v1090
        %v1092 = vrot.slane %v1078, %v1091
        %v1093 = vlaneseq
        %v1094 = vshrl.u32 %v1093, 7
        %v1095 = vsub.s32 0, %v1094
        %v1096 = vrot.slane %v1085, %v1095
        %v1097 = vlaneseq
        %v1098 = vshrl.u32 %v1097, 7
        %v1099 = vsub.s32 0, %v1098
        %v1100 = vrot.slane %v1092, %v1099
        %v1103 = vmul.f32 %v1062, %v1096
        %v1104 = vmul.f32 %v1069, %v1100
        %v1105 = vadd.f32 %v1053, %v1103
        %v1106 = vadd.f32 %v1054, %v1104
        %v1107 = vsub.f32 %v946, %v950
        %v1108 = vlaneseq
        %v1109 = vshrl.u32 %v1108, 7
        %v1110 = vsub.s32 0, %v1109
        %v1111 = vrot.slane %v1107, %v1110
        %1113 = vbcast.lane.b32.xlu0 %v1111, 256
        %v1114 = vpop.permute.xlu0 %1113
        %v1115 = vlaneseq
        %v1116 = vshrl.u32 %v1115, 7
        %v1117 = vsub.s32 1, %v1116
        %v1118 = vrot.slane %v1107, %v1117
        %1120 = vbcast.lane.b32.xlu0 %v1118, 256
        %v1121 = vpop.permute.xlu0 %1120
        %v1124 = vunpack.c.l.s4 1966171168
        %v1125 = vunpack.c.0.s8 %v1124
        %v1126 = vlaneseq
        %v1127 = vshrl.u32 %v1126, 7
        %v1128 = vsub.s32 %v1125, %v1127
        %v1129 = vrot.slane %v1107, %v1128
        %v1130 = vcombine.high %v1129, %v1129
        %v1132 = vunpack.c.l.s4 1966171168
        %v1133 = vunpack.c.0.s8 %v1132
        %v1134 = vlaneseq
        %v1135 = vshrl.u32 %v1134, 7
        %v1136 = vsub.s32 %v1133, %v1135
        %v1137 = vrot.slane %v1129, %v1136
        %v1139 = vunpack.c.l.s4 1966171168
        %v1140 = vunpack.c.0.s8 %v1139
        %v1141 = vlaneseq
        %v1142 = vshrl.u32 %v1141, 7
        %v1143 = vsub.s32 %v1140, %v1142
        %v1144 = vrot.slane %v1130, %v1143
        %v1145 = vlaneseq
        %v1146 = vshrl.u32 %v1145, 7
        %v1147 = vsub.s32 0, %v1146
        %v1148 = vrot.slane %v1137, %v1147
        %v1149 = vlaneseq
        %v1150 = vshrl.u32 %v1149, 7
        %v1151 = vsub.s32 0, %v1150
        %v1152 = vrot.slane %v1144, %v1151
        %v1155 = vmul.f32 %v1114, %v1148
        %v1156 = vmul.f32 %v1121, %v1152
        %v1157 = vadd.f32 %v1105, %v1155
        %v1158 = vadd.f32 %v1106, %v1156
        %v1159 = vmul.f32 %v1157, 0.25
        %v1160 = vmul.f32 %v1158, 0.25
        %v1161 = vld [vmem:[%s8] sm:$0xff]
        %v1162 = vadd.f32 %v1159, %v1161
        %v1163 = vadd.f32 %v1160, %v1161
        %s1164 = scalar_select %p541, 1.0, 0.0
        %v1165 = vld [vmem:[%s10] sm:$0x1]
        %v1166 = vstv %s1164
        %v1167 = vmul.f32 %v1166, %v1165
        %s1168 = ssub.f32 1.0, %s1164
        %v1169 = vstv %s1168
        %v1170 = vmul.f32 %v1169, %v950
        %v1172 = vlaneseq
        %v1173 = vshrl.u32 %v1172, 7
        %v1174 = vsub.s32 0, %v1173
        %v1175 = vrot.slane %v1167, %v1174
        %v1177 = vadd.f32 %v1175, %v1170
        %v1178 = vld [vmem:[%s9] sm:$0xff]
        %v1179 = vmul.f32 %v1166, %v1178
        %v1180 = vmul.f32 %v1169, %v1162
        %v1181 = vmul.f32 %v1169, %v1163
        %v1182 = vadd.f32 %v1179, %v1180
        %v1183 = vadd.f32 %v1179, %v1181
        %v1184 = vld [vmem:[%s11] sm:$0xff]
        %v1185 = vadd.f32 %v1184, 0.0
        %v1186 = vlaneseq
        %v1187 = vshrl.u32 %v1186, 7
        %v1188 = vlog2.pop %v1182
        %v1189 = vmul.f32 %v1188, 0.6931472
        %v1190 = vlog2.pop %v1183
        %v1191 = vmul.f32 %v1190, 0.6931472
        %v1192 = vadd.f32 %v1189, 0.0
        %v1193 = vadd.f32 %v1191, 0.0
        %1195 = vset.pattern.permute.xlu0 0
        %1196 = vperm.xlu0 %1195, %v1182
        %v1197 = vpop.permute.xlu0 %1196
        %1200 = vset.pattern.permute.xlu0 0
        %1201 = vperm.xlu0 %1200, %v1183
        %v1202 = vpop.permute.xlu0 %1201
        %v1204 = vrcp.pop %v1197
        %v1205 = vmul.f32 %v1182, %v1204
        %v1206 = vrcp.pop %v1202
        %v1207 = vmul.f32 %v1183, %v1206
        %v1208 = vmul.f32 %v1185, %v1204
        %v1209 = vmul.f32 %v1185, %v1206
        %vm1210 = vcmp.eq.s32.totalorder %v1187, 0
        %v1211 = vsel %vm1210, 1, 0
        %v1212 = vcvt.s32.f32 %v1211
        %v1213 = vlaneseq
        %v1214 = vshrl.u32 %v1213, 7
        %v1215 = vsub.s32 0, %v1214
        %v1216 = vrot.slane %v1205, %v1215
        %v1217 = vlaneseq
        %v1218 = vshrl.u32 %v1217, 7
        %v1219 = vsub.s32 0, %v1218
        %v1220 = vrot.slane %v1207, %v1219
        %v1221 = vmul.f32 %v1212, %v1216
        %v1222 = vmul.f32 %v1212, %v1220
        %v1223 = vsub.f32 1.0, %v1212
        %v1224 = vmul.f32 %v1197, %v1216
        %v1225 = vmul.f32 %v1202, %v1220
        %v1226 = vsub.f32 %v1182, %v1224
        %v1227 = vsub.f32 %v1183, %v1225
        %v1228 = vmul.f32 %v1223, %v1226
        %v1229 = vmul.f32 %v1223, %v1227
        %v1230 = vadd.f32 %v1221, %v1228
        %v1231 = vadd.f32 %v1222, %v1229
        %v1232 = vlaneseq
        %v1233 = vshrl.u32 %v1232, 7
        %v1234 = vsub.s32 0, %v1233
        %v1235 = vrot.slane %v1208, %v1234
        %v1236 = vlaneseq
        %v1237 = vshrl.u32 %v1236, 7
        %v1238 = vsub.s32 0, %v1237
        %v1239 = vrot.slane %v1209, %v1238
        %v1240 = vmul.f32 %v1212, %v1235
        %v1241 = vmul.f32 %v1212, %v1239
        %v1242 = vmul.f32 %v1197, %v1235
        %v1243 = vmul.f32 %v1202, %v1239
        %v1244 = vsub.f32 %v1185, %v1242
        %v1245 = vsub.f32 %v1185, %v1243
        %v1246 = vmul.f32 %v1223, %v1244
        %v1247 = vmul.f32 %v1223, %v1245
        %v1248 = vadd.f32 %v1240, %v1246
        %v1249 = vadd.f32 %v1241, %v1247
        %v1250 = vlog2.pop %v1230
        %v1251 = vmul.f32 %v1250, 0.6931472
        %v1252 = vlog2.pop %v1231
        %v1253 = vmul.f32 %v1252, 0.6931472
        %v1256 = vrot.slane %v1251, 1
        %v1257 = vrot.slane %v1253, 1
        %1258 = vrot.lane.b32.xlu0 %v1256, 127
        %v1259 = vpop.permute.xlu0 %1258
        %1260 = vrot.lane.b32.xlu0 %v1257, 127
        %v1261 = vpop.permute.xlu0 %1260
        %v1264 = vadd.f32 %v1192, %v1259
        %v1265 = vadd.f32 %v1193, %v1261
        %1267 = vset.pattern.permute.xlu0 1
        %1268 = vperm.xlu0 %1267, %v1230
        %v1269 = vpop.permute.xlu0 %1268
        %1272 = vset.pattern.permute.xlu0 1
        %1273 = vperm.xlu0 %1272, %v1231
        %v1274 = vpop.permute.xlu0 %1273
        %v1276 = vrcp.pop %v1269
        %v1277 = vmul.f32 %v1230, %v1276
        %v1278 = vrcp.pop %v1274
        %v1279 = vmul.f32 %v1231, %v1278
        %v1280 = vmul.f32 %v1248, %v1276
        %v1281 = vmul.f32 %v1249, %v1278
        %vm1282 = vcmp.eq.s32.totalorder %v1187, 1
        %v1283 = vsel %vm1282, 1, 0
        %v1284 = vcvt.s32.f32 %v1283
        %v1285 = vlaneseq
        %v1286 = vshrl.u32 %v1285, 7
        %v1287 = vsub.s32 1, %v1286
        %v1288 = vrot.slane %v1277, %v1287
        %v1289 = vlaneseq
        %v1290 = vshrl.u32 %v1289, 7
        %v1291 = vsub.s32 1, %v1290
        %v1292 = vrot.slane %v1279, %v1291
        %v1293 = vmul.f32 %v1284, %v1288
        %v1294 = vmul.f32 %v1284, %v1292
        %v1295 = vsub.f32 1.0, %v1284
        %v1296 = vmul.f32 %v1269, %v1288
        %v1297 = vmul.f32 %v1274, %v1292
        %v1298 = vsub.f32 %v1230, %v1296
        %v1299 = vsub.f32 %v1231, %v1297
        %v1300 = vmul.f32 %v1295, %v1298
        %v1301 = vmul.f32 %v1295, %v1299
        %v1302 = vadd.f32 %v1293, %v1300
        %v1303 = vadd.f32 %v1294, %v1301
        %v1304 = vlaneseq
        %v1305 = vshrl.u32 %v1304, 7
        %v1306 = vsub.s32 1, %v1305
        %v1307 = vrot.slane %v1280, %v1306
        %v1308 = vlaneseq
        %v1309 = vshrl.u32 %v1308, 7
        %v1310 = vsub.s32 1, %v1309
        %v1311 = vrot.slane %v1281, %v1310
        %v1312 = vmul.f32 %v1284, %v1307
        %v1313 = vmul.f32 %v1284, %v1311
        %v1314 = vmul.f32 %v1269, %v1307
        %v1315 = vmul.f32 %v1274, %v1311
        %v1316 = vsub.f32 %v1248, %v1314
        %v1317 = vsub.f32 %v1249, %v1315
        %v1318 = vmul.f32 %v1295, %v1316
        %v1319 = vmul.f32 %v1295, %v1317
        %v1320 = vadd.f32 %v1312, %v1318
        %v1321 = vadd.f32 %v1313, %v1319
        %v1322 = vlog2.pop %v1302
        %v1323 = vmul.f32 %v1322, 0.6931472
        %v1324 = vlog2.pop %v1303
        %v1325 = vmul.f32 %v1324, 0.6931472
        %v1328 = vrot.slane %v1323, 2
        %v1329 = vrot.slane %v1325, 2
        %1330 = vrot.lane.b32.xlu0 %v1328, 126
        %v1331 = vpop.permute.xlu0 %1330
        %1332 = vrot.lane.b32.xlu0 %v1329, 126
        %v1333 = vpop.permute.xlu0 %1332
        %v1336 = vadd.f32 %v1264, %v1331
        %v1337 = vadd.f32 %v1265, %v1333
        %1339 = vset.pattern.permute.xlu0 2
        %1340 = vperm.xlu0 %1339, %v1302
        %v1341 = vpop.permute.xlu0 %1340
        %1344 = vset.pattern.permute.xlu0 2
        %1345 = vperm.xlu0 %1344, %v1303
        %v1346 = vpop.permute.xlu0 %1345
        %v1348 = vrcp.pop %v1341
        %v1349 = vmul.f32 %v1302, %v1348
        %v1350 = vrcp.pop %v1346
        %v1351 = vmul.f32 %v1303, %v1350
        %v1352 = vmul.f32 %v1320, %v1348
        %v1353 = vmul.f32 %v1321, %v1350
        %vm1354 = vcmp.eq.s32.totalorder %v1187, 2
        %v1355 = vsel %vm1354, 1, 0
        %v1356 = vcvt.s32.f32 %v1355
        %v1357 = vlaneseq
        %v1358 = vshrl.u32 %v1357, 7
        %v1359 = vsub.s32 2, %v1358
        %v1360 = vrot.slane %v1349, %v1359
        %v1361 = vlaneseq
        %v1362 = vshrl.u32 %v1361, 7
        %v1363 = vsub.s32 2, %v1362
        %v1364 = vrot.slane %v1351, %v1363
        %v1365 = vmul.f32 %v1356, %v1360
        %v1366 = vmul.f32 %v1356, %v1364
        %v1367 = vsub.f32 1.0, %v1356
        %v1368 = vmul.f32 %v1341, %v1360
        %v1369 = vmul.f32 %v1346, %v1364
        %v1370 = vsub.f32 %v1302, %v1368
        %v1371 = vsub.f32 %v1303, %v1369
        %v1372 = vmul.f32 %v1367, %v1370
        %v1373 = vmul.f32 %v1367, %v1371
        %v1374 = vadd.f32 %v1365, %v1372
        %v1375 = vadd.f32 %v1366, %v1373
        %v1376 = vlaneseq
        %v1377 = vshrl.u32 %v1376, 7
        %v1378 = vsub.s32 2, %v1377
        %v1379 = vrot.slane %v1352, %v1378
        %v1380 = vlaneseq
        %v1381 = vshrl.u32 %v1380, 7
        %v1382 = vsub.s32 2, %v1381
        %v1383 = vrot.slane %v1353, %v1382
        %v1384 = vmul.f32 %v1356, %v1379
        %v1385 = vmul.f32 %v1356, %v1383
        %v1386 = vmul.f32 %v1341, %v1379
        %v1387 = vmul.f32 %v1346, %v1383
        %v1388 = vsub.f32 %v1320, %v1386
        %v1389 = vsub.f32 %v1321, %v1387
        %v1390 = vmul.f32 %v1367, %v1388
        %v1391 = vmul.f32 %v1367, %v1389
        %v1392 = vadd.f32 %v1384, %v1390
        %v1393 = vadd.f32 %v1385, %v1391
        %v1394 = vlog2.pop %v1374
        %v1395 = vmul.f32 %v1394, 0.6931472
        %v1396 = vlog2.pop %v1375
        %v1397 = vmul.f32 %v1396, 0.6931472
        %v1400 = vrot.slane %v1395, 3
        %v1401 = vrot.slane %v1397, 3
        %1402 = vrot.lane.b32.xlu0 %v1400, 125
        %v1403 = vpop.permute.xlu0 %1402
        %1404 = vrot.lane.b32.xlu0 %v1401, 125
        %v1405 = vpop.permute.xlu0 %1404
        %v1408 = vadd.f32 %v1336, %v1403
        %v1409 = vadd.f32 %v1337, %v1405
        %1411 = vset.pattern.permute.xlu0 3
        %1412 = vperm.xlu0 %1411, %v1374
        %v1413 = vpop.permute.xlu0 %1412
        %1416 = vset.pattern.permute.xlu0 3
        %1417 = vperm.xlu0 %1416, %v1375
        %v1418 = vpop.permute.xlu0 %1417
        %v1420 = vrcp.pop %v1413
        %v1421 = vmul.f32 %v1374, %v1420
        %v1422 = vrcp.pop %v1418
        %v1423 = vmul.f32 %v1375, %v1422
        %v1424 = vmul.f32 %v1392, %v1420
        %v1425 = vmul.f32 %v1393, %v1422
        %vm1426 = vcmp.eq.s32.totalorder %v1187, 3
        %v1427 = vsel %vm1426, 1, 0
        %v1428 = vcvt.s32.f32 %v1427
        %v1429 = vlaneseq
        %v1430 = vshrl.u32 %v1429, 7
        %v1431 = vsub.s32 3, %v1430
        %v1432 = vrot.slane %v1421, %v1431
        %v1433 = vlaneseq
        %v1434 = vshrl.u32 %v1433, 7
        %v1435 = vsub.s32 3, %v1434
        %v1436 = vrot.slane %v1423, %v1435
        %v1437 = vmul.f32 %v1428, %v1432
        %v1438 = vmul.f32 %v1428, %v1436
        %v1439 = vsub.f32 1.0, %v1428
        %v1440 = vmul.f32 %v1413, %v1432
        %v1441 = vmul.f32 %v1418, %v1436
        %v1442 = vsub.f32 %v1374, %v1440
        %v1443 = vsub.f32 %v1375, %v1441
        %v1444 = vmul.f32 %v1439, %v1442
        %v1445 = vmul.f32 %v1439, %v1443
        %v1446 = vadd.f32 %v1437, %v1444
        %v1447 = vadd.f32 %v1438, %v1445
        %v1448 = vlaneseq
        %v1449 = vshrl.u32 %v1448, 7
        %v1450 = vsub.s32 3, %v1449
        %v1451 = vrot.slane %v1424, %v1450
        %v1452 = vlaneseq
        %v1453 = vshrl.u32 %v1452, 7
        %v1454 = vsub.s32 3, %v1453
        %v1455 = vrot.slane %v1425, %v1454
        %v1456 = vmul.f32 %v1428, %v1451
        %v1457 = vmul.f32 %v1428, %v1455
        %v1458 = vmul.f32 %v1413, %v1451
        %v1459 = vmul.f32 %v1418, %v1455
        %v1460 = vsub.f32 %v1392, %v1458
        %v1461 = vsub.f32 %v1393, %v1459
        %v1462 = vmul.f32 %v1439, %v1460
        %v1463 = vmul.f32 %v1439, %v1461
        %v1464 = vadd.f32 %v1456, %v1462
        %v1465 = vadd.f32 %v1457, %v1463
        %v1466 = vlog2.pop %v1446
        %v1467 = vmul.f32 %v1466, 0.6931472
        %v1468 = vlog2.pop %v1447
        %v1469 = vmul.f32 %v1468, 0.6931472
        %v1472 = vrot.slane %v1467, 4
        %v1473 = vrot.slane %v1469, 4
        %1474 = vrot.lane.b32.xlu0 %v1472, 124
        %v1475 = vpop.permute.xlu0 %1474
        %1476 = vrot.lane.b32.xlu0 %v1473, 124
        %v1477 = vpop.permute.xlu0 %1476
        %v1480 = vadd.f32 %v1408, %v1475
        %v1481 = vadd.f32 %v1409, %v1477
        %1483 = vset.pattern.permute.xlu0 4
        %1484 = vperm.xlu0 %1483, %v1446
        %v1485 = vpop.permute.xlu0 %1484
        %1488 = vset.pattern.permute.xlu0 4
        %1489 = vperm.xlu0 %1488, %v1447
        %v1490 = vpop.permute.xlu0 %1489
        %v1492 = vrcp.pop %v1485
        %v1493 = vmul.f32 %v1446, %v1492
        %v1494 = vrcp.pop %v1490
        %v1495 = vmul.f32 %v1447, %v1494
        %v1496 = vmul.f32 %v1464, %v1492
        %v1497 = vmul.f32 %v1465, %v1494
        %vm1498 = vcmp.eq.s32.totalorder %v1187, 4
        %v1499 = vsel %vm1498, 1, 0
        %v1500 = vcvt.s32.f32 %v1499
        %v1501 = vlaneseq
        %v1502 = vshrl.u32 %v1501, 7
        %v1503 = vsub.s32 4, %v1502
        %v1504 = vrot.slane %v1493, %v1503
        %v1505 = vlaneseq
        %v1506 = vshrl.u32 %v1505, 7
        %v1507 = vsub.s32 4, %v1506
        %v1508 = vrot.slane %v1495, %v1507
        %v1509 = vmul.f32 %v1500, %v1504
        %v1510 = vmul.f32 %v1500, %v1508
        %v1511 = vsub.f32 1.0, %v1500
        %v1512 = vmul.f32 %v1485, %v1504
        %v1513 = vmul.f32 %v1490, %v1508
        %v1514 = vsub.f32 %v1446, %v1512
        %v1515 = vsub.f32 %v1447, %v1513
        %v1516 = vmul.f32 %v1511, %v1514
        %v1517 = vmul.f32 %v1511, %v1515
        %v1518 = vadd.f32 %v1509, %v1516
        %v1519 = vadd.f32 %v1510, %v1517
        %v1520 = vlaneseq
        %v1521 = vshrl.u32 %v1520, 7
        %v1522 = vsub.s32 4, %v1521
        %v1523 = vrot.slane %v1496, %v1522
        %v1524 = vlaneseq
        %v1525 = vshrl.u32 %v1524, 7
        %v1526 = vsub.s32 4, %v1525
        %v1527 = vrot.slane %v1497, %v1526
        %v1528 = vmul.f32 %v1500, %v1523
        %v1529 = vmul.f32 %v1500, %v1527
        %v1530 = vmul.f32 %v1485, %v1523
        %v1531 = vmul.f32 %v1490, %v1527
        %v1532 = vsub.f32 %v1464, %v1530
        %v1533 = vsub.f32 %v1465, %v1531
        %v1534 = vmul.f32 %v1511, %v1532
        %v1535 = vmul.f32 %v1511, %v1533
        %v1536 = vadd.f32 %v1528, %v1534
        %v1537 = vadd.f32 %v1529, %v1535
        %v1538 = vlog2.pop %v1518
        %v1539 = vmul.f32 %v1538, 0.6931472
        %v1540 = vlog2.pop %v1519
        %v1541 = vmul.f32 %v1540, 0.6931472
        %v1544 = vrot.slane %v1539, 5
        %v1545 = vrot.slane %v1541, 5
        %1546 = vrot.lane.b32.xlu0 %v1544, 123
        %v1547 = vpop.permute.xlu0 %1546
        %1548 = vrot.lane.b32.xlu0 %v1545, 123
        %v1549 = vpop.permute.xlu0 %1548
        %v1552 = vadd.f32 %v1480, %v1547
        %v1553 = vadd.f32 %v1481, %v1549
        %1555 = vset.pattern.permute.xlu0 5
        %1556 = vperm.xlu0 %1555, %v1518
        %v1557 = vpop.permute.xlu0 %1556
        %1560 = vset.pattern.permute.xlu0 5
        %1561 = vperm.xlu0 %1560, %v1519
        %v1562 = vpop.permute.xlu0 %1561
        %v1564 = vrcp.pop %v1557
        %v1565 = vmul.f32 %v1518, %v1564
        %v1566 = vrcp.pop %v1562
        %v1567 = vmul.f32 %v1519, %v1566
        %v1568 = vmul.f32 %v1536, %v1564
        %v1569 = vmul.f32 %v1537, %v1566
        %vm1570 = vcmp.eq.s32.totalorder %v1187, 5
        %v1571 = vsel %vm1570, 1, 0
        %v1572 = vcvt.s32.f32 %v1571
        %v1573 = vlaneseq
        %v1574 = vshrl.u32 %v1573, 7
        %v1575 = vsub.s32 5, %v1574
        %v1576 = vrot.slane %v1565, %v1575
        %v1577 = vlaneseq
        %v1578 = vshrl.u32 %v1577, 7
        %v1579 = vsub.s32 5, %v1578
        %v1580 = vrot.slane %v1567, %v1579
        %v1581 = vmul.f32 %v1572, %v1576
        %v1582 = vmul.f32 %v1572, %v1580
        %v1583 = vsub.f32 1.0, %v1572
        %v1584 = vmul.f32 %v1557, %v1576
        %v1585 = vmul.f32 %v1562, %v1580
        %v1586 = vsub.f32 %v1518, %v1584
        %v1587 = vsub.f32 %v1519, %v1585
        %v1588 = vmul.f32 %v1583, %v1586
        %v1589 = vmul.f32 %v1583, %v1587
        %v1590 = vadd.f32 %v1581, %v1588
        %v1591 = vadd.f32 %v1582, %v1589
        %v1592 = vlaneseq
        %v1593 = vshrl.u32 %v1592, 7
        %v1594 = vsub.s32 5, %v1593
        %v1595 = vrot.slane %v1568, %v1594
        %v1596 = vlaneseq
        %v1597 = vshrl.u32 %v1596, 7
        %v1598 = vsub.s32 5, %v1597
        %v1599 = vrot.slane %v1569, %v1598
        %v1600 = vmul.f32 %v1572, %v1595
        %v1601 = vmul.f32 %v1572, %v1599
        %v1602 = vmul.f32 %v1557, %v1595
        %v1603 = vmul.f32 %v1562, %v1599
        %v1604 = vsub.f32 %v1536, %v1602
        %v1605 = vsub.f32 %v1537, %v1603
        %v1606 = vmul.f32 %v1583, %v1604
        %v1607 = vmul.f32 %v1583, %v1605
        %v1608 = vadd.f32 %v1600, %v1606
        %v1609 = vadd.f32 %v1601, %v1607
        %v1610 = vlog2.pop %v1590
        %v1611 = vmul.f32 %v1610, 0.6931472
        %v1612 = vlog2.pop %v1591
        %v1613 = vmul.f32 %v1612, 0.6931472
        %v1616 = vrot.slane %v1611, 6
        %v1617 = vrot.slane %v1613, 6
        %1618 = vrot.lane.b32.xlu0 %v1616, 122
        %v1619 = vpop.permute.xlu0 %1618
        %1620 = vrot.lane.b32.xlu0 %v1617, 122
        %v1621 = vpop.permute.xlu0 %1620
        %v1624 = vadd.f32 %v1552, %v1619
        %v1625 = vadd.f32 %v1553, %v1621
        %1627 = vset.pattern.permute.xlu0 6
        %1628 = vperm.xlu0 %1627, %v1590
        %v1629 = vpop.permute.xlu0 %1628
        %1632 = vset.pattern.permute.xlu0 6
        %1633 = vperm.xlu0 %1632, %v1591
        %v1634 = vpop.permute.xlu0 %1633
        %v1636 = vrcp.pop %v1629
        %v1637 = vmul.f32 %v1590, %v1636
        %v1638 = vrcp.pop %v1634
        %v1639 = vmul.f32 %v1591, %v1638
        %v1640 = vmul.f32 %v1608, %v1636
        %v1641 = vmul.f32 %v1609, %v1638
        %vm1642 = vcmp.eq.s32.totalorder %v1187, 6
        %v1643 = vsel %vm1642, 1, 0
        %v1644 = vcvt.s32.f32 %v1643
        %v1645 = vlaneseq
        %v1646 = vshrl.u32 %v1645, 7
        %v1647 = vsub.s32 6, %v1646
        %v1648 = vrot.slane %v1637, %v1647
        %v1649 = vlaneseq
        %v1650 = vshrl.u32 %v1649, 7
        %v1651 = vsub.s32 6, %v1650
        %v1652 = vrot.slane %v1639, %v1651
        %v1653 = vmul.f32 %v1644, %v1648
        %v1654 = vmul.f32 %v1644, %v1652
        %v1655 = vsub.f32 1.0, %v1644
        %v1656 = vmul.f32 %v1629, %v1648
        %v1657 = vmul.f32 %v1634, %v1652
        %v1658 = vsub.f32 %v1590, %v1656
        %v1659 = vsub.f32 %v1591, %v1657
        %v1660 = vmul.f32 %v1655, %v1658
        %v1661 = vmul.f32 %v1655, %v1659
        %v1662 = vadd.f32 %v1653, %v1660
        %v1663 = vadd.f32 %v1654, %v1661
        %v1664 = vlaneseq
        %v1665 = vshrl.u32 %v1664, 7
        %v1666 = vsub.s32 6, %v1665
        %v1667 = vrot.slane %v1640, %v1666
        %v1668 = vlaneseq
        %v1669 = vshrl.u32 %v1668, 7
        %v1670 = vsub.s32 6, %v1669
        %v1671 = vrot.slane %v1641, %v1670
        %v1672 = vmul.f32 %v1644, %v1667
        %v1673 = vmul.f32 %v1644, %v1671
        %v1674 = vmul.f32 %v1629, %v1667
        %v1675 = vmul.f32 %v1634, %v1671
        %v1676 = vsub.f32 %v1608, %v1674
        %v1677 = vsub.f32 %v1609, %v1675
        %v1678 = vmul.f32 %v1655, %v1676
        %v1679 = vmul.f32 %v1655, %v1677
        %v1680 = vadd.f32 %v1672, %v1678
        %v1681 = vadd.f32 %v1673, %v1679
        %v1682 = vlog2.pop %v1662
        %v1683 = vmul.f32 %v1682, 0.6931472
        %v1684 = vlog2.pop %v1663
        %v1685 = vmul.f32 %v1684, 0.6931472
        %v1688 = vrot.slane %v1683, 7
        %v1689 = vrot.slane %v1685, 7
        %1690 = vrot.lane.b32.xlu0 %v1688, 121
        %v1691 = vpop.permute.xlu0 %1690
        %1692 = vrot.lane.b32.xlu0 %v1689, 121
        %v1693 = vpop.permute.xlu0 %1692
        %v1696 = vadd.f32 %v1624, %v1691
        %v1697 = vadd.f32 %v1625, %v1693
        %1699 = vset.pattern.permute.xlu0 7
        %1700 = vperm.xlu0 %1699, %v1662
        %v1701 = vpop.permute.xlu0 %1700
        %1704 = vset.pattern.permute.xlu0 7
        %1705 = vperm.xlu0 %1704, %v1663
        %v1706 = vpop.permute.xlu0 %1705
        %v1708 = vrcp.pop %v1701
        %v1709 = vmul.f32 %v1680, %v1708
        %v1710 = vrcp.pop %v1706
        %v1711 = vmul.f32 %v1681, %v1710
        %vm1712 = vcmp.eq.s32.totalorder %v1187, 7
        %v1713 = vsel %vm1712, 1, 0
        %v1714 = vcvt.s32.f32 %v1713
        %v1715 = vlaneseq
        %v1716 = vshrl.u32 %v1715, 7
        %v1717 = vsub.s32 7, %v1716
        %v1718 = vrot.slane %v1709, %v1717
        %v1719 = vlaneseq
        %v1720 = vshrl.u32 %v1719, 7
        %v1721 = vsub.s32 7, %v1720
        %v1722 = vrot.slane %v1711, %v1721
        %v1723 = vmul.f32 %v1714, %v1718
        %v1724 = vmul.f32 %v1714, %v1722
        %v1725 = vsub.f32 1.0, %v1714
        %v1726 = vmul.f32 %v1701, %v1718
        %v1727 = vmul.f32 %v1706, %v1722
        %v1728 = vsub.f32 %v1680, %v1726
        %v1729 = vsub.f32 %v1681, %v1727
        %v1730 = vmul.f32 %v1725, %v1728
        %v1731 = vmul.f32 %v1725, %v1729
        %v1732 = vadd.f32 %v1723, %v1730
        %v1733 = vadd.f32 %v1724, %v1731
        %v1734 = vld [vmem:[%s521] sm:$0xff]
        %v1735 = vld [vmem:[%s521 + $0x8] sm:$0xff]
        %v1736 = vld [vmem:[%s526] sm:$0xff]
        %v1737 = vld [vmem:[%s526 + $0x8] sm:$0xff]
        %1739 = vset.pattern.permute.xlu0 0
        %1740 = vperm.xlu0 %1739, %v1734
        %v1741 = vpop.permute.xlu0 %1740
        %1744 = vset.pattern.permute.xlu0 0
        %1745 = vperm.xlu0 %1744, %v1735
        %v1746 = vpop.permute.xlu0 %1745
        %v1748 = vlaneseq
        %v1749 = vand.u32 %v1748, 127
        %v1750 = vlaneseq
        %v1751 = vshrl.u32 %v1750, 7
        %v1752 = vsub.s32 %v1749, %v1751
        %v1753 = vrot.slane %v1741, %v1752
        %v1754 = vlaneseq
        %v1755 = vshrl.u32 %v1754, 7
        %v1756 = vsub.s32 %v1749, %v1755
        %v1757 = vrot.slane %v1746, %v1756
        %vm1758 = vcmask 1041409
        %vm1759 = vcmask 1042434
        %v1760 = vsel %vm1759, %v1753, %v1753
        %vm1761 = vcmask 1043459
        %v1762 = vsel %vm1761, %v1753, %v1760
        %vm1763 = vcmask 1044484
        %v1764 = vsel %vm1763, %v1753, %v1762
        %vm1765 = vcmask 1045509
        %v1766 = vsel %vm1765, %v1753, %v1764
        %vm1767 = vcmask 1046534
        %v1768 = vsel %vm1767, %v1753, %v1766
        %vm1769 = vcmask 1047559
        %v1770 = vsel %vm1769, %v1753, %v1768
        %v1771 = vsel %vm1759, %v1757, %v1757
        %v1772 = vsel %vm1761, %v1757, %v1771
        %v1773 = vsel %vm1763, %v1757, %v1772
        %v1774 = vsel %vm1765, %v1757, %v1773
        %v1775 = vsel %vm1767, %v1757, %v1774
        %v1776 = vsel %vm1769, %v1757, %v1775
        %v1779 = vmul.f32 %v1741, %v1770
        %v1780 = vmul.f32 %v1746, %v1776
        %v1781 = vadd.f32 %v1779, 0.0
        %v1782 = vadd.f32 %v1780, 0.0
        %1783 = vset.pattern.permute.xlu0 1
        %1784 = vperm.xlu0 %1783, %v1734
        %v1785 = vpop.permute.xlu0 %1784
        %1787 = vset.pattern.permute.xlu0 1
        %1788 = vperm.xlu0 %1787, %v1735
        %v1789 = vpop.permute.xlu0 %1788
        %v1791 = vlaneseq
        %v1792 = vshrl.u32 %v1791, 7
        %v1793 = vsub.s32 %v1749, %v1792
        %v1794 = vrot.slane %v1785, %v1793
        %v1795 = vlaneseq
        %v1796 = vshrl.u32 %v1795, 7
        %v1797 = vsub.s32 %v1749, %v1796
        %v1798 = vrot.slane %v1789, %v1797
        %v1799 = vsel %vm1759, %v1794, %v1794
        %v1800 = vsel %vm1761, %v1794, %v1799
        %v1801 = vsel %vm1763, %v1794, %v1800
        %v1802 = vsel %vm1765, %v1794, %v1801
        %v1803 = vsel %vm1767, %v1794, %v1802
        %v1804 = vsel %vm1769, %v1794, %v1803
        %v1805 = vsel %vm1759, %v1798, %v1798
        %v1806 = vsel %vm1761, %v1798, %v1805
        %v1807 = vsel %vm1763, %v1798, %v1806
        %v1808 = vsel %vm1765, %v1798, %v1807
        %v1809 = vsel %vm1767, %v1798, %v1808
        %v1810 = vsel %vm1769, %v1798, %v1809
        %v1813 = vmul.f32 %v1785, %v1804
        %v1814 = vmul.f32 %v1789, %v1810
        %v1815 = vadd.f32 %v1781, %v1813
        %v1816 = vadd.f32 %v1782, %v1814
        %1817 = vset.pattern.permute.xlu0 2
        %1818 = vperm.xlu0 %1817, %v1734
        %v1819 = vpop.permute.xlu0 %1818
        %1821 = vset.pattern.permute.xlu0 2
        %1822 = vperm.xlu0 %1821, %v1735
        %v1823 = vpop.permute.xlu0 %1822
        %v1825 = vlaneseq
        %v1826 = vshrl.u32 %v1825, 7
        %v1827 = vsub.s32 %v1749, %v1826
        %v1828 = vrot.slane %v1819, %v1827
        %v1829 = vlaneseq
        %v1830 = vshrl.u32 %v1829, 7
        %v1831 = vsub.s32 %v1749, %v1830
        %v1832 = vrot.slane %v1823, %v1831
        %v1833 = vsel %vm1759, %v1828, %v1828
        %v1834 = vsel %vm1761, %v1828, %v1833
        %v1835 = vsel %vm1763, %v1828, %v1834
        %v1836 = vsel %vm1765, %v1828, %v1835
        %v1837 = vsel %vm1767, %v1828, %v1836
        %v1838 = vsel %vm1769, %v1828, %v1837
        %v1839 = vsel %vm1759, %v1832, %v1832
        %v1840 = vsel %vm1761, %v1832, %v1839
        %v1841 = vsel %vm1763, %v1832, %v1840
        %v1842 = vsel %vm1765, %v1832, %v1841
        %v1843 = vsel %vm1767, %v1832, %v1842
        %v1844 = vsel %vm1769, %v1832, %v1843
        %v1847 = vmul.f32 %v1819, %v1838
        %v1848 = vmul.f32 %v1823, %v1844
        %v1849 = vadd.f32 %v1815, %v1847
        %v1850 = vadd.f32 %v1816, %v1848
        %1851 = vset.pattern.permute.xlu0 3
        %1852 = vperm.xlu0 %1851, %v1734
        %v1853 = vpop.permute.xlu0 %1852
        %1855 = vset.pattern.permute.xlu0 3
        %1856 = vperm.xlu0 %1855, %v1735
        %v1857 = vpop.permute.xlu0 %1856
        %v1859 = vlaneseq
        %v1860 = vshrl.u32 %v1859, 7
        %v1861 = vsub.s32 %v1749, %v1860
        %v1862 = vrot.slane %v1853, %v1861
        %v1863 = vlaneseq
        %v1864 = vshrl.u32 %v1863, 7
        %v1865 = vsub.s32 %v1749, %v1864
        %v1866 = vrot.slane %v1857, %v1865
        %v1867 = vsel %vm1759, %v1862, %v1862
        %v1868 = vsel %vm1761, %v1862, %v1867
        %v1869 = vsel %vm1763, %v1862, %v1868
        %v1870 = vsel %vm1765, %v1862, %v1869
        %v1871 = vsel %vm1767, %v1862, %v1870
        %v1872 = vsel %vm1769, %v1862, %v1871
        %v1873 = vsel %vm1759, %v1866, %v1866
        %v1874 = vsel %vm1761, %v1866, %v1873
        %v1875 = vsel %vm1763, %v1866, %v1874
        %v1876 = vsel %vm1765, %v1866, %v1875
        %v1877 = vsel %vm1767, %v1866, %v1876
        %v1878 = vsel %vm1769, %v1866, %v1877
        %v1881 = vmul.f32 %v1853, %v1872
        %v1882 = vmul.f32 %v1857, %v1878
        %v1883 = vadd.f32 %v1849, %v1881
        %v1884 = vadd.f32 %v1850, %v1882
        %1886 = vset.pattern.permute.xlu0 0
        %1887 = vperm.xlu0 %1886, %v1736
        %v1888 = vpop.permute.xlu0 %1887
        %1891 = vset.pattern.permute.xlu0 0
        %1892 = vperm.xlu0 %1891, %v1737
        %v1893 = vpop.permute.xlu0 %1892
        %v1895 = vlaneseq
        %v1896 = vshrl.u32 %v1895, 7
        %v1897 = vsub.s32 %v1749, %v1896
        %v1898 = vrot.slane %v1888, %v1897
        %v1899 = vlaneseq
        %v1900 = vshrl.u32 %v1899, 7
        %v1901 = vsub.s32 %v1749, %v1900
        %v1902 = vrot.slane %v1893, %v1901
        %v1903 = vsel %vm1759, %v1898, %v1898
        %v1904 = vsel %vm1761, %v1898, %v1903
        %v1905 = vsel %vm1763, %v1898, %v1904
        %v1906 = vsel %vm1765, %v1898, %v1905
        %v1907 = vsel %vm1767, %v1898, %v1906
        %v1908 = vsel %vm1769, %v1898, %v1907
        %v1909 = vsel %vm1759, %v1902, %v1902
        %v1910 = vsel %vm1761, %v1902, %v1909
        %v1911 = vsel %vm1763, %v1902, %v1910
        %v1912 = vsel %vm1765, %v1902, %v1911
        %v1913 = vsel %vm1767, %v1902, %v1912
        %v1914 = vsel %vm1769, %v1902, %v1913
        %v1917 = vmul.f32 %v1888, %v1908
        %v1918 = vmul.f32 %v1893, %v1914
        %v1919 = vadd.f32 %v1883, %v1917
        %v1920 = vadd.f32 %v1884, %v1918
        %1921 = vset.pattern.permute.xlu0 1
        %1922 = vperm.xlu0 %1921, %v1736
        %v1923 = vpop.permute.xlu0 %1922
        %1925 = vset.pattern.permute.xlu0 1
        %1926 = vperm.xlu0 %1925, %v1737
        %v1927 = vpop.permute.xlu0 %1926
        %v1929 = vlaneseq
        %v1930 = vshrl.u32 %v1929, 7
        %v1931 = vsub.s32 %v1749, %v1930
        %v1932 = vrot.slane %v1923, %v1931
        %v1933 = vlaneseq
        %v1934 = vshrl.u32 %v1933, 7
        %v1935 = vsub.s32 %v1749, %v1934
        %v1936 = vrot.slane %v1927, %v1935
        %v1937 = vsel %vm1759, %v1932, %v1932
        %v1938 = vsel %vm1761, %v1932, %v1937
        %v1939 = vsel %vm1763, %v1932, %v1938
        %v1940 = vsel %vm1765, %v1932, %v1939
        %v1941 = vsel %vm1767, %v1932, %v1940
        %v1942 = vsel %vm1769, %v1932, %v1941
        %v1943 = vsel %vm1759, %v1936, %v1936
        %v1944 = vsel %vm1761, %v1936, %v1943
        %v1945 = vsel %vm1763, %v1936, %v1944
        %v1946 = vsel %vm1765, %v1936, %v1945
        %v1947 = vsel %vm1767, %v1936, %v1946
        %v1948 = vsel %vm1769, %v1936, %v1947
        %v1951 = vmul.f32 %v1923, %v1942
        %v1952 = vmul.f32 %v1927, %v1948
        %v1953 = vadd.f32 %v1919, %v1951
        %v1954 = vadd.f32 %v1920, %v1952
        %1955 = vset.pattern.permute.xlu0 2
        %1956 = vperm.xlu0 %1955, %v1736
        %v1957 = vpop.permute.xlu0 %1956
        %1959 = vset.pattern.permute.xlu0 2
        %1960 = vperm.xlu0 %1959, %v1737
        %v1961 = vpop.permute.xlu0 %1960
        %v1963 = vlaneseq
        %v1964 = vshrl.u32 %v1963, 7
        %v1965 = vsub.s32 %v1749, %v1964
        %v1966 = vrot.slane %v1957, %v1965
        %v1967 = vlaneseq
        %v1968 = vshrl.u32 %v1967, 7
        %v1969 = vsub.s32 %v1749, %v1968
        %v1970 = vrot.slane %v1961, %v1969
        %v1971 = vsel %vm1759, %v1966, %v1966
        %v1972 = vsel %vm1761, %v1966, %v1971
        %v1973 = vsel %vm1763, %v1966, %v1972
        %v1974 = vsel %vm1765, %v1966, %v1973
        %v1975 = vsel %vm1767, %v1966, %v1974
        %v1976 = vsel %vm1769, %v1966, %v1975
        %v1977 = vsel %vm1759, %v1970, %v1970
        %v1978 = vsel %vm1761, %v1970, %v1977
        %v1979 = vsel %vm1763, %v1970, %v1978
        %v1980 = vsel %vm1765, %v1970, %v1979
        %v1981 = vsel %vm1767, %v1970, %v1980
        %v1982 = vsel %vm1769, %v1970, %v1981
        %v1985 = vmul.f32 %v1957, %v1976
        %v1986 = vmul.f32 %v1961, %v1982
        %v1987 = vadd.f32 %v1953, %v1985
        %v1988 = vadd.f32 %v1954, %v1986
        %1989 = vset.pattern.permute.xlu0 3
        %1990 = vperm.xlu0 %1989, %v1736
        %v1991 = vpop.permute.xlu0 %1990
        %1993 = vset.pattern.permute.xlu0 3
        %1994 = vperm.xlu0 %1993, %v1737
        %v1995 = vpop.permute.xlu0 %1994
        %v1997 = vlaneseq
        %v1998 = vshrl.u32 %v1997, 7
        %v1999 = vsub.s32 %v1749, %v1998
        %v2000 = vrot.slane %v1991, %v1999
        %v2001 = vlaneseq
        %v2002 = vshrl.u32 %v2001, 7
        %v2003 = vsub.s32 %v1749, %v2002
        %v2004 = vrot.slane %v1995, %v2003
        %v2005 = vsel %vm1759, %v2000, %v2000
        %v2006 = vsel %vm1761, %v2000, %v2005
        %v2007 = vsel %vm1763, %v2000, %v2006
        %v2008 = vsel %vm1765, %v2000, %v2007
        %v2009 = vsel %vm1767, %v2000, %v2008
        %v2010 = vsel %vm1769, %v2000, %v2009
        %v2011 = vsel %vm1759, %v2004, %v2004
        %v2012 = vsel %vm1761, %v2004, %v2011
        %v2013 = vsel %vm1763, %v2004, %v2012
        %v2014 = vsel %vm1765, %v2004, %v2013
        %v2015 = vsel %vm1767, %v2004, %v2014
        %v2016 = vsel %vm1769, %v2004, %v2015
        %v2019 = vmul.f32 %v1991, %v2010
        %v2020 = vmul.f32 %v1995, %v2016
        %v2021 = vadd.f32 %v1987, %v2019
        %v2022 = vadd.f32 %v1988, %v2020
        %v2023 = vadd.f32 %v1732, %v2021
        %v2024 = vadd.f32 %v1733, %v2022
        %v2025 = vlog2.pop %v2023
        %v2026 = vmul.f32 %v2025, 0.6931472
        %v2027 = vlog2.pop %v2024
        %v2028 = vmul.f32 %v2027, 0.6931472
        %v2029 = vadd.f32 %v2026, 0.0
        %v2030 = vadd.f32 %v2028, 0.0
        %2032 = vset.pattern.permute.xlu0 0
        %2033 = vperm.xlu0 %2032, %v2023
        %v2034 = vpop.permute.xlu0 %2033
        %2037 = vset.pattern.permute.xlu0 0
        %2038 = vperm.xlu0 %2037, %v2024
        %v2039 = vpop.permute.xlu0 %2038
        %v2041 = vrcp.pop %v2034
        %v2042 = vmul.f32 %v2023, %v2041
        %v2043 = vrcp.pop %v2039
        %v2044 = vmul.f32 %v2024, %v2043
        %v2045 = vmul.f32 %v1185, %v2041
        %v2046 = vmul.f32 %v1185, %v2043
        %v2047 = vlaneseq
        %v2048 = vshrl.u32 %v2047, 7
        %v2049 = vsub.s32 0, %v2048
        %v2050 = vrot.slane %v2042, %v2049
        %v2051 = vlaneseq
        %v2052 = vshrl.u32 %v2051, 7
        %v2053 = vsub.s32 0, %v2052
        %v2054 = vrot.slane %v2044, %v2053
        %v2055 = vmul.f32 %v1212, %v2050
        %v2056 = vmul.f32 %v1212, %v2054
        %v2057 = vmul.f32 %v2034, %v2050
        %v2058 = vmul.f32 %v2039, %v2054
        %v2059 = vsub.f32 %v2023, %v2057
        %v2060 = vsub.f32 %v2024, %v2058
        %v2061 = vmul.f32 %v1223, %v2059
        %v2062 = vmul.f32 %v1223, %v2060
        %v2063 = vadd.f32 %v2055, %v2061
        %v2064 = vadd.f32 %v2056, %v2062
        %v2065 = vlaneseq
        %v2066 = vshrl.u32 %v2065, 7
        %v2067 = vsub.s32 0, %v2066
        %v2068 = vrot.slane %v2045, %v2067
        %v2069 = vlaneseq
        %v2070 = vshrl.u32 %v2069, 7
        %v2071 = vsub.s32 0, %v2070
        %v2072 = vrot.slane %v2046, %v2071
        %v2073 = vmul.f32 %v1212, %v2068
        %v2074 = vmul.f32 %v1212, %v2072
        %v2075 = vmul.f32 %v2034, %v2068
        %v2076 = vmul.f32 %v2039, %v2072
        %v2077 = vsub.f32 %v1185, %v2075
        %v2078 = vsub.f32 %v1185, %v2076
        %v2079 = vmul.f32 %v1223, %v2077
        %v2080 = vmul.f32 %v1223, %v2078
        %v2081 = vadd.f32 %v2073, %v2079
        %v2082 = vadd.f32 %v2074, %v2080
        %v2083 = vlog2.pop %v2063
        %v2084 = vmul.f32 %v2083, 0.6931472
        %v2085 = vlog2.pop %v2064
        %v2086 = vmul.f32 %v2085, 0.6931472
        %v2089 = vrot.slane %v2084, 1
        %v2090 = vrot.slane %v2086, 1
        %2091 = vrot.lane.b32.xlu0 %v2089, 127
        %v2092 = vpop.permute.xlu0 %2091
        %2093 = vrot.lane.b32.xlu0 %v2090, 127
        %v2094 = vpop.permute.xlu0 %2093
        %v2097 = vadd.f32 %v2029, %v2092
        %v2098 = vadd.f32 %v2030, %v2094
        %2100 = vset.pattern.permute.xlu0 1
        %2101 = vperm.xlu0 %2100, %v2063
        %v2102 = vpop.permute.xlu0 %2101
        %2105 = vset.pattern.permute.xlu0 1
        %2106 = vperm.xlu0 %2105, %v2064
        %v2107 = vpop.permute.xlu0 %2106
        %v2109 = vrcp.pop %v2102
        %v2110 = vmul.f32 %v2063, %v2109
        %v2111 = vrcp.pop %v2107
        %v2112 = vmul.f32 %v2064, %v2111
        %v2113 = vmul.f32 %v2081, %v2109
        %v2114 = vmul.f32 %v2082, %v2111
        %v2115 = vlaneseq
        %v2116 = vshrl.u32 %v2115, 7
        %v2117 = vsub.s32 1, %v2116
        %v2118 = vrot.slane %v2110, %v2117
        %v2119 = vlaneseq
        %v2120 = vshrl.u32 %v2119, 7
        %v2121 = vsub.s32 1, %v2120
        %v2122 = vrot.slane %v2112, %v2121
        %v2123 = vmul.f32 %v1284, %v2118
        %v2124 = vmul.f32 %v1284, %v2122
        %v2125 = vmul.f32 %v2102, %v2118
        %v2126 = vmul.f32 %v2107, %v2122
        %v2127 = vsub.f32 %v2063, %v2125
        %v2128 = vsub.f32 %v2064, %v2126
        %v2129 = vmul.f32 %v1295, %v2127
        %v2130 = vmul.f32 %v1295, %v2128
        %v2131 = vadd.f32 %v2123, %v2129
        %v2132 = vadd.f32 %v2124, %v2130
        %v2133 = vlaneseq
        %v2134 = vshrl.u32 %v2133, 7
        %v2135 = vsub.s32 1, %v2134
        %v2136 = vrot.slane %v2113, %v2135
        %v2137 = vlaneseq
        %v2138 = vshrl.u32 %v2137, 7
        %v2139 = vsub.s32 1, %v2138
        %v2140 = vrot.slane %v2114, %v2139
        %v2141 = vmul.f32 %v1284, %v2136
        %v2142 = vmul.f32 %v1284, %v2140
        %v2143 = vmul.f32 %v2102, %v2136
        %v2144 = vmul.f32 %v2107, %v2140
        %v2145 = vsub.f32 %v2081, %v2143
        %v2146 = vsub.f32 %v2082, %v2144
        %v2147 = vmul.f32 %v1295, %v2145
        %v2148 = vmul.f32 %v1295, %v2146
        %v2149 = vadd.f32 %v2141, %v2147
        %v2150 = vadd.f32 %v2142, %v2148
        %v2151 = vlog2.pop %v2131
        %v2152 = vmul.f32 %v2151, 0.6931472
        %v2153 = vlog2.pop %v2132
        %v2154 = vmul.f32 %v2153, 0.6931472
        %v2157 = vrot.slane %v2152, 2
        %v2158 = vrot.slane %v2154, 2
        %2159 = vrot.lane.b32.xlu0 %v2157, 126
        %v2160 = vpop.permute.xlu0 %2159
        %2161 = vrot.lane.b32.xlu0 %v2158, 126
        %v2162 = vpop.permute.xlu0 %2161
        %v2165 = vadd.f32 %v2097, %v2160
        %v2166 = vadd.f32 %v2098, %v2162
        %2168 = vset.pattern.permute.xlu0 2
        %2169 = vperm.xlu0 %2168, %v2131
        %v2170 = vpop.permute.xlu0 %2169
        %2173 = vset.pattern.permute.xlu0 2
        %2174 = vperm.xlu0 %2173, %v2132
        %v2175 = vpop.permute.xlu0 %2174
        %v2177 = vrcp.pop %v2170
        %v2178 = vmul.f32 %v2131, %v2177
        %v2179 = vrcp.pop %v2175
        %v2180 = vmul.f32 %v2132, %v2179
        %v2181 = vmul.f32 %v2149, %v2177
        %v2182 = vmul.f32 %v2150, %v2179
        %v2183 = vlaneseq
        %v2184 = vshrl.u32 %v2183, 7
        %v2185 = vsub.s32 2, %v2184
        %v2186 = vrot.slane %v2178, %v2185
        %v2187 = vlaneseq
        %v2188 = vshrl.u32 %v2187, 7
        %v2189 = vsub.s32 2, %v2188
        %v2190 = vrot.slane %v2180, %v2189
        %v2191 = vmul.f32 %v1356, %v2186
        %v2192 = vmul.f32 %v1356, %v2190
        %v2193 = vmul.f32 %v2170, %v2186
        %v2194 = vmul.f32 %v2175, %v2190
        %v2195 = vsub.f32 %v2131, %v2193
        %v2196 = vsub.f32 %v2132, %v2194
        %v2197 = vmul.f32 %v1367, %v2195
        %v2198 = vmul.f32 %v1367, %v2196
        %v2199 = vadd.f32 %v2191, %v2197
        %v2200 = vadd.f32 %v2192, %v2198
        %v2201 = vlaneseq
        %v2202 = vshrl.u32 %v2201, 7
        %v2203 = vsub.s32 2, %v2202
        %v2204 = vrot.slane %v2181, %v2203
        %v2205 = vlaneseq
        %v2206 = vshrl.u32 %v2205, 7
        %v2207 = vsub.s32 2, %v2206
        %v2208 = vrot.slane %v2182, %v2207
        %v2209 = vmul.f32 %v1356, %v2204
        %v2210 = vmul.f32 %v1356, %v2208
        %v2211 = vmul.f32 %v2170, %v2204
        %v2212 = vmul.f32 %v2175, %v2208
        %v2213 = vsub.f32 %v2149, %v2211
        %v2214 = vsub.f32 %v2150, %v2212
        %v2215 = vmul.f32 %v1367, %v2213
        %v2216 = vmul.f32 %v1367, %v2214
        %v2217 = vadd.f32 %v2209, %v2215
        %v2218 = vadd.f32 %v2210, %v2216
        %v2219 = vlog2.pop %v2199
        %v2220 = vmul.f32 %v2219, 0.6931472
        %v2221 = vlog2.pop %v2200
        %v2222 = vmul.f32 %v2221, 0.6931472
        %v2225 = vrot.slane %v2220, 3
        %v2226 = vrot.slane %v2222, 3
        %2227 = vrot.lane.b32.xlu0 %v2225, 125
        %v2228 = vpop.permute.xlu0 %2227
        %2229 = vrot.lane.b32.xlu0 %v2226, 125
        %v2230 = vpop.permute.xlu0 %2229
        %v2233 = vadd.f32 %v2165, %v2228
        %v2234 = vadd.f32 %v2166, %v2230
        %2236 = vset.pattern.permute.xlu0 3
        %2237 = vperm.xlu0 %2236, %v2199
        %v2238 = vpop.permute.xlu0 %2237
        %2241 = vset.pattern.permute.xlu0 3
        %2242 = vperm.xlu0 %2241, %v2200
        %v2243 = vpop.permute.xlu0 %2242
        %v2245 = vrcp.pop %v2238
        %v2246 = vmul.f32 %v2199, %v2245
        %v2247 = vrcp.pop %v2243
        %v2248 = vmul.f32 %v2200, %v2247
        %v2249 = vmul.f32 %v2217, %v2245
        %v2250 = vmul.f32 %v2218, %v2247
        %v2251 = vlaneseq
        %v2252 = vshrl.u32 %v2251, 7
        %v2253 = vsub.s32 3, %v2252
        %v2254 = vrot.slane %v2246, %v2253
        %v2255 = vlaneseq
        %v2256 = vshrl.u32 %v2255, 7
        %v2257 = vsub.s32 3, %v2256
        %v2258 = vrot.slane %v2248, %v2257
        %v2259 = vmul.f32 %v1428, %v2254
        %v2260 = vmul.f32 %v1428, %v2258
        %v2261 = vmul.f32 %v2238, %v2254
        %v2262 = vmul.f32 %v2243, %v2258
        %v2263 = vsub.f32 %v2199, %v2261
        %v2264 = vsub.f32 %v2200, %v2262
        %v2265 = vmul.f32 %v1439, %v2263
        %v2266 = vmul.f32 %v1439, %v2264
        %v2267 = vadd.f32 %v2259, %v2265
        %v2268 = vadd.f32 %v2260, %v2266
        %v2269 = vlaneseq
        %v2270 = vshrl.u32 %v2269, 7
        %v2271 = vsub.s32 3, %v2270
        %v2272 = vrot.slane %v2249, %v2271
        %v2273 = vlaneseq
        %v2274 = vshrl.u32 %v2273, 7
        %v2275 = vsub.s32 3, %v2274
        %v2276 = vrot.slane %v2250, %v2275
        %v2277 = vmul.f32 %v1428, %v2272
        %v2278 = vmul.f32 %v1428, %v2276
        %v2279 = vmul.f32 %v2238, %v2272
        %v2280 = vmul.f32 %v2243, %v2276
        %v2281 = vsub.f32 %v2217, %v2279
        %v2282 = vsub.f32 %v2218, %v2280
        %v2283 = vmul.f32 %v1439, %v2281
        %v2284 = vmul.f32 %v1439, %v2282
        %v2285 = vadd.f32 %v2277, %v2283
        %v2286 = vadd.f32 %v2278, %v2284
        %v2287 = vlog2.pop %v2267
        %v2288 = vmul.f32 %v2287, 0.6931472
        %v2289 = vlog2.pop %v2268
        %v2290 = vmul.f32 %v2289, 0.6931472
        %v2293 = vrot.slane %v2288, 4
        %v2294 = vrot.slane %v2290, 4
        %2295 = vrot.lane.b32.xlu0 %v2293, 124
        %v2296 = vpop.permute.xlu0 %2295
        %2297 = vrot.lane.b32.xlu0 %v2294, 124
        %v2298 = vpop.permute.xlu0 %2297
        %v2301 = vadd.f32 %v2233, %v2296
        %v2302 = vadd.f32 %v2234, %v2298
        %2304 = vset.pattern.permute.xlu0 4
        %2305 = vperm.xlu0 %2304, %v2267
        %v2306 = vpop.permute.xlu0 %2305
        %2309 = vset.pattern.permute.xlu0 4
        %2310 = vperm.xlu0 %2309, %v2268
        %v2311 = vpop.permute.xlu0 %2310
        %v2313 = vrcp.pop %v2306
        %v2314 = vmul.f32 %v2267, %v2313
        %v2315 = vrcp.pop %v2311
        %v2316 = vmul.f32 %v2268, %v2315
        %v2317 = vmul.f32 %v2285, %v2313
        %v2318 = vmul.f32 %v2286, %v2315
        %v2319 = vlaneseq
        %v2320 = vshrl.u32 %v2319, 7
        %v2321 = vsub.s32 4, %v2320
        %v2322 = vrot.slane %v2314, %v2321
        %v2323 = vlaneseq
        %v2324 = vshrl.u32 %v2323, 7
        %v2325 = vsub.s32 4, %v2324
        %v2326 = vrot.slane %v2316, %v2325
        %v2327 = vmul.f32 %v1500, %v2322
        %v2328 = vmul.f32 %v1500, %v2326
        %v2329 = vmul.f32 %v2306, %v2322
        %v2330 = vmul.f32 %v2311, %v2326
        %v2331 = vsub.f32 %v2267, %v2329
        %v2332 = vsub.f32 %v2268, %v2330
        %v2333 = vmul.f32 %v1511, %v2331
        %v2334 = vmul.f32 %v1511, %v2332
        %v2335 = vadd.f32 %v2327, %v2333
        %v2336 = vadd.f32 %v2328, %v2334
        %v2337 = vlaneseq
        %v2338 = vshrl.u32 %v2337, 7
        %v2339 = vsub.s32 4, %v2338
        %v2340 = vrot.slane %v2317, %v2339
        %v2341 = vlaneseq
        %v2342 = vshrl.u32 %v2341, 7
        %v2343 = vsub.s32 4, %v2342
        %v2344 = vrot.slane %v2318, %v2343
        %v2345 = vmul.f32 %v1500, %v2340
        %v2346 = vmul.f32 %v1500, %v2344
        %v2347 = vmul.f32 %v2306, %v2340
        %v2348 = vmul.f32 %v2311, %v2344
        %v2349 = vsub.f32 %v2285, %v2347
        %v2350 = vsub.f32 %v2286, %v2348
        %v2351 = vmul.f32 %v1511, %v2349
        %v2352 = vmul.f32 %v1511, %v2350
        %v2353 = vadd.f32 %v2345, %v2351
        %v2354 = vadd.f32 %v2346, %v2352
        %v2355 = vlog2.pop %v2335
        %v2356 = vmul.f32 %v2355, 0.6931472
        %v2357 = vlog2.pop %v2336
        %v2358 = vmul.f32 %v2357, 0.6931472
        %v2361 = vrot.slane %v2356, 5
        %v2362 = vrot.slane %v2358, 5
        %2363 = vrot.lane.b32.xlu0 %v2361, 123
        %v2364 = vpop.permute.xlu0 %2363
        %2365 = vrot.lane.b32.xlu0 %v2362, 123
        %v2366 = vpop.permute.xlu0 %2365
        %v2369 = vadd.f32 %v2301, %v2364
        %v2370 = vadd.f32 %v2302, %v2366
        %2372 = vset.pattern.permute.xlu0 5
        %2373 = vperm.xlu0 %2372, %v2335
        %v2374 = vpop.permute.xlu0 %2373
        %2377 = vset.pattern.permute.xlu0 5
        %2378 = vperm.xlu0 %2377, %v2336
        %v2379 = vpop.permute.xlu0 %2378
        %v2381 = vrcp.pop %v2374
        %v2382 = vmul.f32 %v2335, %v2381
        %v2383 = vrcp.pop %v2379
        %v2384 = vmul.f32 %v2336, %v2383
        %v2385 = vmul.f32 %v2353, %v2381
        %v2386 = vmul.f32 %v2354, %v2383
        %v2387 = vlaneseq
        %v2388 = vshrl.u32 %v2387, 7
        %v2389 = vsub.s32 5, %v2388
        %v2390 = vrot.slane %v2382, %v2389
        %v2391 = vlaneseq
        %v2392 = vshrl.u32 %v2391, 7
        %v2393 = vsub.s32 5, %v2392
        %v2394 = vrot.slane %v2384, %v2393
        %v2395 = vmul.f32 %v1572, %v2390
        %v2396 = vmul.f32 %v1572, %v2394
        %v2397 = vmul.f32 %v2374, %v2390
        %v2398 = vmul.f32 %v2379, %v2394
        %v2399 = vsub.f32 %v2335, %v2397
        %v2400 = vsub.f32 %v2336, %v2398
        %v2401 = vmul.f32 %v1583, %v2399
        %v2402 = vmul.f32 %v1583, %v2400
        %v2403 = vadd.f32 %v2395, %v2401
        %v2404 = vadd.f32 %v2396, %v2402
        %v2405 = vlaneseq
        %v2406 = vshrl.u32 %v2405, 7
        %v2407 = vsub.s32 5, %v2406
        %v2408 = vrot.slane %v2385, %v2407
        %v2409 = vlaneseq
        %v2410 = vshrl.u32 %v2409, 7
        %v2411 = vsub.s32 5, %v2410
        %v2412 = vrot.slane %v2386, %v2411
        %v2413 = vmul.f32 %v1572, %v2408
        %v2414 = vmul.f32 %v1572, %v2412
        %v2415 = vmul.f32 %v2374, %v2408
        %v2416 = vmul.f32 %v2379, %v2412
        %v2417 = vsub.f32 %v2353, %v2415
        %v2418 = vsub.f32 %v2354, %v2416
        %v2419 = vmul.f32 %v1583, %v2417
        %v2420 = vmul.f32 %v1583, %v2418
        %v2421 = vadd.f32 %v2413, %v2419
        %v2422 = vadd.f32 %v2414, %v2420
        %v2423 = vlog2.pop %v2403
        %v2424 = vmul.f32 %v2423, 0.6931472
        %v2425 = vlog2.pop %v2404
        %v2426 = vmul.f32 %v2425, 0.6931472
        %v2429 = vrot.slane %v2424, 6
        %v2430 = vrot.slane %v2426, 6
        %2431 = vrot.lane.b32.xlu0 %v2429, 122
        %v2432 = vpop.permute.xlu0 %2431
        %2433 = vrot.lane.b32.xlu0 %v2430, 122
        %v2434 = vpop.permute.xlu0 %2433
        %v2437 = vadd.f32 %v2369, %v2432
        %v2438 = vadd.f32 %v2370, %v2434
        %2440 = vset.pattern.permute.xlu0 6
        %2441 = vperm.xlu0 %2440, %v2403
        %v2442 = vpop.permute.xlu0 %2441
        %2445 = vset.pattern.permute.xlu0 6
        %2446 = vperm.xlu0 %2445, %v2404
        %v2447 = vpop.permute.xlu0 %2446
        %v2449 = vrcp.pop %v2442
        %v2450 = vmul.f32 %v2403, %v2449
        %v2451 = vrcp.pop %v2447
        %v2452 = vmul.f32 %v2404, %v2451
        %v2453 = vmul.f32 %v2421, %v2449
        %v2454 = vmul.f32 %v2422, %v2451
        %v2455 = vlaneseq
        %v2456 = vshrl.u32 %v2455, 7
        %v2457 = vsub.s32 6, %v2456
        %v2458 = vrot.slane %v2450, %v2457
        %v2459 = vlaneseq
        %v2460 = vshrl.u32 %v2459, 7
        %v2461 = vsub.s32 6, %v2460
        %v2462 = vrot.slane %v2452, %v2461
        %v2463 = vmul.f32 %v1644, %v2458
        %v2464 = vmul.f32 %v1644, %v2462
        %v2465 = vmul.f32 %v2442, %v2458
        %v2466 = vmul.f32 %v2447, %v2462
        %v2467 = vsub.f32 %v2403, %v2465
        %v2468 = vsub.f32 %v2404, %v2466
        %v2469 = vmul.f32 %v1655, %v2467
        %v2470 = vmul.f32 %v1655, %v2468
        %v2471 = vadd.f32 %v2463, %v2469
        %v2472 = vadd.f32 %v2464, %v2470
        %v2473 = vlaneseq
        %v2474 = vshrl.u32 %v2473, 7
        %v2475 = vsub.s32 6, %v2474
        %v2476 = vrot.slane %v2453, %v2475
        %v2477 = vlaneseq
        %v2478 = vshrl.u32 %v2477, 7
        %v2479 = vsub.s32 6, %v2478
        %v2480 = vrot.slane %v2454, %v2479
        %v2481 = vmul.f32 %v1644, %v2476
        %v2482 = vmul.f32 %v1644, %v2480
        %v2483 = vmul.f32 %v2442, %v2476
        %v2484 = vmul.f32 %v2447, %v2480
        %v2485 = vsub.f32 %v2421, %v2483
        %v2486 = vsub.f32 %v2422, %v2484
        %v2487 = vmul.f32 %v1655, %v2485
        %v2488 = vmul.f32 %v1655, %v2486
        %v2489 = vadd.f32 %v2481, %v2487
        %v2490 = vadd.f32 %v2482, %v2488
        %v2491 = vlog2.pop %v2471
        %v2492 = vmul.f32 %v2491, 0.6931472
        %v2493 = vlog2.pop %v2472
        %v2494 = vmul.f32 %v2493, 0.6931472
        %v2497 = vrot.slane %v2492, 7
        %v2498 = vrot.slane %v2494, 7
        %2499 = vrot.lane.b32.xlu0 %v2497, 121
        %v2500 = vpop.permute.xlu0 %2499
        %2501 = vrot.lane.b32.xlu0 %v2498, 121
        %v2502 = vpop.permute.xlu0 %2501
        %v2505 = vadd.f32 %v2437, %v2500
        %v2506 = vadd.f32 %v2438, %v2502
        %2508 = vset.pattern.permute.xlu0 7
        %2509 = vperm.xlu0 %2508, %v2471
        %v2510 = vpop.permute.xlu0 %2509
        %2513 = vset.pattern.permute.xlu0 7
        %2514 = vperm.xlu0 %2513, %v2472
        %v2515 = vpop.permute.xlu0 %2514
        %v2517 = vrcp.pop %v2510
        %v2518 = vmul.f32 %v2489, %v2517
        %v2519 = vrcp.pop %v2515
        %v2520 = vmul.f32 %v2490, %v2519
        %v2521 = vlaneseq
        %v2522 = vshrl.u32 %v2521, 7
        %v2523 = vsub.s32 7, %v2522
        %v2524 = vrot.slane %v2518, %v2523
        %v2525 = vlaneseq
        %v2526 = vshrl.u32 %v2525, 7
        %v2527 = vsub.s32 7, %v2526
        %v2528 = vrot.slane %v2520, %v2527
        %v2529 = vmul.f32 %v1714, %v2524
        %v2530 = vmul.f32 %v1714, %v2528
        %v2531 = vmul.f32 %v2510, %v2524
        %v2532 = vmul.f32 %v2515, %v2528
        %v2533 = vsub.f32 %v2489, %v2531
        %v2534 = vsub.f32 %v2490, %v2532
        %v2535 = vmul.f32 %v1725, %v2533
        %v2536 = vmul.f32 %v1725, %v2534
        %v2537 = vadd.f32 %v2529, %v2535
        %v2538 = vadd.f32 %v2530, %v2536
        %v2539 = vsub.f32 0.0, %v2505
        %v2540 = vsub.f32 0.0, %v2506
        %v2541 = vld [vmem:[%s516] sm:$0x3]
        %v2544 = vunpack.c.l.s4 1966171168
        %v2545 = vunpack.c.0.s8 %v2544
        %v2546 = vlaneseq
        %v2547 = vshrl.u32 %v2546, 7
        %v2548 = vsub.s32 %v2545, %v2547
        %v2549 = vrot.slane %v1177, %v2548
        %v2550 = vcombine.high %v2549, %v2549
        %v2552 = vunpack.c.l.s4 1966171168
        %v2553 = vunpack.c.0.s8 %v2552
        %v2554 = vlaneseq
        %v2555 = vshrl.u32 %v2554, 7
        %v2556 = vsub.s32 %v2553, %v2555
        %v2557 = vrot.slane %v2549, %v2556
        %v2559 = vunpack.c.l.s4 1966171168
        %v2560 = vunpack.c.0.s8 %v2559
        %v2561 = vlaneseq
        %v2562 = vshrl.u32 %v2561, 7
        %v2563 = vsub.s32 %v2560, %v2562
        %v2564 = vrot.slane %v2550, %v2563
        %v2565 = vlaneseq
        %v2566 = vshrl.u32 %v2565, 7
        %v2567 = vsub.s32 0, %v2566
        %v2568 = vrot.slane %v2557, %v2567
        %v2569 = vlaneseq
        %v2570 = vshrl.u32 %v2569, 7
        %v2571 = vsub.s32 0, %v2570
        %v2572 = vrot.slane %v2564, %v2571
        %v2575 = vmul.f32 %v1732, %v2568
        %v2576 = vmul.f32 %v1733, %v2572
        %v2577 = vsel %vm566, %v2575, 0.0
        %2578 = vadd.xlane.f32.xlu0 %v2577
        %v2579 = vpop.xlane.xlu0 %2578
        %v2580 = vsel %vm566, %v2576, 0.0
        %2581 = vadd.xlane.f32.xlu0 %v2580
        %v2582 = vpop.xlane.xlu0 %2581
        %v2584 = vlaneseq
        %v2585 = vshrl.u32 %v2584, 7
        %v2586 = vsub.s32 0, %v2585
        %v2587 = vrot.slane %v2541, %v2586
        %2589 = vbcast.lane.b32.xlu0 %v2587, 256
        %v2590 = vpop.permute.xlu0 %2589
        %v2591 = vlaneseq
        %v2592 = vshrl.u32 %v2591, 7
        %v2593 = vsub.s32 1, %v2592
        %v2594 = vrot.slane %v2541, %v2593
        %2596 = vbcast.lane.b32.xlu0 %v2594, 256
        %v2597 = vpop.permute.xlu0 %2596
        %v2600 = vadd.f32 %v2579, %v2590
        %v2601 = vadd.f32 %v2582, %v2597
        %2604 = vset.pattern.permute.xlu0 0
        %2605 = vperm.xlu0 %2604, %v2600
        %v2606 = vpop.permute.xlu0 %2605
        %2607 = vset.pattern.permute.xlu0 0
        %2608 = vperm.xlu0 %2607, %v2601
        %v2609 = vpop.permute.xlu0 %2608
        %v2610 = vlaneseq
        %v2611 = vshrl.u32 %v2610, 7
        %v2612 = vsub.s32 %v1749, %v2611
        %v2613 = vrot.slane %v2606, %v2612
        %v2614 = vlaneseq
        %v2615 = vshrl.u32 %v2614, 7
        %v2616 = vsub.s32 %v1749, %v2615
        %v2617 = vrot.slane %v2609, %v2616
        %v2618 = vsel %vm1759, %v2613, %v2613
        %v2619 = vsel %vm1761, %v2613, %v2618
        %v2620 = vsel %vm1763, %v2613, %v2619
        %v2621 = vsel %vm1765, %v2613, %v2620
        %v2622 = vsel %vm1767, %v2613, %v2621
        %v2623 = vsel %vm1769, %v2613, %v2622
        %v2624 = vsel %vm1759, %v2617, %v2617
        %v2625 = vsel %vm1761, %v2617, %v2624
        %v2626 = vsel %vm1763, %v2617, %v2625
        %v2627 = vsel %vm1765, %v2617, %v2626
        %v2628 = vsel %vm1767, %v2617, %v2627
        %v2629 = vsel %vm1769, %v2617, %v2628
        %v2632 = vmul.f32 %v2537, %v2623
        %v2633 = vmul.f32 %v2538, %v2629
        %v2634 = vsel %vm566, %v2632, 0.0
        %2635 = vadd.xlane.f32.xlu0 %v2634
        %v2636 = vpop.xlane.xlu0 %2635
        %v2637 = vsel %vm566, %v2633, 0.0
        %2638 = vadd.xlane.f32.xlu0 %v2637
        %v2639 = vpop.xlane.xlu0 %2638
        %v2640 = vrsqrt.pop %v2537
        %v2641 = vmul.f32 %v2537, %v2640
        %vm2642 = vcmp.eq.f32.partialorder %v2537, inf
        %v2643 = vsel %vm2642, %v2537, %v2641
        %vm2644 = vcmp.eq.f32.partialorder %v2537, 0.0
        %v2645 = vand.u32 %v2537, 2147483648
        %v2646 = vsel %vm2644, %v2645, %v2643
        %v2647 = vrsqrt.pop %v2538
        %v2648 = vmul.f32 %v2538, %v2647
        %vm2649 = vcmp.eq.f32.partialorder %v2538, inf
        %v2650 = vsel %vm2649, %v2538, %v2648
        %vm2651 = vcmp.eq.f32.partialorder %v2538, 0.0
        %v2652 = vand.u32 %v2538, 2147483648
        %v2653 = vsel %vm2651, %v2652, %v2650
        %v2654 = vlaneseq
        %v2655 = vshrl.u32 %v2654, 7
        %v2656 = vsub.s32 0, %v2655
        %v2657 = vrot.slane %v2646, %v2656
        %v2658 = vlaneseq
        %v2659 = vshrl.u32 %v2658, 7
        %v2660 = vsub.s32 0, %v2659
        %v2661 = vrot.slane %v2653, %v2660
        %v2662 = vrcp.pop %v2657
        %v2663 = vmul.f32 %v2537, %v2662
        %v2664 = vrcp.pop %v2661
        %v2665 = vmul.f32 %v2538, %v2664
        %vm2666 = vcmp.ge.s32.totalorder %v1749, 0
        %v2667 = vsel %vm2666, 1, 0
        %v2668 = vcvt.s32.f32 %v2667
        %2671 = vbcast.lane.b32.xlu0 %v2668, 256
        %v2672 = vpop.permute.xlu0 %2671
        %v2674 = vmul.f32 %v2663, %v2672
        %v2675 = vmul.f32 %v2665, %v2672
        %vm2676 = vcmp.eq.s32.totalorder %v1749, 0
        %v2677 = vsel %vm2676, 1, 0
        %v2678 = vcvt.s32.f32 %v2677
        %2680 = vset.pattern.permute.xlu0 0
        %2681 = vperm.xlu0 %2680, %v2674
        %v2682 = vpop.permute.xlu0 %2681
        %2685 = vset.pattern.permute.xlu0 0
        %2686 = vperm.xlu0 %2685, %v2675
        %v2687 = vpop.permute.xlu0 %2686
        %v2689 = vmul.f32 %v2678, %v2682
        %v2690 = vmul.f32 %v2678, %v2687
        %v2691 = vadd.f32 %v2689, 0.0
        %v2692 = vadd.f32 %v2690, 0.0
        %v2693 = vlaneseq
        %v2694 = vshrl.u32 %v2693, 7
        %v2695 = vsub.s32 1, %v2694
        %v2696 = vrot.slane %v2691, %v2695
        %v2697 = vlaneseq
        %v2698 = vshrl.u32 %v2697, 7
        %v2699 = vsub.s32 1, %v2698
        %v2700 = vrot.slane %v2692, %v2699
        %v2701 = vmul.f32 %v2691, %v2696
        %v2702 = vmul.f32 %v2692, %v2700
        %v2703 = vadd.f32 %v2701, 0.0
        %v2704 = vadd.f32 %v2702, 0.0
        %2707 = vrot.lane.b32.xlu0 %v2703, 1
        %v2708 = vpop.permute.xlu0 %2707
        %2709 = vrot.lane.b32.xlu0 %v2704, 1
        %v2710 = vpop.permute.xlu0 %2709
        %v2713 = vsub.f32 %v2537, %v2708
        %v2714 = vsub.f32 %v2538, %v2710
        %v2715 = vrsqrt.pop %v2713
        %v2716 = vmul.f32 %v2713, %v2715
        %vm2717 = vcmp.eq.f32.partialorder %v2713, inf
        %v2718 = vsel %vm2717, %v2713, %v2716
        %vm2719 = vcmp.eq.f32.partialorder %v2713, 0.0
        %v2720 = vand.u32 %v2713, 2147483648
        %v2721 = vsel %vm2719, %v2720, %v2718
        %v2722 = vrsqrt.pop %v2714
        %v2723 = vmul.f32 %v2714, %v2722
        %vm2724 = vcmp.eq.f32.partialorder %v2714, inf
        %v2725 = vsel %vm2724, %v2714, %v2723
        %vm2726 = vcmp.eq.f32.partialorder %v2714, 0.0
        %v2727 = vand.u32 %v2714, 2147483648
        %v2728 = vsel %vm2726, %v2727, %v2725
        %v2729 = vlaneseq
        %v2730 = vshrl.u32 %v2729, 7
        %v2731 = vsub.s32 1, %v2730
        %v2732 = vrot.slane %v2721, %v2731
        %v2733 = vlaneseq
        %v2734 = vshrl.u32 %v2733, 7
        %v2735 = vsub.s32 1, %v2734
        %v2736 = vrot.slane %v2728, %v2735
        %v2737 = vrcp.pop %v2732
        %v2738 = vmul.f32 %v2713, %v2737
        %v2739 = vrcp.pop %v2736
        %v2740 = vmul.f32 %v2714, %v2739
        %vm2741 = vcmp.ge.s32.totalorder %v1749, 1
        %v2742 = vsel %vm2741, 1, 0
        %v2743 = vcvt.s32.f32 %v2742
        %2746 = vbcast.lane.b32.xlu0 %v2743, 256
        %v2747 = vpop.permute.xlu0 %2746
        %v2749 = vmul.f32 %v2738, %v2747
        %v2750 = vmul.f32 %v2740, %v2747
        %vm2751 = vcmp.eq.s32.totalorder %v1749, 1
        %v2752 = vsel %vm2751, 1, 0
        %v2753 = vcvt.s32.f32 %v2752
        %2755 = vset.pattern.permute.xlu0 1
        %2756 = vperm.xlu0 %2755, %v2749
        %v2757 = vpop.permute.xlu0 %2756
        %2760 = vset.pattern.permute.xlu0 1
        %2761 = vperm.xlu0 %2760, %v2750
        %v2762 = vpop.permute.xlu0 %2761
        %v2764 = vmul.f32 %v2753, %v2757
        %v2765 = vmul.f32 %v2753, %v2762
        %v2766 = vadd.f32 %v2691, %v2764
        %v2767 = vadd.f32 %v2692, %v2765
        %v2768 = vlaneseq
        %v2769 = vshrl.u32 %v2768, 7
        %v2770 = vsub.s32 2, %v2769
        %v2771 = vrot.slane %v2766, %v2770
        %v2772 = vlaneseq
        %v2773 = vshrl.u32 %v2772, 7
        %v2774 = vsub.s32 2, %v2773
        %v2775 = vrot.slane %v2767, %v2774
        %v2776 = vmul.f32 %v2766, %v2771
        %v2777 = vmul.f32 %v2767, %v2775
        %vm2778 = vcmask 15360
        %v2779 = vsel %vm2778, %v2776, 0.0
        %2780 = vadd.xlane.f32.xlu0 %v2779
        %v2781 = vpop.xlane.xlu0 %2780
        %v2782 = vsel %vm2778, %v2777, 0.0
        %2783 = vadd.xlane.f32.xlu0 %v2782
        %v2784 = vpop.xlane.xlu0 %2783
        %v2785 = vsub.f32 %v2537, %v2781
        %v2786 = vsub.f32 %v2538, %v2784
        %v2787 = vrsqrt.pop %v2785
        %v2788 = vmul.f32 %v2785, %v2787
        %vm2789 = vcmp.eq.f32.partialorder %v2785, inf
        %v2790 = vsel %vm2789, %v2785, %v2788
        %vm2791 = vcmp.eq.f32.partialorder %v2785, 0.0
        %v2792 = vand.u32 %v2785, 2147483648
        %v2793 = vsel %vm2791, %v2792, %v2790
        %v2794 = vrsqrt.pop %v2786
        %v2795 = vmul.f32 %v2786, %v2794
        %vm2796 = vcmp.eq.f32.partialorder %v2786, inf
        %v2797 = vsel %vm2796, %v2786, %v2795
        %vm2798 = vcmp.eq.f32.partialorder %v2786, 0.0
        %v2799 = vand.u32 %v2786, 2147483648
        %v2800 = vsel %vm2798, %v2799, %v2797
        %v2801 = vlaneseq
        %v2802 = vshrl.u32 %v2801, 7
        %v2803 = vsub.s32 2, %v2802
        %v2804 = vrot.slane %v2793, %v2803
        %v2805 = vlaneseq
        %v2806 = vshrl.u32 %v2805, 7
        %v2807 = vsub.s32 2, %v2806
        %v2808 = vrot.slane %v2800, %v2807
        %v2809 = vrcp.pop %v2804
        %v2810 = vmul.f32 %v2785, %v2809
        %v2811 = vrcp.pop %v2808
        %v2812 = vmul.f32 %v2786, %v2811
        %vm2813 = vcmp.ge.s32.totalorder %v1749, 2
        %v2814 = vsel %vm2813, 1, 0
        %v2815 = vcvt.s32.f32 %v2814
        %2818 = vbcast.lane.b32.xlu0 %v2815, 256
        %v2819 = vpop.permute.xlu0 %2818
        %v2821 = vmul.f32 %v2810, %v2819
        %v2822 = vmul.f32 %v2812, %v2819
        %vm2823 = vcmp.eq.s32.totalorder %v1749, 2
        %v2824 = vsel %vm2823, 1, 0
        %v2825 = vcvt.s32.f32 %v2824
        %2827 = vset.pattern.permute.xlu0 2
        %2828 = vperm.xlu0 %2827, %v2821
        %v2829 = vpop.permute.xlu0 %2828
        %2832 = vset.pattern.permute.xlu0 2
        %2833 = vperm.xlu0 %2832, %v2822
        %v2834 = vpop.permute.xlu0 %2833
        %v2836 = vmul.f32 %v2825, %v2829
        %v2837 = vmul.f32 %v2825, %v2834
        %v2838 = vadd.f32 %v2766, %v2836
        %v2839 = vadd.f32 %v2767, %v2837
        %v2840 = vlaneseq
        %v2841 = vshrl.u32 %v2840, 7
        %v2842 = vsub.s32 3, %v2841
        %v2843 = vrot.slane %v2838, %v2842
        %v2844 = vlaneseq
        %v2845 = vshrl.u32 %v2844, 7
        %v2846 = vsub.s32 3, %v2845
        %v2847 = vrot.slane %v2839, %v2846
        %v2848 = vmul.f32 %v2838, %v2843
        %v2849 = vmul.f32 %v2839, %v2847
        %vm2850 = vcmask 23552
        %v2851 = vsel %vm2850, %v2848, 0.0
        %2852 = vadd.xlane.f32.xlu0 %v2851
        %v2853 = vpop.xlane.xlu0 %2852
        %v2854 = vsel %vm2850, %v2849, 0.0
        %2855 = vadd.xlane.f32.xlu0 %v2854
        %v2856 = vpop.xlane.xlu0 %2855
        %v2857 = vsub.f32 %v2537, %v2853
        %v2858 = vsub.f32 %v2538, %v2856
        %v2859 = vrsqrt.pop %v2857
        %v2860 = vmul.f32 %v2857, %v2859
        %vm2861 = vcmp.eq.f32.partialorder %v2857, inf
        %v2862 = vsel %vm2861, %v2857, %v2860
        %vm2863 = vcmp.eq.f32.partialorder %v2857, 0.0
        %v2864 = vand.u32 %v2857, 2147483648
        %v2865 = vsel %vm2863, %v2864, %v2862
        %v2866 = vrsqrt.pop %v2858
        %v2867 = vmul.f32 %v2858, %v2866
        %vm2868 = vcmp.eq.f32.partialorder %v2858, inf
        %v2869 = vsel %vm2868, %v2858, %v2867
        %vm2870 = vcmp.eq.f32.partialorder %v2858, 0.0
        %v2871 = vand.u32 %v2858, 2147483648
        %v2872 = vsel %vm2870, %v2871, %v2869
        %v2873 = vlaneseq
        %v2874 = vshrl.u32 %v2873, 7
        %v2875 = vsub.s32 3, %v2874
        %v2876 = vrot.slane %v2865, %v2875
        %v2877 = vlaneseq
        %v2878 = vshrl.u32 %v2877, 7
        %v2879 = vsub.s32 3, %v2878
        %v2880 = vrot.slane %v2872, %v2879
        %v2881 = vrcp.pop %v2876
        %v2882 = vmul.f32 %v2857, %v2881
        %v2883 = vrcp.pop %v2880
        %v2884 = vmul.f32 %v2858, %v2883
        %vm2885 = vcmp.ge.s32.totalorder %v1749, 3
        %v2886 = vsel %vm2885, 1, 0
        %v2887 = vcvt.s32.f32 %v2886
        %2890 = vbcast.lane.b32.xlu0 %v2887, 256
        %v2891 = vpop.permute.xlu0 %2890
        %v2893 = vmul.f32 %v2882, %v2891
        %v2894 = vmul.f32 %v2884, %v2891
        %vm2895 = vcmp.eq.s32.totalorder %v1749, 3
        %v2896 = vsel %vm2895, 1, 0
        %v2897 = vcvt.s32.f32 %v2896
        %2899 = vset.pattern.permute.xlu0 3
        %2900 = vperm.xlu0 %2899, %v2893
        %v2901 = vpop.permute.xlu0 %2900
        %2904 = vset.pattern.permute.xlu0 3
        %2905 = vperm.xlu0 %2904, %v2894
        %v2906 = vpop.permute.xlu0 %2905
        %v2908 = vmul.f32 %v2897, %v2901
        %v2909 = vmul.f32 %v2897, %v2906
        %v2910 = vadd.f32 %v2838, %v2908
        %v2911 = vadd.f32 %v2839, %v2909
        %v2912 = vlaneseq
        %v2913 = vshrl.u32 %v2912, 7
        %v2914 = vsub.s32 4, %v2913
        %v2915 = vrot.slane %v2910, %v2914
        %v2916 = vlaneseq
        %v2917 = vshrl.u32 %v2916, 7
        %v2918 = vsub.s32 4, %v2917
        %v2919 = vrot.slane %v2911, %v2918
        %v2920 = vmul.f32 %v2910, %v2915
        %v2921 = vmul.f32 %v2911, %v2919
        %vm2922 = vcmask 31744
        %v2923 = vsel %vm2922, %v2920, 0.0
        %2924 = vadd.xlane.f32.xlu0 %v2923
        %v2925 = vpop.xlane.xlu0 %2924
        %v2926 = vsel %vm2922, %v2921, 0.0
        %2927 = vadd.xlane.f32.xlu0 %v2926
        %v2928 = vpop.xlane.xlu0 %2927
        %v2929 = vsub.f32 %v2537, %v2925
        %v2930 = vsub.f32 %v2538, %v2928
        %v2931 = vrsqrt.pop %v2929
        %v2932 = vmul.f32 %v2929, %v2931
        %vm2933 = vcmp.eq.f32.partialorder %v2929, inf
        %v2934 = vsel %vm2933, %v2929, %v2932
        %vm2935 = vcmp.eq.f32.partialorder %v2929, 0.0
        %v2936 = vand.u32 %v2929, 2147483648
        %v2937 = vsel %vm2935, %v2936, %v2934
        %v2938 = vrsqrt.pop %v2930
        %v2939 = vmul.f32 %v2930, %v2938
        %vm2940 = vcmp.eq.f32.partialorder %v2930, inf
        %v2941 = vsel %vm2940, %v2930, %v2939
        %vm2942 = vcmp.eq.f32.partialorder %v2930, 0.0
        %v2943 = vand.u32 %v2930, 2147483648
        %v2944 = vsel %vm2942, %v2943, %v2941
        %v2945 = vlaneseq
        %v2946 = vshrl.u32 %v2945, 7
        %v2947 = vsub.s32 4, %v2946
        %v2948 = vrot.slane %v2937, %v2947
        %v2949 = vlaneseq
        %v2950 = vshrl.u32 %v2949, 7
        %v2951 = vsub.s32 4, %v2950
        %v2952 = vrot.slane %v2944, %v2951
        %v2953 = vrcp.pop %v2948
        %v2954 = vmul.f32 %v2929, %v2953
        %v2955 = vrcp.pop %v2952
        %v2956 = vmul.f32 %v2930, %v2955
        %vm2957 = vcmp.ge.s32.totalorder %v1749, 4
        %v2958 = vsel %vm2957, 1, 0
        %v2959 = vcvt.s32.f32 %v2958
        %2962 = vbcast.lane.b32.xlu0 %v2959, 256
        %v2963 = vpop.permute.xlu0 %2962
        %v2965 = vmul.f32 %v2954, %v2963
        %v2966 = vmul.f32 %v2956, %v2963
        %vm2967 = vcmp.eq.s32.totalorder %v1749, 4
        %v2968 = vsel %vm2967, 1, 0
        %v2969 = vcvt.s32.f32 %v2968
        %2971 = vset.pattern.permute.xlu0 4
        %2972 = vperm.xlu0 %2971, %v2965
        %v2973 = vpop.permute.xlu0 %2972
        %2976 = vset.pattern.permute.xlu0 4
        %2977 = vperm.xlu0 %2976, %v2966
        %v2978 = vpop.permute.xlu0 %2977
        %v2980 = vmul.f32 %v2969, %v2973
        %v2981 = vmul.f32 %v2969, %v2978
        %v2982 = vadd.f32 %v2910, %v2980
        %v2983 = vadd.f32 %v2911, %v2981
        %v2984 = vlaneseq
        %v2985 = vshrl.u32 %v2984, 7
        %v2986 = vsub.s32 5, %v2985
        %v2987 = vrot.slane %v2982, %v2986
        %v2988 = vlaneseq
        %v2989 = vshrl.u32 %v2988, 7
        %v2990 = vsub.s32 5, %v2989
        %v2991 = vrot.slane %v2983, %v2990
        %v2992 = vmul.f32 %v2982, %v2987
        %v2993 = vmul.f32 %v2983, %v2991
        %vm2994 = vcmask 39936
        %v2995 = vsel %vm2994, %v2992, 0.0
        %2996 = vadd.xlane.f32.xlu0 %v2995
        %v2997 = vpop.xlane.xlu0 %2996
        %v2998 = vsel %vm2994, %v2993, 0.0
        %2999 = vadd.xlane.f32.xlu0 %v2998
        %v3000 = vpop.xlane.xlu0 %2999
        %v3001 = vsub.f32 %v2537, %v2997
        %v3002 = vsub.f32 %v2538, %v3000
        %v3003 = vrsqrt.pop %v3001
        %v3004 = vmul.f32 %v3001, %v3003
        %vm3005 = vcmp.eq.f32.partialorder %v3001, inf
        %v3006 = vsel %vm3005, %v3001, %v3004
        %vm3007 = vcmp.eq.f32.partialorder %v3001, 0.0
        %v3008 = vand.u32 %v3001, 2147483648
        %v3009 = vsel %vm3007, %v3008, %v3006
        %v3010 = vrsqrt.pop %v3002
        %v3011 = vmul.f32 %v3002, %v3010
        %vm3012 = vcmp.eq.f32.partialorder %v3002, inf
        %v3013 = vsel %vm3012, %v3002, %v3011
        %vm3014 = vcmp.eq.f32.partialorder %v3002, 0.0
        %v3015 = vand.u32 %v3002, 2147483648
        %v3016 = vsel %vm3014, %v3015, %v3013
        %v3017 = vlaneseq
        %v3018 = vshrl.u32 %v3017, 7
        %v3019 = vsub.s32 5, %v3018
        %v3020 = vrot.slane %v3009, %v3019
        %v3021 = vlaneseq
        %v3022 = vshrl.u32 %v3021, 7
        %v3023 = vsub.s32 5, %v3022
        %v3024 = vrot.slane %v3016, %v3023
        %v3025 = vrcp.pop %v3020
        %v3026 = vmul.f32 %v3001, %v3025
        %v3027 = vrcp.pop %v3024
        %v3028 = vmul.f32 %v3002, %v3027
        %vm3029 = vcmp.ge.s32.totalorder %v1749, 5
        %v3030 = vsel %vm3029, 1, 0
        %v3031 = vcvt.s32.f32 %v3030
        %3034 = vbcast.lane.b32.xlu0 %v3031, 256
        %v3035 = vpop.permute.xlu0 %3034
        %v3037 = vmul.f32 %v3026, %v3035
        %v3038 = vmul.f32 %v3028, %v3035
        %vm3039 = vcmp.eq.s32.totalorder %v1749, 5
        %v3040 = vsel %vm3039, 1, 0
        %v3041 = vcvt.s32.f32 %v3040
        %3043 = vset.pattern.permute.xlu0 5
        %3044 = vperm.xlu0 %3043, %v3037
        %v3045 = vpop.permute.xlu0 %3044
        %3048 = vset.pattern.permute.xlu0 5
        %3049 = vperm.xlu0 %3048, %v3038
        %v3050 = vpop.permute.xlu0 %3049
        %v3052 = vmul.f32 %v3041, %v3045
        %v3053 = vmul.f32 %v3041, %v3050
        %v3054 = vadd.f32 %v2982, %v3052
        %v3055 = vadd.f32 %v2983, %v3053
        %v3056 = vlaneseq
        %v3057 = vshrl.u32 %v3056, 7
        %v3058 = vsub.s32 6, %v3057
        %v3059 = vrot.slane %v3054, %v3058
        %v3060 = vlaneseq
        %v3061 = vshrl.u32 %v3060, 7
        %v3062 = vsub.s32 6, %v3061
        %v3063 = vrot.slane %v3055, %v3062
        %v3064 = vmul.f32 %v3054, %v3059
        %v3065 = vmul.f32 %v3055, %v3063
        %vm3066 = vcmask 48128
        %v3067 = vsel %vm3066, %v3064, 0.0
        %3068 = vadd.xlane.f32.xlu0 %v3067
        %v3069 = vpop.xlane.xlu0 %3068
        %v3070 = vsel %vm3066, %v3065, 0.0
        %3071 = vadd.xlane.f32.xlu0 %v3070
        %v3072 = vpop.xlane.xlu0 %3071
        %v3073 = vsub.f32 %v2537, %v3069
        %v3074 = vsub.f32 %v2538, %v3072
        %v3075 = vrsqrt.pop %v3073
        %v3076 = vmul.f32 %v3073, %v3075
        %vm3077 = vcmp.eq.f32.partialorder %v3073, inf
        %v3078 = vsel %vm3077, %v3073, %v3076
        %vm3079 = vcmp.eq.f32.partialorder %v3073, 0.0
        %v3080 = vand.u32 %v3073, 2147483648
        %v3081 = vsel %vm3079, %v3080, %v3078
        %v3082 = vrsqrt.pop %v3074
        %v3083 = vmul.f32 %v3074, %v3082
        %vm3084 = vcmp.eq.f32.partialorder %v3074, inf
        %v3085 = vsel %vm3084, %v3074, %v3083
        %vm3086 = vcmp.eq.f32.partialorder %v3074, 0.0
        %v3087 = vand.u32 %v3074, 2147483648
        %v3088 = vsel %vm3086, %v3087, %v3085
        %v3089 = vlaneseq
        %v3090 = vshrl.u32 %v3089, 7
        %v3091 = vsub.s32 6, %v3090
        %v3092 = vrot.slane %v3081, %v3091
        %v3093 = vlaneseq
        %v3094 = vshrl.u32 %v3093, 7
        %v3095 = vsub.s32 6, %v3094
        %v3096 = vrot.slane %v3088, %v3095
        %v3097 = vrcp.pop %v3092
        %v3098 = vmul.f32 %v3073, %v3097
        %v3099 = vrcp.pop %v3096
        %v3100 = vmul.f32 %v3074, %v3099
        %vm3101 = vcmp.ge.s32.totalorder %v1749, 6
        %v3102 = vsel %vm3101, 1, 0
        %v3103 = vcvt.s32.f32 %v3102
        %3106 = vbcast.lane.b32.xlu0 %v3103, 256
        %v3107 = vpop.permute.xlu0 %3106
        %v3109 = vmul.f32 %v3098, %v3107
        %v3110 = vmul.f32 %v3100, %v3107
        %vm3111 = vcmp.eq.s32.totalorder %v1749, 6
        %v3112 = vsel %vm3111, 1, 0
        %v3113 = vcvt.s32.f32 %v3112
        %3115 = vset.pattern.permute.xlu0 6
        %3116 = vperm.xlu0 %3115, %v3109
        %v3117 = vpop.permute.xlu0 %3116
        %3120 = vset.pattern.permute.xlu0 6
        %3121 = vperm.xlu0 %3120, %v3110
        %v3122 = vpop.permute.xlu0 %3121
        %v3124 = vmul.f32 %v3113, %v3117
        %v3125 = vmul.f32 %v3113, %v3122
        %v3126 = vadd.f32 %v3054, %v3124
        %v3127 = vadd.f32 %v3055, %v3125
        %v3128 = vlaneseq
        %v3129 = vshrl.u32 %v3128, 7
        %v3130 = vsub.s32 7, %v3129
        %v3131 = vrot.slane %v3126, %v3130
        %v3132 = vlaneseq
        %v3133 = vshrl.u32 %v3132, 7
        %v3134 = vsub.s32 7, %v3133
        %v3135 = vrot.slane %v3127, %v3134
        %v3136 = vmul.f32 %v3126, %v3131
        %v3137 = vmul.f32 %v3127, %v3135
        %vm3138 = vcmask 56320
        %v3139 = vsel %vm3138, %v3136, 0.0
        %3140 = vadd.xlane.f32.xlu0 %v3139
        %v3141 = vpop.xlane.xlu0 %3140
        %v3142 = vsel %vm3138, %v3137, 0.0
        %3143 = vadd.xlane.f32.xlu0 %v3142
        %v3144 = vpop.xlane.xlu0 %3143
        %v3145 = vsub.f32 %v2537, %v3141
        %v3146 = vsub.f32 %v2538, %v3144
        %v3147 = vrsqrt.pop %v3145
        %v3148 = vmul.f32 %v3145, %v3147
        %vm3149 = vcmp.eq.f32.partialorder %v3145, inf
        %v3150 = vsel %vm3149, %v3145, %v3148
        %vm3151 = vcmp.eq.f32.partialorder %v3145, 0.0
        %v3152 = vand.u32 %v3145, 2147483648
        %v3153 = vsel %vm3151, %v3152, %v3150
        %v3154 = vrsqrt.pop %v3146
        %v3155 = vmul.f32 %v3146, %v3154
        %vm3156 = vcmp.eq.f32.partialorder %v3146, inf
        %v3157 = vsel %vm3156, %v3146, %v3155
        %vm3158 = vcmp.eq.f32.partialorder %v3146, 0.0
        %v3159 = vand.u32 %v3146, 2147483648
        %v3160 = vsel %vm3158, %v3159, %v3157
        %v3161 = vlaneseq
        %v3162 = vshrl.u32 %v3161, 7
        %v3163 = vsub.s32 7, %v3162
        %v3164 = vrot.slane %v3153, %v3163
        %v3165 = vlaneseq
        %v3166 = vshrl.u32 %v3165, 7
        %v3167 = vsub.s32 7, %v3166
        %v3168 = vrot.slane %v3160, %v3167
        %v3169 = vrcp.pop %v3164
        %v3170 = vmul.f32 %v3145, %v3169
        %v3171 = vrcp.pop %v3168
        %v3172 = vmul.f32 %v3146, %v3171
        %vm3173 = vcmp.ge.s32.totalorder %v1749, 7
        %v3174 = vsel %vm3173, 1, 0
        %v3175 = vcvt.s32.f32 %v3174
        %3178 = vbcast.lane.b32.xlu0 %v3175, 256
        %v3179 = vpop.permute.xlu0 %3178
        %v3181 = vmul.f32 %v3170, %v3179
        %v3182 = vmul.f32 %v3172, %v3179
        %vm3183 = vcmp.eq.s32.totalorder %v1749, 7
        %v3184 = vsel %vm3183, 1, 0
        %v3185 = vcvt.s32.f32 %v3184
        %3187 = vset.pattern.permute.xlu0 7
        %3188 = vperm.xlu0 %3187, %v3181
        %v3189 = vpop.permute.xlu0 %3188
        %3192 = vset.pattern.permute.xlu0 7
        %3193 = vperm.xlu0 %3192, %v3182
        %v3194 = vpop.permute.xlu0 %3193
        %v3196 = vmul.f32 %v3185, %v3189
        %v3197 = vmul.f32 %v3185, %v3194
        %v3198 = vadd.f32 %v3126, %v3196
        %v3199 = vadd.f32 %v3127, %v3197
        %v3200 = vld [vmem:[%s531] sm:$0x3]
        %v3201 = vld [vmem:[%s531 + $0x2] sm:$0x3]
        %v3202 = vld [vmem:[%s531 + $0x4] sm:$0x3]
        %v3203 = vld [vmem:[%s531 + $0x6] sm:$0x3]
        %v3206 = vunpack.c.l.s4 1966171168
        %v3207 = vunpack.c.0.s8 %v3206
        %v3208 = vlaneseq
        %v3209 = vshrl.u32 %v3208, 7
        %v3210 = vsub.s32 %v3207, %v3209
        %v3211 = vrot.slane %v3200, %v3210
        %v3212 = vcombine.high %v3211, %v3211
        %v3214 = vunpack.c.l.s4 1966171168
        %v3215 = vunpack.c.0.s8 %v3214
        %v3216 = vlaneseq
        %v3217 = vshrl.u32 %v3216, 7
        %v3218 = vsub.s32 %v3215, %v3217
        %v3219 = vrot.slane %v3211, %v3218
        %v3221 = vunpack.c.l.s4 1966171168
        %v3222 = vunpack.c.0.s8 %v3221
        %v3223 = vlaneseq
        %v3224 = vshrl.u32 %v3223, 7
        %v3225 = vsub.s32 %v3222, %v3224
        %v3226 = vrot.slane %v3212, %v3225
        %v3227 = vlaneseq
        %v3228 = vshrl.u32 %v3227, 7
        %v3229 = vsub.s32 0, %v3228
        %v3230 = vrot.slane %v3219, %v3229
        %v3231 = vlaneseq
        %v3232 = vshrl.u32 %v3231, 7
        %v3233 = vsub.s32 0, %v3232
        %v3234 = vrot.slane %v3226, %v3233
        %v3237 = vmul.f32 %v3198, %v3230
        %v3238 = vmul.f32 %v3199, %v3234
        %v3239 = vsel %vm566, %v3237, 0.0
        %3240 = vadd.xlane.f32.xlu0 %v3239
        %v3241 = vpop.xlane.xlu0 %3240
        %v3242 = vsel %vm566, %v3238, 0.0
        %3243 = vadd.xlane.f32.xlu0 %v3242
        %v3244 = vpop.xlane.xlu0 %3243
        %v3245 = vadd.f32 %v2636, %v3241
        %v3246 = vadd.f32 %v2639, %v3244
        %v3249 = vlaneseq
        %v3250 = vshrl.u32 %v3249, 7
        %v3251 = vsub.s32 %v1749, %v3250
        %v3252 = vrot.slane %v3245, %v3251
        %v3253 = vlaneseq
        %v3254 = vshrl.u32 %v3253, 7
        %v3255 = vsub.s32 %v1749, %v3254
        %v3256 = vrot.slane %v3246, %v3255
        %v3257 = vsel %vm1758, %v3256, %v3252
        %vm3259 = vcmask 58368
        %3260 = vst.msk [vmem:[#allocation2] sm:$0x3] %vm3259, %v3257
        %3261 = vst.msk [vmem:[%s500] sm:$0x3] %vm3259, %v3257
        %v3264 = vunpack.c.l.s4 1966171168
        %v3265 = vunpack.c.0.s8 %v3264
        %v3266 = vlaneseq
        %v3267 = vshrl.u32 %v3266, 7
        %v3268 = vsub.s32 %v3265, %v3267
        %v3269 = vrot.slane %v3201, %v3268
        %v3270 = vcombine.high %v3269, %v3269
        %v3272 = vunpack.c.l.s4 1966171168
        %v3273 = vunpack.c.0.s8 %v3272
        %v3274 = vlaneseq
        %v3275 = vshrl.u32 %v3274, 7
        %v3276 = vsub.s32 %v3273, %v3275
        %v3277 = vrot.slane %v3269, %v3276
        %v3279 = vunpack.c.l.s4 1966171168
        %v3280 = vunpack.c.0.s8 %v3279
        %v3281 = vlaneseq
        %v3282 = vshrl.u32 %v3281, 7
        %v3283 = vsub.s32 %v3280, %v3282
        %v3284 = vrot.slane %v3270, %v3283
        %v3285 = vlaneseq
        %v3286 = vshrl.u32 %v3285, 7
        %v3287 = vsub.s32 0, %v3286
        %v3288 = vrot.slane %v3277, %v3287
        %v3289 = vlaneseq
        %v3290 = vshrl.u32 %v3289, 7
        %v3291 = vsub.s32 0, %v3290
        %v3292 = vrot.slane %v3284, %v3291
        %v3295 = vmul.f32 %v3198, %v3288
        %v3296 = vmul.f32 %v3199, %v3292
        %v3297 = vsel %vm566, %v3295, 0.0
        %3298 = vadd.xlane.f32.xlu0 %v3297
        %v3299 = vpop.xlane.xlu0 %3298
        %v3300 = vsel %vm566, %v3296, 0.0
        %3301 = vadd.xlane.f32.xlu0 %v3300
        %v3302 = vpop.xlane.xlu0 %3301
        %v3303 = vadd.f32 %v2636, %v3299
        %v3304 = vadd.f32 %v2639, %v3302
        %v3307 = vlaneseq
        %v3308 = vshrl.u32 %v3307, 7
        %v3309 = vsub.s32 %v1749, %v3308
        %v3310 = vrot.slane %v3303, %v3309
        %v3311 = vlaneseq
        %v3312 = vshrl.u32 %v3311, 7
        %v3313 = vsub.s32 %v1749, %v3312
        %v3314 = vrot.slane %v3304, %v3313
        %v3315 = vsel %vm1758, %v3314, %v3310
        %s3317 = scalar_lea.vmem [#allocation2], 2
        %3318 = vst.msk [vmem:[%s3317] sm:$0x3] %vm3259, %v3315
        %s3319 = scalar_lea.vmem %s500, 2 [#allocation3]
        %3320 = vst.msk [vmem:[%s3319] sm:$0x3] %vm3259, %v3315
        %v3323 = vunpack.c.l.s4 1966171168
        %v3324 = vunpack.c.0.s8 %v3323
        %v3325 = vlaneseq
        %v3326 = vshrl.u32 %v3325, 7
        %v3327 = vsub.s32 %v3324, %v3326
        %v3328 = vrot.slane %v3202, %v3327
        %v3329 = vcombine.high %v3328, %v3328
        %v3331 = vunpack.c.l.s4 1966171168
        %v3332 = vunpack.c.0.s8 %v3331
        %v3333 = vlaneseq
        %v3334 = vshrl.u32 %v3333, 7
        %v3335 = vsub.s32 %v3332, %v3334
        %v3336 = vrot.slane %v3328, %v3335
        %v3338 = vunpack.c.l.s4 1966171168
        %v3339 = vunpack.c.0.s8 %v3338
        %v3340 = vlaneseq
        %v3341 = vshrl.u32 %v3340, 7
        %v3342 = vsub.s32 %v3339, %v3341
        %v3343 = vrot.slane %v3329, %v3342
        %v3344 = vlaneseq
        %v3345 = vshrl.u32 %v3344, 7
        %v3346 = vsub.s32 0, %v3345
        %v3347 = vrot.slane %v3336, %v3346
        %v3348 = vlaneseq
        %v3349 = vshrl.u32 %v3348, 7
        %v3350 = vsub.s32 0, %v3349
        %v3351 = vrot.slane %v3343, %v3350
        %v3354 = vmul.f32 %v3198, %v3347
        %v3355 = vmul.f32 %v3199, %v3351
        %v3356 = vsel %vm566, %v3354, 0.0
        %3357 = vadd.xlane.f32.xlu0 %v3356
        %v3358 = vpop.xlane.xlu0 %3357
        %v3359 = vsel %vm566, %v3355, 0.0
        %3360 = vadd.xlane.f32.xlu0 %v3359
        %v3361 = vpop.xlane.xlu0 %3360
        %v3362 = vadd.f32 %v2636, %v3358
        %v3363 = vadd.f32 %v2639, %v3361
        %v3366 = vlaneseq
        %v3367 = vshrl.u32 %v3366, 7
        %v3368 = vsub.s32 %v1749, %v3367
        %v3369 = vrot.slane %v3362, %v3368
        %v3370 = vlaneseq
        %v3371 = vshrl.u32 %v3370, 7
        %v3372 = vsub.s32 %v1749, %v3371
        %v3373 = vrot.slane %v3363, %v3372
        %v3374 = vsel %vm1758, %v3373, %v3369
        %s3376 = scalar_lea.vmem [#allocation2], 4
        %3377 = vst.msk [vmem:[%s3376] sm:$0x3] %vm3259, %v3374
        %s3378 = scalar_lea.vmem %s500, 4 [#allocation3]
        %3379 = vst.msk [vmem:[%s3378] sm:$0x3] %vm3259, %v3374
        %v3382 = vunpack.c.l.s4 1966171168
        %v3383 = vunpack.c.0.s8 %v3382
        %v3384 = vlaneseq
        %v3385 = vshrl.u32 %v3384, 7
        %v3386 = vsub.s32 %v3383, %v3385
        %v3387 = vrot.slane %v3203, %v3386
        %v3388 = vcombine.high %v3387, %v3387
        %v3390 = vunpack.c.l.s4 1966171168
        %v3391 = vunpack.c.0.s8 %v3390
        %v3392 = vlaneseq
        %v3393 = vshrl.u32 %v3392, 7
        %v3394 = vsub.s32 %v3391, %v3393
        %v3395 = vrot.slane %v3387, %v3394
        %v3397 = vunpack.c.l.s4 1966171168
        %v3398 = vunpack.c.0.s8 %v3397
        %v3399 = vlaneseq
        %v3400 = vshrl.u32 %v3399, 7
        %v3401 = vsub.s32 %v3398, %v3400
        %v3402 = vrot.slane %v3388, %v3401
        %v3403 = vlaneseq
        %v3404 = vshrl.u32 %v3403, 7
        %v3405 = vsub.s32 0, %v3404
        %v3406 = vrot.slane %v3395, %v3405
        %v3407 = vlaneseq
        %v3408 = vshrl.u32 %v3407, 7
        %v3409 = vsub.s32 0, %v3408
        %v3410 = vrot.slane %v3402, %v3409
        %v3413 = vmul.f32 %v3198, %v3406
        %v3414 = vmul.f32 %v3199, %v3410
        %v3415 = vsel %vm566, %v3413, 0.0
        %3416 = vadd.xlane.f32.xlu0 %v3415
        %v3417 = vpop.xlane.xlu0 %3416
        %v3418 = vsel %vm566, %v3414, 0.0
        %3419 = vadd.xlane.f32.xlu0 %v3418
        %v3420 = vpop.xlane.xlu0 %3419
        %v3421 = vadd.f32 %v2636, %v3417
        %v3422 = vadd.f32 %v2639, %v3420
        %v3425 = vlaneseq
        %v3426 = vshrl.u32 %v3425, 7
        %v3427 = vsub.s32 %v1749, %v3426
        %v3428 = vrot.slane %v3421, %v3427
        %v3429 = vlaneseq
        %v3430 = vshrl.u32 %v3429, 7
        %v3431 = vsub.s32 %v1749, %v3430
        %v3432 = vrot.slane %v3422, %v3431
        %v3433 = vsel %vm1758, %v3432, %v3428
        %s3435 = scalar_lea.vmem [#allocation2], 6
        %3436 = vst.msk [vmem:[%s3435] sm:$0x3] %vm3259, %v3433
        %s3437 = scalar_lea.vmem %s500, 6 [#allocation3]
        %3438 = vst.msk [vmem:[%s3437] sm:$0x3] %vm3259, %v3433
        %v3441 = vlaneseq
        %v3442 = vshrl.u32 %v3441, 7
        %v3443 = vsub.s32 %v1749, %v3442
        %v3444 = vrot.slane %v2636, %v3443
        %v3445 = vlaneseq
        %v3446 = vshrl.u32 %v3445, 7
        %v3447 = vsub.s32 %v1749, %v3446
        %v3448 = vrot.slane %v2639, %v3447
        %v3449 = vsel %vm1758, %v3448, %v3444
        %3451 = vst.msk [vmem:[%s539] sm:$0x3] %vm3259, %v3449
        %v3452 = vlaneseq
        %v3453 = vshrl.u32 %v3452, 7
        %v3454 = vsub.s32 0, %v3453
        %v3455 = vrot.slane %v1177, %v3454
        %3457 = vbcast.lane.b32.xlu0 %v3455, 256
        %v3458 = vpop.permute.xlu0 %3457
        %v3459 = vlaneseq
        %v3460 = vshrl.u32 %v3459, 7
        %v3461 = vsub.s32 1, %v3460
        %v3462 = vrot.slane %v1177, %v3461
        %3464 = vbcast.lane.b32.xlu0 %v3462, 256
        %v3465 = vpop.permute.xlu0 %3464
        %v3468 = vsub.f32 %v2636, %v3458
        %v3469 = vsub.f32 %v2639, %v3465
        %v3470 = vmul.f32 %v1732, %v2537
        %v3471 = vmul.f32 %v1733, %v2538
        %v3472 = vsel %vm566, %v3470, 0.0
        %3473 = vadd.xlane.f32.xlu0 %v3472
        %v3474 = vpop.xlane.xlu0 %3473
        %v3475 = vsel %vm566, %v3471, 0.0
        %3476 = vadd.xlane.f32.xlu0 %v3475
        %v3477 = vpop.xlane.xlu0 %3476
        %v3480 = vlaneseq
        %v3481 = vshrl.u32 %v3480, 7
        %v3482 = vsub.s32 %v1749, %v3481
        %v3483 = vrot.slane %v3474, %v3482
        %v3484 = vlaneseq
        %v3485 = vshrl.u32 %v3484, 7
        %v3486 = vsub.s32 %v1749, %v3485
        %v3487 = vrot.slane %v3477, %v3486
        %v3488 = vsel %vm1758, %v3487, %v3483
        %v3490 = vsel %vm3259, %v3488, 0.0
        %3491 = vadd.xlane.f32.xlu0 %v3490
        %v3492 = vpop.xlane.xlu0 %3491
        %3495 = vset.pattern.permute.xlu0 0
        %3496 = vperm.xlu0 %3495, %v3468
        %v3497 = vpop.permute.xlu0 %3496
        %3498 = vset.pattern.permute.xlu0 0
        %3499 = vperm.xlu0 %3498, %v3469
        %v3500 = vpop.permute.xlu0 %3499
        %v3501 = vlaneseq
        %v3502 = vshrl.u32 %v3501, 7
        %v3503 = vsub.s32 %v1749, %v3502
        %v3504 = vrot.slane %v3497, %v3503
        %v3505 = vlaneseq
        %v3506 = vshrl.u32 %v3505, 7
        %v3507 = vsub.s32 %v1749, %v3506
        %v3508 = vrot.slane %v3500, %v3507
        %v3509 = vsel %vm1759, %v3504, %v3504
        %v3510 = vsel %vm1761, %v3504, %v3509
        %v3511 = vsel %vm1763, %v3504, %v3510
        %v3512 = vsel %vm1765, %v3504, %v3511
        %v3513 = vsel %vm1767, %v3504, %v3512
        %v3514 = vsel %vm1769, %v3504, %v3513
        %v3515 = vsel %vm1759, %v3508, %v3508
        %v3516 = vsel %vm1761, %v3508, %v3515
        %v3517 = vsel %vm1763, %v3508, %v3516
        %v3518 = vsel %vm1765, %v3508, %v3517
        %v3519 = vsel %vm1767, %v3508, %v3518
        %v3520 = vsel %vm1769, %v3508, %v3519
        %v3523 = vmul.f32 %v1732, %v3514
        %v3524 = vmul.f32 %v1733, %v3520
        %v3525 = vsel %vm566, %v3523, 0.0
        %3526 = vadd.xlane.f32.xlu0 %v3525
        %v3527 = vpop.xlane.xlu0 %3526
        %v3528 = vsel %vm566, %v3524, 0.0
        %3529 = vadd.xlane.f32.xlu0 %v3528
        %v3530 = vpop.xlane.xlu0 %3529
        %v3531 = vmul.f32 %v3468, %v3527
        %v3532 = vmul.f32 %v3469, %v3530
        %3535 = vset.pattern.permute.xlu0 0
        %3536 = vperm.xlu0 %3535, %v3531
        %v3537 = vpop.permute.xlu0 %3536
        %3538 = vset.pattern.permute.xlu0 0
        %3539 = vperm.xlu0 %3538, %v3532
        %v3540 = vpop.permute.xlu0 %3539
        %v3541 = vlaneseq
        %v3542 = vshrl.u32 %v3541, 7
        %v3543 = vsub.s32 %v1749, %v3542
        %v3544 = vrot.slane %v3537, %v3543
        %v3545 = vlaneseq
        %v3546 = vshrl.u32 %v3545, 7
        %v3547 = vsub.s32 %v1749, %v3546
        %v3548 = vrot.slane %v3540, %v3547
        %v3549 = vsel %vm1758, %v3548, %v3544
        %v3551 = vsel %vm3259, %v3549, 0.0
        %3552 = vadd.xlane.f32.xlu0 %v3551
        %v3553 = vpop.xlane.xlu0 %3552
        %v3554 = vadd.f32 %v3492, %v3553
        %v3555 = vsub.f32 %v3554, 8.0
        %v3558 = vrot.slane %v1697, 7
        %v3559 = vsel %vm1758, %v3558, %v1696
        %v3561 = vadd.f32 %v3555, %v3559
        %v3564 = vrot.slane %v2540, 7
        %v3565 = vsel %vm1758, %v3564, %v2539
        %v3567 = vsub.f32 %v3561, %v3565
        %v3568 = vmul.f32 %v3567, 0.5
        %vm3569 = vcmask 1024
        %3570 = vst.msk [vmem:[%s535] sm:$0x3] %vm3569, %v3568
        %s3571 = sand.u32 %s306, 1
        %s3572 = sand.u32 %s306, 1
        %s3573 = smul.addr %s3572, 8
        %s3574 = scalar_lea.vmem [#allocation3], %s3573
        %p3575 = scmp.lt.s32.totalorder %s26, 7
        %s3576 = scalar_select %p3575, %s26, 7
        %s3577 = smul.addr %s3576, 2
        %s3578 = scalar_lea.vmem %s13, %s3577
        %p3579 = scmp.lt.s32.totalorder %s26, 7
        %s3580 = scalar_select %p3579, %s26, 7
        %s3581 = smul.addr %s3580, 2
        %s3582 = scalar_lea.vmem %s14, %s3581
        // Predicated region
        $region73: #{forward.6} parent=67 // pred_check
          %p3583 = pneg %p316
        $region74: #{forward.6} parent=67 // pred_check_branch
          %3585 = sbr.rel (%p3583) target = $region76
        $region75: #{forward.6} parent=67 // pred_region
          %s3586 = smul.addr %s26, 2
          %s3587 = scalar_lea.vmem %s12, %s3586
          // Predicated region
          $region77: #{forward.6} parent=75 // pred_check
            _
          $region78: #{forward.6} parent=75 // pred_check_branch
            %3589 = sbr.rel (0) target = $region80
          $region79: #{forward.6} parent=75 // pred_region
            // Predicated region
            $region81: #{forward.6} parent=79 // pred_check
              _
            $region82: #{forward.6} parent=79 // pred_check_branch
              %3591 = sbr.rel target = $region84
            $region83: #{forward.6} parent=79 // pred_region
              // Predicated region
              $region96: #{forward.6} parent=83 // pred_check
                _
              $region97: #{forward.6} parent=83 // pred_check_branch
                %3613 = sbr.rel (0) target = $region99
              $region98: #{forward.6} parent=83 // pred_region
                loop: start=0, step=1, limit=1
                $region100: #{forward.6} parent=98 // loop_pre_header
                  _
                $region101: #{forward.6} parent=98 // loop_header
                  %s3615 = sphi 0, %s3619
                  %p3616 = scmp.ge.s32.totalorder %s3615, 1
                  %s3620 = sphi %s3574, %s3574
                  %s3621 = sphi %s3587, %s3587
                $region102: #{forward.6} parent=98 // loop_header_branch
                  %3618 = sbr.rel (%p3616) target = $region106
                $region103: #{forward.6} parent=98 // loop_body
                  _
                $region104: #{forward.6} parent=98 // loop_footer
                  %s3619 = sadd.s32 1, %s3615
                $region105: #{forward.6} parent=98 // loop_footer_branch
                  %3614 = sbr.rel target = $region101
                $region106: #{forward.6} parent=98 // loop_exit
                  _
                %s3623 = ssub.s32 4, 1
                loop: start=0, step=1, limit=1
                $region107: #{forward.6} parent=98 // loop_pre_header
                  _
                $region108: #{forward.6} parent=98 // loop_header
                  %s3625 = sphi 0, %s3629
                  %p3626 = scmp.ge.s32.totalorder %s3625, 1
                  %s3630 = sphi %s3574, %s3574
                  %s3631 = sphi %s3587, %s3587
                $region109: #{forward.6} parent=98 // loop_header_branch
                  %3628 = sbr.rel (%p3626) target = $region113
                $region110: #{forward.6} parent=98 // loop_body
                  %v3632 = vld [vmem:[%s3630] sm:%s3623]
                  %3633 = vst [vmem:[%s3631] sm:%s3623] %v3632
                  %v3634 = vld [vmem:[%s3630 + $0x2] sm:%s3623]
                  %3635 = vst [vmem:[%s3631 + $0x10] sm:%s3623] %v3634
                  %v3636 = vld [vmem:[%s3630 + $0x4] sm:%s3623]
                  %3637 = vst [vmem:[%s3631 + $0x20] sm:%s3623] %v3636
                  %v3638 = vld [vmem:[%s3630 + $0x6] sm:%s3623]
                  %3639 = vst [vmem:[%s3631 + $0x30] sm:%s3623] %v3638
                $region111: #{forward.6} parent=98 // loop_footer
                  %s3629 = sadd.s32 1, %s3625
                $region112: #{forward.6} parent=98 // loop_footer_branch
                  %3624 = sbr.rel target = $region108
                $region113: #{forward.6} parent=98 // loop_exit
                  _
              $region99: #{forward.6} parent=83 // pred_fallthru
                _
            $region84: #{forward.6} parent=79 // pred_fallthru
              _
            // Predicated region
            $region85: #{forward.6} parent=79 // pred_check
              _
            $region86: #{forward.6} parent=79 // pred_check_branch
              %3593 = sbr.rel (0) target = $region88
            $region87: #{forward.6} parent=79 // pred_region
              %s3595 = ssub.s32 4, 1
              loop: start=0, step=1, limit=1
              $region89: #{forward.6} parent=87 // loop_pre_header
                _
              $region90: #{forward.6} parent=87 // loop_header
                %s3597 = sphi 0, %s3601
                %p3598 = scmp.ge.s32.totalorder %s3597, 1
                %s3602 = sphi %s3574, %s3574
                %s3603 = sphi %s3587, %s3587
              $region91: #{forward.6} parent=87 // loop_header_branch
                %3600 = sbr.rel (%p3598) target = $region95
              $region92: #{forward.6} parent=87 // loop_body
                %v3604 = vld [vmem:[%s3602] sm:%s3595]
                %3605 = vst [vmem:[%s3603] sm:%s3595] %v3604
                %v3606 = vld [vmem:[%s3602 + $0x2] sm:%s3595]
                %3607 = vst [vmem:[%s3603 + $0x10] sm:%s3595] %v3606
                %v3608 = vld [vmem:[%s3602 + $0x4] sm:%s3595]
                %3609 = vst [vmem:[%s3603 + $0x20] sm:%s3595] %v3608
                %v3610 = vld [vmem:[%s3602 + $0x6] sm:%s3595]
                %3611 = vst [vmem:[%s3603 + $0x30] sm:%s3595] %v3610
              $region93: #{forward.6} parent=87 // loop_footer
                %s3601 = sadd.s32 1, %s3597
              $region94: #{forward.6} parent=87 // loop_footer_branch
                %3596 = sbr.rel target = $region90
              $region95: #{forward.6} parent=87 // loop_exit
                _
            $region88: #{forward.6} parent=79 // pred_fallthru
              _
          $region80: #{forward.6} parent=75 // pred_fallthru
            _
          %3640 = vnop
        $region76: #{forward.6} parent=67 // pred_fallthru
          _
        // Predicated region
        $region114: #{forward.6} parent=67 // pred_check
          %p3641 = pneg %p342
        $region115: #{forward.6} parent=67 // pred_check_branch
          %3643 = sbr.rel (%p3641) target = $region117
        $region116: #{forward.6} parent=67 // pred_region
          _
        $region117: #{forward.6} parent=67 // pred_fallthru
          _
        // Predicated region
        $region118: #{forward.6} parent=67 // pred_check
          %p3644 = pneg %p368
        $region119: #{forward.6} parent=67 // pred_check_branch
          %3646 = sbr.rel (%p3644) target = $region121
        $region120: #{forward.6} parent=67 // pred_region
          _
        $region121: #{forward.6} parent=67 // pred_fallthru
          _
      $region68: #{forward.6} parent=5 // pred_fallthru
        _
      %p3647 = scmp.le.s32.totalorder 2, %s21
      // Predicated region
      $region122: #{forward.6} parent=5 // pred_check
        %p3648 = pneg %p3647
      $region123: #{forward.6} parent=5 // pred_check_branch
        %3650 = sbr.rel (%p3648) target = $region125
      $region124: #{forward.6} parent=5 // pred_region
        %s3651 = ssub.s32 %s21, 2
        // Predicated region
        $region126: #{forward.6} parent=124 // pred_check
          %p3652 = pneg %p322
        $region127: #{forward.6} parent=124 // pred_check_branch
          %3654 = sbr.rel (%p3652) target = $region129
        $region128: #{forward.6} parent=124 // pred_region
          %s3655 = sand.u32 %s307, 1
          %s3656 = sand.u32 %s307, 1
          %s3657 = smul.addr %s3656, 8
          %s3658 = scalar_lea.vmem [#allocation3], %s3657
        $region129: #{forward.6} parent=124 // pred_fallthru
          _
        // Predicated region
        $region130: #{forward.6} parent=124 // pred_check
          %p3659 = pneg %p348
        $region131: #{forward.6} parent=124 // pred_check_branch
          %3661 = sbr.rel (%p3659) target = $region133
        $region132: #{forward.6} parent=124 // pred_region
          %p3662 = scmp.lt.s32.totalorder %s27, 7
          %s3663 = scalar_select %p3662, %s27, 7
          %s3664 = smul.addr %s3663, 2
          %s3665 = scalar_lea.vmem %s13, %s3664
        $region133: #{forward.6} parent=124 // pred_fallthru
          _
        // Predicated region
        $region134: #{forward.6} parent=124 // pred_check
          %p3666 = pneg %p374
        $region135: #{forward.6} parent=124 // pred_check_branch
          %3668 = sbr.rel (%p3666) target = $region137
        $region136: #{forward.6} parent=124 // pred_region
          %p3669 = scmp.lt.s32.totalorder %s27, 7
          %s3670 = scalar_select %p3669, %s27, 7
          %s3671 = smul.addr %s3670, 2
          %s3672 = scalar_lea.vmem %s14, %s3671
        $region137: #{forward.6} parent=124 // pred_fallthru
          _
      $region125: #{forward.6} parent=5 // pred_fallthru
        _
    $region6: #{forward.6} parent=1 // loop_footer
      %s25 = sadd.s32 1, %s21
    $region7: #{forward.6} parent=1 // loop_footer_branch
      %20 = sbr.rel target = $region3
    $region8: #{forward.6} parent=1 // loop_exit
      _

</llo_original>
